<compile_context>
chip_gen: v7x
topology: tpu7x:2x2x1
jax: 0.10.0
libtpu: 0.0.40
codegen_flags: <defaults>
</compile_context>

<pallas_src>
import functools
import math

import jax
import jax.numpy as jnp
from jax.experimental import pallas as pl
from jax.experimental.pallas import tpu as pltpu


def _srcnn_kernel(x_ref, w1_ref, b1_ref, w2_ref, b2_ref, w3_ref, b3_ref,
                  out_ref, h2_scr, *, B, H, W):
    """Fused SRCNN forward for one grid step (B images).

    Lane-dense layouts (channels folded into the lane axis):
      x_ref   : (B, H+8, W*Cin)    bf16, rows pre-padded for the 9x9 conv
      w1_ref  : (9*W*Cin, W*64)    bf16, conv1 row taps folded into K
      w2_ref  : (W*64,  W*32)      bf16, 1x1 conv as a block-diagonal matmul
      w3_ref  : (5*W*32, W*Coutp)  bf16, conv3 row taps folded into K
      out_ref : (B, H, W*Coutp)    f32  (Coutp padded so W*Coutp % 128 == 0)
      h2_scr  : (B, H+4, W*32)     bf16 VMEM staging with conv3 row halo
    """
    K1, K3, P3 = 9, 5, 2
    WC2 = W * 32

    # Zero the scratch so the +/-2 row halo of conv3 reads zeros.
    h2_scr[...] = jnp.zeros_like(h2_scr)

    # ---- conv1 (9x9) + ReLU + conv2 (1x1) + ReLU, one image at a time so the
    # live f32 accumulator stays ~16 vregs; h2 is staged in the VMEM scratch.
    for b in range(B):
        # Fold the 9 row taps into the contraction dim: (H, 9*W*Cin).
        lhs1 = jnp.concatenate(
            [x_ref[b, kh:kh + H, :] for kh in range(K1)], axis=-1)
        h1 = jnp.dot(lhs1, w1_ref[...], preferred_element_type=jnp.float32)
        h1 = jnp.maximum(h1 + b1_ref[...], 0.0).astype(jnp.bfloat16)  # (H, W*64)

        h2 = jnp.dot(h1, w2_ref[...], preferred_element_type=jnp.float32)
        h2 = jnp.maximum(h2 + b2_ref[...], 0.0).astype(jnp.bfloat16)  # (H, W*32)
        h2_scr[b, P3:P3 + H, :] = h2

    # ---- conv3 (5x5): row taps folded into K via the padded scratch -> 1 dot.
    lhs3 = jnp.concatenate(
        [h2_scr[:, kh:kh + H, :] for kh in range(K3)], axis=-1)
    lhs3 = lhs3.reshape(B * H, K3 * WC2)               # leading-dim collapse
    out = jnp.dot(lhs3, w3_ref[...], preferred_element_type=jnp.float32)
    out = (out + b3_ref[...]).astype(out_ref.dtype)
    out_ref[...] = out.reshape(B, H, -1)


def _band_1d(w_taps, width, pad):
    """Fold the width (kw) and cin dims of a 1-D conv into a dense matrix.

    w_taps: (Kw, Cin, Cout).  Returns band of shape (width*Cin, width*Cout)
    with band[col*Cin+cin, j*Cout+cout] = w_taps[col - j + pad, cin, cout]
    when that tap index is in range, else 0 (zero padding at column borders).
    """
    Kw, Cin, Cout = w_taps.shape
    col = jnp.arange(width)[:, None]
    out_j = jnp.arange(width)[None, :]
    kw = col - out_j + pad                                # (width, width)
    valid = (kw >= 0) & (kw < Kw)
    w_ext = jnp.concatenate(
        [w_taps, jnp.zeros((1, Cin, Cout), w_taps.dtype)], axis=0)
    band4 = w_ext[jnp.where(valid, kw, Kw)]               # (Wc, Wj, Cin, Cout)
    return band4.transpose(0, 2, 1, 3).reshape(width * Cin, width * Cout)


def prepare_srcnn_weights(params, W):
    """One-time weight preprocessing (hoisted out of the forward path)."""
    w1, b1, w2, b2, w3, b3 = params
    Cin, Cout = w1.shape[2], w3.shape[3]

    # Pad conv3 output channels so the output lane dim (W*Coutp) is a multiple
    # of 128 -> full-width stores instead of masked partial stores.
    step = 128 // math.gcd(W, 128)
    Coutp = -(-Cout // step) * step
    w3p = jnp.pad(w3, ((0, 0), (0, 0), (0, 0), (0, Coutp - Cout)))
    b3p = jnp.pad(b3, ((0, 0), (0, Coutp - Cout)))

    band1 = jnp.concatenate([_band_1d(w1[kh], W, 4) for kh in range(9)],
                            axis=0).astype(jnp.bfloat16)   # (9*W*Cin, W*64)
    # TODO(synk): replace kron block-diag with channel-last matmul for large W.
    w2b = jnp.kron(jnp.eye(W, dtype=w2.dtype), w2).astype(jnp.bfloat16)
    band3 = jnp.concatenate([_band_1d(w3p[kh], W, 2) for kh in range(5)],
                            axis=0).astype(jnp.bfloat16)   # (5*W*32, W*Coutp)
    b1r = jnp.tile(b1, (1, W)).astype(jnp.float32)          # (1, W*64)
    b2r = jnp.tile(b2, (1, W)).astype(jnp.float32)          # (1, W*32)
    b3r = jnp.tile(b3p, (1, W)).astype(jnp.float32)         # (1, W*Coutp)
    return dict(band1=band1, b1r=b1r, w2b=w2b, b2r=b2r, band3=band3, b3r=b3r,
                Cin=Cin, Cout=Cout, Coutp=Coutp)


def srcnn2d_forward(x_nchw, prep):
    """x_nchw: (N, C, H, W) float32.  prep: prepare_srcnn_weights output."""
    N, C, H, W = x_nchw.shape
    Cout, Coutp = prep["Cout"], prep["Coutp"]
    band1, b1r = prep["band1"], prep["b1r"]
    w2b, b2r = prep["w2b"], prep["b2r"]
    band3, b3r = prep["band3"], prep["b3r"]

    # Lane-dense activations: (N, H, W*C); pad only the rows for conv1.
    x2d = jnp.transpose(x_nchw, (0, 2, 3, 1)).reshape(N, H, W * C)
    x2d = jnp.pad(x2d, ((0, 0), (4, 4), (0, 0))).astype(jnp.bfloat16)

    # Batch images per grid step so the matmul M dim approaches ~128 rows.
    B_blk = max(1, min(N, max(1, 128 // H)))
    while N % B_blk:
        B_blk -= 1

    kernel = functools.partial(_srcnn_kernel, B=B_blk, H=H, W=W)

    out2d = pl.pallas_call(
        kernel,
        out_shape=jax.ShapeDtypeStruct((N, H, W * Coutp), jnp.float32),
        grid_spec=pltpu.PrefetchScalarGridSpec(
            num_scalar_prefetch=0,
            grid=(N // B_blk,),
            in_specs=[
                pl.BlockSpec((B_blk, H + 8, W * C), lambda n: (n, 0, 0)),
                pl.BlockSpec(band1.shape, lambda n: (0, 0)),
                pl.BlockSpec(b1r.shape, lambda n: (0, 0)),
                pl.BlockSpec(w2b.shape, lambda n: (0, 0)),
                pl.BlockSpec(b2r.shape, lambda n: (0, 0)),
                pl.BlockSpec(band3.shape, lambda n: (0, 0)),
                pl.BlockSpec(b3r.shape, lambda n: (0, 0)),
            ],
            out_specs=pl.BlockSpec((B_blk, H, W * Coutp), lambda n: (n, 0, 0)),
            scratch_shapes=[pltpu.VMEM((B_blk, H + 4, W * 32), jnp.bfloat16)],
        ),
        compiler_params=pltpu.CompilerParams(
            dimension_semantics=("parallel",),
            vmem_limit_bytes=48 * 1024 * 1024),
    )(x2d, band1, b1r, w2b, b2r, band3, b3r)

    out = out2d.reshape(N, H, W, Coutp)[..., :Cout]        # drop pad channels
    return jnp.transpose(out, (0, 3, 1, 2))                # back to NCHW


def init_params(num_channels, key):
    """Deterministic synthetic weights, HWIO layout (+ biases as (1, C))."""
    k1, k2, k3, k4, k5, k6 = jax.random.split(key, 6)
    w1 = 0.05 * jax.random.normal(k1, (9, 9, num_channels, 64), jnp.float32)
    b1 = 0.05 * jax.random.normal(k2, (1, 64), jnp.float32)
    w2 = 0.05 * jax.random.normal(k3, (64, 32), jnp.float32)          # 1x1 conv
    b2 = 0.05 * jax.random.normal(k4, (1, 32), jnp.float32)
    w3 = 0.05 * jax.random.normal(k5, (5, 5, 32, num_channels), jnp.float32)
    b3 = 0.05 * jax.random.normal(k6, (1, num_channels), jnp.float32)
    return (w1, b1, w2, b2, w3, b3)


def _reference_forward(x_nchw, params):
    """Pure-JAX f32 reference (lax conv) for correctness checking."""
    w1, b1, w2, b2, w3, b3 = params
    dn = ('NHWC', 'HWIO', 'NHWC')
    h = jnp.transpose(x_nchw, (0, 2, 3, 1))
    h = jax.lax.conv_general_dilated(h, w1, (1, 1), [(4, 4), (4, 4)],
                                     dimension_numbers=dn)
    h = jnp.maximum(h + b1.reshape(1, 1, 1, -1), 0.0)
    h = jax.lax.conv_general_dilated(h, w2.reshape(1, 1, 64, 32), (1, 1),
                                     [(0, 0), (0, 0)], dimension_numbers=dn)
    h = jnp.maximum(h + b2.reshape(1, 1, 1, -1), 0.0)
    h = jax.lax.conv_general_dilated(h, w3, (1, 1), [(2, 2), (2, 2)],
                                     dimension_numbers=dn)
    h = h + b3.reshape(1, 1, 1, -1)
    return jnp.transpose(h, (0, 3, 1, 2))


if __name__ == "__main__":
    num_channels = 4
    N, H, W = 2, 16, 16

    key = jax.random.PRNGKey(0)
    kx, kp = jax.random.split(key)
    x = jax.random.normal(kx, (N, num_channels, H, W), jnp.float32)
    params = init_params(num_channels, kp)

    prep = prepare_srcnn_weights(params, W)      # one-time weight preprocessing
    out = srcnn2d_forward(x, prep)
    out = jax.block_until_ready(out)
    assert out.shape == (N, num_channels, H, W), out.shape

    ref = jax.block_until_ready(_reference_forward(x, params))
    # bf16 MXU inputs (f32 accumulate) -> loosened tolerance vs the f32 reference.
    assert jnp.allclose(out, ref, atol=5e-2, rtol=5e-2), \
        float(jnp.max(jnp.abs(out - ref)))

    print("KERNEL_OK")
</pallas_src>

<mosaic_0001>
module attributes {stable_mosaic.version = 11 : i64} {
  func.func @_srcnn_kernel(%arg0: i32, %arg1: memref<2x24x64xbf16, #tpu.memory_space<vmem>>, %arg2: memref<576x1024xbf16, #tpu.memory_space<vmem>>, %arg3: memref<1x1024xf32, #tpu.memory_space<vmem>>, %arg4: memref<1024x512xbf16, #tpu.memory_space<vmem>>, %arg5: memref<1x512xf32, #tpu.memory_space<vmem>>, %arg6: memref<2560x128xbf16, #tpu.memory_space<vmem>>, %arg7: memref<1x128xf32, #tpu.memory_space<vmem>>, %arg8: memref<2x16x128xf32, #tpu.memory_space<vmem>>, %arg9: memref<2x20x512xbf16, #tpu.memory_space<vmem>>) attributes {dimension_semantics = [#tpu.dimension_semantics<parallel>], iteration_bounds = array<i64: 1>, scalar_prefetch = 0 : i64, scratch_operands = 1 : i64, tpu.core_type = #tpu.core_type<tc>, window_params = [{transform_indices = @transform_0, window_bounds = array<i64: 2, 24, 64>}, {pipeline_mode = #tpu.pipeline_mode<synchronous>, transform_indices = @transform_1, window_bounds = array<i64: 576, 1024>}, {pipeline_mode = #tpu.pipeline_mode<synchronous>, transform_indices = @transform_2, window_bounds = array<i64: 1, 1024>}, {pipeline_mode = #tpu.pipeline_mode<synchronous>, transform_indices = @transform_3, window_bounds = array<i64: 1024, 512>}, {pipeline_mode = #tpu.pipeline_mode<synchronous>, transform_indices = @transform_4, window_bounds = array<i64: 1, 512>}, {pipeline_mode = #tpu.pipeline_mode<synchronous>, transform_indices = @transform_5, window_bounds = array<i64: 2560, 128>}, {pipeline_mode = #tpu.pipeline_mode<synchronous>, transform_indices = @transform_6, window_bounds = array<i64: 1, 128>}, {transform_indices = @transform_7, window_bounds = array<i64: 2, 16, 128>}]} {
    %cst = arith.constant 0.000000e+00 : bf16
    %0 = vector.broadcast %cst : bf16 to vector<2x20x512xbf16>
    %c0 = arith.constant 0 : index
    %c0_0 = arith.constant 0 : index
    %c0_1 = arith.constant 0 : index
    %1 = vector.load %arg9[%c0, %c0_0, %c0_1] : memref<2x20x512xbf16, #tpu.memory_space<vmem>>, vector<2x20x512xbf16>
    tpu.vector_store %arg9[%c0, %c0_0, %c0_1], %0 {strides = array<i32>} : memref<2x20x512xbf16, #tpu.memory_space<vmem>>, vector<2x20x512xbf16>,
    %c0_2 = arith.constant 0 : index
    %c0_3 = arith.constant 0 : index
    %c0_4 = arith.constant 0 : index
    %2 = vector.load %arg1[%c0_2, %c0_3, %c0_4] : memref<2x24x64xbf16, #tpu.memory_space<vmem>>, vector<1x16x64xbf16>
    %3 = vector.shape_cast %2 : vector<1x16x64xbf16> to vector<16x64xbf16>
    %c0_5 = arith.constant 0 : index
    %c1 = arith.constant 1 : index
    %c0_6 = arith.constant 0 : index
    %4 = vector.load %arg1[%c0_5, %c1, %c0_6] : memref<2x24x64xbf16, #tpu.memory_space<vmem>>, vector<1x16x64xbf16>
    %5 = vector.shape_cast %4 : vector<1x16x64xbf16> to vector<16x64xbf16>
    %c0_7 = arith.constant 0 : index
    %c2 = arith.constant 2 : index
    %c0_8 = arith.constant 0 : index
    %6 = vector.load %arg1[%c0_7, %c2, %c0_8] : memref<2x24x64xbf16, #tpu.memory_space<vmem>>, vector<1x16x64xbf16>
    %7 = vector.shape_cast %6 : vector<1x16x64xbf16> to vector<16x64xbf16>
    %c0_9 = arith.constant 0 : index
    %c3 = arith.constant 3 : index
    %c0_10 = arith.constant 0 : index
    %8 = vector.load %arg1[%c0_9, %c3, %c0_10] : memref<2x24x64xbf16, #tpu.memory_space<vmem>>, vector<1x16x64xbf16>
    %9 = vector.shape_cast %8 : vector<1x16x64xbf16> to vector<16x64xbf16>
    %c0_11 = arith.constant 0 : index
    %c4 = arith.constant 4 : index
    %c0_12 = arith.constant 0 : index
    %10 = vector.load %arg1[%c0_11, %c4, %c0_12] : memref<2x24x64xbf16, #tpu.memory_space<vmem>>, vector<1x16x64xbf16>
    %11 = vector.shape_cast %10 : vector<1x16x64xbf16> to vector<16x64xbf16>
    %c0_13 = arith.constant 0 : index
    %c5 = arith.constant 5 : index
    %c0_14 = arith.constant 0 : index
    %12 = vector.load %arg1[%c0_13, %c5, %c0_14] : memref<2x24x64xbf16, #tpu.memory_space<vmem>>, vector<1x16x64xbf16>
    %13 = vector.shape_cast %12 : vector<1x16x64xbf16> to vector<16x64xbf16>
    %c0_15 = arith.constant 0 : index
    %c6 = arith.constant 6 : index
    %c0_16 = arith.constant 0 : index
    %14 = vector.load %arg1[%c0_15, %c6, %c0_16] : memref<2x24x64xbf16, #tpu.memory_space<vmem>>, vector<1x16x64xbf16>
    %15 = vector.shape_cast %14 : vector<1x16x64xbf16> to vector<16x64xbf16>
    %c0_17 = arith.constant 0 : index
    %c7 = arith.constant 7 : index
    %c0_18 = arith.constant 0 : index
    %16 = vector.load %arg1[%c0_17, %c7, %c0_18] : memref<2x24x64xbf16, #tpu.memory_space<vmem>>, vector<1x16x64xbf16>
    %17 = vector.shape_cast %16 : vector<1x16x64xbf16> to vector<16x64xbf16>
    %c0_19 = arith.constant 0 : index
    %c8 = arith.constant 8 : index
    %c0_20 = arith.constant 0 : index
    %18 = vector.load %arg1[%c0_19, %c8, %c0_20] : memref<2x24x64xbf16, #tpu.memory_space<vmem>>, vector<1x16x64xbf16>
    %19 = vector.shape_cast %18 : vector<1x16x64xbf16> to vector<16x64xbf16>
    %20 = tpu.concatenate %3, %5, %7, %9, %11, %13, %15, %17, %19 in 1 : vector<16x64xbf16>, vector<16x64xbf16>, vector<16x64xbf16>, vector<16x64xbf16>, vector<16x64xbf16>, vector<16x64xbf16>, vector<16x64xbf16>, vector<16x64xbf16>, vector<16x64xbf16> -> vector<16x576xbf16>
    %c0_21 = arith.constant 0 : index
    %c0_22 = arith.constant 0 : index
    %21 = vector.load %arg2[%c0_21, %c0_22] : memref<576x1024xbf16, #tpu.memory_space<vmem>>, vector<576x1024xbf16>
    %cst_23 = arith.constant dense<0.000000e+00> : vector<16x1024xf32>
    %22 = tpu.matmul %20, %21, %cst_23 {dimension_numbers = #tpu.dot_dimension_numbers<[1], [0], [0], [1], [0, 0, 1, 1], [], []>} : vector<16x576xbf16>, vector<576x1024xbf16>, vector<16x1024xf32> -> vector<16x1024xf32>
    %c0_24 = arith.constant 0 : index
    %c0_25 = arith.constant 0 : index
    %23 = vector.load %arg3[%c0_24, %c0_25] : memref<1x1024xf32, #tpu.memory_space<vmem>>, vector<1x1024xf32>
    %24 = vector.broadcast %23 : vector<1x1024xf32> to vector<16x1024xf32>
    %25 = arith.addf %22, %24 : vector<16x1024xf32>
    %cst_26 = arith.constant 0.000000e+00 : f32
    %26 = vector.broadcast %cst_26 : f32 to vector<16x1024xf32>
    %27 = arith.maximumf %25, %26 : vector<16x1024xf32>
    %28 = arith.truncf %27 : vector<16x1024xf32> to vector<16x1024xbf16>
    %c0_27 = arith.constant 0 : index
    %c0_28 = arith.constant 0 : index
    %29 = vector.load %arg4[%c0_27, %c0_28] : memref<1024x512xbf16, #tpu.memory_space<vmem>>, vector<1024x512xbf16>
    %cst_29 = arith.constant dense<0.000000e+00> : vector<16x512xf32>
    %30 = tpu.matmul %28, %29, %cst_29 {dimension_numbers = #tpu.dot_dimension_numbers<[1], [0], [0], [1], [0, 0, 1, 1], [], []>} : vector<16x1024xbf16>, vector<1024x512xbf16>, vector<16x512xf32> -> vector<16x512xf32>
    %c0_30 = arith.constant 0 : index
    %c0_31 = arith.constant 0 : index
    %31 = vector.load %arg5[%c0_30, %c0_31] : memref<1x512xf32, #tpu.memory_space<vmem>>, vector<1x512xf32>
    %32 = vector.broadcast %31 : vector<1x512xf32> to vector<16x512xf32>
    %33 = arith.addf %30, %32 : vector<16x512xf32>
    %cst_32 = arith.constant 0.000000e+00 : f32
    %34 = vector.broadcast %cst_32 : f32 to vector<16x512xf32>
    %35 = arith.maximumf %33, %34 : vector<16x512xf32>
    %36 = arith.truncf %35 : vector<16x512xf32> to vector<16x512xbf16>
    %c0_33 = arith.constant 0 : index
    %c2_34 = arith.constant 2 : index
    %c0_35 = arith.constant 0 : index
    %37 = vector.load %arg9[%c0_33, %c2_34, %c0_35] : memref<2x20x512xbf16, #tpu.memory_space<vmem>>, vector<1x16x512xbf16>
    %38 = vector.shape_cast %37 : vector<1x16x512xbf16> to vector<16x512xbf16>
    %39 = vector.shape_cast %36 : vector<16x512xbf16> to vector<1x16x512xbf16>
    tpu.vector_store %arg9[%c0_33, %c2_34, %c0_35], %39 {strides = array<i32>} : memref<2x20x512xbf16, #tpu.memory_space<vmem>>, vector<1x16x512xbf16>,
    %c1_36 = arith.constant 1 : index
    %c0_37 = arith.constant 0 : index
    %c0_38 = arith.constant 0 : index
    %40 = vector.load %arg1[%c1_36, %c0_37, %c0_38] : memref<2x24x64xbf16, #tpu.memory_space<vmem>>, vector<1x16x64xbf16>
    %41 = vector.shape_cast %40 : vector<1x16x64xbf16> to vector<16x64xbf16>
    %c1_39 = arith.constant 1 : index
    %c1_40 = arith.constant 1 : index
    %c0_41 = arith.constant 0 : index
    %42 = vector.load %arg1[%c1_39, %c1_40, %c0_41] : memref<2x24x64xbf16, #tpu.memory_space<vmem>>, vector<1x16x64xbf16>
    %43 = vector.shape_cast %42 : vector<1x16x64xbf16> to vector<16x64xbf16>
    %c1_42 = arith.constant 1 : index
    %c2_43 = arith.constant 2 : index
    %c0_44 = arith.constant 0 : index
    %44 = vector.load %arg1[%c1_42, %c2_43, %c0_44] : memref<2x24x64xbf16, #tpu.memory_space<vmem>>, vector<1x16x64xbf16>
    %45 = vector.shape_cast %44 : vector<1x16x64xbf16> to vector<16x64xbf16>
    %c1_45 = arith.constant 1 : index
    %c3_46 = arith.constant 3 : index
    %c0_47 = arith.constant 0 : index
    %46 = vector.load %arg1[%c1_45, %c3_46, %c0_47] : memref<2x24x64xbf16, #tpu.memory_space<vmem>>, vector<1x16x64xbf16>
    %47 = vector.shape_cast %46 : vector<1x16x64xbf16> to vector<16x64xbf16>
    %c1_48 = arith.constant 1 : index
    %c4_49 = arith.constant 4 : index
    %c0_50 = arith.constant 0 : index
    %48 = vector.load %arg1[%c1_48, %c4_49, %c0_50] : memref<2x24x64xbf16, #tpu.memory_space<vmem>>, vector<1x16x64xbf16>
    %49 = vector.shape_cast %48 : vector<1x16x64xbf16> to vector<16x64xbf16>
    %c1_51 = arith.constant 1 : index
    %c5_52 = arith.constant 5 : index
    %c0_53 = arith.constant 0 : index
    %50 = vector.load %arg1[%c1_51, %c5_52, %c0_53] : memref<2x24x64xbf16, #tpu.memory_space<vmem>>, vector<1x16x64xbf16>
    %51 = vector.shape_cast %50 : vector<1x16x64xbf16> to vector<16x64xbf16>
    %c1_54 = arith.constant 1 : index
    %c6_55 = arith.constant 6 : index
    %c0_56 = arith.constant 0 : index
    %52 = vector.load %arg1[%c1_54, %c6_55, %c0_56] : memref<2x24x64xbf16, #tpu.memory_space<vmem>>, vector<1x16x64xbf16>
    %53 = vector.shape_cast %52 : vector<1x16x64xbf16> to vector<16x64xbf16>
    %c1_57 = arith.constant 1 : index
    %c7_58 = arith.constant 7 : index
    %c0_59 = arith.constant 0 : index
    %54 = vector.load %arg1[%c1_57, %c7_58, %c0_59] : memref<2x24x64xbf16, #tpu.memory_space<vmem>>, vector<1x16x64xbf16>
    %55 = vector.shape_cast %54 : vector<1x16x64xbf16> to vector<16x64xbf16>
    %c1_60 = arith.constant 1 : index
    %c8_61 = arith.constant 8 : index
    %c0_62 = arith.constant 0 : index
    %56 = vector.load %arg1[%c1_60, %c8_61, %c0_62] : memref<2x24x64xbf16, #tpu.memory_space<vmem>>, vector<1x16x64xbf16>
    %57 = vector.shape_cast %56 : vector<1x16x64xbf16> to vector<16x64xbf16>
    %58 = tpu.concatenate %41, %43, %45, %47, %49, %51, %53, %55, %57 in 1 : vector<16x64xbf16>, vector<16x64xbf16>, vector<16x64xbf16>, vector<16x64xbf16>, vector<16x64xbf16>, vector<16x64xbf16>, vector<16x64xbf16>, vector<16x64xbf16>, vector<16x64xbf16> -> vector<16x576xbf16>
    %c0_63 = arith.constant 0 : index
    %c0_64 = arith.constant 0 : index
    %59 = vector.load %arg2[%c0_63, %c0_64] : memref<576x1024xbf16, #tpu.memory_space<vmem>>, vector<576x1024xbf16>
    %cst_65 = arith.constant dense<0.000000e+00> : vector<16x1024xf32>
    %60 = tpu.matmul %58, %59, %cst_65 {dimension_numbers = #tpu.dot_dimension_numbers<[1], [0], [0], [1], [0, 0, 1, 1], [], []>} : vector<16x576xbf16>, vector<576x1024xbf16>, vector<16x1024xf32> -> vector<16x1024xf32>
    %c0_66 = arith.constant 0 : index
    %c0_67 = arith.constant 0 : index
    %61 = vector.load %arg3[%c0_66, %c0_67] : memref<1x1024xf32, #tpu.memory_space<vmem>>, vector<1x1024xf32>
    %62 = vector.broadcast %61 : vector<1x1024xf32> to vector<16x1024xf32>
    %63 = arith.addf %60, %62 : vector<16x1024xf32>
    %cst_68 = arith.constant 0.000000e+00 : f32
    %64 = vector.broadcast %cst_68 : f32 to vector<16x1024xf32>
    %65 = arith.maximumf %63, %64 : vector<16x1024xf32>
    %66 = arith.truncf %65 : vector<16x1024xf32> to vector<16x1024xbf16>
    %c0_69 = arith.constant 0 : index
    %c0_70 = arith.constant 0 : index
    %67 = vector.load %arg4[%c0_69, %c0_70] : memref<1024x512xbf16, #tpu.memory_space<vmem>>, vector<1024x512xbf16>
    %cst_71 = arith.constant dense<0.000000e+00> : vector<16x512xf32>
    %68 = tpu.matmul %66, %67, %cst_71 {dimension_numbers = #tpu.dot_dimension_numbers<[1], [0], [0], [1], [0, 0, 1, 1], [], []>} : vector<16x1024xbf16>, vector<1024x512xbf16>, vector<16x512xf32> -> vector<16x512xf32>
    %c0_72 = arith.constant 0 : index
    %c0_73 = arith.constant 0 : index
    %69 = vector.load %arg5[%c0_72, %c0_73] : memref<1x512xf32, #tpu.memory_space<vmem>>, vector<1x512xf32>
    %70 = vector.broadcast %69 : vector<1x512xf32> to vector<16x512xf32>
    %71 = arith.addf %68, %70 : vector<16x512xf32>
    %cst_74 = arith.constant 0.000000e+00 : f32
    %72 = vector.broadcast %cst_74 : f32 to vector<16x512xf32>
    %73 = arith.maximumf %71, %72 : vector<16x512xf32>
    %74 = arith.truncf %73 : vector<16x512xf32> to vector<16x512xbf16>
    %c1_75 = arith.constant 1 : index
    %c2_76 = arith.constant 2 : index
    %c0_77 = arith.constant 0 : index
    %75 = vector.load %arg9[%c1_75, %c2_76, %c0_77] : memref<2x20x512xbf16, #tpu.memory_space<vmem>>, vector<1x16x512xbf16>
    %76 = vector.shape_cast %75 : vector<1x16x512xbf16> to vector<16x512xbf16>
    %77 = vector.shape_cast %74 : vector<16x512xbf16> to vector<1x16x512xbf16>
    tpu.vector_store %arg9[%c1_75, %c2_76, %c0_77], %77 {strides = array<i32>} : memref<2x20x512xbf16, #tpu.memory_space<vmem>>, vector<1x16x512xbf16>,
    %c0_78 = arith.constant 0 : index
    %c0_79 = arith.constant 0 : index
    %c0_80 = arith.constant 0 : index
    %78 = vector.load %arg9[%c0_78, %c0_79, %c0_80] : memref<2x20x512xbf16, #tpu.memory_space<vmem>>, vector<2x16x512xbf16>
    %c0_81 = arith.constant 0 : index
    %c1_82 = arith.constant 1 : index
    %c0_83 = arith.constant 0 : index
    %79 = vector.load %arg9[%c0_81, %c1_82, %c0_83] : memref<2x20x512xbf16, #tpu.memory_space<vmem>>, vector<2x16x512xbf16>
    %c0_84 = arith.constant 0 : index
    %c2_85 = arith.constant 2 : index
    %c0_86 = arith.constant 0 : index
    %80 = vector.load %arg9[%c0_84, %c2_85, %c0_86] : memref<2x20x512xbf16, #tpu.memory_space<vmem>>, vector<2x16x512xbf16>
    %c0_87 = arith.constant 0 : index
    %c3_88 = arith.constant 3 : index
    %c0_89 = arith.constant 0 : index
    %81 = vector.load %arg9[%c0_87, %c3_88, %c0_89] : memref<2x20x512xbf16, #tpu.memory_space<vmem>>, vector<2x16x512xbf16>
    %c0_90 = arith.constant 0 : index
    %c4_91 = arith.constant 4 : index
    %c0_92 = arith.constant 0 : index
    %82 = vector.load %arg9[%c0_90, %c4_91, %c0_92] : memref<2x20x512xbf16, #tpu.memory_space<vmem>>, vector<2x16x512xbf16>
    %83 = tpu.concatenate %78, %79, %80, %81, %82 in 2 : vector<2x16x512xbf16>, vector<2x16x512xbf16>, vector<2x16x512xbf16>, vector<2x16x512xbf16>, vector<2x16x512xbf16> -> vector<2x16x2560xbf16>
    %84 = vector.shape_cast %83 : vector<2x16x2560xbf16> to vector<32x2560xbf16>
    %c0_93 = arith.constant 0 : index
    %c0_94 = arith.constant 0 : index
    %85 = vector.load %arg6[%c0_93, %c0_94] : memref<2560x128xbf16, #tpu.memory_space<vmem>>, vector<2560x128xbf16>
    %cst_95 = arith.constant dense<0.000000e+00> : vector<32x128xf32>
    %86 = tpu.matmul %84, %85, %cst_95 {dimension_numbers = #tpu.dot_dimension_numbers<[1], [0], [0], [1], [0, 0, 1, 1], [], []>} : vector<32x2560xbf16>, vector<2560x128xbf16>, vector<32x128xf32> -> vector<32x128xf32>
    %c0_96 = arith.constant 0 : index
    %c0_97 = arith.constant 0 : index
    %87 = vector.load %arg7[%c0_96, %c0_97] : memref<1x128xf32, #tpu.memory_space<vmem>>, vector<1x128xf32>
    %88 = vector.broadcast %87 : vector<1x128xf32> to vector<32x128xf32>
    %89 = arith.addf %86, %88 : vector<32x128xf32>
    %90 = vector.shape_cast %89 : vector<32x128xf32> to vector<2x16x128xf32>
    %c0_98 = arith.constant 0 : index
    %c0_99 = arith.constant 0 : index
    %c0_100 = arith.constant 0 : index
    %91 = vector.load %arg8[%c0_98, %c0_99, %c0_100] : memref<2x16x128xf32, #tpu.memory_space<vmem>>, vector<2x16x128xf32>
    tpu.vector_store %arg8[%c0_98, %c0_99, %c0_100], %90 {strides = array<i32>} : memref<2x16x128xf32, #tpu.memory_space<vmem>>, vector<2x16x128xf32>,
    return
  }
  func.func @transform_0(%arg0: i32) -> (i32, i32, i32) {
    %c0_i32 = arith.constant 0 : i32
    %c0_i32_0 = arith.constant 0 : i32
    %c0_i32_1 = arith.constant 0 : i32
    return %arg0, %c0_i32, %c0_i32_0 : i32, i32, i32
  }
  func.func @transform_1(%arg0: i32) -> (i32, i32) {
    %c0_i32 = arith.constant 0 : i32
    %c0_i32_0 = arith.constant 0 : i32
    %c0_i32_1 = arith.constant 0 : i32
    return %c0_i32, %c0_i32_0 : i32, i32
  }
  func.func @transform_2(%arg0: i32) -> (i32, i32) {
    %c0_i32 = arith.constant 0 : i32
    %c0_i32_0 = arith.constant 0 : i32
    %c0_i32_1 = arith.constant 0 : i32
    return %c0_i32, %c0_i32_0 : i32, i32
  }
  func.func @transform_3(%arg0: i32) -> (i32, i32) {
    %c0_i32 = arith.constant 0 : i32
    %c0_i32_0 = arith.constant 0 : i32
    %c0_i32_1 = arith.constant 0 : i32
    return %c0_i32, %c0_i32_0 : i32, i32
  }
  func.func @transform_4(%arg0: i32) -> (i32, i32) {
    %c0_i32 = arith.constant 0 : i32
    %c0_i32_0 = arith.constant 0 : i32
    %c0_i32_1 = arith.constant 0 : i32
    return %c0_i32, %c0_i32_0 : i32, i32
  }
  func.func @transform_5(%arg0: i32) -> (i32, i32) {
    %c0_i32 = arith.constant 0 : i32
    %c0_i32_0 = arith.constant 0 : i32
    %c0_i32_1 = arith.constant 0 : i32
    return %c0_i32, %c0_i32_0 : i32, i32
  }
  func.func @transform_6(%arg0: i32) -> (i32, i32) {
    %c0_i32 = arith.constant 0 : i32
    %c0_i32_0 = arith.constant 0 : i32
    %c0_i32_1 = arith.constant 0 : i32
    return %c0_i32, %c0_i32_0 : i32, i32
  }
  func.func @transform_7(%arg0: i32) -> (i32, i32, i32) {
    %c0_i32 = arith.constant 0 : i32
    %c0_i32_0 = arith.constant 0 : i32
    %c0_i32_1 = arith.constant 0 : i32
    return %arg0, %c0_i32, %c0_i32_0 : i32, i32, i32
  }
}

</mosaic_0001>

<llo_original>
// kernel: tpu_custom_call.1
$region0: #{tpu_custom_call.1}
  #allocation0 [shape = 'u32[]', space=smem, size = 0x4, offset = 0x4, fixed_abs, tag = 'smem constant byte address 0x4 - core index']
  #allocation1 [shape = 'u32[144,128]{1,0:T(1,128)}', space=vmem, size = 0x12000, scoped, tag = 'internal scratch']
  #allocation2 [shape = 'bf16[2,20,512]{2,1,0:T(8,128)(2,1)}', space=vmem, size = 0xc000, scoped, tag = 'scratch operand']
  %s0 = inlined_call_operand.hbm [shape: bf16[2,24,64], index: 0, kind: input, shape index: {}]
  %s1 = inlined_call_operand.hbm [shape: bf16[576,1024], index: 1, kind: input, shape index: {}]
  %s2 = inlined_call_operand.hbm [shape: f32[1,1024], index: 2, kind: input, shape index: {}]
  %s3 = inlined_call_operand.hbm [shape: bf16[1024,512], index: 3, kind: input, shape index: {}]
  %s4 = inlined_call_operand.hbm [shape: f32[1,512], index: 4, kind: input, shape index: {}]
  %s5 = inlined_call_operand.hbm [shape: bf16[2560,128], index: 5, kind: input, shape index: {}]
  %s6 = inlined_call_operand.hbm [shape: f32[1,128], index: 6, kind: input, shape index: {}]
  %s7 = inlined_call_operand.hbm [shape: f32[2,16,128], index: 7, kind: output, shape index: {}]
  %s8 = sld [smem:[#allocation0]]
  $region66: #{tpu_custom_call.1} parent=0
    _
  %s10 = ssub.s32 1, %s8
  %s11 = scalar_select 0, %s10, %s8
  $region1: #{tpu_custom_call.1} parent=0
    #allocation3 [shape = 'u8[12288]{0}', space=vmem, size = 0x3000, scoped, tag = 'input window, operand 0, single buffered']
    #allocation4 [shape = 's32[1]{0}', space=sflag, size = 0x4, scoped, tag = 'scoped memory for tpu_custom_call.1']
    #allocation5 [shape = 's32[1]{0}', space=sflag, size = 0x4, scoped, tag = 'scoped memory for tpu_custom_call.1']
    #allocation6 [shape = 'u8[1179648]{0}', space=vmem, size = 0x120000, scoped, tag = 'input window, operand 1, single buffered']
    #allocation7 [shape = 's32[1]{0}', space=sflag, size = 0x4, scoped, tag = 'scoped memory for tpu_custom_call.1']
    #allocation8 [shape = 'u8[4096]{0}', space=vmem, size = 0x1000, scoped, tag = 'input window, operand 2, single buffered']
    #allocation9 [shape = 'u8[1048576]{0}', space=vmem, size = 0x100000, scoped, tag = 'input window, operand 3, single buffered']
    #allocation10 [shape = 's32[1]{0}', space=sflag, size = 0x4, scoped, tag = 'scoped memory for tpu_custom_call.1']
    #allocation11 [shape = 'u8[2048]{0}', space=vmem, size = 0x800, scoped, tag = 'input window, operand 4, single buffered']
    #allocation12 [shape = 'u8[655360]{0}', space=vmem, size = 0xa0000, scoped, tag = 'input window, operand 5, single buffered']
    #allocation13 [shape = 's32[1]{0}', space=sflag, size = 0x4, scoped, tag = 'scoped memory for tpu_custom_call.1']
    #allocation14 [shape = 'u8[512]{0}', space=vmem, size = 0x400, scoped, tag = 'input window, operand 6, single buffered']
    #allocation15 [shape = 'u8[16384]{0}', space=vmem, size = 0x4000, scoped, tag = 'output window, operand 0, single buffered']
    %12 = vsyncpa [#allocation4], 0
    %13 = vsyncpa [#allocation7], 0
    %14 = vsyncpa [#allocation10], 0
    %15 = vsyncpa [#allocation13], 0
    %16 = vsyncpa [#allocation5], 0
    // Predicated region
    $region2: #{tpu_custom_call.1} parent=1 // pred_check
      _
    $region3: #{tpu_custom_call.1} parent=1 // pred_check_branch
      %18 = sbr.rel (0) target = $region5
    $region4: #{tpu_custom_call.1} parent=1 // pred_region
      %s20 = ssub.s32 384, 384
      %21 = vsyncadd [#allocation4], %s20
      %s22 = sshll.u32 [#allocation3], 4
      %s23 = int_to_ptr.vmem [resolvable:$true] %s22
      %28 = dma.hbm_to_vmem [thread:$0]  %s0, 384, %s23, [#allocation4], 64, 64, 4
    $region5: #{tpu_custom_call.1} parent=1 // pred_fallthru
      _
    // Predicated region
    $region6: #{tpu_custom_call.1} parent=1 // pred_check
      _
    $region7: #{tpu_custom_call.1} parent=1 // pred_check_branch
      %30 = sbr.rel (0) target = $region9
    $region8: #{tpu_custom_call.1} parent=1 // pred_region
      %s32 = ssub.s32 36864, 36864
      %33 = vsyncadd [#allocation7], %s32
      %s34 = sshll.u32 [#allocation6], 4
      %s35 = int_to_ptr.vmem [resolvable:$true] %s34
      %40 = dma.hbm_to_vmem [thread:$0]  %s1, 36864, %s35, [#allocation7], 512, 512, 32
    $region9: #{tpu_custom_call.1} parent=1 // pred_fallthru
      _
    // Predicated region
    $region10: #{tpu_custom_call.1} parent=1 // pred_check
      _
    $region11: #{tpu_custom_call.1} parent=1 // pred_check_branch
      %42 = sbr.rel (0) target = $region13
    $region12: #{tpu_custom_call.1} parent=1 // pred_region
      %s44 = ssub.s32 128, 128
      %45 = vsyncadd [#allocation7], %s44
      %s47 = sshll.u32 [#allocation8], 4
      %s48 = int_to_ptr.vmem [resolvable:$true] %s47
      %50 = dma.hbm_to_vmem [thread:$0]  %s2, 128, %s48, [#allocation7]
    $region13: #{tpu_custom_call.1} parent=1 // pred_fallthru
      _
    // Predicated region
    $region14: #{tpu_custom_call.1} parent=1 // pred_check
      _
    $region15: #{tpu_custom_call.1} parent=1 // pred_check_branch
      %52 = sbr.rel (0) target = $region17
    $region16: #{tpu_custom_call.1} parent=1 // pred_region
      %s54 = ssub.s32 32768, 32768
      %55 = vsyncadd [#allocation10], %s54
      %s56 = sshll.u32 [#allocation9], 4
      %s57 = int_to_ptr.vmem [resolvable:$true] %s56
      %62 = dma.hbm_to_vmem [thread:$0]  %s3, 32768, %s57, [#allocation10], 256, 256, 16
    $region17: #{tpu_custom_call.1} parent=1 // pred_fallthru
      _
    // Predicated region
    $region18: #{tpu_custom_call.1} parent=1 // pred_check
      _
    $region19: #{tpu_custom_call.1} parent=1 // pred_check_branch
      %64 = sbr.rel (0) target = $region21
    $region20: #{tpu_custom_call.1} parent=1 // pred_region
      %s66 = ssub.s32 64, 64
      %67 = vsyncadd [#allocation10], %s66
      %s69 = sshll.u32 [#allocation11], 4
      %s70 = int_to_ptr.vmem [resolvable:$true] %s69
      %72 = dma.hbm_to_vmem [thread:$0]  %s4, 64, %s70, [#allocation10]
    $region21: #{tpu_custom_call.1} parent=1 // pred_fallthru
      _
    // Predicated region
    $region22: #{tpu_custom_call.1} parent=1 // pred_check
      _
    $region23: #{tpu_custom_call.1} parent=1 // pred_check_branch
      %74 = sbr.rel (0) target = $region25
    $region24: #{tpu_custom_call.1} parent=1 // pred_region
      %s76 = ssub.s32 20480, 20480
      %77 = vsyncadd [#allocation13], %s76
      %s78 = sshll.u32 [#allocation12], 4
      %s79 = int_to_ptr.vmem [resolvable:$true] %s78
      %84 = dma.hbm_to_vmem [thread:$0]  %s5, 20480, %s79, [#allocation13], 64, 64, 4
    $region25: #{tpu_custom_call.1} parent=1 // pred_fallthru
      _
    // Predicated region
    $region26: #{tpu_custom_call.1} parent=1 // pred_check
      _
    $region27: #{tpu_custom_call.1} parent=1 // pred_check_branch
      %86 = sbr.rel (0) target = $region29
    $region28: #{tpu_custom_call.1} parent=1 // pred_region
      %s88 = ssub.s32 16, 16
      %89 = vsyncadd [#allocation13], %s88
      %s91 = sshll.u32 [#allocation14], 4
      %s92 = int_to_ptr.vmem [resolvable:$true] %s91
      %94 = dma.hbm_to_vmem [thread:$0]  %s6, 16, %s92, [#allocation13]
    $region29: #{tpu_custom_call.1} parent=1 // pred_fallthru
      _
    // Predicated region
    $region30: #{tpu_custom_call.1} parent=1 // pred_check
      _
    $region31: #{tpu_custom_call.1} parent=1 // pred_check_branch
      %96 = sbr.rel (0) target = $region33
    $region32: #{tpu_custom_call.1} parent=1 // pred_region
      %97 = dma.done [#allocation4], 384
    $region33: #{tpu_custom_call.1} parent=1 // pred_fallthru
      _
    // Predicated region
    $region34: #{tpu_custom_call.1} parent=1 // pred_check
      _
    $region35: #{tpu_custom_call.1} parent=1 // pred_check_branch
      %99 = sbr.rel (0) target = $region37
    $region36: #{tpu_custom_call.1} parent=1 // pred_region
      %100 = dma.done [#allocation7], 36864
    $region37: #{tpu_custom_call.1} parent=1 // pred_fallthru
      _
    // Predicated region
    $region38: #{tpu_custom_call.1} parent=1 // pred_check
      _
    $region39: #{tpu_custom_call.1} parent=1 // pred_check_branch
      %102 = sbr.rel (0) target = $region41
    $region40: #{tpu_custom_call.1} parent=1 // pred_region
      %103 = dma.done [#allocation7], 128
    $region41: #{tpu_custom_call.1} parent=1 // pred_fallthru
      _
    // Predicated region
    $region42: #{tpu_custom_call.1} parent=1 // pred_check
      _
    $region43: #{tpu_custom_call.1} parent=1 // pred_check_branch
      %105 = sbr.rel (0) target = $region45
    $region44: #{tpu_custom_call.1} parent=1 // pred_region
      %106 = dma.done [#allocation10], 32768
    $region45: #{tpu_custom_call.1} parent=1 // pred_fallthru
      _
    // Predicated region
    $region46: #{tpu_custom_call.1} parent=1 // pred_check
      _
    $region47: #{tpu_custom_call.1} parent=1 // pred_check_branch
      %108 = sbr.rel (0) target = $region49
    $region48: #{tpu_custom_call.1} parent=1 // pred_region
      %109 = dma.done [#allocation10], 64
    $region49: #{tpu_custom_call.1} parent=1 // pred_fallthru
      _
    // Predicated region
    $region50: #{tpu_custom_call.1} parent=1 // pred_check
      _
    $region51: #{tpu_custom_call.1} parent=1 // pred_check_branch
      %111 = sbr.rel (0) target = $region53
    $region52: #{tpu_custom_call.1} parent=1 // pred_region
      %112 = dma.done [#allocation13], 20480
    $region53: #{tpu_custom_call.1} parent=1 // pred_fallthru
      _
    // Predicated region
    $region54: #{tpu_custom_call.1} parent=1 // pred_check
      _
    $region55: #{tpu_custom_call.1} parent=1 // pred_check_branch
      %114 = sbr.rel (0) target = $region57
    $region56: #{tpu_custom_call.1} parent=1 // pred_region
      %115 = dma.done [#allocation13], 16
    $region57: #{tpu_custom_call.1} parent=1 // pred_fallthru
      _
    %117 = vst [vmem:[#allocation2] sm:$0xff] 0
    %118 = vst [vmem:[#allocation2 + $0x8] sm:$0xff] 0
    %119 = vst [vmem:[#allocation2 + $0x10] sm:$0xff] 0
    %120 = vst [vmem:[#allocation2 + $0x18] sm:$0xff] 0
    %121 = vst [vmem:[#allocation2 + $0x20] sm:$0x33] 0
    %122 = vst [vmem:[#allocation2 + $0x28] sm:$0x33] 0
    %123 = vst [vmem:[#allocation2 + $0x30] sm:$0xff] 0
    %124 = vst [vmem:[#allocation2 + $0x38] sm:$0xff] 0
    %125 = vst [vmem:[#allocation2 + $0x40] sm:$0xff] 0
    %126 = vst [vmem:[#allocation2 + $0x48] sm:$0xff] 0
    %127 = vst [vmem:[#allocation2 + $0x50] sm:$0x33] 0
    %128 = vst [vmem:[#allocation2 + $0x58] sm:$0x33] 0
    %v129 = vld [vmem:[#allocation3] sm:$0xf]
    %v130 = vld [vmem:[#allocation3 + $0x4] sm:$0xf]
    %v131 = vld [vmem:[#allocation3 + $0x8] sm:$0x1]
    %v132 = vld [vmem:[#allocation3] sm:$0xe]
    %v133 = vld [vmem:[#allocation3 + $0x8] sm:$0x3]
    %v134 = vld [vmem:[#allocation3] sm:$0xc]
    %v135 = vld [vmem:[#allocation3 + $0x8] sm:$0x7]
    %v136 = vld [vmem:[#allocation3] sm:$0x8]
    %v137 = vld [vmem:[#allocation3 + $0x8] sm:$0xf]
    %v140 = vunpack.c.l.b16 %v129
    %v141 = vunpack.c.l.b16 %v130
    %v142 = vpack.c.b16 %v141, %v140
    %v144 = vunpack.c.l.b16 %v131
    %v145 = vpack.c.b16 %v144, %v144
    %vm146 = vsmask.f32 7424
    %v148 = vshrl.u32 %v142, 16
    %v150 = vshll.u32 %v142, 16
    %v152 = vrot.slane %v150, 1
    %v153 = vor.u32 %v148, %v152
    %v155 = vshll.u32 %v145, 16
    %v157 = vrot.slane %v155, 1
    %v158 = vsel %vm146, %v153, %v157
    %159 = vrot.lane.b32.xlu0 %v158, 64
    %v160 = vpop.permute.xlu0 %159
    %v162 = vunpack.c.l.b16 %v132
    %v163 = vpack.c.b16 %v141, %v162
    %vm164 = vcmask 1046528
    %v165 = vrot.slane %v163, 1
    %v166 = vrot.slane %v145, 1
    %v167 = vsel %vm164, %v165, %v166
    %v169 = vunpack.c.l.b16 %v133
    %v170 = vpack.c.b16 %v169, %v169
    %vm171 = vsmask.f32 6400
    %v173 = vshrl.u32 %v163, 16
    %v175 = vrot.slane %v173, 1
    %v176 = vshll.u32 %v163, 16
    %v178 = vrot.slane %v176, 2
    %v179 = vor.u32 %v175, %v178
    %v181 = vshrl.u32 %v170, 16
    %v183 = vrot.slane %v181, 1
    %v184 = vshll.u32 %v170, 16
    %v186 = vrot.slane %v184, 2
    %v187 = vor.u32 %v183, %v186
    %v188 = vsel %vm171, %v179, %v187
    %189 = vrot.lane.b32.xlu0 %v188, 64
    %v190 = vpop.permute.xlu0 %189
    %v192 = vunpack.c.l.b16 %v134
    %v193 = vpack.c.b16 %v141, %v192
    %vm194 = vcmask 1045504
    %v195 = vrot.slane %v193, 2
    %v196 = vrot.slane %v170, 2
    %v197 = vsel %vm194, %v195, %v196
    %v199 = vunpack.c.l.b16 %v135
    %v200 = vpack.c.b16 %v199, %v199
    %vm201 = vsmask.f32 5376
    %v203 = vshrl.u32 %v193, 16
    %v205 = vrot.slane %v203, 2
    %v206 = vshll.u32 %v193, 16
    %v208 = vrot.slane %v206, 3
    %v209 = vor.u32 %v205, %v208
    %v211 = vshrl.u32 %v200, 16
    %v213 = vrot.slane %v211, 2
    %v214 = vshll.u32 %v200, 16
    %v216 = vrot.slane %v214, 3
    %v217 = vor.u32 %v213, %v216
    %v218 = vsel %vm201, %v209, %v217
    %219 = vrot.lane.b32.xlu0 %v218, 64
    %v220 = vpop.permute.xlu0 %219
    %v222 = vunpack.c.l.b16 %v136
    %v223 = vpack.c.b16 %v141, %v222
    %vm224 = vcmask 1044480
    %v225 = vrot.slane %v223, 3
    %v226 = vrot.slane %v200, 3
    %v227 = vsel %vm224, %v225, %v226
    %v229 = vunpack.c.l.b16 %v137
    %v230 = vpack.c.b16 %v229, %v229
    %vm231 = vsmask.f32 4352
    %v233 = vshrl.u32 %v223, 16
    %v235 = vrot.slane %v233, 3
    %v236 = vshll.u32 %v223, 16
    %v238 = vrot.slane %v236, 4
    %v239 = vor.u32 %v235, %v238
    %v241 = vshrl.u32 %v230, 16
    %v243 = vrot.slane %v241, 3
    %v244 = vshll.u32 %v230, 16
    %v246 = vrot.slane %v244, 4
    %v247 = vor.u32 %v243, %v246
    %v248 = vsel %vm231, %v239, %v247
    %249 = vrot.lane.b32.xlu0 %v248, 64
    %v250 = vpop.permute.xlu0 %249
    %v251 = vpack.c.b16 %v229, %v141
    %vm252 = vcmask 523264
    %v254 = vsel %vm252, %v142, %v160
    %v258 = vsel %vm252, %v167, %v190
    %v262 = vsel %vm252, %v197, %v220
    %v266 = vsel %vm252, %v227, %v250
    %v268 = vld [vmem:[#allocation6] sm:$0xff]
    %v269 = vld [vmem:[#allocation6 + $0x8] sm:$0xff]
    %v270 = vld [vmem:[#allocation6 + $0x10] sm:$0xff]
    %v271 = vld [vmem:[#allocation6 + $0x18] sm:$0xff]
    %v272 = vld [vmem:[#allocation6 + $0x20] sm:$0xff]
    %v273 = vld [vmem:[#allocation6 + $0x28] sm:$0xff]
    %v274 = vld [vmem:[#allocation6 + $0x30] sm:$0xff]
    %v275 = vld [vmem:[#allocation6 + $0x38] sm:$0xff]
    %v276 = vld [vmem:[#allocation6 + $0x40] sm:$0xff]
    %v277 = vld [vmem:[#allocation6 + $0x48] sm:$0xff]
    %v278 = vld [vmem:[#allocation6 + $0x50] sm:$0xff]
    %v279 = vld [vmem:[#allocation6 + $0x58] sm:$0xff]
    %v280 = vld [vmem:[#allocation6 + $0x60] sm:$0xff]
    %v281 = vld [vmem:[#allocation6 + $0x68] sm:$0xff]
    %v282 = vld [vmem:[#allocation6 + $0x70] sm:$0xff]
    %v283 = vld [vmem:[#allocation6 + $0x78] sm:$0xff]
    %v284 = vld [vmem:[#allocation6 + $0x80] sm:$0xff]
    %v285 = vld [vmem:[#allocation6 + $0x88] sm:$0xff]
    %v286 = vld [vmem:[#allocation6 + $0x90] sm:$0xff]
    %v287 = vld [vmem:[#allocation6 + $0x98] sm:$0xff]
    %v288 = vld [vmem:[#allocation6 + $0xa0] sm:$0xff]
    %v289 = vld [vmem:[#allocation6 + $0xa8] sm:$0xff]
    %v290 = vld [vmem:[#allocation6 + $0xb0] sm:$0xff]
    %v291 = vld [vmem:[#allocation6 + $0xb8] sm:$0xff]
    %v292 = vld [vmem:[#allocation6 + $0xc0] sm:$0xff]
    %v293 = vld [vmem:[#allocation6 + $0xc8] sm:$0xff]
    %v294 = vld [vmem:[#allocation6 + $0xd0] sm:$0xff]
    %v295 = vld [vmem:[#allocation6 + $0xd8] sm:$0xff]
    %v296 = vld [vmem:[#allocation6 + $0xe0] sm:$0xff]
    %v297 = vld [vmem:[#allocation6 + $0xe8] sm:$0xff]
    %v298 = vld [vmem:[#allocation6 + $0xf0] sm:$0xff]
    %v299 = vld [vmem:[#allocation6 + $0xf8] sm:$0xff]
    %v300 = vld [vmem:[#allocation6 + $0x100] sm:$0xff]
    %v301 = vld [vmem:[#allocation6 + $0x108] sm:$0xff]
    %v302 = vld [vmem:[#allocation6 + $0x110] sm:$0xff]
    %v303 = vld [vmem:[#allocation6 + $0x118] sm:$0xff]
    %v304 = vld [vmem:[#allocation6 + $0x120] sm:$0xff]
    %v305 = vld [vmem:[#allocation6 + $0x128] sm:$0xff]
    %v306 = vld [vmem:[#allocation6 + $0x130] sm:$0xff]
    %v307 = vld [vmem:[#allocation6 + $0x138] sm:$0xff]
    %v308 = vld [vmem:[#allocation6 + $0x140] sm:$0xff]
    %v309 = vld [vmem:[#allocation6 + $0x148] sm:$0xff]
    %v310 = vld [vmem:[#allocation6 + $0x150] sm:$0xff]
    %v311 = vld [vmem:[#allocation6 + $0x158] sm:$0xff]
    %v312 = vld [vmem:[#allocation6 + $0x160] sm:$0xff]
    %v313 = vld [vmem:[#allocation6 + $0x168] sm:$0xff]
    %v314 = vld [vmem:[#allocation6 + $0x170] sm:$0xff]
    %v315 = vld [vmem:[#allocation6 + $0x178] sm:$0xff]
    %v316 = vld [vmem:[#allocation6 + $0x180] sm:$0xff]
    %v317 = vld [vmem:[#allocation6 + $0x188] sm:$0xff]
    %v318 = vld [vmem:[#allocation6 + $0x190] sm:$0xff]
    %v319 = vld [vmem:[#allocation6 + $0x198] sm:$0xff]
    %v320 = vld [vmem:[#allocation6 + $0x1a0] sm:$0xff]
    %v321 = vld [vmem:[#allocation6 + $0x1a8] sm:$0xff]
    %v322 = vld [vmem:[#allocation6 + $0x1b0] sm:$0xff]
    %v323 = vld [vmem:[#allocation6 + $0x1b8] sm:$0xff]
    %v324 = vld [vmem:[#allocation6 + $0x1c0] sm:$0xff]
    %v325 = vld [vmem:[#allocation6 + $0x1c8] sm:$0xff]
    %v326 = vld [vmem:[#allocation6 + $0x1d0] sm:$0xff]
    %v327 = vld [vmem:[#allocation6 + $0x1d8] sm:$0xff]
    %v328 = vld [vmem:[#allocation6 + $0x1e0] sm:$0xff]
    %v329 = vld [vmem:[#allocation6 + $0x1e8] sm:$0xff]
    %v330 = vld [vmem:[#allocation6 + $0x1f0] sm:$0xff]
    %v331 = vld [vmem:[#allocation6 + $0x1f8] sm:$0xff]
    %v332 = vld [vmem:[#allocation6 + $0x200] sm:$0xff]
    %v333 = vld [vmem:[#allocation6 + $0x208] sm:$0xff]
    %v334 = vld [vmem:[#allocation6 + $0x210] sm:$0xff]
    %v335 = vld [vmem:[#allocation6 + $0x218] sm:$0xff]
    %v336 = vld [vmem:[#allocation6 + $0x220] sm:$0xff]
    %v337 = vld [vmem:[#allocation6 + $0x228] sm:$0xff]
    %v338 = vld [vmem:[#allocation6 + $0x230] sm:$0xff]
    %v339 = vld [vmem:[#allocation6 + $0x238] sm:$0xff]
    %v340 = vld [vmem:[#allocation6 + $0x240] sm:$0xff]
    %v341 = vld [vmem:[#allocation6 + $0x248] sm:$0xff]
    %v342 = vld [vmem:[#allocation6 + $0x250] sm:$0xff]
    %v343 = vld [vmem:[#allocation6 + $0x258] sm:$0xff]
    %v344 = vld [vmem:[#allocation6 + $0x260] sm:$0xff]
    %v345 = vld [vmem:[#allocation6 + $0x268] sm:$0xff]
    %v346 = vld [vmem:[#allocation6 + $0x270] sm:$0xff]
    %v347 = vld [vmem:[#allocation6 + $0x278] sm:$0xff]
    %v348 = vld [vmem:[#allocation6 + $0x280] sm:$0xff]
    %v349 = vld [vmem:[#allocation6 + $0x288] sm:$0xff]
    %v350 = vld [vmem:[#allocation6 + $0x290] sm:$0xff]
    %v351 = vld [vmem:[#allocation6 + $0x298] sm:$0xff]
    %v352 = vld [vmem:[#allocation6 + $0x2a0] sm:$0xff]
    %v353 = vld [vmem:[#allocation6 + $0x2a8] sm:$0xff]
    %v354 = vld [vmem:[#allocation6 + $0x2b0] sm:$0xff]
    %v355 = vld [vmem:[#allocation6 + $0x2b8] sm:$0xff]
    %v356 = vld [vmem:[#allocation6 + $0x2c0] sm:$0xff]
    %v357 = vld [vmem:[#allocation6 + $0x2c8] sm:$0xff]
    %v358 = vld [vmem:[#allocation6 + $0x2d0] sm:$0xff]
    %v359 = vld [vmem:[#allocation6 + $0x2d8] sm:$0xff]
    %v360 = vld [vmem:[#allocation6 + $0x2e0] sm:$0xff]
    %v361 = vld [vmem:[#allocation6 + $0x2e8] sm:$0xff]
    %v362 = vld [vmem:[#allocation6 + $0x2f0] sm:$0xff]
    %v363 = vld [vmem:[#allocation6 + $0x2f8] sm:$0xff]
    %v364 = vld [vmem:[#allocation6 + $0x300] sm:$0xff]
    %v365 = vld [vmem:[#allocation6 + $0x308] sm:$0xff]
    %v366 = vld [vmem:[#allocation6 + $0x310] sm:$0xff]
    %v367 = vld [vmem:[#allocation6 + $0x318] sm:$0xff]
    %v368 = vld [vmem:[#allocation6 + $0x320] sm:$0xff]
    %v369 = vld [vmem:[#allocation6 + $0x328] sm:$0xff]
    %v370 = vld [vmem:[#allocation6 + $0x330] sm:$0xff]
    %v371 = vld [vmem:[#allocation6 + $0x338] sm:$0xff]
    %v372 = vld [vmem:[#allocation6 + $0x340] sm:$0xff]
    %v373 = vld [vmem:[#allocation6 + $0x348] sm:$0xff]
    %v374 = vld [vmem:[#allocation6 + $0x350] sm:$0xff]
    %v375 = vld [vmem:[#allocation6 + $0x358] sm:$0xff]
    %v376 = vld [vmem:[#allocation6 + $0x360] sm:$0xff]
    %v377 = vld [vmem:[#allocation6 + $0x368] sm:$0xff]
    %v378 = vld [vmem:[#allocation6 + $0x370] sm:$0xff]
    %v379 = vld [vmem:[#allocation6 + $0x378] sm:$0xff]
    %v380 = vld [vmem:[#allocation6 + $0x380] sm:$0xff]
    %v381 = vld [vmem:[#allocation6 + $0x388] sm:$0xff]
    %v382 = vld [vmem:[#allocation6 + $0x390] sm:$0xff]
    %v383 = vld [vmem:[#allocation6 + $0x398] sm:$0xff]
    %v384 = vld [vmem:[#allocation6 + $0x3a0] sm:$0xff]
    %v385 = vld [vmem:[#allocation6 + $0x3a8] sm:$0xff]
    %v386 = vld [vmem:[#allocation6 + $0x3b0] sm:$0xff]
    %v387 = vld [vmem:[#allocation6 + $0x3b8] sm:$0xff]
    %v388 = vld [vmem:[#allocation6 + $0x3c0] sm:$0xff]
    %v389 = vld [vmem:[#allocation6 + $0x3c8] sm:$0xff]
    %v390 = vld [vmem:[#allocation6 + $0x3d0] sm:$0xff]
    %v391 = vld [vmem:[#allocation6 + $0x3d8] sm:$0xff]
    %v392 = vld [vmem:[#allocation6 + $0x3e0] sm:$0xff]
    %v393 = vld [vmem:[#allocation6 + $0x3e8] sm:$0xff]
    %v394 = vld [vmem:[#allocation6 + $0x3f0] sm:$0xff]
    %v395 = vld [vmem:[#allocation6 + $0x3f8] sm:$0xff]
    %v396 = vld [vmem:[#allocation6 + $0x400] sm:$0xff]
    %v397 = vld [vmem:[#allocation6 + $0x408] sm:$0xff]
    %v398 = vld [vmem:[#allocation6 + $0x410] sm:$0xff]
    %v399 = vld [vmem:[#allocation6 + $0x418] sm:$0xff]
    %v400 = vld [vmem:[#allocation6 + $0x420] sm:$0xff]
    %v401 = vld [vmem:[#allocation6 + $0x428] sm:$0xff]
    %v402 = vld [vmem:[#allocation6 + $0x430] sm:$0xff]
    %v403 = vld [vmem:[#allocation6 + $0x438] sm:$0xff]
    %v404 = vld [vmem:[#allocation6 + $0x440] sm:$0xff]
    %v405 = vld [vmem:[#allocation6 + $0x448] sm:$0xff]
    %v406 = vld [vmem:[#allocation6 + $0x450] sm:$0xff]
    %v407 = vld [vmem:[#allocation6 + $0x458] sm:$0xff]
    %v408 = vld [vmem:[#allocation6 + $0x460] sm:$0xff]
    %v409 = vld [vmem:[#allocation6 + $0x468] sm:$0xff]
    %v410 = vld [vmem:[#allocation6 + $0x470] sm:$0xff]
    %v411 = vld [vmem:[#allocation6 + $0x478] sm:$0xff]
    %v412 = vld [vmem:[#allocation6 + $0x480] sm:$0xff]
    %v413 = vld [vmem:[#allocation6 + $0x488] sm:$0xff]
    %v414 = vld [vmem:[#allocation6 + $0x490] sm:$0xff]
    %v415 = vld [vmem:[#allocation6 + $0x498] sm:$0xff]
    %v416 = vld [vmem:[#allocation6 + $0x4a0] sm:$0xff]
    %v417 = vld [vmem:[#allocation6 + $0x4a8] sm:$0xff]
    %v418 = vld [vmem:[#allocation6 + $0x4b0] sm:$0xff]
    %v419 = vld [vmem:[#allocation6 + $0x4b8] sm:$0xff]
    %v420 = vld [vmem:[#allocation6 + $0x4c0] sm:$0xff]
    %v421 = vld [vmem:[#allocation6 + $0x4c8] sm:$0xff]
    %v422 = vld [vmem:[#allocation6 + $0x4d0] sm:$0xff]
    %v423 = vld [vmem:[#allocation6 + $0x4d8] sm:$0xff]
    %v424 = vld [vmem:[#allocation6 + $0x4e0] sm:$0xff]
    %v425 = vld [vmem:[#allocation6 + $0x4e8] sm:$0xff]
    %v426 = vld [vmem:[#allocation6 + $0x4f0] sm:$0xff]
    %v427 = vld [vmem:[#allocation6 + $0x4f8] sm:$0xff]
    %v428 = vld [vmem:[#allocation6 + $0x500] sm:$0xff]
    %v429 = vld [vmem:[#allocation6 + $0x508] sm:$0xff]
    %v430 = vld [vmem:[#allocation6 + $0x510] sm:$0xff]
    %v431 = vld [vmem:[#allocation6 + $0x518] sm:$0xff]
    %v432 = vld [vmem:[#allocation6 + $0x520] sm:$0xff]
    %v433 = vld [vmem:[#allocation6 + $0x528] sm:$0xff]
    %v434 = vld [vmem:[#allocation6 + $0x530] sm:$0xff]
    %v435 = vld [vmem:[#allocation6 + $0x538] sm:$0xff]
    %v436 = vld [vmem:[#allocation6 + $0x540] sm:$0xff]
    %v437 = vld [vmem:[#allocation6 + $0x548] sm:$0xff]
    %v438 = vld [vmem:[#allocation6 + $0x550] sm:$0xff]
    %v439 = vld [vmem:[#allocation6 + $0x558] sm:$0xff]
    %v440 = vld [vmem:[#allocation6 + $0x560] sm:$0xff]
    %v441 = vld [vmem:[#allocation6 + $0x568] sm:$0xff]
    %v442 = vld [vmem:[#allocation6 + $0x570] sm:$0xff]
    %v443 = vld [vmem:[#allocation6 + $0x578] sm:$0xff]
    %v444 = vld [vmem:[#allocation6 + $0x580] sm:$0xff]
    %v445 = vld [vmem:[#allocation6 + $0x588] sm:$0xff]
    %v446 = vld [vmem:[#allocation6 + $0x590] sm:$0xff]
    %v447 = vld [vmem:[#allocation6 + $0x598] sm:$0xff]
    %v448 = vld [vmem:[#allocation6 + $0x5a0] sm:$0xff]
    %v449 = vld [vmem:[#allocation6 + $0x5a8] sm:$0xff]
    %v450 = vld [vmem:[#allocation6 + $0x5b0] sm:$0xff]
    %v451 = vld [vmem:[#allocation6 + $0x5b8] sm:$0xff]
    %v452 = vld [vmem:[#allocation6 + $0x5c0] sm:$0xff]
    %v453 = vld [vmem:[#allocation6 + $0x5c8] sm:$0xff]
    %v454 = vld [vmem:[#allocation6 + $0x5d0] sm:$0xff]
    %v455 = vld [vmem:[#allocation6 + $0x5d8] sm:$0xff]
    %v456 = vld [vmem:[#allocation6 + $0x5e0] sm:$0xff]
    %v457 = vld [vmem:[#allocation6 + $0x5e8] sm:$0xff]
    %v458 = vld [vmem:[#allocation6 + $0x5f0] sm:$0xff]
    %v459 = vld [vmem:[#allocation6 + $0x5f8] sm:$0xff]
    %v460 = vld [vmem:[#allocation6 + $0x600] sm:$0xff]
    %v461 = vld [vmem:[#allocation6 + $0x608] sm:$0xff]
    %v462 = vld [vmem:[#allocation6 + $0x610] sm:$0xff]
    %v463 = vld [vmem:[#allocation6 + $0x618] sm:$0xff]
    %v464 = vld [vmem:[#allocation6 + $0x620] sm:$0xff]
    %v465 = vld [vmem:[#allocation6 + $0x628] sm:$0xff]
    %v466 = vld [vmem:[#allocation6 + $0x630] sm:$0xff]
    %v467 = vld [vmem:[#allocation6 + $0x638] sm:$0xff]
    %v468 = vld [vmem:[#allocation6 + $0x640] sm:$0xff]
    %v469 = vld [vmem:[#allocation6 + $0x648] sm:$0xff]
    %v470 = vld [vmem:[#allocation6 + $0x650] sm:$0xff]
    %v471 = vld [vmem:[#allocation6 + $0x658] sm:$0xff]
    %v472 = vld [vmem:[#allocation6 + $0x660] sm:$0xff]
    %v473 = vld [vmem:[#allocation6 + $0x668] sm:$0xff]
    %v474 = vld [vmem:[#allocation6 + $0x670] sm:$0xff]
    %v475 = vld [vmem:[#allocation6 + $0x678] sm:$0xff]
    %v476 = vld [vmem:[#allocation6 + $0x680] sm:$0xff]
    %v477 = vld [vmem:[#allocation6 + $0x688] sm:$0xff]
    %v478 = vld [vmem:[#allocation6 + $0x690] sm:$0xff]
    %v479 = vld [vmem:[#allocation6 + $0x698] sm:$0xff]
    %v480 = vld [vmem:[#allocation6 + $0x6a0] sm:$0xff]
    %v481 = vld [vmem:[#allocation6 + $0x6a8] sm:$0xff]
    %v482 = vld [vmem:[#allocation6 + $0x6b0] sm:$0xff]
    %v483 = vld [vmem:[#allocation6 + $0x6b8] sm:$0xff]
    %v484 = vld [vmem:[#allocation6 + $0x6c0] sm:$0xff]
    %v485 = vld [vmem:[#allocation6 + $0x6c8] sm:$0xff]
    %v486 = vld [vmem:[#allocation6 + $0x6d0] sm:$0xff]
    %v487 = vld [vmem:[#allocation6 + $0x6d8] sm:$0xff]
    %v488 = vld [vmem:[#allocation6 + $0x6e0] sm:$0xff]
    %v489 = vld [vmem:[#allocation6 + $0x6e8] sm:$0xff]
    %v490 = vld [vmem:[#allocation6 + $0x6f0] sm:$0xff]
    %v491 = vld [vmem:[#allocation6 + $0x6f8] sm:$0xff]
    %v492 = vld [vmem:[#allocation6 + $0x700] sm:$0xff]
    %v493 = vld [vmem:[#allocation6 + $0x708] sm:$0xff]
    %v494 = vld [vmem:[#allocation6 + $0x710] sm:$0xff]
    %v495 = vld [vmem:[#allocation6 + $0x718] sm:$0xff]
    %v496 = vld [vmem:[#allocation6 + $0x720] sm:$0xff]
    %v497 = vld [vmem:[#allocation6 + $0x728] sm:$0xff]
    %v498 = vld [vmem:[#allocation6 + $0x730] sm:$0xff]
    %v499 = vld [vmem:[#allocation6 + $0x738] sm:$0xff]
    %v500 = vld [vmem:[#allocation6 + $0x740] sm:$0xff]
    %v501 = vld [vmem:[#allocation6 + $0x748] sm:$0xff]
    %v502 = vld [vmem:[#allocation6 + $0x750] sm:$0xff]
    %v503 = vld [vmem:[#allocation6 + $0x758] sm:$0xff]
    %v504 = vld [vmem:[#allocation6 + $0x760] sm:$0xff]
    %v505 = vld [vmem:[#allocation6 + $0x768] sm:$0xff]
    %v506 = vld [vmem:[#allocation6 + $0x770] sm:$0xff]
    %v507 = vld [vmem:[#allocation6 + $0x778] sm:$0xff]
    %v508 = vld [vmem:[#allocation6 + $0x780] sm:$0xff]
    %v509 = vld [vmem:[#allocation6 + $0x788] sm:$0xff]
    %v510 = vld [vmem:[#allocation6 + $0x790] sm:$0xff]
    %v511 = vld [vmem:[#allocation6 + $0x798] sm:$0xff]
    %v512 = vld [vmem:[#allocation6 + $0x7a0] sm:$0xff]
    %v513 = vld [vmem:[#allocation6 + $0x7a8] sm:$0xff]
    %v514 = vld [vmem:[#allocation6 + $0x7b0] sm:$0xff]
    %v515 = vld [vmem:[#allocation6 + $0x7b8] sm:$0xff]
    %v516 = vld [vmem:[#allocation6 + $0x7c0] sm:$0xff]
    %v517 = vld [vmem:[#allocation6 + $0x7c8] sm:$0xff]
    %v518 = vld [vmem:[#allocation6 + $0x7d0] sm:$0xff]
    %v519 = vld [vmem:[#allocation6 + $0x7d8] sm:$0xff]
    %v520 = vld [vmem:[#allocation6 + $0x7e0] sm:$0xff]
    %v521 = vld [vmem:[#allocation6 + $0x7e8] sm:$0xff]
    %v522 = vld [vmem:[#allocation6 + $0x7f0] sm:$0xff]
    %v523 = vld [vmem:[#allocation6 + $0x7f8] sm:$0xff]
    %v524 = vld [vmem:[#allocation6 + $0x800] sm:$0xff]
    %v525 = vld [vmem:[#allocation6 + $0x808] sm:$0xff]
    %v526 = vld [vmem:[#allocation6 + $0x810] sm:$0xff]
    %v527 = vld [vmem:[#allocation6 + $0x818] sm:$0xff]
    %v528 = vld [vmem:[#allocation6 + $0x820] sm:$0xff]
    %v529 = vld [vmem:[#allocation6 + $0x828] sm:$0xff]
    %v530 = vld [vmem:[#allocation6 + $0x830] sm:$0xff]
    %v531 = vld [vmem:[#allocation6 + $0x838] sm:$0xff]
    %v532 = vld [vmem:[#allocation6 + $0x840] sm:$0xff]
    %v533 = vld [vmem:[#allocation6 + $0x848] sm:$0xff]
    %v534 = vld [vmem:[#allocation6 + $0x850] sm:$0xff]
    %v535 = vld [vmem:[#allocation6 + $0x858] sm:$0xff]
    %v536 = vld [vmem:[#allocation6 + $0x860] sm:$0xff]
    %v537 = vld [vmem:[#allocation6 + $0x868] sm:$0xff]
    %v538 = vld [vmem:[#allocation6 + $0x870] sm:$0xff]
    %v539 = vld [vmem:[#allocation6 + $0x878] sm:$0xff]
    %v540 = vld [vmem:[#allocation6 + $0x880] sm:$0xff]
    %v541 = vld [vmem:[#allocation6 + $0x888] sm:$0xff]
    %v542 = vld [vmem:[#allocation6 + $0x890] sm:$0xff]
    %v543 = vld [vmem:[#allocation6 + $0x898] sm:$0xff]
    %v544 = vld [vmem:[#allocation6 + $0x8a0] sm:$0xff]
    %v545 = vld [vmem:[#allocation6 + $0x8a8] sm:$0xff]
    %v546 = vld [vmem:[#allocation6 + $0x8b0] sm:$0xff]
    %v547 = vld [vmem:[#allocation6 + $0x8b8] sm:$0xff]
    %v548 = vld [vmem:[#allocation6 + $0x8c0] sm:$0xff]
    %v549 = vld [vmem:[#allocation6 + $0x8c8] sm:$0xff]
    %v550 = vld [vmem:[#allocation6 + $0x8d0] sm:$0xff]
    %v551 = vld [vmem:[#allocation6 + $0x8d8] sm:$0xff]
    %v552 = vld [vmem:[#allocation6 + $0x8e0] sm:$0xff]
    %v553 = vld [vmem:[#allocation6 + $0x8e8] sm:$0xff]
    %v554 = vld [vmem:[#allocation6 + $0x8f0] sm:$0xff]
    %v555 = vld [vmem:[#allocation6 + $0x8f8] sm:$0xff]
    %v556 = vld [vmem:[#allocation8] sm:$0xff]
    %v558 = vlaneseq
    %v559 = vshrl.u32 %v558, 7
    %v560 = vsub.s32 0, %v559
    %v561 = vrot.slane %v556, %v560
    %v562 = vlaneseq
    %v563 = vshrl.u32 %v562, 7
    %v564 = vsub.s32 1, %v563
    %v565 = vrot.slane %v556, %v564
    %v566 = vlaneseq
    %v567 = vshrl.u32 %v566, 7
    %v568 = vsub.s32 2, %v567
    %v569 = vrot.slane %v556, %v568
    %v570 = vlaneseq
    %v571 = vshrl.u32 %v570, 7
    %v572 = vsub.s32 3, %v571
    %v573 = vrot.slane %v556, %v572
    %v574 = vlaneseq
    %v575 = vshrl.u32 %v574, 7
    %v576 = vsub.s32 4, %v575
    %v577 = vrot.slane %v556, %v576
    %v578 = vlaneseq
    %v579 = vshrl.u32 %v578, 7
    %v580 = vsub.s32 5, %v579
    %v581 = vrot.slane %v556, %v580
    %v582 = vlaneseq
    %v583 = vshrl.u32 %v582, 7
    %v584 = vsub.s32 6, %v583
    %v585 = vrot.slane %v556, %v584
    %v586 = vlaneseq
    %v587 = vshrl.u32 %v586, 7
    %v588 = vsub.s32 7, %v587
    %v589 = vrot.slane %v556, %v588
    %v886 = vunpack.c.l.b16 %v268
    %v887 = vunpack.c.h.b16 %v268
    %v888 = vunpack.c.l.b16 %v269
    %v889 = vunpack.c.h.b16 %v269
    %v890 = vunpack.c.l.b16 %v270
    %v891 = vunpack.c.h.b16 %v270
    %v892 = vunpack.c.l.b16 %v271
    %v893 = vunpack.c.h.b16 %v271
    %v894 = vunpack.c.l.b16 %v272
    %v895 = vunpack.c.h.b16 %v272
    %v896 = vunpack.c.l.b16 %v273
    %v897 = vunpack.c.h.b16 %v273
    %v898 = vunpack.c.l.b16 %v274
    %v899 = vunpack.c.h.b16 %v274
    %v900 = vunpack.c.l.b16 %v275
    %v901 = vunpack.c.h.b16 %v275
    %v902 = vunpack.c.l.b16 %v276
    %v903 = vunpack.c.h.b16 %v276
    %v904 = vunpack.c.l.b16 %v277
    %v905 = vunpack.c.h.b16 %v277
    %v906 = vunpack.c.l.b16 %v278
    %v907 = vunpack.c.h.b16 %v278
    %v908 = vunpack.c.l.b16 %v279
    %v909 = vunpack.c.h.b16 %v279
    %v910 = vunpack.c.l.b16 %v280
    %v911 = vunpack.c.h.b16 %v280
    %v912 = vunpack.c.l.b16 %v281
    %v913 = vunpack.c.h.b16 %v281
    %v914 = vunpack.c.l.b16 %v282
    %v915 = vunpack.c.h.b16 %v282
    %v916 = vunpack.c.l.b16 %v283
    %v917 = vunpack.c.h.b16 %v283
    %v918 = vunpack.c.l.b16 %v284
    %v919 = vunpack.c.h.b16 %v284
    %v920 = vunpack.c.l.b16 %v285
    %v921 = vunpack.c.h.b16 %v285
    %v922 = vunpack.c.l.b16 %v286
    %v923 = vunpack.c.h.b16 %v286
    %v924 = vunpack.c.l.b16 %v287
    %v925 = vunpack.c.h.b16 %v287
    %v926 = vunpack.c.l.b16 %v288
    %v927 = vunpack.c.h.b16 %v288
    %v928 = vunpack.c.l.b16 %v289
    %v929 = vunpack.c.h.b16 %v289
    %v930 = vunpack.c.l.b16 %v290
    %v931 = vunpack.c.h.b16 %v290
    %v932 = vunpack.c.l.b16 %v291
    %v933 = vunpack.c.h.b16 %v291
    %v934 = vunpack.c.l.b16 %v292
    %v935 = vunpack.c.h.b16 %v292
    %v936 = vunpack.c.l.b16 %v293
    %v937 = vunpack.c.h.b16 %v293
    %v938 = vunpack.c.l.b16 %v294
    %v939 = vunpack.c.h.b16 %v294
    %v940 = vunpack.c.l.b16 %v295
    %v941 = vunpack.c.h.b16 %v295
    %v942 = vunpack.c.l.b16 %v296
    %v943 = vunpack.c.h.b16 %v296
    %v944 = vunpack.c.l.b16 %v297
    %v945 = vunpack.c.h.b16 %v297
    %v946 = vunpack.c.l.b16 %v298
    %v947 = vunpack.c.h.b16 %v298
    %v948 = vunpack.c.l.b16 %v299
    %v949 = vunpack.c.h.b16 %v299
    %v950 = vunpack.c.l.b16 %v300
    %v951 = vunpack.c.h.b16 %v300
    %v952 = vunpack.c.l.b16 %v301
    %v953 = vunpack.c.h.b16 %v301
    %v954 = vunpack.c.l.b16 %v302
    %v955 = vunpack.c.h.b16 %v302
    %v956 = vunpack.c.l.b16 %v303
    %v957 = vunpack.c.h.b16 %v303
    %v958 = vunpack.c.l.b16 %v304
    %v959 = vunpack.c.h.b16 %v304
    %v960 = vunpack.c.l.b16 %v305
    %v961 = vunpack.c.h.b16 %v305
    %v962 = vunpack.c.l.b16 %v306
    %v963 = vunpack.c.h.b16 %v306
    %v964 = vunpack.c.l.b16 %v307
    %v965 = vunpack.c.h.b16 %v307
    %v966 = vunpack.c.l.b16 %v308
    %v967 = vunpack.c.h.b16 %v308
    %v968 = vunpack.c.l.b16 %v309
    %v969 = vunpack.c.h.b16 %v309
    %v970 = vunpack.c.l.b16 %v310
    %v971 = vunpack.c.h.b16 %v310
    %v972 = vunpack.c.l.b16 %v311
    %v973 = vunpack.c.h.b16 %v311
    %v974 = vunpack.c.l.b16 %v312
    %v975 = vunpack.c.h.b16 %v312
    %v976 = vunpack.c.l.b16 %v313
    %v977 = vunpack.c.h.b16 %v313
    %v978 = vunpack.c.l.b16 %v314
    %v979 = vunpack.c.h.b16 %v314
    %v980 = vunpack.c.l.b16 %v315
    %v981 = vunpack.c.h.b16 %v315
    %v982 = vunpack.c.l.b16 %v316
    %v983 = vunpack.c.h.b16 %v316
    %v984 = vunpack.c.l.b16 %v317
    %v985 = vunpack.c.h.b16 %v317
    %v986 = vunpack.c.l.b16 %v318
    %v987 = vunpack.c.h.b16 %v318
    %v988 = vunpack.c.l.b16 %v319
    %v989 = vunpack.c.h.b16 %v319
    %v990 = vunpack.c.l.b16 %v320
    %v991 = vunpack.c.h.b16 %v320
    %v992 = vunpack.c.l.b16 %v321
    %v993 = vunpack.c.h.b16 %v321
    %v994 = vunpack.c.l.b16 %v322
    %v995 = vunpack.c.h.b16 %v322
    %v996 = vunpack.c.l.b16 %v323
    %v997 = vunpack.c.h.b16 %v323
    %v998 = vunpack.c.l.b16 %v324
    %v999 = vunpack.c.h.b16 %v324
    %v1000 = vunpack.c.l.b16 %v325
    %v1001 = vunpack.c.h.b16 %v325
    %v1002 = vunpack.c.l.b16 %v326
    %v1003 = vunpack.c.h.b16 %v326
    %v1004 = vunpack.c.l.b16 %v327
    %v1005 = vunpack.c.h.b16 %v327
    %v1006 = vunpack.c.l.b16 %v328
    %v1007 = vunpack.c.h.b16 %v328
    %v1008 = vunpack.c.l.b16 %v329
    %v1009 = vunpack.c.h.b16 %v329
    %v1010 = vunpack.c.l.b16 %v330
    %v1011 = vunpack.c.h.b16 %v330
    %v1012 = vunpack.c.l.b16 %v331
    %v1013 = vunpack.c.h.b16 %v331
    %v1014 = vunpack.c.l.b16 %v332
    %v1015 = vunpack.c.h.b16 %v332
    %v1016 = vunpack.c.l.b16 %v333
    %v1017 = vunpack.c.h.b16 %v333
    %v1018 = vunpack.c.l.b16 %v334
    %v1019 = vunpack.c.h.b16 %v334
    %v1020 = vunpack.c.l.b16 %v335
    %v1021 = vunpack.c.h.b16 %v335
    %v1022 = vunpack.c.l.b16 %v336
    %v1023 = vunpack.c.h.b16 %v336
    %v1024 = vunpack.c.l.b16 %v337
    %v1025 = vunpack.c.h.b16 %v337
    %v1026 = vunpack.c.l.b16 %v338
    %v1027 = vunpack.c.h.b16 %v338
    %v1028 = vunpack.c.l.b16 %v339
    %v1029 = vunpack.c.h.b16 %v339
    %v1030 = vunpack.c.l.b16 %v340
    %v1031 = vunpack.c.h.b16 %v340
    %v1032 = vunpack.c.l.b16 %v341
    %v1033 = vunpack.c.h.b16 %v341
    %v1034 = vunpack.c.l.b16 %v342
    %v1035 = vunpack.c.h.b16 %v342
    %v1036 = vunpack.c.l.b16 %v343
    %v1037 = vunpack.c.h.b16 %v343
    %v1038 = vunpack.c.l.b16 %v344
    %v1039 = vunpack.c.h.b16 %v344
    %v1040 = vunpack.c.l.b16 %v345
    %v1041 = vunpack.c.h.b16 %v345
    %v1042 = vunpack.c.l.b16 %v346
    %v1043 = vunpack.c.h.b16 %v346
    %v1044 = vunpack.c.l.b16 %v347
    %v1045 = vunpack.c.h.b16 %v347
    %v1046 = vunpack.c.l.b16 %v348
    %v1047 = vunpack.c.h.b16 %v348
    %v1048 = vunpack.c.l.b16 %v349
    %v1049 = vunpack.c.h.b16 %v349
    %v1050 = vunpack.c.l.b16 %v350
    %v1051 = vunpack.c.h.b16 %v350
    %v1052 = vunpack.c.l.b16 %v351
    %v1053 = vunpack.c.h.b16 %v351
    %v1054 = vunpack.c.l.b16 %v352
    %v1055 = vunpack.c.h.b16 %v352
    %v1056 = vunpack.c.l.b16 %v353
    %v1057 = vunpack.c.h.b16 %v353
    %v1058 = vunpack.c.l.b16 %v354
    %v1059 = vunpack.c.h.b16 %v354
    %v1060 = vunpack.c.l.b16 %v355
    %v1061 = vunpack.c.h.b16 %v355
    %v1062 = vunpack.c.l.b16 %v356
    %v1063 = vunpack.c.h.b16 %v356
    %v1064 = vunpack.c.l.b16 %v357
    %v1065 = vunpack.c.h.b16 %v357
    %v1066 = vunpack.c.l.b16 %v358
    %v1067 = vunpack.c.h.b16 %v358
    %v1068 = vunpack.c.l.b16 %v359
    %v1069 = vunpack.c.h.b16 %v359
    %v1070 = vunpack.c.l.b16 %v360
    %v1071 = vunpack.c.h.b16 %v360
    %v1072 = vunpack.c.l.b16 %v361
    %v1073 = vunpack.c.h.b16 %v361
    %v1074 = vunpack.c.l.b16 %v362
    %v1075 = vunpack.c.h.b16 %v362
    %v1076 = vunpack.c.l.b16 %v363
    %v1077 = vunpack.c.h.b16 %v363
    %v1078 = vunpack.c.l.b16 %v364
    %v1079 = vunpack.c.h.b16 %v364
    %v1080 = vunpack.c.l.b16 %v365
    %v1081 = vunpack.c.h.b16 %v365
    %v1082 = vunpack.c.l.b16 %v366
    %v1083 = vunpack.c.h.b16 %v366
    %v1084 = vunpack.c.l.b16 %v367
    %v1085 = vunpack.c.h.b16 %v367
    %v1086 = vunpack.c.l.b16 %v368
    %v1087 = vunpack.c.h.b16 %v368
    %v1088 = vunpack.c.l.b16 %v369
    %v1089 = vunpack.c.h.b16 %v369
    %v1090 = vunpack.c.l.b16 %v370
    %v1091 = vunpack.c.h.b16 %v370
    %v1092 = vunpack.c.l.b16 %v371
    %v1093 = vunpack.c.h.b16 %v371
    %v1094 = vunpack.c.l.b16 %v372
    %v1095 = vunpack.c.h.b16 %v372
    %v1096 = vunpack.c.l.b16 %v373
    %v1097 = vunpack.c.h.b16 %v373
    %v1098 = vunpack.c.l.b16 %v374
    %v1099 = vunpack.c.h.b16 %v374
    %v1100 = vunpack.c.l.b16 %v375
    %v1101 = vunpack.c.h.b16 %v375
    %v1102 = vunpack.c.l.b16 %v376
    %v1103 = vunpack.c.h.b16 %v376
    %v1104 = vunpack.c.l.b16 %v377
    %v1105 = vunpack.c.h.b16 %v377
    %v1106 = vunpack.c.l.b16 %v378
    %v1107 = vunpack.c.h.b16 %v378
    %v1108 = vunpack.c.l.b16 %v379
    %v1109 = vunpack.c.h.b16 %v379
    %v1110 = vunpack.c.l.b16 %v380
    %v1111 = vunpack.c.h.b16 %v380
    %v1112 = vunpack.c.l.b16 %v381
    %v1113 = vunpack.c.h.b16 %v381
    %v1114 = vunpack.c.l.b16 %v382
    %v1115 = vunpack.c.h.b16 %v382
    %v1116 = vunpack.c.l.b16 %v383
    %v1117 = vunpack.c.h.b16 %v383
    %v1118 = vunpack.c.l.b16 %v384
    %v1119 = vunpack.c.h.b16 %v384
    %v1120 = vunpack.c.l.b16 %v385
    %v1121 = vunpack.c.h.b16 %v385
    %v1122 = vunpack.c.l.b16 %v386
    %v1123 = vunpack.c.h.b16 %v386
    %v1124 = vunpack.c.l.b16 %v387
    %v1125 = vunpack.c.h.b16 %v387
    %v1126 = vunpack.c.l.b16 %v388
    %v1127 = vunpack.c.h.b16 %v388
    %v1128 = vunpack.c.l.b16 %v389
    %v1129 = vunpack.c.h.b16 %v389
    %v1130 = vunpack.c.l.b16 %v390
    %v1131 = vunpack.c.h.b16 %v390
    %v1132 = vunpack.c.l.b16 %v391
    %v1133 = vunpack.c.h.b16 %v391
    %v1134 = vunpack.c.l.b16 %v392
    %v1135 = vunpack.c.h.b16 %v392
    %v1136 = vunpack.c.l.b16 %v393
    %v1137 = vunpack.c.h.b16 %v393
    %v1138 = vunpack.c.l.b16 %v394
    %v1139 = vunpack.c.h.b16 %v394
    %v1140 = vunpack.c.l.b16 %v395
    %v1141 = vunpack.c.h.b16 %v395
    %v1142 = vunpack.c.l.b16 %v396
    %v1143 = vunpack.c.h.b16 %v396
    %v1144 = vunpack.c.l.b16 %v397
    %v1145 = vunpack.c.h.b16 %v397
    %v1146 = vunpack.c.l.b16 %v398
    %v1147 = vunpack.c.h.b16 %v398
    %v1148 = vunpack.c.l.b16 %v399
    %v1149 = vunpack.c.h.b16 %v399
    %v1150 = vunpack.c.l.b16 %v400
    %v1151 = vunpack.c.h.b16 %v400
    %v1152 = vunpack.c.l.b16 %v401
    %v1153 = vunpack.c.h.b16 %v401
    %v1154 = vunpack.c.l.b16 %v402
    %v1155 = vunpack.c.h.b16 %v402
    %v1156 = vunpack.c.l.b16 %v403
    %v1157 = vunpack.c.h.b16 %v403
    %v1158 = vunpack.c.l.b16 %v404
    %v1159 = vunpack.c.h.b16 %v404
    %v1160 = vunpack.c.l.b16 %v405
    %v1161 = vunpack.c.h.b16 %v405
    %v1162 = vunpack.c.l.b16 %v406
    %v1163 = vunpack.c.h.b16 %v406
    %v1164 = vunpack.c.l.b16 %v407
    %v1165 = vunpack.c.h.b16 %v407
    %v1166 = vunpack.c.l.b16 %v408
    %v1167 = vunpack.c.h.b16 %v408
    %v1168 = vunpack.c.l.b16 %v409
    %v1169 = vunpack.c.h.b16 %v409
    %v1170 = vunpack.c.l.b16 %v410
    %v1171 = vunpack.c.h.b16 %v410
    %v1172 = vunpack.c.l.b16 %v411
    %v1173 = vunpack.c.h.b16 %v411
    %v1174 = vunpack.c.l.b16 %v412
    %v1175 = vunpack.c.h.b16 %v412
    %v1176 = vunpack.c.l.b16 %v413
    %v1177 = vunpack.c.h.b16 %v413
    %v1178 = vunpack.c.l.b16 %v414
    %v1179 = vunpack.c.h.b16 %v414
    %v1180 = vunpack.c.l.b16 %v415
    %v1181 = vunpack.c.h.b16 %v415
    %v1182 = vunpack.c.l.b16 %v416
    %v1183 = vunpack.c.h.b16 %v416
    %v1184 = vunpack.c.l.b16 %v417
    %v1185 = vunpack.c.h.b16 %v417
    %v1186 = vunpack.c.l.b16 %v418
    %v1187 = vunpack.c.h.b16 %v418
    %v1188 = vunpack.c.l.b16 %v419
    %v1189 = vunpack.c.h.b16 %v419
    %v1190 = vunpack.c.l.b16 %v420
    %v1191 = vunpack.c.h.b16 %v420
    %v1192 = vunpack.c.l.b16 %v421
    %v1193 = vunpack.c.h.b16 %v421
    %v1194 = vunpack.c.l.b16 %v422
    %v1195 = vunpack.c.h.b16 %v422
    %v1196 = vunpack.c.l.b16 %v423
    %v1197 = vunpack.c.h.b16 %v423
    %v1198 = vunpack.c.l.b16 %v424
    %v1199 = vunpack.c.h.b16 %v424
    %v1200 = vunpack.c.l.b16 %v425
    %v1201 = vunpack.c.h.b16 %v425
    %v1202 = vunpack.c.l.b16 %v426
    %v1203 = vunpack.c.h.b16 %v426
    %v1204 = vunpack.c.l.b16 %v427
    %v1205 = vunpack.c.h.b16 %v427
    %v1206 = vunpack.c.l.b16 %v428
    %v1207 = vunpack.c.h.b16 %v428
    %v1208 = vunpack.c.l.b16 %v429
    %v1209 = vunpack.c.h.b16 %v429
    %v1210 = vunpack.c.l.b16 %v430
    %v1211 = vunpack.c.h.b16 %v430
    %v1212 = vunpack.c.l.b16 %v431
    %v1213 = vunpack.c.h.b16 %v431
    %v1214 = vunpack.c.l.b16 %v432
    %v1215 = vunpack.c.h.b16 %v432
    %v1216 = vunpack.c.l.b16 %v433
    %v1217 = vunpack.c.h.b16 %v433
    %v1218 = vunpack.c.l.b16 %v434
    %v1219 = vunpack.c.h.b16 %v434
    %v1220 = vunpack.c.l.b16 %v435
    %v1221 = vunpack.c.h.b16 %v435
    %v1222 = vunpack.c.l.b16 %v436
    %v1223 = vunpack.c.h.b16 %v436
    %v1224 = vunpack.c.l.b16 %v437
    %v1225 = vunpack.c.h.b16 %v437
    %v1226 = vunpack.c.l.b16 %v438
    %v1227 = vunpack.c.h.b16 %v438
    %v1228 = vunpack.c.l.b16 %v439
    %v1229 = vunpack.c.h.b16 %v439
    %v1230 = vunpack.c.l.b16 %v440
    %v1231 = vunpack.c.h.b16 %v440
    %v1232 = vunpack.c.l.b16 %v441
    %v1233 = vunpack.c.h.b16 %v441
    %v1234 = vunpack.c.l.b16 %v442
    %v1235 = vunpack.c.h.b16 %v442
    %v1236 = vunpack.c.l.b16 %v443
    %v1237 = vunpack.c.h.b16 %v443
    %v1238 = vunpack.c.l.b16 %v444
    %v1239 = vunpack.c.h.b16 %v444
    %v1240 = vunpack.c.l.b16 %v445
    %v1241 = vunpack.c.h.b16 %v445
    %v1242 = vunpack.c.l.b16 %v446
    %v1243 = vunpack.c.h.b16 %v446
    %v1244 = vunpack.c.l.b16 %v447
    %v1245 = vunpack.c.h.b16 %v447
    %v1246 = vunpack.c.l.b16 %v448
    %v1247 = vunpack.c.h.b16 %v448
    %v1248 = vunpack.c.l.b16 %v449
    %v1249 = vunpack.c.h.b16 %v449
    %v1250 = vunpack.c.l.b16 %v450
    %v1251 = vunpack.c.h.b16 %v450
    %v1252 = vunpack.c.l.b16 %v451
    %v1253 = vunpack.c.h.b16 %v451
    %v1254 = vunpack.c.l.b16 %v452
    %v1255 = vunpack.c.h.b16 %v452
    %v1256 = vunpack.c.l.b16 %v453
    %v1257 = vunpack.c.h.b16 %v453
    %v1258 = vunpack.c.l.b16 %v454
    %v1259 = vunpack.c.h.b16 %v454
    %v1260 = vunpack.c.l.b16 %v455
    %v1261 = vunpack.c.h.b16 %v455
    %v1262 = vunpack.c.l.b16 %v456
    %v1263 = vunpack.c.h.b16 %v456
    %v1264 = vunpack.c.l.b16 %v457
    %v1265 = vunpack.c.h.b16 %v457
    %v1266 = vunpack.c.l.b16 %v458
    %v1267 = vunpack.c.h.b16 %v458
    %v1268 = vunpack.c.l.b16 %v459
    %v1269 = vunpack.c.h.b16 %v459
    %v1270 = vunpack.c.l.b16 %v460
    %v1271 = vunpack.c.h.b16 %v460
    %v1272 = vunpack.c.l.b16 %v461
    %v1273 = vunpack.c.h.b16 %v461
    %v1274 = vunpack.c.l.b16 %v462
    %v1275 = vunpack.c.h.b16 %v462
    %v1276 = vunpack.c.l.b16 %v463
    %v1277 = vunpack.c.h.b16 %v463
    %v1278 = vunpack.c.l.b16 %v464
    %v1279 = vunpack.c.h.b16 %v464
    %v1280 = vunpack.c.l.b16 %v465
    %v1281 = vunpack.c.h.b16 %v465
    %v1282 = vunpack.c.l.b16 %v466
    %v1283 = vunpack.c.h.b16 %v466
    %v1284 = vunpack.c.l.b16 %v467
    %v1285 = vunpack.c.h.b16 %v467
    %v1286 = vunpack.c.l.b16 %v468
    %v1287 = vunpack.c.h.b16 %v468
    %v1288 = vunpack.c.l.b16 %v469
    %v1289 = vunpack.c.h.b16 %v469
    %v1290 = vunpack.c.l.b16 %v470
    %v1291 = vunpack.c.h.b16 %v470
    %v1292 = vunpack.c.l.b16 %v471
    %v1293 = vunpack.c.h.b16 %v471
    %v1294 = vunpack.c.l.b16 %v472
    %v1295 = vunpack.c.h.b16 %v472
    %v1296 = vunpack.c.l.b16 %v473
    %v1297 = vunpack.c.h.b16 %v473
    %v1298 = vunpack.c.l.b16 %v474
    %v1299 = vunpack.c.h.b16 %v474
    %v1300 = vunpack.c.l.b16 %v475
    %v1301 = vunpack.c.h.b16 %v475
    %v1302 = vunpack.c.l.b16 %v476
    %v1303 = vunpack.c.h.b16 %v476
    %v1304 = vunpack.c.l.b16 %v477
    %v1305 = vunpack.c.h.b16 %v477
    %v1306 = vunpack.c.l.b16 %v478
    %v1307 = vunpack.c.h.b16 %v478
    %v1308 = vunpack.c.l.b16 %v479
    %v1309 = vunpack.c.h.b16 %v479
    %v1310 = vunpack.c.l.b16 %v480
    %v1311 = vunpack.c.h.b16 %v480
    %v1312 = vunpack.c.l.b16 %v481
    %v1313 = vunpack.c.h.b16 %v481
    %v1314 = vunpack.c.l.b16 %v482
    %v1315 = vunpack.c.h.b16 %v482
    %v1316 = vunpack.c.l.b16 %v483
    %v1317 = vunpack.c.h.b16 %v483
    %v1318 = vunpack.c.l.b16 %v484
    %v1319 = vunpack.c.h.b16 %v484
    %v1320 = vunpack.c.l.b16 %v485
    %v1321 = vunpack.c.h.b16 %v485
    %v1322 = vunpack.c.l.b16 %v486
    %v1323 = vunpack.c.h.b16 %v486
    %v1324 = vunpack.c.l.b16 %v487
    %v1325 = vunpack.c.h.b16 %v487
    %v1326 = vunpack.c.l.b16 %v488
    %v1327 = vunpack.c.h.b16 %v488
    %v1328 = vunpack.c.l.b16 %v489
    %v1329 = vunpack.c.h.b16 %v489
    %v1330 = vunpack.c.l.b16 %v490
    %v1331 = vunpack.c.h.b16 %v490
    %v1332 = vunpack.c.l.b16 %v491
    %v1333 = vunpack.c.h.b16 %v491
    %v1334 = vunpack.c.l.b16 %v492
    %v1335 = vunpack.c.h.b16 %v492
    %v1336 = vunpack.c.l.b16 %v493
    %v1337 = vunpack.c.h.b16 %v493
    %v1338 = vunpack.c.l.b16 %v494
    %v1339 = vunpack.c.h.b16 %v494
    %v1340 = vunpack.c.l.b16 %v495
    %v1341 = vunpack.c.h.b16 %v495
    %v1342 = vunpack.c.l.b16 %v496
    %v1343 = vunpack.c.h.b16 %v496
    %v1344 = vunpack.c.l.b16 %v497
    %v1345 = vunpack.c.h.b16 %v497
    %v1346 = vunpack.c.l.b16 %v498
    %v1347 = vunpack.c.h.b16 %v498
    %v1348 = vunpack.c.l.b16 %v499
    %v1349 = vunpack.c.h.b16 %v499
    %v1350 = vunpack.c.l.b16 %v500
    %v1351 = vunpack.c.h.b16 %v500
    %v1352 = vunpack.c.l.b16 %v501
    %v1353 = vunpack.c.h.b16 %v501
    %v1354 = vunpack.c.l.b16 %v502
    %v1355 = vunpack.c.h.b16 %v502
    %v1356 = vunpack.c.l.b16 %v503
    %v1357 = vunpack.c.h.b16 %v503
    %v1358 = vunpack.c.l.b16 %v504
    %v1359 = vunpack.c.h.b16 %v504
    %v1360 = vunpack.c.l.b16 %v505
    %v1361 = vunpack.c.h.b16 %v505
    %v1362 = vunpack.c.l.b16 %v506
    %v1363 = vunpack.c.h.b16 %v506
    %v1364 = vunpack.c.l.b16 %v507
    %v1365 = vunpack.c.h.b16 %v507
    %v1366 = vunpack.c.l.b16 %v508
    %v1367 = vunpack.c.h.b16 %v508
    %v1368 = vunpack.c.l.b16 %v509
    %v1369 = vunpack.c.h.b16 %v509
    %v1370 = vunpack.c.l.b16 %v510
    %v1371 = vunpack.c.h.b16 %v510
    %v1372 = vunpack.c.l.b16 %v511
    %v1373 = vunpack.c.h.b16 %v511
    %v1374 = vunpack.c.l.b16 %v512
    %v1375 = vunpack.c.h.b16 %v512
    %v1376 = vunpack.c.l.b16 %v513
    %v1377 = vunpack.c.h.b16 %v513
    %v1378 = vunpack.c.l.b16 %v514
    %v1379 = vunpack.c.h.b16 %v514
    %v1380 = vunpack.c.l.b16 %v515
    %v1381 = vunpack.c.h.b16 %v515
    %v1382 = vunpack.c.l.b16 %v516
    %v1383 = vunpack.c.h.b16 %v516
    %v1384 = vunpack.c.l.b16 %v517
    %v1385 = vunpack.c.h.b16 %v517
    %v1386 = vunpack.c.l.b16 %v518
    %v1387 = vunpack.c.h.b16 %v518
    %v1388 = vunpack.c.l.b16 %v519
    %v1389 = vunpack.c.h.b16 %v519
    %v1390 = vunpack.c.l.b16 %v520
    %v1391 = vunpack.c.h.b16 %v520
    %v1392 = vunpack.c.l.b16 %v521
    %v1393 = vunpack.c.h.b16 %v521
    %v1394 = vunpack.c.l.b16 %v522
    %v1395 = vunpack.c.h.b16 %v522
    %v1396 = vunpack.c.l.b16 %v523
    %v1397 = vunpack.c.h.b16 %v523
    %v1398 = vunpack.c.l.b16 %v524
    %v1399 = vunpack.c.h.b16 %v524
    %v1400 = vunpack.c.l.b16 %v525
    %v1401 = vunpack.c.h.b16 %v525
    %v1402 = vunpack.c.l.b16 %v526
    %v1403 = vunpack.c.h.b16 %v526
    %v1404 = vunpack.c.l.b16 %v527
    %v1405 = vunpack.c.h.b16 %v527
    %v1406 = vunpack.c.l.b16 %v528
    %v1407 = vunpack.c.h.b16 %v528
    %v1408 = vunpack.c.l.b16 %v529
    %v1409 = vunpack.c.h.b16 %v529
    %v1410 = vunpack.c.l.b16 %v530
    %v1411 = vunpack.c.h.b16 %v530
    %v1412 = vunpack.c.l.b16 %v531
    %v1413 = vunpack.c.h.b16 %v531
    %v1414 = vunpack.c.l.b16 %v532
    %v1415 = vunpack.c.h.b16 %v532
    %v1416 = vunpack.c.l.b16 %v533
    %v1417 = vunpack.c.h.b16 %v533
    %v1418 = vunpack.c.l.b16 %v534
    %v1419 = vunpack.c.h.b16 %v534
    %v1420 = vunpack.c.l.b16 %v535
    %v1421 = vunpack.c.h.b16 %v535
    %v1422 = vunpack.c.l.b16 %v536
    %v1423 = vunpack.c.h.b16 %v536
    %v1424 = vunpack.c.l.b16 %v537
    %v1425 = vunpack.c.h.b16 %v537
    %v1426 = vunpack.c.l.b16 %v538
    %v1427 = vunpack.c.h.b16 %v538
    %v1428 = vunpack.c.l.b16 %v539
    %v1429 = vunpack.c.h.b16 %v539
    %v1430 = vunpack.c.l.b16 %v540
    %v1431 = vunpack.c.h.b16 %v540
    %v1432 = vunpack.c.l.b16 %v541
    %v1433 = vunpack.c.h.b16 %v541
    %v1434 = vunpack.c.l.b16 %v542
    %v1435 = vunpack.c.h.b16 %v542
    %v1436 = vunpack.c.l.b16 %v543
    %v1437 = vunpack.c.h.b16 %v543
    %v1438 = vunpack.c.l.b16 %v544
    %v1439 = vunpack.c.h.b16 %v544
    %v1440 = vunpack.c.l.b16 %v545
    %v1441 = vunpack.c.h.b16 %v545
    %v1442 = vunpack.c.l.b16 %v546
    %v1443 = vunpack.c.h.b16 %v546
    %v1444 = vunpack.c.l.b16 %v547
    %v1445 = vunpack.c.h.b16 %v547
    %v1446 = vunpack.c.l.b16 %v548
    %v1447 = vunpack.c.h.b16 %v548
    %v1448 = vunpack.c.l.b16 %v549
    %v1449 = vunpack.c.h.b16 %v549
    %v1450 = vunpack.c.l.b16 %v550
    %v1451 = vunpack.c.h.b16 %v550
    %v1452 = vunpack.c.l.b16 %v551
    %v1453 = vunpack.c.h.b16 %v551
    %v1454 = vunpack.c.l.b16 %v552
    %v1455 = vunpack.c.h.b16 %v552
    %v1456 = vunpack.c.l.b16 %v553
    %v1457 = vunpack.c.h.b16 %v553
    %v1458 = vunpack.c.l.b16 %v554
    %v1459 = vunpack.c.h.b16 %v554
    %v1460 = vunpack.c.l.b16 %v555
    %v1461 = vunpack.c.h.b16 %v555
    %v1462 = vpack.c.b16 %v894, %v886
    %v1463 = vpack.c.b16 %v895, %v887
    %v1464 = vpack.c.b16 %v896, %v888
    %v1465 = vpack.c.b16 %v897, %v889
    %v1466 = vpack.c.b16 %v898, %v890
    %v1467 = vpack.c.b16 %v899, %v891
    %v1468 = vpack.c.b16 %v900, %v892
    %v1469 = vpack.c.b16 %v901, %v893
    %v1470 = vpack.c.b16 %v910, %v902
    %v1471 = vpack.c.b16 %v911, %v903
    %v1472 = vpack.c.b16 %v912, %v904
    %v1473 = vpack.c.b16 %v913, %v905
    %v1474 = vpack.c.b16 %v914, %v906
    %v1475 = vpack.c.b16 %v915, %v907
    %v1476 = vpack.c.b16 %v916, %v908
    %v1477 = vpack.c.b16 %v917, %v909
    %v1478 = vpack.c.b16 %v926, %v918
    %v1479 = vpack.c.b16 %v927, %v919
    %v1480 = vpack.c.b16 %v928, %v920
    %v1481 = vpack.c.b16 %v929, %v921
    %v1482 = vpack.c.b16 %v930, %v922
    %v1483 = vpack.c.b16 %v931, %v923
    %v1484 = vpack.c.b16 %v932, %v924
    %v1485 = vpack.c.b16 %v933, %v925
    %v1486 = vpack.c.b16 %v942, %v934
    %v1487 = vpack.c.b16 %v943, %v935
    %v1488 = vpack.c.b16 %v944, %v936
    %v1489 = vpack.c.b16 %v945, %v937
    %v1490 = vpack.c.b16 %v946, %v938
    %v1491 = vpack.c.b16 %v947, %v939
    %v1492 = vpack.c.b16 %v948, %v940
    %v1493 = vpack.c.b16 %v949, %v941
    %v1494 = vpack.c.b16 %v958, %v950
    %v1495 = vpack.c.b16 %v959, %v951
    %v1496 = vpack.c.b16 %v960, %v952
    %v1497 = vpack.c.b16 %v961, %v953
    %v1498 = vpack.c.b16 %v962, %v954
    %v1499 = vpack.c.b16 %v963, %v955
    %v1500 = vpack.c.b16 %v964, %v956
    %v1501 = vpack.c.b16 %v965, %v957
    %v1502 = vpack.c.b16 %v974, %v966
    %v1503 = vpack.c.b16 %v975, %v967
    %v1504 = vpack.c.b16 %v976, %v968
    %v1505 = vpack.c.b16 %v977, %v969
    %v1506 = vpack.c.b16 %v978, %v970
    %v1507 = vpack.c.b16 %v979, %v971
    %v1508 = vpack.c.b16 %v980, %v972
    %v1509 = vpack.c.b16 %v981, %v973
    %v1510 = vpack.c.b16 %v990, %v982
    %v1511 = vpack.c.b16 %v991, %v983
    %v1512 = vpack.c.b16 %v992, %v984
    %v1513 = vpack.c.b16 %v993, %v985
    %v1514 = vpack.c.b16 %v994, %v986
    %v1515 = vpack.c.b16 %v995, %v987
    %v1516 = vpack.c.b16 %v996, %v988
    %v1517 = vpack.c.b16 %v997, %v989
    %v1518 = vpack.c.b16 %v1006, %v998
    %v1519 = vpack.c.b16 %v1007, %v999
    %v1520 = vpack.c.b16 %v1008, %v1000
    %v1521 = vpack.c.b16 %v1009, %v1001
    %v1522 = vpack.c.b16 %v1010, %v1002
    %v1523 = vpack.c.b16 %v1011, %v1003
    %v1524 = vpack.c.b16 %v1012, %v1004
    %v1525 = vpack.c.b16 %v1013, %v1005
    %v1526 = vpack.c.b16 %v1022, %v1014
    %v1527 = vpack.c.b16 %v1023, %v1015
    %v1528 = vpack.c.b16 %v1024, %v1016
    %v1529 = vpack.c.b16 %v1025, %v1017
    %v1530 = vpack.c.b16 %v1026, %v1018
    %v1531 = vpack.c.b16 %v1027, %v1019
    %v1532 = vpack.c.b16 %v1028, %v1020
    %v1533 = vpack.c.b16 %v1029, %v1021
    %v1534 = vpack.c.b16 %v1038, %v1030
    %v1535 = vpack.c.b16 %v1039, %v1031
    %v1536 = vpack.c.b16 %v1040, %v1032
    %v1537 = vpack.c.b16 %v1041, %v1033
    %v1538 = vpack.c.b16 %v1042, %v1034
    %v1539 = vpack.c.b16 %v1043, %v1035
    %v1540 = vpack.c.b16 %v1044, %v1036
    %v1541 = vpack.c.b16 %v1045, %v1037
    %v1542 = vpack.c.b16 %v1054, %v1046
    %v1543 = vpack.c.b16 %v1055, %v1047
    %v1544 = vpack.c.b16 %v1056, %v1048
    %v1545 = vpack.c.b16 %v1057, %v1049
    %v1546 = vpack.c.b16 %v1058, %v1050
    %v1547 = vpack.c.b16 %v1059, %v1051
    %v1548 = vpack.c.b16 %v1060, %v1052
    %v1549 = vpack.c.b16 %v1061, %v1053
    %v1550 = vpack.c.b16 %v1070, %v1062
    %v1551 = vpack.c.b16 %v1071, %v1063
    %v1552 = vpack.c.b16 %v1072, %v1064
    %v1553 = vpack.c.b16 %v1073, %v1065
    %v1554 = vpack.c.b16 %v1074, %v1066
    %v1555 = vpack.c.b16 %v1075, %v1067
    %v1556 = vpack.c.b16 %v1076, %v1068
    %v1557 = vpack.c.b16 %v1077, %v1069
    %v1558 = vpack.c.b16 %v1086, %v1078
    %v1559 = vpack.c.b16 %v1087, %v1079
    %v1560 = vpack.c.b16 %v1088, %v1080
    %v1561 = vpack.c.b16 %v1089, %v1081
    %v1562 = vpack.c.b16 %v1090, %v1082
    %v1563 = vpack.c.b16 %v1091, %v1083
    %v1564 = vpack.c.b16 %v1092, %v1084
    %v1565 = vpack.c.b16 %v1093, %v1085
    %v1566 = vpack.c.b16 %v1102, %v1094
    %v1567 = vpack.c.b16 %v1103, %v1095
    %v1568 = vpack.c.b16 %v1104, %v1096
    %v1569 = vpack.c.b16 %v1105, %v1097
    %v1570 = vpack.c.b16 %v1106, %v1098
    %v1571 = vpack.c.b16 %v1107, %v1099
    %v1572 = vpack.c.b16 %v1108, %v1100
    %v1573 = vpack.c.b16 %v1109, %v1101
    %v1574 = vpack.c.b16 %v1118, %v1110
    %v1575 = vpack.c.b16 %v1119, %v1111
    %v1576 = vpack.c.b16 %v1120, %v1112
    %v1577 = vpack.c.b16 %v1121, %v1113
    %v1578 = vpack.c.b16 %v1122, %v1114
    %v1579 = vpack.c.b16 %v1123, %v1115
    %v1580 = vpack.c.b16 %v1124, %v1116
    %v1581 = vpack.c.b16 %v1125, %v1117
    %v1582 = vpack.c.b16 %v1134, %v1126
    %v1583 = vpack.c.b16 %v1135, %v1127
    %v1584 = vpack.c.b16 %v1136, %v1128
    %v1585 = vpack.c.b16 %v1137, %v1129
    %v1586 = vpack.c.b16 %v1138, %v1130
    %v1587 = vpack.c.b16 %v1139, %v1131
    %v1588 = vpack.c.b16 %v1140, %v1132
    %v1589 = vpack.c.b16 %v1141, %v1133
    %v1590 = vpack.c.b16 %v1150, %v1142
    %v1591 = vpack.c.b16 %v1151, %v1143
    %v1592 = vpack.c.b16 %v1152, %v1144
    %v1593 = vpack.c.b16 %v1153, %v1145
    %v1594 = vpack.c.b16 %v1154, %v1146
    %v1595 = vpack.c.b16 %v1155, %v1147
    %v1596 = vpack.c.b16 %v1156, %v1148
    %v1597 = vpack.c.b16 %v1157, %v1149
    %v1598 = vpack.c.b16 %v1166, %v1158
    %v1599 = vpack.c.b16 %v1167, %v1159
    %v1600 = vpack.c.b16 %v1168, %v1160
    %v1601 = vpack.c.b16 %v1169, %v1161
    %v1602 = vpack.c.b16 %v1170, %v1162
    %v1603 = vpack.c.b16 %v1171, %v1163
    %v1604 = vpack.c.b16 %v1172, %v1164
    %v1605 = vpack.c.b16 %v1173, %v1165
    %v1606 = vpack.c.b16 %v1182, %v1174
    %v1607 = vpack.c.b16 %v1183, %v1175
    %v1608 = vpack.c.b16 %v1184, %v1176
    %v1609 = vpack.c.b16 %v1185, %v1177
    %v1610 = vpack.c.b16 %v1186, %v1178
    %v1611 = vpack.c.b16 %v1187, %v1179
    %v1612 = vpack.c.b16 %v1188, %v1180
    %v1613 = vpack.c.b16 %v1189, %v1181
    %v1614 = vpack.c.b16 %v1198, %v1190
    %v1615 = vpack.c.b16 %v1199, %v1191
    %v1616 = vpack.c.b16 %v1200, %v1192
    %v1617 = vpack.c.b16 %v1201, %v1193
    %v1618 = vpack.c.b16 %v1202, %v1194
    %v1619 = vpack.c.b16 %v1203, %v1195
    %v1620 = vpack.c.b16 %v1204, %v1196
    %v1621 = vpack.c.b16 %v1205, %v1197
    %v1622 = vpack.c.b16 %v1214, %v1206
    %v1623 = vpack.c.b16 %v1215, %v1207
    %v1624 = vpack.c.b16 %v1216, %v1208
    %v1625 = vpack.c.b16 %v1217, %v1209
    %v1626 = vpack.c.b16 %v1218, %v1210
    %v1627 = vpack.c.b16 %v1219, %v1211
    %v1628 = vpack.c.b16 %v1220, %v1212
    %v1629 = vpack.c.b16 %v1221, %v1213
    %v1630 = vpack.c.b16 %v1230, %v1222
    %v1631 = vpack.c.b16 %v1231, %v1223
    %v1632 = vpack.c.b16 %v1232, %v1224
    %v1633 = vpack.c.b16 %v1233, %v1225
    %v1634 = vpack.c.b16 %v1234, %v1226
    %v1635 = vpack.c.b16 %v1235, %v1227
    %v1636 = vpack.c.b16 %v1236, %v1228
    %v1637 = vpack.c.b16 %v1237, %v1229
    %v1638 = vpack.c.b16 %v1246, %v1238
    %v1639 = vpack.c.b16 %v1247, %v1239
    %v1640 = vpack.c.b16 %v1248, %v1240
    %v1641 = vpack.c.b16 %v1249, %v1241
    %v1642 = vpack.c.b16 %v1250, %v1242
    %v1643 = vpack.c.b16 %v1251, %v1243
    %v1644 = vpack.c.b16 %v1252, %v1244
    %v1645 = vpack.c.b16 %v1253, %v1245
    %v1646 = vpack.c.b16 %v1262, %v1254
    %v1647 = vpack.c.b16 %v1263, %v1255
    %v1648 = vpack.c.b16 %v1264, %v1256
    %v1649 = vpack.c.b16 %v1265, %v1257
    %v1650 = vpack.c.b16 %v1266, %v1258
    %v1651 = vpack.c.b16 %v1267, %v1259
    %v1652 = vpack.c.b16 %v1268, %v1260
    %v1653 = vpack.c.b16 %v1269, %v1261
    %v1654 = vpack.c.b16 %v1278, %v1270
    %v1655 = vpack.c.b16 %v1279, %v1271
    %v1656 = vpack.c.b16 %v1280, %v1272
    %v1657 = vpack.c.b16 %v1281, %v1273
    %v1658 = vpack.c.b16 %v1282, %v1274
    %v1659 = vpack.c.b16 %v1283, %v1275
    %v1660 = vpack.c.b16 %v1284, %v1276
    %v1661 = vpack.c.b16 %v1285, %v1277
    %v1662 = vpack.c.b16 %v1294, %v1286
    %v1663 = vpack.c.b16 %v1295, %v1287
    %v1664 = vpack.c.b16 %v1296, %v1288
    %v1665 = vpack.c.b16 %v1297, %v1289
    %v1666 = vpack.c.b16 %v1298, %v1290
    %v1667 = vpack.c.b16 %v1299, %v1291
    %v1668 = vpack.c.b16 %v1300, %v1292
    %v1669 = vpack.c.b16 %v1301, %v1293
    %v1670 = vpack.c.b16 %v1310, %v1302
    %v1671 = vpack.c.b16 %v1311, %v1303
    %v1672 = vpack.c.b16 %v1312, %v1304
    %v1673 = vpack.c.b16 %v1313, %v1305
    %v1674 = vpack.c.b16 %v1314, %v1306
    %v1675 = vpack.c.b16 %v1315, %v1307
    %v1676 = vpack.c.b16 %v1316, %v1308
    %v1677 = vpack.c.b16 %v1317, %v1309
    %v1678 = vpack.c.b16 %v1326, %v1318
    %v1679 = vpack.c.b16 %v1327, %v1319
    %v1680 = vpack.c.b16 %v1328, %v1320
    %v1681 = vpack.c.b16 %v1329, %v1321
    %v1682 = vpack.c.b16 %v1330, %v1322
    %v1683 = vpack.c.b16 %v1331, %v1323
    %v1684 = vpack.c.b16 %v1332, %v1324
    %v1685 = vpack.c.b16 %v1333, %v1325
    %v1686 = vpack.c.b16 %v1342, %v1334
    %v1687 = vpack.c.b16 %v1343, %v1335
    %v1688 = vpack.c.b16 %v1344, %v1336
    %v1689 = vpack.c.b16 %v1345, %v1337
    %v1690 = vpack.c.b16 %v1346, %v1338
    %v1691 = vpack.c.b16 %v1347, %v1339
    %v1692 = vpack.c.b16 %v1348, %v1340
    %v1693 = vpack.c.b16 %v1349, %v1341
    %v1694 = vpack.c.b16 %v1358, %v1350
    %v1695 = vpack.c.b16 %v1359, %v1351
    %v1696 = vpack.c.b16 %v1360, %v1352
    %v1697 = vpack.c.b16 %v1361, %v1353
    %v1698 = vpack.c.b16 %v1362, %v1354
    %v1699 = vpack.c.b16 %v1363, %v1355
    %v1700 = vpack.c.b16 %v1364, %v1356
    %v1701 = vpack.c.b16 %v1365, %v1357
    %v1702 = vpack.c.b16 %v1374, %v1366
    %v1703 = vpack.c.b16 %v1375, %v1367
    %v1704 = vpack.c.b16 %v1376, %v1368
    %v1705 = vpack.c.b16 %v1377, %v1369
    %v1706 = vpack.c.b16 %v1378, %v1370
    %v1707 = vpack.c.b16 %v1379, %v1371
    %v1708 = vpack.c.b16 %v1380, %v1372
    %v1709 = vpack.c.b16 %v1381, %v1373
    %v1710 = vpack.c.b16 %v1390, %v1382
    %v1711 = vpack.c.b16 %v1391, %v1383
    %v1712 = vpack.c.b16 %v1392, %v1384
    %v1713 = vpack.c.b16 %v1393, %v1385
    %v1714 = vpack.c.b16 %v1394, %v1386
    %v1715 = vpack.c.b16 %v1395, %v1387
    %v1716 = vpack.c.b16 %v1396, %v1388
    %v1717 = vpack.c.b16 %v1397, %v1389
    %v1718 = vpack.c.b16 %v1406, %v1398
    %v1719 = vpack.c.b16 %v1407, %v1399
    %v1720 = vpack.c.b16 %v1408, %v1400
    %v1721 = vpack.c.b16 %v1409, %v1401
    %v1722 = vpack.c.b16 %v1410, %v1402
    %v1723 = vpack.c.b16 %v1411, %v1403
    %v1724 = vpack.c.b16 %v1412, %v1404
    %v1725 = vpack.c.b16 %v1413, %v1405
    %v1726 = vpack.c.b16 %v1422, %v1414
    %v1727 = vpack.c.b16 %v1423, %v1415
    %v1728 = vpack.c.b16 %v1424, %v1416
    %v1729 = vpack.c.b16 %v1425, %v1417
    %v1730 = vpack.c.b16 %v1426, %v1418
    %v1731 = vpack.c.b16 %v1427, %v1419
    %v1732 = vpack.c.b16 %v1428, %v1420
    %v1733 = vpack.c.b16 %v1429, %v1421
    %v1734 = vpack.c.b16 %v1438, %v1430
    %v1735 = vpack.c.b16 %v1439, %v1431
    %v1736 = vpack.c.b16 %v1440, %v1432
    %v1737 = vpack.c.b16 %v1441, %v1433
    %v1738 = vpack.c.b16 %v1442, %v1434
    %v1739 = vpack.c.b16 %v1443, %v1435
    %v1740 = vpack.c.b16 %v1444, %v1436
    %v1741 = vpack.c.b16 %v1445, %v1437
    %v1742 = vpack.c.b16 %v1454, %v1446
    %v1743 = vpack.c.b16 %v1455, %v1447
    %v1744 = vpack.c.b16 %v1456, %v1448
    %v1745 = vpack.c.b16 %v1457, %v1449
    %v1746 = vpack.c.b16 %v1458, %v1450
    %v1747 = vpack.c.b16 %v1459, %v1451
    %v1748 = vpack.c.b16 %v1460, %v1452
    %v1749 = vpack.c.b16 %v1461, %v1453
    %v2039 = vsel %vm252, %v251, 0
    %2041 = vmatprep.subr.bf16.mxu0 %v1463
    %2042 = vmatpush1.bf16.msra.mxu0 %v1462
    %2043 = vmatprep.subr.bf16.mxu0 %v1471
    %2044 = vmatpush1.bf16.msra.mxu0 %v1470
    %2045 = vmatprep.subr.bf16.mxu0 %v1479
    %2046 = vmatpush1.bf16.msra.mxu0 %v1478
    %2047 = vmatprep.subr.bf16.mxu0 %v1487
    %2048 = vmatpush1.bf16.msra.mxu0 %v1486
    %2049 = vmatprep.subr.bf16.mxu0 %v1495
    %2050 = vmatpush1.bf16.msra.mxu0 %v1494
    %2051 = vmatprep.subr.bf16.mxu0 %v1503
    %2052 = vmatpush1.bf16.msra.mxu0 %v1502
    %2053 = vmatprep.subr.bf16.mxu0 %v1511
    %2054 = vmatpush1.bf16.msra.mxu0 %v1510
    %2055 = vmatprep.subr.bf16.mxu0 %v1519
    %2056 = vmatpush1.bf16.msra.mxu0 %v1518
    %2057 = vmatprep.subr.bf16.mxu0 %v1527
    %2058 = vmatpush1.bf16.msra.mxu0 %v1526
    %2059 = vmatprep.subr.bf16.mxu0 %v1535
    %2060 = vmatpush1.bf16.msra.mxu0 %v1534
    %2061 = vmatprep.subr.bf16.mxu0 %v1543
    %2062 = vmatpush1.bf16.msra.mxu0 %v1542
    %2063 = vmatprep.subr.bf16.mxu0 %v1551
    %2064 = vmatpush1.bf16.msra.mxu0 %v1550
    %2065 = vmatprep.subr.bf16.mxu0 %v1559
    %2066 = vmatpush1.bf16.msra.mxu0 %v1558
    %2067 = vmatprep.subr.bf16.mxu0 %v1567
    %2068 = vmatpush1.bf16.msra.mxu0 %v1566
    %2069 = vmatprep.subr.bf16.mxu0 %v1575
    %2070 = vmatpush1.bf16.msra.mxu0 %v1574
    %2071 = vmatprep.subr.bf16.mxu0 %v1583
    %2072 = vmatpush1.bf16.msra.mxu0 %v1582
    %2073 = vmatprep.mubr.bf16.mxu0 %v258
    %2074 = vmatmul.mubr.bf16.gmra.mrb[0].mxu0 %v254
    %v2075 = vpop.f32.mrb[0].mxu0
    %v2076 = vadd.f32 %v561, %v2075
    %v2077 = vpop.f32.mrb[0].mxu0
    %v2078 = vadd.f32 %v565, %v2077
    %v2079 = vpop.f32.mrb[0].mxu0
    %v2080 = vadd.f32 %v561, %v2079
    %v2081 = vpop.f32.mrb[0].mxu0
    %v2082 = vadd.f32 %v565, %v2081
    %2083 = vdwg.mxu0
    %2084 = vmatprep.subr.bf16.mxu0 %v1591
    %2085 = vmatpush1.bf16.msra.mxu0 %v1590
    %2086 = vmatprep.subr.bf16.mxu0 %v1599
    %2087 = vmatpush1.bf16.msra.mxu0 %v1598
    %2088 = vmatprep.subr.bf16.mxu0 %v1607
    %2089 = vmatpush1.bf16.msra.mxu0 %v1606
    %2090 = vmatprep.subr.bf16.mxu0 %v1615
    %2091 = vmatpush1.bf16.msra.mxu0 %v1614
    %2092 = vmatprep.subr.bf16.mxu0 %v1623
    %2093 = vmatpush1.bf16.msra.mxu0 %v1622
    %2094 = vmatprep.subr.bf16.mxu0 %v1631
    %2095 = vmatpush1.bf16.msra.mxu0 %v1630
    %2096 = vmatprep.subr.bf16.mxu0 %v1639
    %2097 = vmatpush1.bf16.msra.mxu0 %v1638
    %2098 = vmatprep.subr.bf16.mxu0 %v1647
    %2099 = vmatpush1.bf16.msra.mxu0 %v1646
    %2100 = vmatprep.subr.bf16.mxu0 %v1655
    %2101 = vmatpush1.bf16.msra.mxu0 %v1654
    %2102 = vmatprep.subr.bf16.mxu0 %v1663
    %2103 = vmatpush1.bf16.msra.mxu0 %v1662
    %2104 = vmatprep.subr.bf16.mxu0 %v1671
    %2105 = vmatpush1.bf16.msra.mxu0 %v1670
    %2106 = vmatprep.subr.bf16.mxu0 %v1679
    %2107 = vmatpush1.bf16.msra.mxu0 %v1678
    %2108 = vmatprep.subr.bf16.mxu0 %v1687
    %2109 = vmatpush1.bf16.msra.mxu0 %v1686
    %2110 = vmatprep.subr.bf16.mxu0 %v1695
    %2111 = vmatpush1.bf16.msra.mxu0 %v1694
    %2112 = vmatprep.subr.bf16.mxu0 %v1703
    %2113 = vmatpush1.bf16.msra.mxu0 %v1702
    %2114 = vmatprep.subr.bf16.mxu0 %v1711
    %2115 = vmatpush1.bf16.msra.mxu0 %v1710
    %2116 = vmatprep.mubr.bf16.mxu0 %v266
    %2117 = vmatmul.mubr.bf16.gmra.mrb[0].mxu0 %v262
    %v2118 = vpop.f32.mrb[0].mxu0
    %v2119 = vadd.f32 %v2076, %v2118
    %v2120 = vpop.f32.mrb[0].mxu0
    %v2121 = vadd.f32 %v2078, %v2120
    %v2122 = vpop.f32.mrb[0].mxu0
    %v2123 = vadd.f32 %v2080, %v2122
    %v2124 = vpop.f32.mrb[0].mxu0
    %v2125 = vadd.f32 %v2082, %v2124
    %2126 = vdwg.mxu0
    %2127 = vmatprep.subr.bf16.mxu0 %v1719
    %2128 = vmatpush1.bf16.msra.mxu0 %v1718
    %2129 = vmatprep.subr.bf16.mxu0 %v1727
    %2130 = vmatpush1.bf16.msra.mxu0 %v1726
    %2131 = vmatprep.subr.bf16.mxu0 %v1735
    %2132 = vmatpush1.bf16.msra.mxu0 %v1734
    %2133 = vmatprep.subr.bf16.mxu0 %v1743
    %2134 = vmatpush1.bf16.msra.mxu0 %v1742
    %2135 = vmatprep.subr.bf16.mxu0 0
    %2136 = vmatpush1.bf16.msra.mxu0 0
    %2137 = vmatprep.subr.bf16.mxu0 0
    %2138 = vmatpush1.bf16.msra.mxu0 0
    %2139 = vmatprep.subr.bf16.mxu0 0
    %2140 = vmatpush1.bf16.msra.mxu0 0
    %2141 = vmatprep.subr.bf16.mxu0 0
    %2142 = vmatpush1.bf16.msra.mxu0 0
    %2143 = vmatprep.subr.bf16.mxu0 0
    %2144 = vmatpush1.bf16.msra.mxu0 0
    %2145 = vmatprep.subr.bf16.mxu0 0
    %2146 = vmatpush1.bf16.msra.mxu0 0
    %2147 = vmatprep.subr.bf16.mxu0 0
    %2148 = vmatpush1.bf16.msra.mxu0 0
    %2149 = vmatprep.subr.bf16.mxu0 0
    %2150 = vmatpush1.bf16.msra.mxu0 0
    %2151 = vmatprep.subr.bf16.mxu0 0
    %2152 = vmatpush1.bf16.msra.mxu0 0
    %2153 = vmatprep.subr.bf16.mxu0 0
    %2154 = vmatpush1.bf16.msra.mxu0 0
    %2155 = vmatprep.subr.bf16.mxu0 0
    %2156 = vmatpush1.bf16.msra.mxu0 0
    %2157 = vmatprep.subr.bf16.mxu0 0
    %2158 = vmatpush1.bf16.msra.mxu0 0
    %2159 = vmatprep.mubr.bf16.mxu0 0
    %2160 = vmatmul.mubr.bf16.gmra.mrb[0].mxu0 %v2039
    %v2161 = vpop.f32.mrb[0].mxu0
    %v2162 = vadd.f32 %v2119, %v2161
    %v2163 = vpop.f32.mrb[0].mxu0
    %v2164 = vadd.f32 %v2121, %v2163
    %v2165 = vpop.f32.mrb[0].mxu0
    %v2166 = vadd.f32 %v2123, %v2165
    %v2167 = vpop.f32.mrb[0].mxu0
    %v2168 = vadd.f32 %v2125, %v2167
    %2169 = vdwg.mxu0
    %2170 = vmatprep.subr.bf16.mxu0 %v1465
    %2171 = vmatpush1.bf16.msra.mxu0 %v1464
    %2172 = vmatprep.subr.bf16.mxu0 %v1473
    %2173 = vmatpush1.bf16.msra.mxu0 %v1472
    %2174 = vmatprep.subr.bf16.mxu0 %v1481
    %2175 = vmatpush1.bf16.msra.mxu0 %v1480
    %2176 = vmatprep.subr.bf16.mxu0 %v1489
    %2177 = vmatpush1.bf16.msra.mxu0 %v1488
    %2178 = vmatprep.subr.bf16.mxu0 %v1497
    %2179 = vmatpush1.bf16.msra.mxu0 %v1496
    %2180 = vmatprep.subr.bf16.mxu0 %v1505
    %2181 = vmatpush1.bf16.msra.mxu0 %v1504
    %2182 = vmatprep.subr.bf16.mxu0 %v1513
    %2183 = vmatpush1.bf16.msra.mxu0 %v1512
    %2184 = vmatprep.subr.bf16.mxu0 %v1521
    %2185 = vmatpush1.bf16.msra.mxu0 %v1520
    %2186 = vmatprep.subr.bf16.mxu0 %v1529
    %2187 = vmatpush1.bf16.msra.mxu0 %v1528
    %2188 = vmatprep.subr.bf16.mxu0 %v1537
    %2189 = vmatpush1.bf16.msra.mxu0 %v1536
    %2190 = vmatprep.subr.bf16.mxu0 %v1545
    %2191 = vmatpush1.bf16.msra.mxu0 %v1544
    %2192 = vmatprep.subr.bf16.mxu0 %v1553
    %2193 = vmatpush1.bf16.msra.mxu0 %v1552
    %2194 = vmatprep.subr.bf16.mxu0 %v1561
    %2195 = vmatpush1.bf16.msra.mxu0 %v1560
    %2196 = vmatprep.subr.bf16.mxu0 %v1569
    %2197 = vmatpush1.bf16.msra.mxu0 %v1568
    %2198 = vmatprep.subr.bf16.mxu0 %v1577
    %2199 = vmatpush1.bf16.msra.mxu0 %v1576
    %2200 = vmatprep.subr.bf16.mxu0 %v1585
    %2201 = vmatpush1.bf16.msra.mxu0 %v1584
    %2202 = vmatprep.mubr.bf16.mxu0 %v258
    %2203 = vmatmul.mubr.bf16.gmra.mrb[0].mxu0 %v254
    %v2204 = vpop.f32.mrb[0].mxu0
    %v2205 = vadd.f32 %v569, %v2204
    %v2206 = vpop.f32.mrb[0].mxu0
    %v2207 = vadd.f32 %v573, %v2206
    %v2208 = vpop.f32.mrb[0].mxu0
    %v2209 = vadd.f32 %v569, %v2208
    %v2210 = vpop.f32.mrb[0].mxu0
    %v2211 = vadd.f32 %v573, %v2210
    %2212 = vdwg.mxu0
    %2213 = vmatprep.subr.bf16.mxu0 %v1593
    %2214 = vmatpush1.bf16.msra.mxu0 %v1592
    %2215 = vmatprep.subr.bf16.mxu0 %v1601
    %2216 = vmatpush1.bf16.msra.mxu0 %v1600
    %2217 = vmatprep.subr.bf16.mxu0 %v1609
    %2218 = vmatpush1.bf16.msra.mxu0 %v1608
    %2219 = vmatprep.subr.bf16.mxu0 %v1617
    %2220 = vmatpush1.bf16.msra.mxu0 %v1616
    %2221 = vmatprep.subr.bf16.mxu0 %v1625
    %2222 = vmatpush1.bf16.msra.mxu0 %v1624
    %2223 = vmatprep.subr.bf16.mxu0 %v1633
    %2224 = vmatpush1.bf16.msra.mxu0 %v1632
    %2225 = vmatprep.subr.bf16.mxu0 %v1641
    %2226 = vmatpush1.bf16.msra.mxu0 %v1640
    %2227 = vmatprep.subr.bf16.mxu0 %v1649
    %2228 = vmatpush1.bf16.msra.mxu0 %v1648
    %2229 = vmatprep.subr.bf16.mxu0 %v1657
    %2230 = vmatpush1.bf16.msra.mxu0 %v1656
    %2231 = vmatprep.subr.bf16.mxu0 %v1665
    %2232 = vmatpush1.bf16.msra.mxu0 %v1664
    %2233 = vmatprep.subr.bf16.mxu0 %v1673
    %2234 = vmatpush1.bf16.msra.mxu0 %v1672
    %2235 = vmatprep.subr.bf16.mxu0 %v1681
    %2236 = vmatpush1.bf16.msra.mxu0 %v1680
    %2237 = vmatprep.subr.bf16.mxu0 %v1689
    %2238 = vmatpush1.bf16.msra.mxu0 %v1688
    %2239 = vmatprep.subr.bf16.mxu0 %v1697
    %2240 = vmatpush1.bf16.msra.mxu0 %v1696
    %2241 = vmatprep.subr.bf16.mxu0 %v1705
    %2242 = vmatpush1.bf16.msra.mxu0 %v1704
    %2243 = vmatprep.subr.bf16.mxu0 %v1713
    %2244 = vmatpush1.bf16.msra.mxu0 %v1712
    %2245 = vmatprep.mubr.bf16.mxu0 %v266
    %2246 = vmatmul.mubr.bf16.gmra.mrb[0].mxu0 %v262
    %v2247 = vpop.f32.mrb[0].mxu0
    %v2248 = vadd.f32 %v2205, %v2247
    %v2249 = vpop.f32.mrb[0].mxu0
    %v2250 = vadd.f32 %v2207, %v2249
    %v2251 = vpop.f32.mrb[0].mxu0
    %v2252 = vadd.f32 %v2209, %v2251
    %v2253 = vpop.f32.mrb[0].mxu0
    %v2254 = vadd.f32 %v2211, %v2253
    %2255 = vdwg.mxu0
    %2256 = vmatprep.subr.bf16.mxu0 %v1721
    %2257 = vmatpush1.bf16.msra.mxu0 %v1720
    %2258 = vmatprep.subr.bf16.mxu0 %v1729
    %2259 = vmatpush1.bf16.msra.mxu0 %v1728
    %2260 = vmatprep.subr.bf16.mxu0 %v1737
    %2261 = vmatpush1.bf16.msra.mxu0 %v1736
    %2262 = vmatprep.subr.bf16.mxu0 %v1745
    %2263 = vmatpush1.bf16.msra.mxu0 %v1744
    %2264 = vmatprep.subr.bf16.mxu0 0
    %2265 = vmatpush1.bf16.msra.mxu0 0
    %2266 = vmatprep.subr.bf16.mxu0 0
    %2267 = vmatpush1.bf16.msra.mxu0 0
    %2268 = vmatprep.subr.bf16.mxu0 0
    %2269 = vmatpush1.bf16.msra.mxu0 0
    %2270 = vmatprep.subr.bf16.mxu0 0
    %2271 = vmatpush1.bf16.msra.mxu0 0
    %2272 = vmatprep.subr.bf16.mxu0 0
    %2273 = vmatpush1.bf16.msra.mxu0 0
    %2274 = vmatprep.subr.bf16.mxu0 0
    %2275 = vmatpush1.bf16.msra.mxu0 0
    %2276 = vmatprep.subr.bf16.mxu0 0
    %2277 = vmatpush1.bf16.msra.mxu0 0
    %2278 = vmatprep.subr.bf16.mxu0 0
    %2279 = vmatpush1.bf16.msra.mxu0 0
    %2280 = vmatprep.subr.bf16.mxu0 0
    %2281 = vmatpush1.bf16.msra.mxu0 0
    %2282 = vmatprep.subr.bf16.mxu0 0
    %2283 = vmatpush1.bf16.msra.mxu0 0
    %2284 = vmatprep.subr.bf16.mxu0 0
    %2285 = vmatpush1.bf16.msra.mxu0 0
    %2286 = vmatprep.subr.bf16.mxu0 0
    %2287 = vmatpush1.bf16.msra.mxu0 0
    %2288 = vmatprep.mubr.bf16.mxu0 0
    %2289 = vmatmul.mubr.bf16.gmra.mrb[0].mxu0 %v2039
    %v2290 = vpop.f32.mrb[0].mxu0
    %v2291 = vadd.f32 %v2248, %v2290
    %v2292 = vpop.f32.mrb[0].mxu0
    %v2293 = vadd.f32 %v2250, %v2292
    %v2294 = vpop.f32.mrb[0].mxu0
    %v2295 = vadd.f32 %v2252, %v2294
    %v2296 = vpop.f32.mrb[0].mxu0
    %v2297 = vadd.f32 %v2254, %v2296
    %2298 = vdwg.mxu0
    %2299 = vmatprep.subr.bf16.mxu0 %v1467
    %2300 = vmatpush1.bf16.msra.mxu0 %v1466
    %2301 = vmatprep.subr.bf16.mxu0 %v1475
    %2302 = vmatpush1.bf16.msra.mxu0 %v1474
    %2303 = vmatprep.subr.bf16.mxu0 %v1483
    %2304 = vmatpush1.bf16.msra.mxu0 %v1482
    %2305 = vmatprep.subr.bf16.mxu0 %v1491
    %2306 = vmatpush1.bf16.msra.mxu0 %v1490
    %2307 = vmatprep.subr.bf16.mxu0 %v1499
    %2308 = vmatpush1.bf16.msra.mxu0 %v1498
    %2309 = vmatprep.subr.bf16.mxu0 %v1507
    %2310 = vmatpush1.bf16.msra.mxu0 %v1506
    %2311 = vmatprep.subr.bf16.mxu0 %v1515
    %2312 = vmatpush1.bf16.msra.mxu0 %v1514
    %2313 = vmatprep.subr.bf16.mxu0 %v1523
    %2314 = vmatpush1.bf16.msra.mxu0 %v1522
    %2315 = vmatprep.subr.bf16.mxu0 %v1531
    %2316 = vmatpush1.bf16.msra.mxu0 %v1530
    %2317 = vmatprep.subr.bf16.mxu0 %v1539
    %2318 = vmatpush1.bf16.msra.mxu0 %v1538
    %2319 = vmatprep.subr.bf16.mxu0 %v1547
    %2320 = vmatpush1.bf16.msra.mxu0 %v1546
    %2321 = vmatprep.subr.bf16.mxu0 %v1555
    %2322 = vmatpush1.bf16.msra.mxu0 %v1554
    %2323 = vmatprep.subr.bf16.mxu0 %v1563
    %2324 = vmatpush1.bf16.msra.mxu0 %v1562
    %2325 = vmatprep.subr.bf16.mxu0 %v1571
    %2326 = vmatpush1.bf16.msra.mxu0 %v1570
    %2327 = vmatprep.subr.bf16.mxu0 %v1579
    %2328 = vmatpush1.bf16.msra.mxu0 %v1578
    %2329 = vmatprep.subr.bf16.mxu0 %v1587
    %2330 = vmatpush1.bf16.msra.mxu0 %v1586
    %2331 = vmatprep.mubr.bf16.mxu0 %v258
    %2332 = vmatmul.mubr.bf16.gmra.mrb[0].mxu0 %v254
    %v2333 = vpop.f32.mrb[0].mxu0
    %v2334 = vadd.f32 %v577, %v2333
    %v2335 = vpop.f32.mrb[0].mxu0
    %v2336 = vadd.f32 %v581, %v2335
    %v2337 = vpop.f32.mrb[0].mxu0
    %v2338 = vadd.f32 %v577, %v2337
    %v2339 = vpop.f32.mrb[0].mxu0
    %v2340 = vadd.f32 %v581, %v2339
    %2341 = vdwg.mxu0
    %2342 = vmatprep.subr.bf16.mxu0 %v1595
    %2343 = vmatpush1.bf16.msra.mxu0 %v1594
    %2344 = vmatprep.subr.bf16.mxu0 %v1603
    %2345 = vmatpush1.bf16.msra.mxu0 %v1602
    %2346 = vmatprep.subr.bf16.mxu0 %v1611
    %2347 = vmatpush1.bf16.msra.mxu0 %v1610
    %2348 = vmatprep.subr.bf16.mxu0 %v1619
    %2349 = vmatpush1.bf16.msra.mxu0 %v1618
    %2350 = vmatprep.subr.bf16.mxu0 %v1627
    %2351 = vmatpush1.bf16.msra.mxu0 %v1626
    %2352 = vmatprep.subr.bf16.mxu0 %v1635
    %2353 = vmatpush1.bf16.msra.mxu0 %v1634
    %2354 = vmatprep.subr.bf16.mxu0 %v1643
    %2355 = vmatpush1.bf16.msra.mxu0 %v1642
    %2356 = vmatprep.subr.bf16.mxu0 %v1651
    %2357 = vmatpush1.bf16.msra.mxu0 %v1650
    %2358 = vmatprep.subr.bf16.mxu0 %v1659
    %2359 = vmatpush1.bf16.msra.mxu0 %v1658
    %2360 = vmatprep.subr.bf16.mxu0 %v1667
    %2361 = vmatpush1.bf16.msra.mxu0 %v1666
    %2362 = vmatprep.subr.bf16.mxu0 %v1675
    %2363 = vmatpush1.bf16.msra.mxu0 %v1674
    %2364 = vmatprep.subr.bf16.mxu0 %v1683
    %2365 = vmatpush1.bf16.msra.mxu0 %v1682
    %2366 = vmatprep.subr.bf16.mxu0 %v1691
    %2367 = vmatpush1.bf16.msra.mxu0 %v1690
    %2368 = vmatprep.subr.bf16.mxu0 %v1699
    %2369 = vmatpush1.bf16.msra.mxu0 %v1698
    %2370 = vmatprep.subr.bf16.mxu0 %v1707
    %2371 = vmatpush1.bf16.msra.mxu0 %v1706
    %2372 = vmatprep.subr.bf16.mxu0 %v1715
    %2373 = vmatpush1.bf16.msra.mxu0 %v1714
    %2374 = vmatprep.mubr.bf16.mxu0 %v266
    %2375 = vmatmul.mubr.bf16.gmra.mrb[0].mxu0 %v262
    %v2376 = vpop.f32.mrb[0].mxu0
    %v2377 = vadd.f32 %v2334, %v2376
    %v2378 = vpop.f32.mrb[0].mxu0
    %v2379 = vadd.f32 %v2336, %v2378
    %v2380 = vpop.f32.mrb[0].mxu0
    %v2381 = vadd.f32 %v2338, %v2380
    %v2382 = vpop.f32.mrb[0].mxu0
    %v2383 = vadd.f32 %v2340, %v2382
    %2384 = vdwg.mxu0
    %2385 = vmatprep.subr.bf16.mxu0 %v1723
    %2386 = vmatpush1.bf16.msra.mxu0 %v1722
    %2387 = vmatprep.subr.bf16.mxu0 %v1731
    %2388 = vmatpush1.bf16.msra.mxu0 %v1730
    %2389 = vmatprep.subr.bf16.mxu0 %v1739
    %2390 = vmatpush1.bf16.msra.mxu0 %v1738
    %2391 = vmatprep.subr.bf16.mxu0 %v1747
    %2392 = vmatpush1.bf16.msra.mxu0 %v1746
    %2393 = vmatprep.subr.bf16.mxu0 0
    %2394 = vmatpush1.bf16.msra.mxu0 0
    %2395 = vmatprep.subr.bf16.mxu0 0
    %2396 = vmatpush1.bf16.msra.mxu0 0
    %2397 = vmatprep.subr.bf16.mxu0 0
    %2398 = vmatpush1.bf16.msra.mxu0 0
    %2399 = vmatprep.subr.bf16.mxu0 0
    %2400 = vmatpush1.bf16.msra.mxu0 0
    %2401 = vmatprep.subr.bf16.mxu0 0
    %2402 = vmatpush1.bf16.msra.mxu0 0
    %2403 = vmatprep.subr.bf16.mxu0 0
    %2404 = vmatpush1.bf16.msra.mxu0 0
    %2405 = vmatprep.subr.bf16.mxu0 0
    %2406 = vmatpush1.bf16.msra.mxu0 0
    %2407 = vmatprep.subr.bf16.mxu0 0
    %2408 = vmatpush1.bf16.msra.mxu0 0
    %2409 = vmatprep.subr.bf16.mxu0 0
    %2410 = vmatpush1.bf16.msra.mxu0 0
    %2411 = vmatprep.subr.bf16.mxu0 0
    %2412 = vmatpush1.bf16.msra.mxu0 0
    %2413 = vmatprep.subr.bf16.mxu0 0
    %2414 = vmatpush1.bf16.msra.mxu0 0
    %2415 = vmatprep.subr.bf16.mxu0 0
    %2416 = vmatpush1.bf16.msra.mxu0 0
    %2417 = vmatprep.mubr.bf16.mxu0 0
    %2418 = vmatmul.mubr.bf16.gmra.mrb[0].mxu0 %v2039
    %v2419 = vpop.f32.mrb[0].mxu0
    %v2420 = vadd.f32 %v2377, %v2419
    %v2421 = vpop.f32.mrb[0].mxu0
    %v2422 = vadd.f32 %v2379, %v2421
    %v2423 = vpop.f32.mrb[0].mxu0
    %v2424 = vadd.f32 %v2381, %v2423
    %v2425 = vpop.f32.mrb[0].mxu0
    %v2426 = vadd.f32 %v2383, %v2425
    %2427 = vdwg.mxu0
    %2428 = vmatprep.subr.bf16.mxu0 %v1469
    %2429 = vmatpush1.bf16.msra.mxu0 %v1468
    %2430 = vmatprep.subr.bf16.mxu0 %v1477
    %2431 = vmatpush1.bf16.msra.mxu0 %v1476
    %2432 = vmatprep.subr.bf16.mxu0 %v1485
    %2433 = vmatpush1.bf16.msra.mxu0 %v1484
    %2434 = vmatprep.subr.bf16.mxu0 %v1493
    %2435 = vmatpush1.bf16.msra.mxu0 %v1492
    %2436 = vmatprep.subr.bf16.mxu0 %v1501
    %2437 = vmatpush1.bf16.msra.mxu0 %v1500
    %2438 = vmatprep.subr.bf16.mxu0 %v1509
    %2439 = vmatpush1.bf16.msra.mxu0 %v1508
    %2440 = vmatprep.subr.bf16.mxu0 %v1517
    %2441 = vmatpush1.bf16.msra.mxu0 %v1516
    %2442 = vmatprep.subr.bf16.mxu0 %v1525
    %2443 = vmatpush1.bf16.msra.mxu0 %v1524
    %2444 = vmatprep.subr.bf16.mxu0 %v1533
    %2445 = vmatpush1.bf16.msra.mxu0 %v1532
    %2446 = vmatprep.subr.bf16.mxu0 %v1541
    %2447 = vmatpush1.bf16.msra.mxu0 %v1540
    %2448 = vmatprep.subr.bf16.mxu0 %v1549
    %2449 = vmatpush1.bf16.msra.mxu0 %v1548
    %2450 = vmatprep.subr.bf16.mxu0 %v1557
    %2451 = vmatpush1.bf16.msra.mxu0 %v1556
    %2452 = vmatprep.subr.bf16.mxu0 %v1565
    %2453 = vmatpush1.bf16.msra.mxu0 %v1564
    %2454 = vmatprep.subr.bf16.mxu0 %v1573
    %2455 = vmatpush1.bf16.msra.mxu0 %v1572
    %2456 = vmatprep.subr.bf16.mxu0 %v1581
    %2457 = vmatpush1.bf16.msra.mxu0 %v1580
    %2458 = vmatprep.subr.bf16.mxu0 %v1589
    %2459 = vmatpush1.bf16.msra.mxu0 %v1588
    %2460 = vmatprep.mubr.bf16.mxu0 %v258
    %2461 = vmatmul.mubr.bf16.gmra.mrb[0].mxu0 %v254
    %v2462 = vpop.f32.mrb[0].mxu0
    %v2463 = vadd.f32 %v585, %v2462
    %v2464 = vpop.f32.mrb[0].mxu0
    %v2465 = vadd.f32 %v589, %v2464
    %v2466 = vpop.f32.mrb[0].mxu0
    %v2467 = vadd.f32 %v585, %v2466
    %v2468 = vpop.f32.mrb[0].mxu0
    %v2469 = vadd.f32 %v589, %v2468
    %2470 = vdwg.mxu0
    %2471 = vmatprep.subr.bf16.mxu0 %v1597
    %2472 = vmatpush1.bf16.msra.mxu0 %v1596
    %2473 = vmatprep.subr.bf16.mxu0 %v1605
    %2474 = vmatpush1.bf16.msra.mxu0 %v1604
    %2475 = vmatprep.subr.bf16.mxu0 %v1613
    %2476 = vmatpush1.bf16.msra.mxu0 %v1612
    %2477 = vmatprep.subr.bf16.mxu0 %v1621
    %2478 = vmatpush1.bf16.msra.mxu0 %v1620
    %2479 = vmatprep.subr.bf16.mxu0 %v1629
    %2480 = vmatpush1.bf16.msra.mxu0 %v1628
    %2481 = vmatprep.subr.bf16.mxu0 %v1637
    %2482 = vmatpush1.bf16.msra.mxu0 %v1636
    %2483 = vmatprep.subr.bf16.mxu0 %v1645
    %2484 = vmatpush1.bf16.msra.mxu0 %v1644
    %2485 = vmatprep.subr.bf16.mxu0 %v1653
    %2486 = vmatpush1.bf16.msra.mxu0 %v1652
    %2487 = vmatprep.subr.bf16.mxu0 %v1661
    %2488 = vmatpush1.bf16.msra.mxu0 %v1660
    %2489 = vmatprep.subr.bf16.mxu0 %v1669
    %2490 = vmatpush1.bf16.msra.mxu0 %v1668
    %2491 = vmatprep.subr.bf16.mxu0 %v1677
    %2492 = vmatpush1.bf16.msra.mxu0 %v1676
    %2493 = vmatprep.subr.bf16.mxu0 %v1685
    %2494 = vmatpush1.bf16.msra.mxu0 %v1684
    %2495 = vmatprep.subr.bf16.mxu0 %v1693
    %2496 = vmatpush1.bf16.msra.mxu0 %v1692
    %2497 = vmatprep.subr.bf16.mxu0 %v1701
    %2498 = vmatpush1.bf16.msra.mxu0 %v1700
    %2499 = vmatprep.subr.bf16.mxu0 %v1709
    %2500 = vmatpush1.bf16.msra.mxu0 %v1708
    %2501 = vmatprep.subr.bf16.mxu0 %v1717
    %2502 = vmatpush1.bf16.msra.mxu0 %v1716
    %2503 = vmatprep.mubr.bf16.mxu0 %v266
    %2504 = vmatmul.mubr.bf16.gmra.mrb[0].mxu0 %v262
    %v2505 = vpop.f32.mrb[0].mxu0
    %v2506 = vadd.f32 %v2463, %v2505
    %v2507 = vpop.f32.mrb[0].mxu0
    %v2508 = vadd.f32 %v2465, %v2507
    %v2509 = vpop.f32.mrb[0].mxu0
    %v2510 = vadd.f32 %v2467, %v2509
    %v2511 = vpop.f32.mrb[0].mxu0
    %v2512 = vadd.f32 %v2469, %v2511
    %2513 = vdwg.mxu0
    %2514 = vmatprep.subr.bf16.mxu0 %v1725
    %2515 = vmatpush1.bf16.msra.mxu0 %v1724
    %2516 = vmatprep.subr.bf16.mxu0 %v1733
    %2517 = vmatpush1.bf16.msra.mxu0 %v1732
    %2518 = vmatprep.subr.bf16.mxu0 %v1741
    %2519 = vmatpush1.bf16.msra.mxu0 %v1740
    %2520 = vmatprep.subr.bf16.mxu0 %v1749
    %2521 = vmatpush1.bf16.msra.mxu0 %v1748
    %2522 = vmatprep.subr.bf16.mxu0 0
    %2523 = vmatpush1.bf16.msra.mxu0 0
    %2524 = vmatprep.subr.bf16.mxu0 0
    %2525 = vmatpush1.bf16.msra.mxu0 0
    %2526 = vmatprep.subr.bf16.mxu0 0
    %2527 = vmatpush1.bf16.msra.mxu0 0
    %2528 = vmatprep.subr.bf16.mxu0 0
    %2529 = vmatpush1.bf16.msra.mxu0 0
    %2530 = vmatprep.subr.bf16.mxu0 0
    %2531 = vmatpush1.bf16.msra.mxu0 0
    %2532 = vmatprep.subr.bf16.mxu0 0
    %2533 = vmatpush1.bf16.msra.mxu0 0
    %2534 = vmatprep.subr.bf16.mxu0 0
    %2535 = vmatpush1.bf16.msra.mxu0 0
    %2536 = vmatprep.subr.bf16.mxu0 0
    %2537 = vmatpush1.bf16.msra.mxu0 0
    %2538 = vmatprep.subr.bf16.mxu0 0
    %2539 = vmatpush1.bf16.msra.mxu0 0
    %2540 = vmatprep.subr.bf16.mxu0 0
    %2541 = vmatpush1.bf16.msra.mxu0 0
    %2542 = vmatprep.subr.bf16.mxu0 0
    %2543 = vmatpush1.bf16.msra.mxu0 0
    %2544 = vmatprep.subr.bf16.mxu0 0
    %2545 = vmatpush1.bf16.msra.mxu0 0
    %2546 = vmatprep.mubr.bf16.mxu0 0
    %2547 = vmatmul.mubr.bf16.gmra.mrb[0].mxu0 %v2039
    %v2548 = vpop.f32.mrb[0].mxu0
    %v2549 = vadd.f32 %v2506, %v2548
    %v2550 = vpop.f32.mrb[0].mxu0
    %v2551 = vadd.f32 %v2508, %v2550
    %v2552 = vpop.f32.mrb[0].mxu0
    %v2553 = vadd.f32 %v2510, %v2552
    %v2554 = vpop.f32.mrb[0].mxu0
    %v2555 = vadd.f32 %v2512, %v2554
    %2556 = vdwg.mxu0
    %v2557 = vmax.f32 %v2162, 0.0
    %v2558 = vmax.f32 %v2164, 0.0
    %v2559 = vmax.f32 %v2291, 0.0
    %v2560 = vmax.f32 %v2293, 0.0
    %v2561 = vmax.f32 %v2420, 0.0
    %v2562 = vmax.f32 %v2422, 0.0
    %v2563 = vmax.f32 %v2549, 0.0
    %v2564 = vmax.f32 %v2551, 0.0
    %v2565 = vmax.f32 %v2166, 0.0
    %v2566 = vmax.f32 %v2168, 0.0
    %v2567 = vmax.f32 %v2295, 0.0
    %v2568 = vmax.f32 %v2297, 0.0
    %v2569 = vmax.f32 %v2424, 0.0
    %v2570 = vmax.f32 %v2426, 0.0
    %v2571 = vmax.f32 %v2553, 0.0
    %v2572 = vmax.f32 %v2555, 0.0
    %v2573 = vpack.c.bf16 %v2565, %v2557
    %v2574 = vpack.c.bf16 %v2566, %v2558
    %v2575 = vpack.c.bf16 %v2567, %v2559
    %v2576 = vpack.c.bf16 %v2568, %v2560
    %v2577 = vpack.c.bf16 %v2569, %v2561
    %v2578 = vpack.c.bf16 %v2570, %v2562
    %v2579 = vpack.c.bf16 %v2571, %v2563
    %v2580 = vpack.c.bf16 %v2572, %v2564
    %v2581 = vld [vmem:[#allocation9] sm:$0xff]
    %v2582 = vld [vmem:[#allocation9 + $0x8] sm:$0xff]
    %v2583 = vld [vmem:[#allocation9 + $0x10] sm:$0xff]
    %v2584 = vld [vmem:[#allocation9 + $0x18] sm:$0xff]
    %v2585 = vld [vmem:[#allocation9 + $0x20] sm:$0xff]
    %v2586 = vld [vmem:[#allocation9 + $0x28] sm:$0xff]
    %v2587 = vld [vmem:[#allocation9 + $0x30] sm:$0xff]
    %v2588 = vld [vmem:[#allocation9 + $0x38] sm:$0xff]
    %v2589 = vld [vmem:[#allocation9 + $0x40] sm:$0xff]
    %v2590 = vld [vmem:[#allocation9 + $0x48] sm:$0xff]
    %v2591 = vld [vmem:[#allocation9 + $0x50] sm:$0xff]
    %v2592 = vld [vmem:[#allocation9 + $0x58] sm:$0xff]
    %v2593 = vld [vmem:[#allocation9 + $0x60] sm:$0xff]
    %v2594 = vld [vmem:[#allocation9 + $0x68] sm:$0xff]
    %v2595 = vld [vmem:[#allocation9 + $0x70] sm:$0xff]
    %v2596 = vld [vmem:[#allocation9 + $0x78] sm:$0xff]
    %v2597 = vld [vmem:[#allocation9 + $0x80] sm:$0xff]
    %v2598 = vld [vmem:[#allocation9 + $0x88] sm:$0xff]
    %v2599 = vld [vmem:[#allocation9 + $0x90] sm:$0xff]
    %v2600 = vld [vmem:[#allocation9 + $0x98] sm:$0xff]
    %v2601 = vld [vmem:[#allocation9 + $0xa0] sm:$0xff]
    %v2602 = vld [vmem:[#allocation9 + $0xa8] sm:$0xff]
    %v2603 = vld [vmem:[#allocation9 + $0xb0] sm:$0xff]
    %v2604 = vld [vmem:[#allocation9 + $0xb8] sm:$0xff]
    %v2605 = vld [vmem:[#allocation9 + $0xc0] sm:$0xff]
    %v2606 = vld [vmem:[#allocation9 + $0xc8] sm:$0xff]
    %v2607 = vld [vmem:[#allocation9 + $0xd0] sm:$0xff]
    %v2608 = vld [vmem:[#allocation9 + $0xd8] sm:$0xff]
    %v2609 = vld [vmem:[#allocation9 + $0xe0] sm:$0xff]
    %v2610 = vld [vmem:[#allocation9 + $0xe8] sm:$0xff]
    %v2611 = vld [vmem:[#allocation9 + $0xf0] sm:$0xff]
    %v2612 = vld [vmem:[#allocation9 + $0xf8] sm:$0xff]
    %v2613 = vld [vmem:[#allocation9 + $0x100] sm:$0xff]
    %v2614 = vld [vmem:[#allocation9 + $0x108] sm:$0xff]
    %v2615 = vld [vmem:[#allocation9 + $0x110] sm:$0xff]
    %v2616 = vld [vmem:[#allocation9 + $0x118] sm:$0xff]
    %v2617 = vld [vmem:[#allocation9 + $0x120] sm:$0xff]
    %v2618 = vld [vmem:[#allocation9 + $0x128] sm:$0xff]
    %v2619 = vld [vmem:[#allocation9 + $0x130] sm:$0xff]
    %v2620 = vld [vmem:[#allocation9 + $0x138] sm:$0xff]
    %v2621 = vld [vmem:[#allocation9 + $0x140] sm:$0xff]
    %v2622 = vld [vmem:[#allocation9 + $0x148] sm:$0xff]
    %v2623 = vld [vmem:[#allocation9 + $0x150] sm:$0xff]
    %v2624 = vld [vmem:[#allocation9 + $0x158] sm:$0xff]
    %v2625 = vld [vmem:[#allocation9 + $0x160] sm:$0xff]
    %v2626 = vld [vmem:[#allocation9 + $0x168] sm:$0xff]
    %v2627 = vld [vmem:[#allocation9 + $0x170] sm:$0xff]
    %v2628 = vld [vmem:[#allocation9 + $0x178] sm:$0xff]
    %v2629 = vld [vmem:[#allocation9 + $0x180] sm:$0xff]
    %v2630 = vld [vmem:[#allocation9 + $0x188] sm:$0xff]
    %v2631 = vld [vmem:[#allocation9 + $0x190] sm:$0xff]
    %v2632 = vld [vmem:[#allocation9 + $0x198] sm:$0xff]
    %v2633 = vld [vmem:[#allocation9 + $0x1a0] sm:$0xff]
    %v2634 = vld [vmem:[#allocation9 + $0x1a8] sm:$0xff]
    %v2635 = vld [vmem:[#allocation9 + $0x1b0] sm:$0xff]
    %v2636 = vld [vmem:[#allocation9 + $0x1b8] sm:$0xff]
    %v2637 = vld [vmem:[#allocation9 + $0x1c0] sm:$0xff]
    %v2638 = vld [vmem:[#allocation9 + $0x1c8] sm:$0xff]
    %v2639 = vld [vmem:[#allocation9 + $0x1d0] sm:$0xff]
    %v2640 = vld [vmem:[#allocation9 + $0x1d8] sm:$0xff]
    %v2641 = vld [vmem:[#allocation9 + $0x1e0] sm:$0xff]
    %v2642 = vld [vmem:[#allocation9 + $0x1e8] sm:$0xff]
    %v2643 = vld [vmem:[#allocation9 + $0x1f0] sm:$0xff]
    %v2644 = vld [vmem:[#allocation9 + $0x1f8] sm:$0xff]
    %v2645 = vld [vmem:[#allocation9 + $0x200] sm:$0xff]
    %v2646 = vld [vmem:[#allocation9 + $0x208] sm:$0xff]
    %v2647 = vld [vmem:[#allocation9 + $0x210] sm:$0xff]
    %v2648 = vld [vmem:[#allocation9 + $0x218] sm:$0xff]
    %v2649 = vld [vmem:[#allocation9 + $0x220] sm:$0xff]
    %v2650 = vld [vmem:[#allocation9 + $0x228] sm:$0xff]
    %v2651 = vld [vmem:[#allocation9 + $0x230] sm:$0xff]
    %v2652 = vld [vmem:[#allocation9 + $0x238] sm:$0xff]
    %v2653 = vld [vmem:[#allocation9 + $0x240] sm:$0xff]
    %v2654 = vld [vmem:[#allocation9 + $0x248] sm:$0xff]
    %v2655 = vld [vmem:[#allocation9 + $0x250] sm:$0xff]
    %v2656 = vld [vmem:[#allocation9 + $0x258] sm:$0xff]
    %v2657 = vld [vmem:[#allocation9 + $0x260] sm:$0xff]
    %v2658 = vld [vmem:[#allocation9 + $0x268] sm:$0xff]
    %v2659 = vld [vmem:[#allocation9 + $0x270] sm:$0xff]
    %v2660 = vld [vmem:[#allocation9 + $0x278] sm:$0xff]
    %v2661 = vld [vmem:[#allocation9 + $0x280] sm:$0xff]
    %v2662 = vld [vmem:[#allocation9 + $0x288] sm:$0xff]
    %v2663 = vld [vmem:[#allocation9 + $0x290] sm:$0xff]
    %v2664 = vld [vmem:[#allocation9 + $0x298] sm:$0xff]
    %v2665 = vld [vmem:[#allocation9 + $0x2a0] sm:$0xff]
    %v2666 = vld [vmem:[#allocation9 + $0x2a8] sm:$0xff]
    %v2667 = vld [vmem:[#allocation9 + $0x2b0] sm:$0xff]
    %v2668 = vld [vmem:[#allocation9 + $0x2b8] sm:$0xff]
    %v2669 = vld [vmem:[#allocation9 + $0x2c0] sm:$0xff]
    %v2670 = vld [vmem:[#allocation9 + $0x2c8] sm:$0xff]
    %v2671 = vld [vmem:[#allocation9 + $0x2d0] sm:$0xff]
    %v2672 = vld [vmem:[#allocation9 + $0x2d8] sm:$0xff]
    %v2673 = vld [vmem:[#allocation9 + $0x2e0] sm:$0xff]
    %v2674 = vld [vmem:[#allocation9 + $0x2e8] sm:$0xff]
    %v2675 = vld [vmem:[#allocation9 + $0x2f0] sm:$0xff]
    %v2676 = vld [vmem:[#allocation9 + $0x2f8] sm:$0xff]
    %v2677 = vld [vmem:[#allocation9 + $0x300] sm:$0xff]
    %v2678 = vld [vmem:[#allocation9 + $0x308] sm:$0xff]
    %v2679 = vld [vmem:[#allocation9 + $0x310] sm:$0xff]
    %v2680 = vld [vmem:[#allocation9 + $0x318] sm:$0xff]
    %v2681 = vld [vmem:[#allocation9 + $0x320] sm:$0xff]
    %v2682 = vld [vmem:[#allocation9 + $0x328] sm:$0xff]
    %v2683 = vld [vmem:[#allocation9 + $0x330] sm:$0xff]
    %v2684 = vld [vmem:[#allocation9 + $0x338] sm:$0xff]
    %v2685 = vld [vmem:[#allocation9 + $0x340] sm:$0xff]
    %v2686 = vld [vmem:[#allocation9 + $0x348] sm:$0xff]
    %v2687 = vld [vmem:[#allocation9 + $0x350] sm:$0xff]
    %v2688 = vld [vmem:[#allocation9 + $0x358] sm:$0xff]
    %v2689 = vld [vmem:[#allocation9 + $0x360] sm:$0xff]
    %v2690 = vld [vmem:[#allocation9 + $0x368] sm:$0xff]
    %v2691 = vld [vmem:[#allocation9 + $0x370] sm:$0xff]
    %v2692 = vld [vmem:[#allocation9 + $0x378] sm:$0xff]
    %v2693 = vld [vmem:[#allocation9 + $0x380] sm:$0xff]
    %v2694 = vld [vmem:[#allocation9 + $0x388] sm:$0xff]
    %v2695 = vld [vmem:[#allocation9 + $0x390] sm:$0xff]
    %v2696 = vld [vmem:[#allocation9 + $0x398] sm:$0xff]
    %v2697 = vld [vmem:[#allocation9 + $0x3a0] sm:$0xff]
    %v2698 = vld [vmem:[#allocation9 + $0x3a8] sm:$0xff]
    %v2699 = vld [vmem:[#allocation9 + $0x3b0] sm:$0xff]
    %v2700 = vld [vmem:[#allocation9 + $0x3b8] sm:$0xff]
    %v2701 = vld [vmem:[#allocation9 + $0x3c0] sm:$0xff]
    %v2702 = vld [vmem:[#allocation9 + $0x3c8] sm:$0xff]
    %v2703 = vld [vmem:[#allocation9 + $0x3d0] sm:$0xff]
    %v2704 = vld [vmem:[#allocation9 + $0x3d8] sm:$0xff]
    %v2705 = vld [vmem:[#allocation9 + $0x3e0] sm:$0xff]
    %v2706 = vld [vmem:[#allocation9 + $0x3e8] sm:$0xff]
    %v2707 = vld [vmem:[#allocation9 + $0x3f0] sm:$0xff]
    %v2708 = vld [vmem:[#allocation9 + $0x3f8] sm:$0xff]
    %v2709 = vld [vmem:[#allocation9 + $0x400] sm:$0xff]
    %v2710 = vld [vmem:[#allocation9 + $0x408] sm:$0xff]
    %v2711 = vld [vmem:[#allocation9 + $0x410] sm:$0xff]
    %v2712 = vld [vmem:[#allocation9 + $0x418] sm:$0xff]
    %v2713 = vld [vmem:[#allocation9 + $0x420] sm:$0xff]
    %v2714 = vld [vmem:[#allocation9 + $0x428] sm:$0xff]
    %v2715 = vld [vmem:[#allocation9 + $0x430] sm:$0xff]
    %v2716 = vld [vmem:[#allocation9 + $0x438] sm:$0xff]
    %v2717 = vld [vmem:[#allocation9 + $0x440] sm:$0xff]
    %v2718 = vld [vmem:[#allocation9 + $0x448] sm:$0xff]
    %v2719 = vld [vmem:[#allocation9 + $0x450] sm:$0xff]
    %v2720 = vld [vmem:[#allocation9 + $0x458] sm:$0xff]
    %v2721 = vld [vmem:[#allocation9 + $0x460] sm:$0xff]
    %v2722 = vld [vmem:[#allocation9 + $0x468] sm:$0xff]
    %v2723 = vld [vmem:[#allocation9 + $0x470] sm:$0xff]
    %v2724 = vld [vmem:[#allocation9 + $0x478] sm:$0xff]
    %v2725 = vld [vmem:[#allocation9 + $0x480] sm:$0xff]
    %v2726 = vld [vmem:[#allocation9 + $0x488] sm:$0xff]
    %v2727 = vld [vmem:[#allocation9 + $0x490] sm:$0xff]
    %v2728 = vld [vmem:[#allocation9 + $0x498] sm:$0xff]
    %v2729 = vld [vmem:[#allocation9 + $0x4a0] sm:$0xff]
    %v2730 = vld [vmem:[#allocation9 + $0x4a8] sm:$0xff]
    %v2731 = vld [vmem:[#allocation9 + $0x4b0] sm:$0xff]
    %v2732 = vld [vmem:[#allocation9 + $0x4b8] sm:$0xff]
    %v2733 = vld [vmem:[#allocation9 + $0x4c0] sm:$0xff]
    %v2734 = vld [vmem:[#allocation9 + $0x4c8] sm:$0xff]
    %v2735 = vld [vmem:[#allocation9 + $0x4d0] sm:$0xff]
    %v2736 = vld [vmem:[#allocation9 + $0x4d8] sm:$0xff]
    %v2737 = vld [vmem:[#allocation9 + $0x4e0] sm:$0xff]
    %v2738 = vld [vmem:[#allocation9 + $0x4e8] sm:$0xff]
    %v2739 = vld [vmem:[#allocation9 + $0x4f0] sm:$0xff]
    %v2740 = vld [vmem:[#allocation9 + $0x4f8] sm:$0xff]
    %v2741 = vld [vmem:[#allocation9 + $0x500] sm:$0xff]
    %v2742 = vld [vmem:[#allocation9 + $0x508] sm:$0xff]
    %v2743 = vld [vmem:[#allocation9 + $0x510] sm:$0xff]
    %v2744 = vld [vmem:[#allocation9 + $0x518] sm:$0xff]
    %v2745 = vld [vmem:[#allocation9 + $0x520] sm:$0xff]
    %v2746 = vld [vmem:[#allocation9 + $0x528] sm:$0xff]
    %v2747 = vld [vmem:[#allocation9 + $0x530] sm:$0xff]
    %v2748 = vld [vmem:[#allocation9 + $0x538] sm:$0xff]
    %v2749 = vld [vmem:[#allocation9 + $0x540] sm:$0xff]
    %v2750 = vld [vmem:[#allocation9 + $0x548] sm:$0xff]
    %v2751 = vld [vmem:[#allocation9 + $0x550] sm:$0xff]
    %v2752 = vld [vmem:[#allocation9 + $0x558] sm:$0xff]
    %v2753 = vld [vmem:[#allocation9 + $0x560] sm:$0xff]
    %v2754 = vld [vmem:[#allocation9 + $0x568] sm:$0xff]
    %v2755 = vld [vmem:[#allocation9 + $0x570] sm:$0xff]
    %v2756 = vld [vmem:[#allocation9 + $0x578] sm:$0xff]
    %v2757 = vld [vmem:[#allocation9 + $0x580] sm:$0xff]
    %v2758 = vld [vmem:[#allocation9 + $0x588] sm:$0xff]
    %v2759 = vld [vmem:[#allocation9 + $0x590] sm:$0xff]
    %v2760 = vld [vmem:[#allocation9 + $0x598] sm:$0xff]
    %v2761 = vld [vmem:[#allocation9 + $0x5a0] sm:$0xff]
    %v2762 = vld [vmem:[#allocation9 + $0x5a8] sm:$0xff]
    %v2763 = vld [vmem:[#allocation9 + $0x5b0] sm:$0xff]
    %v2764 = vld [vmem:[#allocation9 + $0x5b8] sm:$0xff]
    %v2765 = vld [vmem:[#allocation9 + $0x5c0] sm:$0xff]
    %v2766 = vld [vmem:[#allocation9 + $0x5c8] sm:$0xff]
    %v2767 = vld [vmem:[#allocation9 + $0x5d0] sm:$0xff]
    %v2768 = vld [vmem:[#allocation9 + $0x5d8] sm:$0xff]
    %v2769 = vld [vmem:[#allocation9 + $0x5e0] sm:$0xff]
    %v2770 = vld [vmem:[#allocation9 + $0x5e8] sm:$0xff]
    %v2771 = vld [vmem:[#allocation9 + $0x5f0] sm:$0xff]
    %v2772 = vld [vmem:[#allocation9 + $0x5f8] sm:$0xff]
    %v2773 = vld [vmem:[#allocation9 + $0x600] sm:$0xff]
    %v2774 = vld [vmem:[#allocation9 + $0x608] sm:$0xff]
    %v2775 = vld [vmem:[#allocation9 + $0x610] sm:$0xff]
    %v2776 = vld [vmem:[#allocation9 + $0x618] sm:$0xff]
    %v2777 = vld [vmem:[#allocation9 + $0x620] sm:$0xff]
    %v2778 = vld [vmem:[#allocation9 + $0x628] sm:$0xff]
    %v2779 = vld [vmem:[#allocation9 + $0x630] sm:$0xff]
    %v2780 = vld [vmem:[#allocation9 + $0x638] sm:$0xff]
    %v2781 = vld [vmem:[#allocation9 + $0x640] sm:$0xff]
    %v2782 = vld [vmem:[#allocation9 + $0x648] sm:$0xff]
    %v2783 = vld [vmem:[#allocation9 + $0x650] sm:$0xff]
    %v2784 = vld [vmem:[#allocation9 + $0x658] sm:$0xff]
    %v2785 = vld [vmem:[#allocation9 + $0x660] sm:$0xff]
    %v2786 = vld [vmem:[#allocation9 + $0x668] sm:$0xff]
    %v2787 = vld [vmem:[#allocation9 + $0x670] sm:$0xff]
    %v2788 = vld [vmem:[#allocation9 + $0x678] sm:$0xff]
    %v2789 = vld [vmem:[#allocation9 + $0x680] sm:$0xff]
    %v2790 = vld [vmem:[#allocation9 + $0x688] sm:$0xff]
    %v2791 = vld [vmem:[#allocation9 + $0x690] sm:$0xff]
    %v2792 = vld [vmem:[#allocation9 + $0x698] sm:$0xff]
    %v2793 = vld [vmem:[#allocation9 + $0x6a0] sm:$0xff]
    %v2794 = vld [vmem:[#allocation9 + $0x6a8] sm:$0xff]
    %v2795 = vld [vmem:[#allocation9 + $0x6b0] sm:$0xff]
    %v2796 = vld [vmem:[#allocation9 + $0x6b8] sm:$0xff]
    %v2797 = vld [vmem:[#allocation9 + $0x6c0] sm:$0xff]
    %v2798 = vld [vmem:[#allocation9 + $0x6c8] sm:$0xff]
    %v2799 = vld [vmem:[#allocation9 + $0x6d0] sm:$0xff]
    %v2800 = vld [vmem:[#allocation9 + $0x6d8] sm:$0xff]
    %v2801 = vld [vmem:[#allocation9 + $0x6e0] sm:$0xff]
    %v2802 = vld [vmem:[#allocation9 + $0x6e8] sm:$0xff]
    %v2803 = vld [vmem:[#allocation9 + $0x6f0] sm:$0xff]
    %v2804 = vld [vmem:[#allocation9 + $0x6f8] sm:$0xff]
    %v2805 = vld [vmem:[#allocation9 + $0x700] sm:$0xff]
    %v2806 = vld [vmem:[#allocation9 + $0x708] sm:$0xff]
    %v2807 = vld [vmem:[#allocation9 + $0x710] sm:$0xff]
    %v2808 = vld [vmem:[#allocation9 + $0x718] sm:$0xff]
    %v2809 = vld [vmem:[#allocation9 + $0x720] sm:$0xff]
    %v2810 = vld [vmem:[#allocation9 + $0x728] sm:$0xff]
    %v2811 = vld [vmem:[#allocation9 + $0x730] sm:$0xff]
    %v2812 = vld [vmem:[#allocation9 + $0x738] sm:$0xff]
    %v2813 = vld [vmem:[#allocation9 + $0x740] sm:$0xff]
    %v2814 = vld [vmem:[#allocation9 + $0x748] sm:$0xff]
    %v2815 = vld [vmem:[#allocation9 + $0x750] sm:$0xff]
    %v2816 = vld [vmem:[#allocation9 + $0x758] sm:$0xff]
    %v2817 = vld [vmem:[#allocation9 + $0x760] sm:$0xff]
    %v2818 = vld [vmem:[#allocation9 + $0x768] sm:$0xff]
    %v2819 = vld [vmem:[#allocation9 + $0x770] sm:$0xff]
    %v2820 = vld [vmem:[#allocation9 + $0x778] sm:$0xff]
    %v2821 = vld [vmem:[#allocation9 + $0x780] sm:$0xff]
    %v2822 = vld [vmem:[#allocation9 + $0x788] sm:$0xff]
    %v2823 = vld [vmem:[#allocation9 + $0x790] sm:$0xff]
    %v2824 = vld [vmem:[#allocation9 + $0x798] sm:$0xff]
    %v2825 = vld [vmem:[#allocation9 + $0x7a0] sm:$0xff]
    %v2826 = vld [vmem:[#allocation9 + $0x7a8] sm:$0xff]
    %v2827 = vld [vmem:[#allocation9 + $0x7b0] sm:$0xff]
    %v2828 = vld [vmem:[#allocation9 + $0x7b8] sm:$0xff]
    %v2829 = vld [vmem:[#allocation9 + $0x7c0] sm:$0xff]
    %v2830 = vld [vmem:[#allocation9 + $0x7c8] sm:$0xff]
    %v2831 = vld [vmem:[#allocation9 + $0x7d0] sm:$0xff]
    %v2832 = vld [vmem:[#allocation9 + $0x7d8] sm:$0xff]
    %v2833 = vld [vmem:[#allocation9 + $0x7e0] sm:$0xff]
    %v2834 = vld [vmem:[#allocation9 + $0x7e8] sm:$0xff]
    %v2835 = vld [vmem:[#allocation9 + $0x7f0] sm:$0xff]
    %v2836 = vld [vmem:[#allocation9 + $0x7f8] sm:$0xff]
    %v2837 = vld [vmem:[#allocation11] sm:$0xf]
    %v2839 = vlaneseq
    %v2840 = vshrl.u32 %v2839, 7
    %v2841 = vsub.s32 0, %v2840
    %v2842 = vrot.slane %v2837, %v2841
    %v2843 = vlaneseq
    %v2844 = vshrl.u32 %v2843, 7
    %v2845 = vsub.s32 1, %v2844
    %v2846 = vrot.slane %v2837, %v2845
    %v2847 = vlaneseq
    %v2848 = vshrl.u32 %v2847, 7
    %v2849 = vsub.s32 2, %v2848
    %v2850 = vrot.slane %v2837, %v2849
    %v2851 = vlaneseq
    %v2852 = vshrl.u32 %v2851, 7
    %v2853 = vsub.s32 3, %v2852
    %v2854 = vrot.slane %v2837, %v2853
    %v3115 = vunpack.c.l.b16 %v2581
    %v3116 = vunpack.c.h.b16 %v2581
    %v3117 = vunpack.c.l.b16 %v2582
    %v3118 = vunpack.c.h.b16 %v2582
    %v3119 = vunpack.c.l.b16 %v2583
    %v3120 = vunpack.c.h.b16 %v2583
    %v3121 = vunpack.c.l.b16 %v2584
    %v3122 = vunpack.c.h.b16 %v2584
    %v3123 = vunpack.c.l.b16 %v2585
    %v3124 = vunpack.c.h.b16 %v2585
    %v3125 = vunpack.c.l.b16 %v2586
    %v3126 = vunpack.c.h.b16 %v2586
    %v3127 = vunpack.c.l.b16 %v2587
    %v3128 = vunpack.c.h.b16 %v2587
    %v3129 = vunpack.c.l.b16 %v2588
    %v3130 = vunpack.c.h.b16 %v2588
    %v3131 = vunpack.c.l.b16 %v2589
    %v3132 = vunpack.c.h.b16 %v2589
    %v3133 = vunpack.c.l.b16 %v2590
    %v3134 = vunpack.c.h.b16 %v2590
    %v3135 = vunpack.c.l.b16 %v2591
    %v3136 = vunpack.c.h.b16 %v2591
    %v3137 = vunpack.c.l.b16 %v2592
    %v3138 = vunpack.c.h.b16 %v2592
    %v3139 = vunpack.c.l.b16 %v2593
    %v3140 = vunpack.c.h.b16 %v2593
    %v3141 = vunpack.c.l.b16 %v2594
    %v3142 = vunpack.c.h.b16 %v2594
    %v3143 = vunpack.c.l.b16 %v2595
    %v3144 = vunpack.c.h.b16 %v2595
    %v3145 = vunpack.c.l.b16 %v2596
    %v3146 = vunpack.c.h.b16 %v2596
    %v3147 = vunpack.c.l.b16 %v2597
    %v3148 = vunpack.c.h.b16 %v2597
    %v3149 = vunpack.c.l.b16 %v2598
    %v3150 = vunpack.c.h.b16 %v2598
    %v3151 = vunpack.c.l.b16 %v2599
    %v3152 = vunpack.c.h.b16 %v2599
    %v3153 = vunpack.c.l.b16 %v2600
    %v3154 = vunpack.c.h.b16 %v2600
    %v3155 = vunpack.c.l.b16 %v2601
    %v3156 = vunpack.c.h.b16 %v2601
    %v3157 = vunpack.c.l.b16 %v2602
    %v3158 = vunpack.c.h.b16 %v2602
    %v3159 = vunpack.c.l.b16 %v2603
    %v3160 = vunpack.c.h.b16 %v2603
    %v3161 = vunpack.c.l.b16 %v2604
    %v3162 = vunpack.c.h.b16 %v2604
    %v3163 = vunpack.c.l.b16 %v2605
    %v3164 = vunpack.c.h.b16 %v2605
    %v3165 = vunpack.c.l.b16 %v2606
    %v3166 = vunpack.c.h.b16 %v2606
    %v3167 = vunpack.c.l.b16 %v2607
    %v3168 = vunpack.c.h.b16 %v2607
    %v3169 = vunpack.c.l.b16 %v2608
    %v3170 = vunpack.c.h.b16 %v2608
    %v3171 = vunpack.c.l.b16 %v2609
    %v3172 = vunpack.c.h.b16 %v2609
    %v3173 = vunpack.c.l.b16 %v2610
    %v3174 = vunpack.c.h.b16 %v2610
    %v3175 = vunpack.c.l.b16 %v2611
    %v3176 = vunpack.c.h.b16 %v2611
    %v3177 = vunpack.c.l.b16 %v2612
    %v3178 = vunpack.c.h.b16 %v2612
    %v3179 = vunpack.c.l.b16 %v2613
    %v3180 = vunpack.c.h.b16 %v2613
    %v3181 = vunpack.c.l.b16 %v2614
    %v3182 = vunpack.c.h.b16 %v2614
    %v3183 = vunpack.c.l.b16 %v2615
    %v3184 = vunpack.c.h.b16 %v2615
    %v3185 = vunpack.c.l.b16 %v2616
    %v3186 = vunpack.c.h.b16 %v2616
    %v3187 = vunpack.c.l.b16 %v2617
    %v3188 = vunpack.c.h.b16 %v2617
    %v3189 = vunpack.c.l.b16 %v2618
    %v3190 = vunpack.c.h.b16 %v2618
    %v3191 = vunpack.c.l.b16 %v2619
    %v3192 = vunpack.c.h.b16 %v2619
    %v3193 = vunpack.c.l.b16 %v2620
    %v3194 = vunpack.c.h.b16 %v2620
    %v3195 = vunpack.c.l.b16 %v2621
    %v3196 = vunpack.c.h.b16 %v2621
    %v3197 = vunpack.c.l.b16 %v2622
    %v3198 = vunpack.c.h.b16 %v2622
    %v3199 = vunpack.c.l.b16 %v2623
    %v3200 = vunpack.c.h.b16 %v2623
    %v3201 = vunpack.c.l.b16 %v2624
    %v3202 = vunpack.c.h.b16 %v2624
    %v3203 = vunpack.c.l.b16 %v2625
    %v3204 = vunpack.c.h.b16 %v2625
    %v3205 = vunpack.c.l.b16 %v2626
    %v3206 = vunpack.c.h.b16 %v2626
    %v3207 = vunpack.c.l.b16 %v2627
    %v3208 = vunpack.c.h.b16 %v2627
    %v3209 = vunpack.c.l.b16 %v2628
    %v3210 = vunpack.c.h.b16 %v2628
    %v3211 = vunpack.c.l.b16 %v2629
    %v3212 = vunpack.c.h.b16 %v2629
    %v3213 = vunpack.c.l.b16 %v2630
    %v3214 = vunpack.c.h.b16 %v2630
    %v3215 = vunpack.c.l.b16 %v2631
    %v3216 = vunpack.c.h.b16 %v2631
    %v3217 = vunpack.c.l.b16 %v2632
    %v3218 = vunpack.c.h.b16 %v2632
    %v3219 = vunpack.c.l.b16 %v2633
    %v3220 = vunpack.c.h.b16 %v2633
    %v3221 = vunpack.c.l.b16 %v2634
    %v3222 = vunpack.c.h.b16 %v2634
    %v3223 = vunpack.c.l.b16 %v2635
    %v3224 = vunpack.c.h.b16 %v2635
    %v3225 = vunpack.c.l.b16 %v2636
    %v3226 = vunpack.c.h.b16 %v2636
    %v3227 = vunpack.c.l.b16 %v2637
    %v3228 = vunpack.c.h.b16 %v2637
    %v3229 = vunpack.c.l.b16 %v2638
    %v3230 = vunpack.c.h.b16 %v2638
    %v3231 = vunpack.c.l.b16 %v2639
    %v3232 = vunpack.c.h.b16 %v2639
    %v3233 = vunpack.c.l.b16 %v2640
    %v3234 = vunpack.c.h.b16 %v2640
    %v3235 = vunpack.c.l.b16 %v2641
    %v3236 = vunpack.c.h.b16 %v2641
    %v3237 = vunpack.c.l.b16 %v2642
    %v3238 = vunpack.c.h.b16 %v2642
    %v3239 = vunpack.c.l.b16 %v2643
    %v3240 = vunpack.c.h.b16 %v2643
    %v3241 = vunpack.c.l.b16 %v2644
    %v3242 = vunpack.c.h.b16 %v2644
    %v3243 = vunpack.c.l.b16 %v2645
    %v3244 = vunpack.c.h.b16 %v2645
    %v3245 = vunpack.c.l.b16 %v2646
    %v3246 = vunpack.c.h.b16 %v2646
    %v3247 = vunpack.c.l.b16 %v2647
    %v3248 = vunpack.c.h.b16 %v2647
    %v3249 = vunpack.c.l.b16 %v2648
    %v3250 = vunpack.c.h.b16 %v2648
    %v3251 = vunpack.c.l.b16 %v2649
    %v3252 = vunpack.c.h.b16 %v2649
    %v3253 = vunpack.c.l.b16 %v2650
    %v3254 = vunpack.c.h.b16 %v2650
    %v3255 = vunpack.c.l.b16 %v2651
    %v3256 = vunpack.c.h.b16 %v2651
    %v3257 = vunpack.c.l.b16 %v2652
    %v3258 = vunpack.c.h.b16 %v2652
    %v3259 = vunpack.c.l.b16 %v2653
    %v3260 = vunpack.c.h.b16 %v2653
    %v3261 = vunpack.c.l.b16 %v2654
    %v3262 = vunpack.c.h.b16 %v2654
    %v3263 = vunpack.c.l.b16 %v2655
    %v3264 = vunpack.c.h.b16 %v2655
    %v3265 = vunpack.c.l.b16 %v2656
    %v3266 = vunpack.c.h.b16 %v2656
    %v3267 = vunpack.c.l.b16 %v2657
    %v3268 = vunpack.c.h.b16 %v2657
    %v3269 = vunpack.c.l.b16 %v2658
    %v3270 = vunpack.c.h.b16 %v2658
    %v3271 = vunpack.c.l.b16 %v2659
    %v3272 = vunpack.c.h.b16 %v2659
    %v3273 = vunpack.c.l.b16 %v2660
    %v3274 = vunpack.c.h.b16 %v2660
    %v3275 = vunpack.c.l.b16 %v2661
    %v3276 = vunpack.c.h.b16 %v2661
    %v3277 = vunpack.c.l.b16 %v2662
    %v3278 = vunpack.c.h.b16 %v2662
    %v3279 = vunpack.c.l.b16 %v2663
    %v3280 = vunpack.c.h.b16 %v2663
    %v3281 = vunpack.c.l.b16 %v2664
    %v3282 = vunpack.c.h.b16 %v2664
    %v3283 = vunpack.c.l.b16 %v2665
    %v3284 = vunpack.c.h.b16 %v2665
    %v3285 = vunpack.c.l.b16 %v2666
    %v3286 = vunpack.c.h.b16 %v2666
    %v3287 = vunpack.c.l.b16 %v2667
    %v3288 = vunpack.c.h.b16 %v2667
    %v3289 = vunpack.c.l.b16 %v2668
    %v3290 = vunpack.c.h.b16 %v2668
    %v3291 = vunpack.c.l.b16 %v2669
    %v3292 = vunpack.c.h.b16 %v2669
    %v3293 = vunpack.c.l.b16 %v2670
    %v3294 = vunpack.c.h.b16 %v2670
    %v3295 = vunpack.c.l.b16 %v2671
    %v3296 = vunpack.c.h.b16 %v2671
    %v3297 = vunpack.c.l.b16 %v2672
    %v3298 = vunpack.c.h.b16 %v2672
    %v3299 = vunpack.c.l.b16 %v2673
    %v3300 = vunpack.c.h.b16 %v2673
    %v3301 = vunpack.c.l.b16 %v2674
    %v3302 = vunpack.c.h.b16 %v2674
    %v3303 = vunpack.c.l.b16 %v2675
    %v3304 = vunpack.c.h.b16 %v2675
    %v3305 = vunpack.c.l.b16 %v2676
    %v3306 = vunpack.c.h.b16 %v2676
    %v3307 = vunpack.c.l.b16 %v2677
    %v3308 = vunpack.c.h.b16 %v2677
    %v3309 = vunpack.c.l.b16 %v2678
    %v3310 = vunpack.c.h.b16 %v2678
    %v3311 = vunpack.c.l.b16 %v2679
    %v3312 = vunpack.c.h.b16 %v2679
    %v3313 = vunpack.c.l.b16 %v2680
    %v3314 = vunpack.c.h.b16 %v2680
    %v3315 = vunpack.c.l.b16 %v2681
    %v3316 = vunpack.c.h.b16 %v2681
    %v3317 = vunpack.c.l.b16 %v2682
    %v3318 = vunpack.c.h.b16 %v2682
    %v3319 = vunpack.c.l.b16 %v2683
    %v3320 = vunpack.c.h.b16 %v2683
    %v3321 = vunpack.c.l.b16 %v2684
    %v3322 = vunpack.c.h.b16 %v2684
    %v3323 = vunpack.c.l.b16 %v2685
    %v3324 = vunpack.c.h.b16 %v2685
    %v3325 = vunpack.c.l.b16 %v2686
    %v3326 = vunpack.c.h.b16 %v2686
    %v3327 = vunpack.c.l.b16 %v2687
    %v3328 = vunpack.c.h.b16 %v2687
    %v3329 = vunpack.c.l.b16 %v2688
    %v3330 = vunpack.c.h.b16 %v2688
    %v3331 = vunpack.c.l.b16 %v2689
    %v3332 = vunpack.c.h.b16 %v2689
    %v3333 = vunpack.c.l.b16 %v2690
    %v3334 = vunpack.c.h.b16 %v2690
    %v3335 = vunpack.c.l.b16 %v2691
    %v3336 = vunpack.c.h.b16 %v2691
    %v3337 = vunpack.c.l.b16 %v2692
    %v3338 = vunpack.c.h.b16 %v2692
    %v3339 = vunpack.c.l.b16 %v2693
    %v3340 = vunpack.c.h.b16 %v2693
    %v3341 = vunpack.c.l.b16 %v2694
    %v3342 = vunpack.c.h.b16 %v2694
    %v3343 = vunpack.c.l.b16 %v2695
    %v3344 = vunpack.c.h.b16 %v2695
    %v3345 = vunpack.c.l.b16 %v2696
    %v3346 = vunpack.c.h.b16 %v2696
    %v3347 = vunpack.c.l.b16 %v2697
    %v3348 = vunpack.c.h.b16 %v2697
    %v3349 = vunpack.c.l.b16 %v2698
    %v3350 = vunpack.c.h.b16 %v2698
    %v3351 = vunpack.c.l.b16 %v2699
    %v3352 = vunpack.c.h.b16 %v2699
    %v3353 = vunpack.c.l.b16 %v2700
    %v3354 = vunpack.c.h.b16 %v2700
    %v3355 = vunpack.c.l.b16 %v2701
    %v3356 = vunpack.c.h.b16 %v2701
    %v3357 = vunpack.c.l.b16 %v2702
    %v3358 = vunpack.c.h.b16 %v2702
    %v3359 = vunpack.c.l.b16 %v2703
    %v3360 = vunpack.c.h.b16 %v2703
    %v3361 = vunpack.c.l.b16 %v2704
    %v3362 = vunpack.c.h.b16 %v2704
    %v3363 = vunpack.c.l.b16 %v2705
    %v3364 = vunpack.c.h.b16 %v2705
    %v3365 = vunpack.c.l.b16 %v2706
    %v3366 = vunpack.c.h.b16 %v2706
    %v3367 = vunpack.c.l.b16 %v2707
    %v3368 = vunpack.c.h.b16 %v2707
    %v3369 = vunpack.c.l.b16 %v2708
    %v3370 = vunpack.c.h.b16 %v2708
    %v3371 = vunpack.c.l.b16 %v2709
    %v3372 = vunpack.c.h.b16 %v2709
    %v3373 = vunpack.c.l.b16 %v2710
    %v3374 = vunpack.c.h.b16 %v2710
    %v3375 = vunpack.c.l.b16 %v2711
    %v3376 = vunpack.c.h.b16 %v2711
    %v3377 = vunpack.c.l.b16 %v2712
    %v3378 = vunpack.c.h.b16 %v2712
    %v3379 = vunpack.c.l.b16 %v2713
    %v3380 = vunpack.c.h.b16 %v2713
    %v3381 = vunpack.c.l.b16 %v2714
    %v3382 = vunpack.c.h.b16 %v2714
    %v3383 = vunpack.c.l.b16 %v2715
    %v3384 = vunpack.c.h.b16 %v2715
    %v3385 = vunpack.c.l.b16 %v2716
    %v3386 = vunpack.c.h.b16 %v2716
    %v3387 = vunpack.c.l.b16 %v2717
    %v3388 = vunpack.c.h.b16 %v2717
    %v3389 = vunpack.c.l.b16 %v2718
    %v3390 = vunpack.c.h.b16 %v2718
    %v3391 = vunpack.c.l.b16 %v2719
    %v3392 = vunpack.c.h.b16 %v2719
    %v3393 = vunpack.c.l.b16 %v2720
    %v3394 = vunpack.c.h.b16 %v2720
    %v3395 = vunpack.c.l.b16 %v2721
    %v3396 = vunpack.c.h.b16 %v2721
    %v3397 = vunpack.c.l.b16 %v2722
    %v3398 = vunpack.c.h.b16 %v2722
    %v3399 = vunpack.c.l.b16 %v2723
    %v3400 = vunpack.c.h.b16 %v2723
    %v3401 = vunpack.c.l.b16 %v2724
    %v3402 = vunpack.c.h.b16 %v2724
    %v3403 = vunpack.c.l.b16 %v2725
    %v3404 = vunpack.c.h.b16 %v2725
    %v3405 = vunpack.c.l.b16 %v2726
    %v3406 = vunpack.c.h.b16 %v2726
    %v3407 = vunpack.c.l.b16 %v2727
    %v3408 = vunpack.c.h.b16 %v2727
    %v3409 = vunpack.c.l.b16 %v2728
    %v3410 = vunpack.c.h.b16 %v2728
    %v3411 = vunpack.c.l.b16 %v2729
    %v3412 = vunpack.c.h.b16 %v2729
    %v3413 = vunpack.c.l.b16 %v2730
    %v3414 = vunpack.c.h.b16 %v2730
    %v3415 = vunpack.c.l.b16 %v2731
    %v3416 = vunpack.c.h.b16 %v2731
    %v3417 = vunpack.c.l.b16 %v2732
    %v3418 = vunpack.c.h.b16 %v2732
    %v3419 = vunpack.c.l.b16 %v2733
    %v3420 = vunpack.c.h.b16 %v2733
    %v3421 = vunpack.c.l.b16 %v2734
    %v3422 = vunpack.c.h.b16 %v2734
    %v3423 = vunpack.c.l.b16 %v2735
    %v3424 = vunpack.c.h.b16 %v2735
    %v3425 = vunpack.c.l.b16 %v2736
    %v3426 = vunpack.c.h.b16 %v2736
    %v3427 = vunpack.c.l.b16 %v2737
    %v3428 = vunpack.c.h.b16 %v2737
    %v3429 = vunpack.c.l.b16 %v2738
    %v3430 = vunpack.c.h.b16 %v2738
    %v3431 = vunpack.c.l.b16 %v2739
    %v3432 = vunpack.c.h.b16 %v2739
    %v3433 = vunpack.c.l.b16 %v2740
    %v3434 = vunpack.c.h.b16 %v2740
    %v3435 = vunpack.c.l.b16 %v2741
    %v3436 = vunpack.c.h.b16 %v2741
    %v3437 = vunpack.c.l.b16 %v2742
    %v3438 = vunpack.c.h.b16 %v2742
    %v3439 = vunpack.c.l.b16 %v2743
    %v3440 = vunpack.c.h.b16 %v2743
    %v3441 = vunpack.c.l.b16 %v2744
    %v3442 = vunpack.c.h.b16 %v2744
    %v3443 = vunpack.c.l.b16 %v2745
    %v3444 = vunpack.c.h.b16 %v2745
    %v3445 = vunpack.c.l.b16 %v2746
    %v3446 = vunpack.c.h.b16 %v2746
    %v3447 = vunpack.c.l.b16 %v2747
    %v3448 = vunpack.c.h.b16 %v2747
    %v3449 = vunpack.c.l.b16 %v2748
    %v3450 = vunpack.c.h.b16 %v2748
    %v3451 = vunpack.c.l.b16 %v2749
    %v3452 = vunpack.c.h.b16 %v2749
    %v3453 = vunpack.c.l.b16 %v2750
    %v3454 = vunpack.c.h.b16 %v2750
    %v3455 = vunpack.c.l.b16 %v2751
    %v3456 = vunpack.c.h.b16 %v2751
    %v3457 = vunpack.c.l.b16 %v2752
    %v3458 = vunpack.c.h.b16 %v2752
    %v3459 = vunpack.c.l.b16 %v2753
    %v3460 = vunpack.c.h.b16 %v2753
    %v3461 = vunpack.c.l.b16 %v2754
    %v3462 = vunpack.c.h.b16 %v2754
    %v3463 = vunpack.c.l.b16 %v2755
    %v3464 = vunpack.c.h.b16 %v2755
    %v3465 = vunpack.c.l.b16 %v2756
    %v3466 = vunpack.c.h.b16 %v2756
    %v3467 = vunpack.c.l.b16 %v2757
    %v3468 = vunpack.c.h.b16 %v2757
    %v3469 = vunpack.c.l.b16 %v2758
    %v3470 = vunpack.c.h.b16 %v2758
    %v3471 = vunpack.c.l.b16 %v2759
    %v3472 = vunpack.c.h.b16 %v2759
    %v3473 = vunpack.c.l.b16 %v2760
    %v3474 = vunpack.c.h.b16 %v2760
    %v3475 = vunpack.c.l.b16 %v2761
    %v3476 = vunpack.c.h.b16 %v2761
    %v3477 = vunpack.c.l.b16 %v2762
    %v3478 = vunpack.c.h.b16 %v2762
    %v3479 = vunpack.c.l.b16 %v2763
    %v3480 = vunpack.c.h.b16 %v2763
    %v3481 = vunpack.c.l.b16 %v2764
    %v3482 = vunpack.c.h.b16 %v2764
    %v3483 = vunpack.c.l.b16 %v2765
    %v3484 = vunpack.c.h.b16 %v2765
    %v3485 = vunpack.c.l.b16 %v2766
    %v3486 = vunpack.c.h.b16 %v2766
    %v3487 = vunpack.c.l.b16 %v2767
    %v3488 = vunpack.c.h.b16 %v2767
    %v3489 = vunpack.c.l.b16 %v2768
    %v3490 = vunpack.c.h.b16 %v2768
    %v3491 = vunpack.c.l.b16 %v2769
    %v3492 = vunpack.c.h.b16 %v2769
    %v3493 = vunpack.c.l.b16 %v2770
    %v3494 = vunpack.c.h.b16 %v2770
    %v3495 = vunpack.c.l.b16 %v2771
    %v3496 = vunpack.c.h.b16 %v2771
    %v3497 = vunpack.c.l.b16 %v2772
    %v3498 = vunpack.c.h.b16 %v2772
    %v3499 = vunpack.c.l.b16 %v2773
    %v3500 = vunpack.c.h.b16 %v2773
    %v3501 = vunpack.c.l.b16 %v2774
    %v3502 = vunpack.c.h.b16 %v2774
    %v3503 = vunpack.c.l.b16 %v2775
    %v3504 = vunpack.c.h.b16 %v2775
    %v3505 = vunpack.c.l.b16 %v2776
    %v3506 = vunpack.c.h.b16 %v2776
    %v3507 = vunpack.c.l.b16 %v2777
    %v3508 = vunpack.c.h.b16 %v2777
    %v3509 = vunpack.c.l.b16 %v2778
    %v3510 = vunpack.c.h.b16 %v2778
    %v3511 = vunpack.c.l.b16 %v2779
    %v3512 = vunpack.c.h.b16 %v2779
    %v3513 = vunpack.c.l.b16 %v2780
    %v3514 = vunpack.c.h.b16 %v2780
    %v3515 = vunpack.c.l.b16 %v2781
    %v3516 = vunpack.c.h.b16 %v2781
    %v3517 = vunpack.c.l.b16 %v2782
    %v3518 = vunpack.c.h.b16 %v2782
    %v3519 = vunpack.c.l.b16 %v2783
    %v3520 = vunpack.c.h.b16 %v2783
    %v3521 = vunpack.c.l.b16 %v2784
    %v3522 = vunpack.c.h.b16 %v2784
    %v3523 = vunpack.c.l.b16 %v2785
    %v3524 = vunpack.c.h.b16 %v2785
    %v3525 = vunpack.c.l.b16 %v2786
    %v3526 = vunpack.c.h.b16 %v2786
    %v3527 = vunpack.c.l.b16 %v2787
    %v3528 = vunpack.c.h.b16 %v2787
    %v3529 = vunpack.c.l.b16 %v2788
    %v3530 = vunpack.c.h.b16 %v2788
    %v3531 = vunpack.c.l.b16 %v2789
    %v3532 = vunpack.c.h.b16 %v2789
    %v3533 = vunpack.c.l.b16 %v2790
    %v3534 = vunpack.c.h.b16 %v2790
    %v3535 = vunpack.c.l.b16 %v2791
    %v3536 = vunpack.c.h.b16 %v2791
    %v3537 = vunpack.c.l.b16 %v2792
    %v3538 = vunpack.c.h.b16 %v2792
    %v3539 = vunpack.c.l.b16 %v2793
    %v3540 = vunpack.c.h.b16 %v2793
    %v3541 = vunpack.c.l.b16 %v2794
    %v3542 = vunpack.c.h.b16 %v2794
    %v3543 = vunpack.c.l.b16 %v2795
    %v3544 = vunpack.c.h.b16 %v2795
    %v3545 = vunpack.c.l.b16 %v2796
    %v3546 = vunpack.c.h.b16 %v2796
    %v3547 = vunpack.c.l.b16 %v2797
    %v3548 = vunpack.c.h.b16 %v2797
    %v3549 = vunpack.c.l.b16 %v2798
    %v3550 = vunpack.c.h.b16 %v2798
    %v3551 = vunpack.c.l.b16 %v2799
    %v3552 = vunpack.c.h.b16 %v2799
    %v3553 = vunpack.c.l.b16 %v2800
    %v3554 = vunpack.c.h.b16 %v2800
    %v3555 = vunpack.c.l.b16 %v2801
    %v3556 = vunpack.c.h.b16 %v2801
    %v3557 = vunpack.c.l.b16 %v2802
    %v3558 = vunpack.c.h.b16 %v2802
    %v3559 = vunpack.c.l.b16 %v2803
    %v3560 = vunpack.c.h.b16 %v2803
    %v3561 = vunpack.c.l.b16 %v2804
    %v3562 = vunpack.c.h.b16 %v2804
    %v3563 = vunpack.c.l.b16 %v2805
    %v3564 = vunpack.c.h.b16 %v2805
    %v3565 = vunpack.c.l.b16 %v2806
    %v3566 = vunpack.c.h.b16 %v2806
    %v3567 = vunpack.c.l.b16 %v2807
    %v3568 = vunpack.c.h.b16 %v2807
    %v3569 = vunpack.c.l.b16 %v2808
    %v3570 = vunpack.c.h.b16 %v2808
    %v3571 = vunpack.c.l.b16 %v2809
    %v3572 = vunpack.c.h.b16 %v2809
    %v3573 = vunpack.c.l.b16 %v2810
    %v3574 = vunpack.c.h.b16 %v2810
    %v3575 = vunpack.c.l.b16 %v2811
    %v3576 = vunpack.c.h.b16 %v2811
    %v3577 = vunpack.c.l.b16 %v2812
    %v3578 = vunpack.c.h.b16 %v2812
    %v3579 = vunpack.c.l.b16 %v2813
    %v3580 = vunpack.c.h.b16 %v2813
    %v3581 = vunpack.c.l.b16 %v2814
    %v3582 = vunpack.c.h.b16 %v2814
    %v3583 = vunpack.c.l.b16 %v2815
    %v3584 = vunpack.c.h.b16 %v2815
    %v3585 = vunpack.c.l.b16 %v2816
    %v3586 = vunpack.c.h.b16 %v2816
    %v3587 = vunpack.c.l.b16 %v2817
    %v3588 = vunpack.c.h.b16 %v2817
    %v3589 = vunpack.c.l.b16 %v2818
    %v3590 = vunpack.c.h.b16 %v2818
    %v3591 = vunpack.c.l.b16 %v2819
    %v3592 = vunpack.c.h.b16 %v2819
    %v3593 = vunpack.c.l.b16 %v2820
    %v3594 = vunpack.c.h.b16 %v2820
    %v3595 = vunpack.c.l.b16 %v2821
    %v3596 = vunpack.c.h.b16 %v2821
    %v3597 = vunpack.c.l.b16 %v2822
    %v3598 = vunpack.c.h.b16 %v2822
    %v3599 = vunpack.c.l.b16 %v2823
    %v3600 = vunpack.c.h.b16 %v2823
    %v3601 = vunpack.c.l.b16 %v2824
    %v3602 = vunpack.c.h.b16 %v2824
    %v3603 = vunpack.c.l.b16 %v2825
    %v3604 = vunpack.c.h.b16 %v2825
    %v3605 = vunpack.c.l.b16 %v2826
    %v3606 = vunpack.c.h.b16 %v2826
    %v3607 = vunpack.c.l.b16 %v2827
    %v3608 = vunpack.c.h.b16 %v2827
    %v3609 = vunpack.c.l.b16 %v2828
    %v3610 = vunpack.c.h.b16 %v2828
    %v3611 = vunpack.c.l.b16 %v2829
    %v3612 = vunpack.c.h.b16 %v2829
    %v3613 = vunpack.c.l.b16 %v2830
    %v3614 = vunpack.c.h.b16 %v2830
    %v3615 = vunpack.c.l.b16 %v2831
    %v3616 = vunpack.c.h.b16 %v2831
    %v3617 = vunpack.c.l.b16 %v2832
    %v3618 = vunpack.c.h.b16 %v2832
    %v3619 = vunpack.c.l.b16 %v2833
    %v3620 = vunpack.c.h.b16 %v2833
    %v3621 = vunpack.c.l.b16 %v2834
    %v3622 = vunpack.c.h.b16 %v2834
    %v3623 = vunpack.c.l.b16 %v2835
    %v3624 = vunpack.c.h.b16 %v2835
    %v3625 = vunpack.c.l.b16 %v2836
    %v3626 = vunpack.c.h.b16 %v2836
    %v3627 = vpack.c.b16 %v3119, %v3115
    %v3628 = vpack.c.b16 %v3120, %v3116
    %v3629 = vpack.c.b16 %v3121, %v3117
    %v3630 = vpack.c.b16 %v3122, %v3118
    %v3631 = vpack.c.b16 %v3127, %v3123
    %v3632 = vpack.c.b16 %v3128, %v3124
    %v3633 = vpack.c.b16 %v3129, %v3125
    %v3634 = vpack.c.b16 %v3130, %v3126
    %v3635 = vpack.c.b16 %v3135, %v3131
    %v3636 = vpack.c.b16 %v3136, %v3132
    %v3637 = vpack.c.b16 %v3137, %v3133
    %v3638 = vpack.c.b16 %v3138, %v3134
    %v3639 = vpack.c.b16 %v3143, %v3139
    %v3640 = vpack.c.b16 %v3144, %v3140
    %v3641 = vpack.c.b16 %v3145, %v3141
    %v3642 = vpack.c.b16 %v3146, %v3142
    %v3643 = vpack.c.b16 %v3151, %v3147
    %v3644 = vpack.c.b16 %v3152, %v3148
    %v3645 = vpack.c.b16 %v3153, %v3149
    %v3646 = vpack.c.b16 %v3154, %v3150
    %v3647 = vpack.c.b16 %v3159, %v3155
    %v3648 = vpack.c.b16 %v3160, %v3156
    %v3649 = vpack.c.b16 %v3161, %v3157
    %v3650 = vpack.c.b16 %v3162, %v3158
    %v3651 = vpack.c.b16 %v3167, %v3163
    %v3652 = vpack.c.b16 %v3168, %v3164
    %v3653 = vpack.c.b16 %v3169, %v3165
    %v3654 = vpack.c.b16 %v3170, %v3166
    %v3655 = vpack.c.b16 %v3175, %v3171
    %v3656 = vpack.c.b16 %v3176, %v3172
    %v3657 = vpack.c.b16 %v3177, %v3173
    %v3658 = vpack.c.b16 %v3178, %v3174
    %v3659 = vpack.c.b16 %v3183, %v3179
    %v3660 = vpack.c.b16 %v3184, %v3180
    %v3661 = vpack.c.b16 %v3185, %v3181
    %v3662 = vpack.c.b16 %v3186, %v3182
    %v3663 = vpack.c.b16 %v3191, %v3187
    %v3664 = vpack.c.b16 %v3192, %v3188
    %v3665 = vpack.c.b16 %v3193, %v3189
    %v3666 = vpack.c.b16 %v3194, %v3190
    %v3667 = vpack.c.b16 %v3199, %v3195
    %v3668 = vpack.c.b16 %v3200, %v3196
    %v3669 = vpack.c.b16 %v3201, %v3197
    %v3670 = vpack.c.b16 %v3202, %v3198
    %v3671 = vpack.c.b16 %v3207, %v3203
    %v3672 = vpack.c.b16 %v3208, %v3204
    %v3673 = vpack.c.b16 %v3209, %v3205
    %v3674 = vpack.c.b16 %v3210, %v3206
    %v3675 = vpack.c.b16 %v3215, %v3211
    %v3676 = vpack.c.b16 %v3216, %v3212
    %v3677 = vpack.c.b16 %v3217, %v3213
    %v3678 = vpack.c.b16 %v3218, %v3214
    %v3679 = vpack.c.b16 %v3223, %v3219
    %v3680 = vpack.c.b16 %v3224, %v3220
    %v3681 = vpack.c.b16 %v3225, %v3221
    %v3682 = vpack.c.b16 %v3226, %v3222
    %v3683 = vpack.c.b16 %v3231, %v3227
    %v3684 = vpack.c.b16 %v3232, %v3228
    %v3685 = vpack.c.b16 %v3233, %v3229
    %v3686 = vpack.c.b16 %v3234, %v3230
    %v3687 = vpack.c.b16 %v3239, %v3235
    %v3688 = vpack.c.b16 %v3240, %v3236
    %v3689 = vpack.c.b16 %v3241, %v3237
    %v3690 = vpack.c.b16 %v3242, %v3238
    %v3691 = vpack.c.b16 %v3247, %v3243
    %v3692 = vpack.c.b16 %v3248, %v3244
    %v3693 = vpack.c.b16 %v3249, %v3245
    %v3694 = vpack.c.b16 %v3250, %v3246
    %v3695 = vpack.c.b16 %v3255, %v3251
    %v3696 = vpack.c.b16 %v3256, %v3252
    %v3697 = vpack.c.b16 %v3257, %v3253
    %v3698 = vpack.c.b16 %v3258, %v3254
    %v3699 = vpack.c.b16 %v3263, %v3259
    %v3700 = vpack.c.b16 %v3264, %v3260
    %v3701 = vpack.c.b16 %v3265, %v3261
    %v3702 = vpack.c.b16 %v3266, %v3262
    %v3703 = vpack.c.b16 %v3271, %v3267
    %v3704 = vpack.c.b16 %v3272, %v3268
    %v3705 = vpack.c.b16 %v3273, %v3269
    %v3706 = vpack.c.b16 %v3274, %v3270
    %v3707 = vpack.c.b16 %v3279, %v3275
    %v3708 = vpack.c.b16 %v3280, %v3276
    %v3709 = vpack.c.b16 %v3281, %v3277
    %v3710 = vpack.c.b16 %v3282, %v3278
    %v3711 = vpack.c.b16 %v3287, %v3283
    %v3712 = vpack.c.b16 %v3288, %v3284
    %v3713 = vpack.c.b16 %v3289, %v3285
    %v3714 = vpack.c.b16 %v3290, %v3286
    %v3715 = vpack.c.b16 %v3295, %v3291
    %v3716 = vpack.c.b16 %v3296, %v3292
    %v3717 = vpack.c.b16 %v3297, %v3293
    %v3718 = vpack.c.b16 %v3298, %v3294
    %v3719 = vpack.c.b16 %v3303, %v3299
    %v3720 = vpack.c.b16 %v3304, %v3300
    %v3721 = vpack.c.b16 %v3305, %v3301
    %v3722 = vpack.c.b16 %v3306, %v3302
    %v3723 = vpack.c.b16 %v3311, %v3307
    %v3724 = vpack.c.b16 %v3312, %v3308
    %v3725 = vpack.c.b16 %v3313, %v3309
    %v3726 = vpack.c.b16 %v3314, %v3310
    %v3727 = vpack.c.b16 %v3319, %v3315
    %v3728 = vpack.c.b16 %v3320, %v3316
    %v3729 = vpack.c.b16 %v3321, %v3317
    %v3730 = vpack.c.b16 %v3322, %v3318
    %v3731 = vpack.c.b16 %v3327, %v3323
    %v3732 = vpack.c.b16 %v3328, %v3324
    %v3733 = vpack.c.b16 %v3329, %v3325
    %v3734 = vpack.c.b16 %v3330, %v3326
    %v3735 = vpack.c.b16 %v3335, %v3331
    %v3736 = vpack.c.b16 %v3336, %v3332
    %v3737 = vpack.c.b16 %v3337, %v3333
    %v3738 = vpack.c.b16 %v3338, %v3334
    %v3739 = vpack.c.b16 %v3343, %v3339
    %v3740 = vpack.c.b16 %v3344, %v3340
    %v3741 = vpack.c.b16 %v3345, %v3341
    %v3742 = vpack.c.b16 %v3346, %v3342
    %v3743 = vpack.c.b16 %v3351, %v3347
    %v3744 = vpack.c.b16 %v3352, %v3348
    %v3745 = vpack.c.b16 %v3353, %v3349
    %v3746 = vpack.c.b16 %v3354, %v3350
    %v3747 = vpack.c.b16 %v3359, %v3355
    %v3748 = vpack.c.b16 %v3360, %v3356
    %v3749 = vpack.c.b16 %v3361, %v3357
    %v3750 = vpack.c.b16 %v3362, %v3358
    %v3751 = vpack.c.b16 %v3367, %v3363
    %v3752 = vpack.c.b16 %v3368, %v3364
    %v3753 = vpack.c.b16 %v3369, %v3365
    %v3754 = vpack.c.b16 %v3370, %v3366
    %v3755 = vpack.c.b16 %v3375, %v3371
    %v3756 = vpack.c.b16 %v3376, %v3372
    %v3757 = vpack.c.b16 %v3377, %v3373
    %v3758 = vpack.c.b16 %v3378, %v3374
    %v3759 = vpack.c.b16 %v3383, %v3379
    %v3760 = vpack.c.b16 %v3384, %v3380
    %v3761 = vpack.c.b16 %v3385, %v3381
    %v3762 = vpack.c.b16 %v3386, %v3382
    %v3763 = vpack.c.b16 %v3391, %v3387
    %v3764 = vpack.c.b16 %v3392, %v3388
    %v3765 = vpack.c.b16 %v3393, %v3389
    %v3766 = vpack.c.b16 %v3394, %v3390
    %v3767 = vpack.c.b16 %v3399, %v3395
    %v3768 = vpack.c.b16 %v3400, %v3396
    %v3769 = vpack.c.b16 %v3401, %v3397
    %v3770 = vpack.c.b16 %v3402, %v3398
    %v3771 = vpack.c.b16 %v3407, %v3403
    %v3772 = vpack.c.b16 %v3408, %v3404
    %v3773 = vpack.c.b16 %v3409, %v3405
    %v3774 = vpack.c.b16 %v3410, %v3406
    %v3775 = vpack.c.b16 %v3415, %v3411
    %v3776 = vpack.c.b16 %v3416, %v3412
    %v3777 = vpack.c.b16 %v3417, %v3413
    %v3778 = vpack.c.b16 %v3418, %v3414
    %v3779 = vpack.c.b16 %v3423, %v3419
    %v3780 = vpack.c.b16 %v3424, %v3420
    %v3781 = vpack.c.b16 %v3425, %v3421
    %v3782 = vpack.c.b16 %v3426, %v3422
    %v3783 = vpack.c.b16 %v3431, %v3427
    %v3784 = vpack.c.b16 %v3432, %v3428
    %v3785 = vpack.c.b16 %v3433, %v3429
    %v3786 = vpack.c.b16 %v3434, %v3430
    %v3787 = vpack.c.b16 %v3439, %v3435
    %v3788 = vpack.c.b16 %v3440, %v3436
    %v3789 = vpack.c.b16 %v3441, %v3437
    %v3790 = vpack.c.b16 %v3442, %v3438
    %v3791 = vpack.c.b16 %v3447, %v3443
    %v3792 = vpack.c.b16 %v3448, %v3444
    %v3793 = vpack.c.b16 %v3449, %v3445
    %v3794 = vpack.c.b16 %v3450, %v3446
    %v3795 = vpack.c.b16 %v3455, %v3451
    %v3796 = vpack.c.b16 %v3456, %v3452
    %v3797 = vpack.c.b16 %v3457, %v3453
    %v3798 = vpack.c.b16 %v3458, %v3454
    %v3799 = vpack.c.b16 %v3463, %v3459
    %v3800 = vpack.c.b16 %v3464, %v3460
    %v3801 = vpack.c.b16 %v3465, %v3461
    %v3802 = vpack.c.b16 %v3466, %v3462
    %v3803 = vpack.c.b16 %v3471, %v3467
    %v3804 = vpack.c.b16 %v3472, %v3468
    %v3805 = vpack.c.b16 %v3473, %v3469
    %v3806 = vpack.c.b16 %v3474, %v3470
    %v3807 = vpack.c.b16 %v3479, %v3475
    %v3808 = vpack.c.b16 %v3480, %v3476
    %v3809 = vpack.c.b16 %v3481, %v3477
    %v3810 = vpack.c.b16 %v3482, %v3478
    %v3811 = vpack.c.b16 %v3487, %v3483
    %v3812 = vpack.c.b16 %v3488, %v3484
    %v3813 = vpack.c.b16 %v3489, %v3485
    %v3814 = vpack.c.b16 %v3490, %v3486
    %v3815 = vpack.c.b16 %v3495, %v3491
    %v3816 = vpack.c.b16 %v3496, %v3492
    %v3817 = vpack.c.b16 %v3497, %v3493
    %v3818 = vpack.c.b16 %v3498, %v3494
    %v3819 = vpack.c.b16 %v3503, %v3499
    %v3820 = vpack.c.b16 %v3504, %v3500
    %v3821 = vpack.c.b16 %v3505, %v3501
    %v3822 = vpack.c.b16 %v3506, %v3502
    %v3823 = vpack.c.b16 %v3511, %v3507
    %v3824 = vpack.c.b16 %v3512, %v3508
    %v3825 = vpack.c.b16 %v3513, %v3509
    %v3826 = vpack.c.b16 %v3514, %v3510
    %v3827 = vpack.c.b16 %v3519, %v3515
    %v3828 = vpack.c.b16 %v3520, %v3516
    %v3829 = vpack.c.b16 %v3521, %v3517
    %v3830 = vpack.c.b16 %v3522, %v3518
    %v3831 = vpack.c.b16 %v3527, %v3523
    %v3832 = vpack.c.b16 %v3528, %v3524
    %v3833 = vpack.c.b16 %v3529, %v3525
    %v3834 = vpack.c.b16 %v3530, %v3526
    %v3835 = vpack.c.b16 %v3535, %v3531
    %v3836 = vpack.c.b16 %v3536, %v3532
    %v3837 = vpack.c.b16 %v3537, %v3533
    %v3838 = vpack.c.b16 %v3538, %v3534
    %v3839 = vpack.c.b16 %v3543, %v3539
    %v3840 = vpack.c.b16 %v3544, %v3540
    %v3841 = vpack.c.b16 %v3545, %v3541
    %v3842 = vpack.c.b16 %v3546, %v3542
    %v3843 = vpack.c.b16 %v3551, %v3547
    %v3844 = vpack.c.b16 %v3552, %v3548
    %v3845 = vpack.c.b16 %v3553, %v3549
    %v3846 = vpack.c.b16 %v3554, %v3550
    %v3847 = vpack.c.b16 %v3559, %v3555
    %v3848 = vpack.c.b16 %v3560, %v3556
    %v3849 = vpack.c.b16 %v3561, %v3557
    %v3850 = vpack.c.b16 %v3562, %v3558
    %v3851 = vpack.c.b16 %v3567, %v3563
    %v3852 = vpack.c.b16 %v3568, %v3564
    %v3853 = vpack.c.b16 %v3569, %v3565
    %v3854 = vpack.c.b16 %v3570, %v3566
    %v3855 = vpack.c.b16 %v3575, %v3571
    %v3856 = vpack.c.b16 %v3576, %v3572
    %v3857 = vpack.c.b16 %v3577, %v3573
    %v3858 = vpack.c.b16 %v3578, %v3574
    %v3859 = vpack.c.b16 %v3583, %v3579
    %v3860 = vpack.c.b16 %v3584, %v3580
    %v3861 = vpack.c.b16 %v3585, %v3581
    %v3862 = vpack.c.b16 %v3586, %v3582
    %v3863 = vpack.c.b16 %v3591, %v3587
    %v3864 = vpack.c.b16 %v3592, %v3588
    %v3865 = vpack.c.b16 %v3593, %v3589
    %v3866 = vpack.c.b16 %v3594, %v3590
    %v3867 = vpack.c.b16 %v3599, %v3595
    %v3868 = vpack.c.b16 %v3600, %v3596
    %v3869 = vpack.c.b16 %v3601, %v3597
    %v3870 = vpack.c.b16 %v3602, %v3598
    %v3871 = vpack.c.b16 %v3607, %v3603
    %v3872 = vpack.c.b16 %v3608, %v3604
    %v3873 = vpack.c.b16 %v3609, %v3605
    %v3874 = vpack.c.b16 %v3610, %v3606
    %v3875 = vpack.c.b16 %v3615, %v3611
    %v3876 = vpack.c.b16 %v3616, %v3612
    %v3877 = vpack.c.b16 %v3617, %v3613
    %v3878 = vpack.c.b16 %v3618, %v3614
    %v3879 = vpack.c.b16 %v3623, %v3619
    %v3880 = vpack.c.b16 %v3624, %v3620
    %v3881 = vpack.c.b16 %v3625, %v3621
    %v3882 = vpack.c.b16 %v3626, %v3622
    %4139 = vmatprep.subr.bf16.mxu0 %v3628
    %4140 = vmatpush1.bf16.msra.mxu0 %v3627
    %4141 = vmatprep.subr.bf16.mxu0 %v3632
    %4142 = vmatpush1.bf16.msra.mxu0 %v3631
    %4143 = vmatprep.subr.bf16.mxu0 %v3636
    %4144 = vmatpush1.bf16.msra.mxu0 %v3635
    %4145 = vmatprep.subr.bf16.mxu0 %v3640
    %4146 = vmatpush1.bf16.msra.mxu0 %v3639
    %4147 = vmatprep.subr.bf16.mxu0 %v3644
    %4148 = vmatpush1.bf16.msra.mxu0 %v3643
    %4149 = vmatprep.subr.bf16.mxu0 %v3648
    %4150 = vmatpush1.bf16.msra.mxu0 %v3647
    %4151 = vmatprep.subr.bf16.mxu0 %v3652
    %4152 = vmatpush1.bf16.msra.mxu0 %v3651
    %4153 = vmatprep.subr.bf16.mxu0 %v3656
    %4154 = vmatpush1.bf16.msra.mxu0 %v3655
    %4155 = vmatprep.subr.bf16.mxu0 %v3660
    %4156 = vmatpush1.bf16.msra.mxu0 %v3659
    %4157 = vmatprep.subr.bf16.mxu0 %v3664
    %4158 = vmatpush1.bf16.msra.mxu0 %v3663
    %4159 = vmatprep.subr.bf16.mxu0 %v3668
    %4160 = vmatpush1.bf16.msra.mxu0 %v3667
    %4161 = vmatprep.subr.bf16.mxu0 %v3672
    %4162 = vmatpush1.bf16.msra.mxu0 %v3671
    %4163 = vmatprep.subr.bf16.mxu0 %v3676
    %4164 = vmatpush1.bf16.msra.mxu0 %v3675
    %4165 = vmatprep.subr.bf16.mxu0 %v3680
    %4166 = vmatpush1.bf16.msra.mxu0 %v3679
    %4167 = vmatprep.subr.bf16.mxu0 %v3684
    %4168 = vmatpush1.bf16.msra.mxu0 %v3683
    %4169 = vmatprep.subr.bf16.mxu0 %v3688
    %4170 = vmatpush1.bf16.msra.mxu0 %v3687
    %4171 = vmatprep.mubr.bf16.mxu0 %v2574
    %4172 = vmatmul.mubr.bf16.gmra.mrb[0].mxu0 %v2573
    %v4173 = vpop.f32.mrb[0].mxu0
    %v4174 = vadd.f32 %v2842, %v4173
    %v4175 = vpop.f32.mrb[0].mxu0
    %v4176 = vadd.f32 %v2846, %v4175
    %v4177 = vpop.f32.mrb[0].mxu0
    %v4178 = vadd.f32 %v2842, %v4177
    %v4179 = vpop.f32.mrb[0].mxu0
    %v4180 = vadd.f32 %v2846, %v4179
    %4181 = vdwg.mxu0
    %4182 = vmatprep.subr.bf16.mxu0 %v3692
    %4183 = vmatpush1.bf16.msra.mxu0 %v3691
    %4184 = vmatprep.subr.bf16.mxu0 %v3696
    %4185 = vmatpush1.bf16.msra.mxu0 %v3695
    %4186 = vmatprep.subr.bf16.mxu0 %v3700
    %4187 = vmatpush1.bf16.msra.mxu0 %v3699
    %4188 = vmatprep.subr.bf16.mxu0 %v3704
    %4189 = vmatpush1.bf16.msra.mxu0 %v3703
    %4190 = vmatprep.subr.bf16.mxu0 %v3708
    %4191 = vmatpush1.bf16.msra.mxu0 %v3707
    %4192 = vmatprep.subr.bf16.mxu0 %v3712
    %4193 = vmatpush1.bf16.msra.mxu0 %v3711
    %4194 = vmatprep.subr.bf16.mxu0 %v3716
    %4195 = vmatpush1.bf16.msra.mxu0 %v3715
    %4196 = vmatprep.subr.bf16.mxu0 %v3720
    %4197 = vmatpush1.bf16.msra.mxu0 %v3719
    %4198 = vmatprep.subr.bf16.mxu0 %v3724
    %4199 = vmatpush1.bf16.msra.mxu0 %v3723
    %4200 = vmatprep.subr.bf16.mxu0 %v3728
    %4201 = vmatpush1.bf16.msra.mxu0 %v3727
    %4202 = vmatprep.subr.bf16.mxu0 %v3732
    %4203 = vmatpush1.bf16.msra.mxu0 %v3731
    %4204 = vmatprep.subr.bf16.mxu0 %v3736
    %4205 = vmatpush1.bf16.msra.mxu0 %v3735
    %4206 = vmatprep.subr.bf16.mxu0 %v3740
    %4207 = vmatpush1.bf16.msra.mxu0 %v3739
    %4208 = vmatprep.subr.bf16.mxu0 %v3744
    %4209 = vmatpush1.bf16.msra.mxu0 %v3743
    %4210 = vmatprep.subr.bf16.mxu0 %v3748
    %4211 = vmatpush1.bf16.msra.mxu0 %v3747
    %4212 = vmatprep.subr.bf16.mxu0 %v3752
    %4213 = vmatpush1.bf16.msra.mxu0 %v3751
    %4214 = vmatprep.mubr.bf16.mxu0 %v2576
    %4215 = vmatmul.mubr.bf16.gmra.mrb[0].mxu0 %v2575
    %v4216 = vpop.f32.mrb[0].mxu0
    %v4217 = vadd.f32 %v4174, %v4216
    %v4218 = vpop.f32.mrb[0].mxu0
    %v4219 = vadd.f32 %v4176, %v4218
    %v4220 = vpop.f32.mrb[0].mxu0
    %v4221 = vadd.f32 %v4178, %v4220
    %v4222 = vpop.f32.mrb[0].mxu0
    %v4223 = vadd.f32 %v4180, %v4222
    %4224 = vdwg.mxu0
    %4225 = vmatprep.subr.bf16.mxu0 %v3756
    %4226 = vmatpush1.bf16.msra.mxu0 %v3755
    %4227 = vmatprep.subr.bf16.mxu0 %v3760
    %4228 = vmatpush1.bf16.msra.mxu0 %v3759
    %4229 = vmatprep.subr.bf16.mxu0 %v3764
    %4230 = vmatpush1.bf16.msra.mxu0 %v3763
    %4231 = vmatprep.subr.bf16.mxu0 %v3768
    %4232 = vmatpush1.bf16.msra.mxu0 %v3767
    %4233 = vmatprep.subr.bf16.mxu0 %v3772
    %4234 = vmatpush1.bf16.msra.mxu0 %v3771
    %4235 = vmatprep.subr.bf16.mxu0 %v3776
    %4236 = vmatpush1.bf16.msra.mxu0 %v3775
    %4237 = vmatprep.subr.bf16.mxu0 %v3780
    %4238 = vmatpush1.bf16.msra.mxu0 %v3779
    %4239 = vmatprep.subr.bf16.mxu0 %v3784
    %4240 = vmatpush1.bf16.msra.mxu0 %v3783
    %4241 = vmatprep.subr.bf16.mxu0 %v3788
    %4242 = vmatpush1.bf16.msra.mxu0 %v3787
    %4243 = vmatprep.subr.bf16.mxu0 %v3792
    %4244 = vmatpush1.bf16.msra.mxu0 %v3791
    %4245 = vmatprep.subr.bf16.mxu0 %v3796
    %4246 = vmatpush1.bf16.msra.mxu0 %v3795
    %4247 = vmatprep.subr.bf16.mxu0 %v3800
    %4248 = vmatpush1.bf16.msra.mxu0 %v3799
    %4249 = vmatprep.subr.bf16.mxu0 %v3804
    %4250 = vmatpush1.bf16.msra.mxu0 %v3803
    %4251 = vmatprep.subr.bf16.mxu0 %v3808
    %4252 = vmatpush1.bf16.msra.mxu0 %v3807
    %4253 = vmatprep.subr.bf16.mxu0 %v3812
    %4254 = vmatpush1.bf16.msra.mxu0 %v3811
    %4255 = vmatprep.subr.bf16.mxu0 %v3816
    %4256 = vmatpush1.bf16.msra.mxu0 %v3815
    %4257 = vmatprep.mubr.bf16.mxu0 %v2578
    %4258 = vmatmul.mubr.bf16.gmra.mrb[0].mxu0 %v2577
    %v4259 = vpop.f32.mrb[0].mxu0
    %v4260 = vadd.f32 %v4217, %v4259
    %v4261 = vpop.f32.mrb[0].mxu0
    %v4262 = vadd.f32 %v4219, %v4261
    %v4263 = vpop.f32.mrb[0].mxu0
    %v4264 = vadd.f32 %v4221, %v4263
    %v4265 = vpop.f32.mrb[0].mxu0
    %v4266 = vadd.f32 %v4223, %v4265
    %4267 = vdwg.mxu0
    %4268 = vmatprep.subr.bf16.mxu0 %v3820
    %4269 = vmatpush1.bf16.msra.mxu0 %v3819
    %4270 = vmatprep.subr.bf16.mxu0 %v3824
    %4271 = vmatpush1.bf16.msra.mxu0 %v3823
    %4272 = vmatprep.subr.bf16.mxu0 %v3828
    %4273 = vmatpush1.bf16.msra.mxu0 %v3827
    %4274 = vmatprep.subr.bf16.mxu0 %v3832
    %4275 = vmatpush1.bf16.msra.mxu0 %v3831
    %4276 = vmatprep.subr.bf16.mxu0 %v3836
    %4277 = vmatpush1.bf16.msra.mxu0 %v3835
    %4278 = vmatprep.subr.bf16.mxu0 %v3840
    %4279 = vmatpush1.bf16.msra.mxu0 %v3839
    %4280 = vmatprep.subr.bf16.mxu0 %v3844
    %4281 = vmatpush1.bf16.msra.mxu0 %v3843
    %4282 = vmatprep.subr.bf16.mxu0 %v3848
    %4283 = vmatpush1.bf16.msra.mxu0 %v3847
    %4284 = vmatprep.subr.bf16.mxu0 %v3852
    %4285 = vmatpush1.bf16.msra.mxu0 %v3851
    %4286 = vmatprep.subr.bf16.mxu0 %v3856
    %4287 = vmatpush1.bf16.msra.mxu0 %v3855
    %4288 = vmatprep.subr.bf16.mxu0 %v3860
    %4289 = vmatpush1.bf16.msra.mxu0 %v3859
    %4290 = vmatprep.subr.bf16.mxu0 %v3864
    %4291 = vmatpush1.bf16.msra.mxu0 %v3863
    %4292 = vmatprep.subr.bf16.mxu0 %v3868
    %4293 = vmatpush1.bf16.msra.mxu0 %v3867
    %4294 = vmatprep.subr.bf16.mxu0 %v3872
    %4295 = vmatpush1.bf16.msra.mxu0 %v3871
    %4296 = vmatprep.subr.bf16.mxu0 %v3876
    %4297 = vmatpush1.bf16.msra.mxu0 %v3875
    %4298 = vmatprep.subr.bf16.mxu0 %v3880
    %4299 = vmatpush1.bf16.msra.mxu0 %v3879
    %4300 = vmatprep.mubr.bf16.mxu0 %v2580
    %4301 = vmatmul.mubr.bf16.gmra.mrb[0].mxu0 %v2579
    %v4302 = vpop.f32.mrb[0].mxu0
    %v4303 = vadd.f32 %v4260, %v4302
    %v4304 = vpop.f32.mrb[0].mxu0
    %v4305 = vadd.f32 %v4262, %v4304
    %v4306 = vpop.f32.mrb[0].mxu0
    %v4307 = vadd.f32 %v4264, %v4306
    %v4308 = vpop.f32.mrb[0].mxu0
    %v4309 = vadd.f32 %v4266, %v4308
    %4310 = vdwg.mxu0
    %4311 = vmatprep.subr.bf16.mxu0 %v3630
    %4312 = vmatpush1.bf16.msra.mxu0 %v3629
    %4313 = vmatprep.subr.bf16.mxu0 %v3634
    %4314 = vmatpush1.bf16.msra.mxu0 %v3633
    %4315 = vmatprep.subr.bf16.mxu0 %v3638
    %4316 = vmatpush1.bf16.msra.mxu0 %v3637
    %4317 = vmatprep.subr.bf16.mxu0 %v3642
    %4318 = vmatpush1.bf16.msra.mxu0 %v3641
    %4319 = vmatprep.subr.bf16.mxu0 %v3646
    %4320 = vmatpush1.bf16.msra.mxu0 %v3645
    %4321 = vmatprep.subr.bf16.mxu0 %v3650
    %4322 = vmatpush1.bf16.msra.mxu0 %v3649
    %4323 = vmatprep.subr.bf16.mxu0 %v3654
    %4324 = vmatpush1.bf16.msra.mxu0 %v3653
    %4325 = vmatprep.subr.bf16.mxu0 %v3658
    %4326 = vmatpush1.bf16.msra.mxu0 %v3657
    %4327 = vmatprep.subr.bf16.mxu0 %v3662
    %4328 = vmatpush1.bf16.msra.mxu0 %v3661
    %4329 = vmatprep.subr.bf16.mxu0 %v3666
    %4330 = vmatpush1.bf16.msra.mxu0 %v3665
    %4331 = vmatprep.subr.bf16.mxu0 %v3670
    %4332 = vmatpush1.bf16.msra.mxu0 %v3669
    %4333 = vmatprep.subr.bf16.mxu0 %v3674
    %4334 = vmatpush1.bf16.msra.mxu0 %v3673
    %4335 = vmatprep.subr.bf16.mxu0 %v3678
    %4336 = vmatpush1.bf16.msra.mxu0 %v3677
    %4337 = vmatprep.subr.bf16.mxu0 %v3682
    %4338 = vmatpush1.bf16.msra.mxu0 %v3681
    %4339 = vmatprep.subr.bf16.mxu0 %v3686
    %4340 = vmatpush1.bf16.msra.mxu0 %v3685
    %4341 = vmatprep.subr.bf16.mxu0 %v3690
    %4342 = vmatpush1.bf16.msra.mxu0 %v3689
    %4343 = vmatprep.mubr.bf16.mxu0 %v2574
    %4344 = vmatmul.mubr.bf16.gmra.mrb[0].mxu0 %v2573
    %v4345 = vpop.f32.mrb[0].mxu0
    %v4346 = vadd.f32 %v2850, %v4345
    %v4347 = vpop.f32.mrb[0].mxu0
    %v4348 = vadd.f32 %v2854, %v4347
    %v4349 = vpop.f32.mrb[0].mxu0
    %v4350 = vadd.f32 %v2850, %v4349
    %v4351 = vpop.f32.mrb[0].mxu0
    %v4352 = vadd.f32 %v2854, %v4351
    %4353 = vdwg.mxu0
    %4354 = vmatprep.subr.bf16.mxu0 %v3694
    %4355 = vmatpush1.bf16.msra.mxu0 %v3693
    %4356 = vmatprep.subr.bf16.mxu0 %v3698
    %4357 = vmatpush1.bf16.msra.mxu0 %v3697
    %4358 = vmatprep.subr.bf16.mxu0 %v3702
    %4359 = vmatpush1.bf16.msra.mxu0 %v3701
    %4360 = vmatprep.subr.bf16.mxu0 %v3706
    %4361 = vmatpush1.bf16.msra.mxu0 %v3705
    %4362 = vmatprep.subr.bf16.mxu0 %v3710
    %4363 = vmatpush1.bf16.msra.mxu0 %v3709
    %4364 = vmatprep.subr.bf16.mxu0 %v3714
    %4365 = vmatpush1.bf16.msra.mxu0 %v3713
    %4366 = vmatprep.subr.bf16.mxu0 %v3718
    %4367 = vmatpush1.bf16.msra.mxu0 %v3717
    %4368 = vmatprep.subr.bf16.mxu0 %v3722
    %4369 = vmatpush1.bf16.msra.mxu0 %v3721
    %4370 = vmatprep.subr.bf16.mxu0 %v3726
    %4371 = vmatpush1.bf16.msra.mxu0 %v3725
    %4372 = vmatprep.subr.bf16.mxu0 %v3730
    %4373 = vmatpush1.bf16.msra.mxu0 %v3729
    %4374 = vmatprep.subr.bf16.mxu0 %v3734
    %4375 = vmatpush1.bf16.msra.mxu0 %v3733
    %4376 = vmatprep.subr.bf16.mxu0 %v3738
    %4377 = vmatpush1.bf16.msra.mxu0 %v3737
    %4378 = vmatprep.subr.bf16.mxu0 %v3742
    %4379 = vmatpush1.bf16.msra.mxu0 %v3741
    %4380 = vmatprep.subr.bf16.mxu0 %v3746
    %4381 = vmatpush1.bf16.msra.mxu0 %v3745
    %4382 = vmatprep.subr.bf16.mxu0 %v3750
    %4383 = vmatpush1.bf16.msra.mxu0 %v3749
    %4384 = vmatprep.subr.bf16.mxu0 %v3754
    %4385 = vmatpush1.bf16.msra.mxu0 %v3753
    %4386 = vmatprep.mubr.bf16.mxu0 %v2576
    %4387 = vmatmul.mubr.bf16.gmra.mrb[0].mxu0 %v2575
    %v4388 = vpop.f32.mrb[0].mxu0
    %v4389 = vadd.f32 %v4346, %v4388
    %v4390 = vpop.f32.mrb[0].mxu0
    %v4391 = vadd.f32 %v4348, %v4390
    %v4392 = vpop.f32.mrb[0].mxu0
    %v4393 = vadd.f32 %v4350, %v4392
    %v4394 = vpop.f32.mrb[0].mxu0
    %v4395 = vadd.f32 %v4352, %v4394
    %4396 = vdwg.mxu0
    %4397 = vmatprep.subr.bf16.mxu0 %v3758
    %4398 = vmatpush1.bf16.msra.mxu0 %v3757
    %4399 = vmatprep.subr.bf16.mxu0 %v3762
    %4400 = vmatpush1.bf16.msra.mxu0 %v3761
    %4401 = vmatprep.subr.bf16.mxu0 %v3766
    %4402 = vmatpush1.bf16.msra.mxu0 %v3765
    %4403 = vmatprep.subr.bf16.mxu0 %v3770
    %4404 = vmatpush1.bf16.msra.mxu0 %v3769
    %4405 = vmatprep.subr.bf16.mxu0 %v3774
    %4406 = vmatpush1.bf16.msra.mxu0 %v3773
    %4407 = vmatprep.subr.bf16.mxu0 %v3778
    %4408 = vmatpush1.bf16.msra.mxu0 %v3777
    %4409 = vmatprep.subr.bf16.mxu0 %v3782
    %4410 = vmatpush1.bf16.msra.mxu0 %v3781
    %4411 = vmatprep.subr.bf16.mxu0 %v3786
    %4412 = vmatpush1.bf16.msra.mxu0 %v3785
    %4413 = vmatprep.subr.bf16.mxu0 %v3790
    %4414 = vmatpush1.bf16.msra.mxu0 %v3789
    %4415 = vmatprep.subr.bf16.mxu0 %v3794
    %4416 = vmatpush1.bf16.msra.mxu0 %v3793
    %4417 = vmatprep.subr.bf16.mxu0 %v3798
    %4418 = vmatpush1.bf16.msra.mxu0 %v3797
    %4419 = vmatprep.subr.bf16.mxu0 %v3802
    %4420 = vmatpush1.bf16.msra.mxu0 %v3801
    %4421 = vmatprep.subr.bf16.mxu0 %v3806
    %4422 = vmatpush1.bf16.msra.mxu0 %v3805
    %4423 = vmatprep.subr.bf16.mxu0 %v3810
    %4424 = vmatpush1.bf16.msra.mxu0 %v3809
    %4425 = vmatprep.subr.bf16.mxu0 %v3814
    %4426 = vmatpush1.bf16.msra.mxu0 %v3813
    %4427 = vmatprep.subr.bf16.mxu0 %v3818
    %4428 = vmatpush1.bf16.msra.mxu0 %v3817
    %4429 = vmatprep.mubr.bf16.mxu0 %v2578
    %4430 = vmatmul.mubr.bf16.gmra.mrb[0].mxu0 %v2577
    %v4431 = vpop.f32.mrb[0].mxu0
    %v4432 = vadd.f32 %v4389, %v4431
    %v4433 = vpop.f32.mrb[0].mxu0
    %v4434 = vadd.f32 %v4391, %v4433
    %v4435 = vpop.f32.mrb[0].mxu0
    %v4436 = vadd.f32 %v4393, %v4435
    %v4437 = vpop.f32.mrb[0].mxu0
    %v4438 = vadd.f32 %v4395, %v4437
    %4439 = vdwg.mxu0
    %4440 = vmatprep.subr.bf16.mxu0 %v3822
    %4441 = vmatpush1.bf16.msra.mxu0 %v3821
    %4442 = vmatprep.subr.bf16.mxu0 %v3826
    %4443 = vmatpush1.bf16.msra.mxu0 %v3825
    %4444 = vmatprep.subr.bf16.mxu0 %v3830
    %4445 = vmatpush1.bf16.msra.mxu0 %v3829
    %4446 = vmatprep.subr.bf16.mxu0 %v3834
    %4447 = vmatpush1.bf16.msra.mxu0 %v3833
    %4448 = vmatprep.subr.bf16.mxu0 %v3838
    %4449 = vmatpush1.bf16.msra.mxu0 %v3837
    %4450 = vmatprep.subr.bf16.mxu0 %v3842
    %4451 = vmatpush1.bf16.msra.mxu0 %v3841
    %4452 = vmatprep.subr.bf16.mxu0 %v3846
    %4453 = vmatpush1.bf16.msra.mxu0 %v3845
    %4454 = vmatprep.subr.bf16.mxu0 %v3850
    %4455 = vmatpush1.bf16.msra.mxu0 %v3849
    %4456 = vmatprep.subr.bf16.mxu0 %v3854
    %4457 = vmatpush1.bf16.msra.mxu0 %v3853
    %4458 = vmatprep.subr.bf16.mxu0 %v3858
    %4459 = vmatpush1.bf16.msra.mxu0 %v3857
    %4460 = vmatprep.subr.bf16.mxu0 %v3862
    %4461 = vmatpush1.bf16.msra.mxu0 %v3861
    %4462 = vmatprep.subr.bf16.mxu0 %v3866
    %4463 = vmatpush1.bf16.msra.mxu0 %v3865
    %4464 = vmatprep.subr.bf16.mxu0 %v3870
    %4465 = vmatpush1.bf16.msra.mxu0 %v3869
    %4466 = vmatprep.subr.bf16.mxu0 %v3874
    %4467 = vmatpush1.bf16.msra.mxu0 %v3873
    %4468 = vmatprep.subr.bf16.mxu0 %v3878
    %4469 = vmatpush1.bf16.msra.mxu0 %v3877
    %4470 = vmatprep.subr.bf16.mxu0 %v3882
    %4471 = vmatpush1.bf16.msra.mxu0 %v3881
    %4472 = vmatprep.mubr.bf16.mxu0 %v2580
    %4473 = vmatmul.mubr.bf16.gmra.mrb[0].mxu0 %v2579
    %v4474 = vpop.f32.mrb[0].mxu0
    %v4475 = vadd.f32 %v4432, %v4474
    %v4476 = vpop.f32.mrb[0].mxu0
    %v4477 = vadd.f32 %v4434, %v4476
    %v4478 = vpop.f32.mrb[0].mxu0
    %v4479 = vadd.f32 %v4436, %v4478
    %v4480 = vpop.f32.mrb[0].mxu0
    %v4481 = vadd.f32 %v4438, %v4480
    %4482 = vdwg.mxu0
    %v4483 = vmax.f32 %v4303, 0.0
    %v4484 = vmax.f32 %v4305, 0.0
    %v4485 = vmax.f32 %v4475, 0.0
    %v4486 = vmax.f32 %v4477, 0.0
    %v4487 = vmax.f32 %v4307, 0.0
    %v4488 = vmax.f32 %v4309, 0.0
    %v4489 = vmax.f32 %v4479, 0.0
    %v4490 = vmax.f32 %v4481, 0.0
    %v4491 = vpack.c.bf16 %v4487, %v4483
    %v4492 = vpack.c.bf16 %v4488, %v4484
    %v4493 = vpack.c.bf16 %v4489, %v4485
    %v4494 = vpack.c.bf16 %v4490, %v4486
    %v4499 = vunpack.c.l.b16 %v4491
    %v4500 = vunpack.c.l.b16 %v4492
    %v4501 = vunpack.c.l.b16 %v4493
    %v4502 = vunpack.c.l.b16 %v4494
    %v4503 = vunpack.c.h.b16 %v4491
    %v4504 = vunpack.c.h.b16 %v4492
    %v4505 = vunpack.c.h.b16 %v4493
    %v4506 = vunpack.c.h.b16 %v4494
    %v4507 = vpack.c.b16 %v4500, %v4499
    %v4508 = vpack.c.b16 %v4502, %v4501
    %v4509 = vpack.c.b16 %v4504, %v4503
    %v4510 = vpack.c.b16 %v4506, %v4505
    %vm4511 = vcmask 1040384
    %vm4512 = vcmask 1044484
    %vm4513 = vmor %vm4511, %vm4512
    %v4514 = vrot.slane %v4507, 7
    %v4515 = vrot.slane %v4508, 7
    %v4516 = vrot.slane %v4514, 4
    %v4517 = vrot.slane %v4509, 7
    %v4518 = vsel %vm4513, %v4516, %v4517
    %v4519 = vrot.slane %v4515, 4
    %v4520 = vrot.slane %v4510, 7
    %v4521 = vsel %vm4513, %v4519, %v4520
    %v4522 = vrot.slane %v4517, 4
    %v4523 = vrot.slane %v4520, 4
    %4530 = vst [vmem:[#allocation2] sm:$0xee] %v4514
    %4531 = vst [vmem:[#allocation2 + $0x8] sm:$0xee] %v4515
    %4532 = vst [vmem:[#allocation2 + $0x10] sm:$0xff] %v4518
    %4533 = vst [vmem:[#allocation2 + $0x18] sm:$0xff] %v4521
    %4534 = vst [vmem:[#allocation2 + $0x20] sm:$0x11] %v4522
    %4535 = vst [vmem:[#allocation2 + $0x28] sm:$0x11] %v4523
    %s4536 = scalar_lea.vmem [#allocation3], 12
    %v4537 = vld [vmem:[%s4536] sm:$0xf]
    %v4538 = vld [vmem:[%s4536 + $0x4] sm:$0xf]
    %v4539 = vld [vmem:[%s4536 + $0x8] sm:$0x1]
    %v4540 = vld [vmem:[%s4536] sm:$0xe]
    %v4541 = vld [vmem:[%s4536 + $0x8] sm:$0x3]
    %v4542 = vld [vmem:[%s4536] sm:$0xc]
    %v4543 = vld [vmem:[%s4536 + $0x8] sm:$0x7]
    %v4544 = vld [vmem:[%s4536] sm:$0x8]
    %v4545 = vld [vmem:[%s4536 + $0x8] sm:$0xf]
    %v4548 = vunpack.c.l.b16 %v4537
    %v4549 = vunpack.c.l.b16 %v4538
    %v4550 = vpack.c.b16 %v4549, %v4548
    %v4552 = vunpack.c.l.b16 %v4539
    %v4553 = vpack.c.b16 %v4552, %v4552
    %v4555 = vshrl.u32 %v4550, 16
    %v4557 = vshll.u32 %v4550, 16
    %v4559 = vrot.slane %v4557, 1
    %v4560 = vor.u32 %v4555, %v4559
    %v4562 = vshll.u32 %v4553, 16
    %v4564 = vrot.slane %v4562, 1
    %v4565 = vsel %vm146, %v4560, %v4564
    %4566 = vrot.lane.b32.xlu0 %v4565, 64
    %v4567 = vpop.permute.xlu0 %4566
    %v4569 = vunpack.c.l.b16 %v4540
    %v4570 = vpack.c.b16 %v4549, %v4569
    %v4571 = vrot.slane %v4570, 1
    %v4572 = vrot.slane %v4553, 1
    %v4573 = vsel %vm164, %v4571, %v4572
    %v4575 = vunpack.c.l.b16 %v4541
    %v4576 = vpack.c.b16 %v4575, %v4575
    %v4578 = vshrl.u32 %v4570, 16
    %v4580 = vrot.slane %v4578, 1
    %v4581 = vshll.u32 %v4570, 16
    %v4583 = vrot.slane %v4581, 2
    %v4584 = vor.u32 %v4580, %v4583
    %v4586 = vshrl.u32 %v4576, 16
    %v4588 = vrot.slane %v4586, 1
    %v4589 = vshll.u32 %v4576, 16
    %v4591 = vrot.slane %v4589, 2
    %v4592 = vor.u32 %v4588, %v4591
    %v4593 = vsel %vm171, %v4584, %v4592
    %4594 = vrot.lane.b32.xlu0 %v4593, 64
    %v4595 = vpop.permute.xlu0 %4594
    %v4597 = vunpack.c.l.b16 %v4542
    %v4598 = vpack.c.b16 %v4549, %v4597
    %v4599 = vrot.slane %v4598, 2
    %v4600 = vrot.slane %v4576, 2
    %v4601 = vsel %vm194, %v4599, %v4600
    %v4603 = vunpack.c.l.b16 %v4543
    %v4604 = vpack.c.b16 %v4603, %v4603
    %v4606 = vshrl.u32 %v4598, 16
    %v4608 = vrot.slane %v4606, 2
    %v4609 = vshll.u32 %v4598, 16
    %v4611 = vrot.slane %v4609, 3
    %v4612 = vor.u32 %v4608, %v4611
    %v4614 = vshrl.u32 %v4604, 16
    %v4616 = vrot.slane %v4614, 2
    %v4617 = vshll.u32 %v4604, 16
    %v4619 = vrot.slane %v4617, 3
    %v4620 = vor.u32 %v4616, %v4619
    %v4621 = vsel %vm201, %v4612, %v4620
    %4622 = vrot.lane.b32.xlu0 %v4621, 64
    %v4623 = vpop.permute.xlu0 %4622
    %v4625 = vunpack.c.l.b16 %v4544
    %v4626 = vpack.c.b16 %v4549, %v4625
    %v4627 = vrot.slane %v4626, 3
    %v4628 = vrot.slane %v4604, 3
    %v4629 = vsel %vm224, %v4627, %v4628
    %v4631 = vunpack.c.l.b16 %v4545
    %v4632 = vpack.c.b16 %v4631, %v4631
    %v4634 = vshrl.u32 %v4626, 16
    %v4636 = vrot.slane %v4634, 3
    %v4637 = vshll.u32 %v4626, 16
    %v4639 = vrot.slane %v4637, 4
    %v4640 = vor.u32 %v4636, %v4639
    %v4642 = vshrl.u32 %v4632, 16
    %v4644 = vrot.slane %v4642, 3
    %v4645 = vshll.u32 %v4632, 16
    %v4647 = vrot.slane %v4645, 4
    %v4648 = vor.u32 %v4644, %v4647
    %v4649 = vsel %vm231, %v4640, %v4648
    %4650 = vrot.lane.b32.xlu0 %v4649, 64
    %v4651 = vpop.permute.xlu0 %4650
    %v4652 = vpack.c.b16 %v4631, %v4549
    %v4654 = vsel %vm252, %v4550, %v4567
    %v4658 = vsel %vm252, %v4573, %v4595
    %v4662 = vsel %vm252, %v4601, %v4623
    %v4666 = vsel %vm252, %v4629, %v4651
    %v4668 = vld [vmem:[#allocation6] sm:$0xff]
    %v4669 = vld [vmem:[#allocation6 + $0x8] sm:$0xff]
    %v4670 = vld [vmem:[#allocation6 + $0x10] sm:$0xff]
    %v4671 = vld [vmem:[#allocation6 + $0x18] sm:$0xff]
    %v4672 = vld [vmem:[#allocation6 + $0x20] sm:$0xff]
    %v4673 = vld [vmem:[#allocation6 + $0x28] sm:$0xff]
    %v4674 = vld [vmem:[#allocation6 + $0x30] sm:$0xff]
    %v4675 = vld [vmem:[#allocation6 + $0x38] sm:$0xff]
    %v4676 = vld [vmem:[#allocation6 + $0x40] sm:$0xff]
    %v4677 = vld [vmem:[#allocation6 + $0x48] sm:$0xff]
    %v4678 = vld [vmem:[#allocation6 + $0x50] sm:$0xff]
    %v4679 = vld [vmem:[#allocation6 + $0x58] sm:$0xff]
    %v4680 = vld [vmem:[#allocation6 + $0x60] sm:$0xff]
    %v4681 = vld [vmem:[#allocation6 + $0x68] sm:$0xff]
    %v4682 = vld [vmem:[#allocation6 + $0x70] sm:$0xff]
    %v4683 = vld [vmem:[#allocation6 + $0x78] sm:$0xff]
    %v4684 = vld [vmem:[#allocation6 + $0x80] sm:$0xff]
    %v4685 = vld [vmem:[#allocation6 + $0x88] sm:$0xff]
    %v4686 = vld [vmem:[#allocation6 + $0x90] sm:$0xff]
    %v4687 = vld [vmem:[#allocation6 + $0x98] sm:$0xff]
    %v4688 = vld [vmem:[#allocation6 + $0xa0] sm:$0xff]
    %v4689 = vld [vmem:[#allocation6 + $0xa8] sm:$0xff]
    %v4690 = vld [vmem:[#allocation6 + $0xb0] sm:$0xff]
    %v4691 = vld [vmem:[#allocation6 + $0xb8] sm:$0xff]
    %v4692 = vld [vmem:[#allocation6 + $0xc0] sm:$0xff]
    %v4693 = vld [vmem:[#allocation6 + $0xc8] sm:$0xff]
    %v4694 = vld [vmem:[#allocation6 + $0xd0] sm:$0xff]
    %v4695 = vld [vmem:[#allocation6 + $0xd8] sm:$0xff]
    %v4696 = vld [vmem:[#allocation6 + $0xe0] sm:$0xff]
    %v4697 = vld [vmem:[#allocation6 + $0xe8] sm:$0xff]
    %v4698 = vld [vmem:[#allocation6 + $0xf0] sm:$0xff]
    %v4699 = vld [vmem:[#allocation6 + $0xf8] sm:$0xff]
    %v4700 = vld [vmem:[#allocation6 + $0x100] sm:$0xff]
    %v4701 = vld [vmem:[#allocation6 + $0x108] sm:$0xff]
    %v4702 = vld [vmem:[#allocation6 + $0x110] sm:$0xff]
    %v4703 = vld [vmem:[#allocation6 + $0x118] sm:$0xff]
    %v4704 = vld [vmem:[#allocation6 + $0x120] sm:$0xff]
    %v4705 = vld [vmem:[#allocation6 + $0x128] sm:$0xff]
    %v4706 = vld [vmem:[#allocation6 + $0x130] sm:$0xff]
    %v4707 = vld [vmem:[#allocation6 + $0x138] sm:$0xff]
    %v4708 = vld [vmem:[#allocation6 + $0x140] sm:$0xff]
    %v4709 = vld [vmem:[#allocation6 + $0x148] sm:$0xff]
    %v4710 = vld [vmem:[#allocation6 + $0x150] sm:$0xff]
    %v4711 = vld [vmem:[#allocation6 + $0x158] sm:$0xff]
    %v4712 = vld [vmem:[#allocation6 + $0x160] sm:$0xff]
    %v4713 = vld [vmem:[#allocation6 + $0x168] sm:$0xff]
    %v4714 = vld [vmem:[#allocation6 + $0x170] sm:$0xff]
    %v4715 = vld [vmem:[#allocation6 + $0x178] sm:$0xff]
    %v4716 = vld [vmem:[#allocation6 + $0x180] sm:$0xff]
    %v4717 = vld [vmem:[#allocation6 + $0x188] sm:$0xff]
    %v4718 = vld [vmem:[#allocation6 + $0x190] sm:$0xff]
    %v4719 = vld [vmem:[#allocation6 + $0x198] sm:$0xff]
    %v4720 = vld [vmem:[#allocation6 + $0x1a0] sm:$0xff]
    %v4721 = vld [vmem:[#allocation6 + $0x1a8] sm:$0xff]
    %v4722 = vld [vmem:[#allocation6 + $0x1b0] sm:$0xff]
    %v4723 = vld [vmem:[#allocation6 + $0x1b8] sm:$0xff]
    %v4724 = vld [vmem:[#allocation6 + $0x1c0] sm:$0xff]
    %v4725 = vld [vmem:[#allocation6 + $0x1c8] sm:$0xff]
    %v4726 = vld [vmem:[#allocation6 + $0x1d0] sm:$0xff]
    %v4727 = vld [vmem:[#allocation6 + $0x1d8] sm:$0xff]
    %v4728 = vld [vmem:[#allocation6 + $0x1e0] sm:$0xff]
    %v4729 = vld [vmem:[#allocation6 + $0x1e8] sm:$0xff]
    %v4730 = vld [vmem:[#allocation6 + $0x1f0] sm:$0xff]
    %v4731 = vld [vmem:[#allocation6 + $0x1f8] sm:$0xff]
    %v4732 = vld [vmem:[#allocation6 + $0x200] sm:$0xff]
    %v4733 = vld [vmem:[#allocation6 + $0x208] sm:$0xff]
    %v4734 = vld [vmem:[#allocation6 + $0x210] sm:$0xff]
    %v4735 = vld [vmem:[#allocation6 + $0x218] sm:$0xff]
    %v4736 = vld [vmem:[#allocation6 + $0x220] sm:$0xff]
    %v4737 = vld [vmem:[#allocation6 + $0x228] sm:$0xff]
    %v4738 = vld [vmem:[#allocation6 + $0x230] sm:$0xff]
    %v4739 = vld [vmem:[#allocation6 + $0x238] sm:$0xff]
    %v4740 = vld [vmem:[#allocation6 + $0x240] sm:$0xff]
    %v4741 = vld [vmem:[#allocation6 + $0x248] sm:$0xff]
    %v4742 = vld [vmem:[#allocation6 + $0x250] sm:$0xff]
    %v4743 = vld [vmem:[#allocation6 + $0x258] sm:$0xff]
    %v4744 = vld [vmem:[#allocation6 + $0x260] sm:$0xff]
    %v4745 = vld [vmem:[#allocation6 + $0x268] sm:$0xff]
    %v4746 = vld [vmem:[#allocation6 + $0x270] sm:$0xff]
    %v4747 = vld [vmem:[#allocation6 + $0x278] sm:$0xff]
    %v4748 = vld [vmem:[#allocation6 + $0x280] sm:$0xff]
    %v4749 = vld [vmem:[#allocation6 + $0x288] sm:$0xff]
    %v4750 = vld [vmem:[#allocation6 + $0x290] sm:$0xff]
    %v4751 = vld [vmem:[#allocation6 + $0x298] sm:$0xff]
    %v4752 = vld [vmem:[#allocation6 + $0x2a0] sm:$0xff]
    %v4753 = vld [vmem:[#allocation6 + $0x2a8] sm:$0xff]
    %v4754 = vld [vmem:[#allocation6 + $0x2b0] sm:$0xff]
    %v4755 = vld [vmem:[#allocation6 + $0x2b8] sm:$0xff]
    %v4756 = vld [vmem:[#allocation6 + $0x2c0] sm:$0xff]
    %v4757 = vld [vmem:[#allocation6 + $0x2c8] sm:$0xff]
    %v4758 = vld [vmem:[#allocation6 + $0x2d0] sm:$0xff]
    %v4759 = vld [vmem:[#allocation6 + $0x2d8] sm:$0xff]
    %v4760 = vld [vmem:[#allocation6 + $0x2e0] sm:$0xff]
    %v4761 = vld [vmem:[#allocation6 + $0x2e8] sm:$0xff]
    %v4762 = vld [vmem:[#allocation6 + $0x2f0] sm:$0xff]
    %v4763 = vld [vmem:[#allocation6 + $0x2f8] sm:$0xff]
    %v4764 = vld [vmem:[#allocation6 + $0x300] sm:$0xff]
    %v4765 = vld [vmem:[#allocation6 + $0x308] sm:$0xff]
    %v4766 = vld [vmem:[#allocation6 + $0x310] sm:$0xff]
    %v4767 = vld [vmem:[#allocation6 + $0x318] sm:$0xff]
    %v4768 = vld [vmem:[#allocation6 + $0x320] sm:$0xff]
    %v4769 = vld [vmem:[#allocation6 + $0x328] sm:$0xff]
    %v4770 = vld [vmem:[#allocation6 + $0x330] sm:$0xff]
    %v4771 = vld [vmem:[#allocation6 + $0x338] sm:$0xff]
    %v4772 = vld [vmem:[#allocation6 + $0x340] sm:$0xff]
    %v4773 = vld [vmem:[#allocation6 + $0x348] sm:$0xff]
    %v4774 = vld [vmem:[#allocation6 + $0x350] sm:$0xff]
    %v4775 = vld [vmem:[#allocation6 + $0x358] sm:$0xff]
    %v4776 = vld [vmem:[#allocation6 + $0x360] sm:$0xff]
    %v4777 = vld [vmem:[#allocation6 + $0x368] sm:$0xff]
    %v4778 = vld [vmem:[#allocation6 + $0x370] sm:$0xff]
    %v4779 = vld [vmem:[#allocation6 + $0x378] sm:$0xff]
    %v4780 = vld [vmem:[#allocation6 + $0x380] sm:$0xff]
    %v4781 = vld [vmem:[#allocation6 + $0x388] sm:$0xff]
    %v4782 = vld [vmem:[#allocation6 + $0x390] sm:$0xff]
    %v4783 = vld [vmem:[#allocation6 + $0x398] sm:$0xff]
    %v4784 = vld [vmem:[#allocation6 + $0x3a0] sm:$0xff]
    %v4785 = vld [vmem:[#allocation6 + $0x3a8] sm:$0xff]
    %v4786 = vld [vmem:[#allocation6 + $0x3b0] sm:$0xff]
    %v4787 = vld [vmem:[#allocation6 + $0x3b8] sm:$0xff]
    %v4788 = vld [vmem:[#allocation6 + $0x3c0] sm:$0xff]
    %v4789 = vld [vmem:[#allocation6 + $0x3c8] sm:$0xff]
    %v4790 = vld [vmem:[#allocation6 + $0x3d0] sm:$0xff]
    %v4791 = vld [vmem:[#allocation6 + $0x3d8] sm:$0xff]
    %v4792 = vld [vmem:[#allocation6 + $0x3e0] sm:$0xff]
    %v4793 = vld [vmem:[#allocation6 + $0x3e8] sm:$0xff]
    %v4794 = vld [vmem:[#allocation6 + $0x3f0] sm:$0xff]
    %v4795 = vld [vmem:[#allocation6 + $0x3f8] sm:$0xff]
    %v4796 = vld [vmem:[#allocation6 + $0x400] sm:$0xff]
    %v4797 = vld [vmem:[#allocation6 + $0x408] sm:$0xff]
    %v4798 = vld [vmem:[#allocation6 + $0x410] sm:$0xff]
    %v4799 = vld [vmem:[#allocation6 + $0x418] sm:$0xff]
    %v4800 = vld [vmem:[#allocation6 + $0x420] sm:$0xff]
    %v4801 = vld [vmem:[#allocation6 + $0x428] sm:$0xff]
    %v4802 = vld [vmem:[#allocation6 + $0x430] sm:$0xff]
    %v4803 = vld [vmem:[#allocation6 + $0x438] sm:$0xff]
    %v4804 = vld [vmem:[#allocation6 + $0x440] sm:$0xff]
    %v4805 = vld [vmem:[#allocation6 + $0x448] sm:$0xff]
    %v4806 = vld [vmem:[#allocation6 + $0x450] sm:$0xff]
    %v4807 = vld [vmem:[#allocation6 + $0x458] sm:$0xff]
    %v4808 = vld [vmem:[#allocation6 + $0x460] sm:$0xff]
    %v4809 = vld [vmem:[#allocation6 + $0x468] sm:$0xff]
    %v4810 = vld [vmem:[#allocation6 + $0x470] sm:$0xff]
    %v4811 = vld [vmem:[#allocation6 + $0x478] sm:$0xff]
    %v4812 = vld [vmem:[#allocation6 + $0x480] sm:$0xff]
    %v4813 = vld [vmem:[#allocation6 + $0x488] sm:$0xff]
    %v4814 = vld [vmem:[#allocation6 + $0x490] sm:$0xff]
    %v4815 = vld [vmem:[#allocation6 + $0x498] sm:$0xff]
    %v4816 = vld [vmem:[#allocation6 + $0x4a0] sm:$0xff]
    %v4817 = vld [vmem:[#allocation6 + $0x4a8] sm:$0xff]
    %v4818 = vld [vmem:[#allocation6 + $0x4b0] sm:$0xff]
    %v4819 = vld [vmem:[#allocation6 + $0x4b8] sm:$0xff]
    %v4820 = vld [vmem:[#allocation6 + $0x4c0] sm:$0xff]
    %v4821 = vld [vmem:[#allocation6 + $0x4c8] sm:$0xff]
    %v4822 = vld [vmem:[#allocation6 + $0x4d0] sm:$0xff]
    %v4823 = vld [vmem:[#allocation6 + $0x4d8] sm:$0xff]
    %v4824 = vld [vmem:[#allocation6 + $0x4e0] sm:$0xff]
    %v4825 = vld [vmem:[#allocation6 + $0x4e8] sm:$0xff]
    %v4826 = vld [vmem:[#allocation6 + $0x4f0] sm:$0xff]
    %v4827 = vld [vmem:[#allocation6 + $0x4f8] sm:$0xff]
    %v4828 = vld [vmem:[#allocation6 + $0x500] sm:$0xff]
    %v4829 = vld [vmem:[#allocation6 + $0x508] sm:$0xff]
    %v4830 = vld [vmem:[#allocation6 + $0x510] sm:$0xff]
    %v4831 = vld [vmem:[#allocation6 + $0x518] sm:$0xff]
    %v4832 = vld [vmem:[#allocation6 + $0x520] sm:$0xff]
    %v4833 = vld [vmem:[#allocation6 + $0x528] sm:$0xff]
    %v4834 = vld [vmem:[#allocation6 + $0x530] sm:$0xff]
    %v4835 = vld [vmem:[#allocation6 + $0x538] sm:$0xff]
    %v4836 = vld [vmem:[#allocation6 + $0x540] sm:$0xff]
    %v4837 = vld [vmem:[#allocation6 + $0x548] sm:$0xff]
    %v4838 = vld [vmem:[#allocation6 + $0x550] sm:$0xff]
    %v4839 = vld [vmem:[#allocation6 + $0x558] sm:$0xff]
    %v4840 = vld [vmem:[#allocation6 + $0x560] sm:$0xff]
    %v4841 = vld [vmem:[#allocation6 + $0x568] sm:$0xff]
    %v4842 = vld [vmem:[#allocation6 + $0x570] sm:$0xff]
    %v4843 = vld [vmem:[#allocation6 + $0x578] sm:$0xff]
    %v4844 = vld [vmem:[#allocation6 + $0x580] sm:$0xff]
    %v4845 = vld [vmem:[#allocation6 + $0x588] sm:$0xff]
    %v4846 = vld [vmem:[#allocation6 + $0x590] sm:$0xff]
    %v4847 = vld [vmem:[#allocation6 + $0x598] sm:$0xff]
    %v4848 = vld [vmem:[#allocation6 + $0x5a0] sm:$0xff]
    %v4849 = vld [vmem:[#allocation6 + $0x5a8] sm:$0xff]
    %v4850 = vld [vmem:[#allocation6 + $0x5b0] sm:$0xff]
    %v4851 = vld [vmem:[#allocation6 + $0x5b8] sm:$0xff]
    %v4852 = vld [vmem:[#allocation6 + $0x5c0] sm:$0xff]
    %v4853 = vld [vmem:[#allocation6 + $0x5c8] sm:$0xff]
    %v4854 = vld [vmem:[#allocation6 + $0x5d0] sm:$0xff]
    %v4855 = vld [vmem:[#allocation6 + $0x5d8] sm:$0xff]
    %v4856 = vld [vmem:[#allocation6 + $0x5e0] sm:$0xff]
    %v4857 = vld [vmem:[#allocation6 + $0x5e8] sm:$0xff]
    %v4858 = vld [vmem:[#allocation6 + $0x5f0] sm:$0xff]
    %v4859 = vld [vmem:[#allocation6 + $0x5f8] sm:$0xff]
    %v4860 = vld [vmem:[#allocation6 + $0x600] sm:$0xff]
    %v4861 = vld [vmem:[#allocation6 + $0x608] sm:$0xff]
    %v4862 = vld [vmem:[#allocation6 + $0x610] sm:$0xff]
    %v4863 = vld [vmem:[#allocation6 + $0x618] sm:$0xff]
    %v4864 = vld [vmem:[#allocation6 + $0x620] sm:$0xff]
    %v4865 = vld [vmem:[#allocation6 + $0x628] sm:$0xff]
    %v4866 = vld [vmem:[#allocation6 + $0x630] sm:$0xff]
    %v4867 = vld [vmem:[#allocation6 + $0x638] sm:$0xff]
    %v4868 = vld [vmem:[#allocation6 + $0x640] sm:$0xff]
    %v4869 = vld [vmem:[#allocation6 + $0x648] sm:$0xff]
    %v4870 = vld [vmem:[#allocation6 + $0x650] sm:$0xff]
    %v4871 = vld [vmem:[#allocation6 + $0x658] sm:$0xff]
    %v4872 = vld [vmem:[#allocation6 + $0x660] sm:$0xff]
    %v4873 = vld [vmem:[#allocation6 + $0x668] sm:$0xff]
    %v4874 = vld [vmem:[#allocation6 + $0x670] sm:$0xff]
    %v4875 = vld [vmem:[#allocation6 + $0x678] sm:$0xff]
    %v4876 = vld [vmem:[#allocation6 + $0x680] sm:$0xff]
    %v4877 = vld [vmem:[#allocation6 + $0x688] sm:$0xff]
    %v4878 = vld [vmem:[#allocation6 + $0x690] sm:$0xff]
    %v4879 = vld [vmem:[#allocation6 + $0x698] sm:$0xff]
    %v4880 = vld [vmem:[#allocation6 + $0x6a0] sm:$0xff]
    %v4881 = vld [vmem:[#allocation6 + $0x6a8] sm:$0xff]
    %v4882 = vld [vmem:[#allocation6 + $0x6b0] sm:$0xff]
    %v4883 = vld [vmem:[#allocation6 + $0x6b8] sm:$0xff]
    %v4884 = vld [vmem:[#allocation6 + $0x6c0] sm:$0xff]
    %v4885 = vld [vmem:[#allocation6 + $0x6c8] sm:$0xff]
    %v4886 = vld [vmem:[#allocation6 + $0x6d0] sm:$0xff]
    %v4887 = vld [vmem:[#allocation6 + $0x6d8] sm:$0xff]
    %v4888 = vld [vmem:[#allocation6 + $0x6e0] sm:$0xff]
    %v4889 = vld [vmem:[#allocation6 + $0x6e8] sm:$0xff]
    %v4890 = vld [vmem:[#allocation6 + $0x6f0] sm:$0xff]
    %v4891 = vld [vmem:[#allocation6 + $0x6f8] sm:$0xff]
    %v4892 = vld [vmem:[#allocation6 + $0x700] sm:$0xff]
    %v4893 = vld [vmem:[#allocation6 + $0x708] sm:$0xff]
    %v4894 = vld [vmem:[#allocation6 + $0x710] sm:$0xff]
    %v4895 = vld [vmem:[#allocation6 + $0x718] sm:$0xff]
    %v4896 = vld [vmem:[#allocation6 + $0x720] sm:$0xff]
    %v4897 = vld [vmem:[#allocation6 + $0x728] sm:$0xff]
    %v4898 = vld [vmem:[#allocation6 + $0x730] sm:$0xff]
    %v4899 = vld [vmem:[#allocation6 + $0x738] sm:$0xff]
    %v4900 = vld [vmem:[#allocation6 + $0x740] sm:$0xff]
    %v4901 = vld [vmem:[#allocation6 + $0x748] sm:$0xff]
    %v4902 = vld [vmem:[#allocation6 + $0x750] sm:$0xff]
    %v4903 = vld [vmem:[#allocation6 + $0x758] sm:$0xff]
    %v4904 = vld [vmem:[#allocation6 + $0x760] sm:$0xff]
    %v4905 = vld [vmem:[#allocation6 + $0x768] sm:$0xff]
    %v4906 = vld [vmem:[#allocation6 + $0x770] sm:$0xff]
    %v4907 = vld [vmem:[#allocation6 + $0x778] sm:$0xff]
    %v4908 = vld [vmem:[#allocation6 + $0x780] sm:$0xff]
    %v4909 = vld [vmem:[#allocation6 + $0x788] sm:$0xff]
    %v4910 = vld [vmem:[#allocation6 + $0x790] sm:$0xff]
    %v4911 = vld [vmem:[#allocation6 + $0x798] sm:$0xff]
    %v4912 = vld [vmem:[#allocation6 + $0x7a0] sm:$0xff]
    %v4913 = vld [vmem:[#allocation6 + $0x7a8] sm:$0xff]
    %v4914 = vld [vmem:[#allocation6 + $0x7b0] sm:$0xff]
    %v4915 = vld [vmem:[#allocation6 + $0x7b8] sm:$0xff]
    %v4916 = vld [vmem:[#allocation6 + $0x7c0] sm:$0xff]
    %v4917 = vld [vmem:[#allocation6 + $0x7c8] sm:$0xff]
    %v4918 = vld [vmem:[#allocation6 + $0x7d0] sm:$0xff]
    %v4919 = vld [vmem:[#allocation6 + $0x7d8] sm:$0xff]
    %v4920 = vld [vmem:[#allocation6 + $0x7e0] sm:$0xff]
    %v4921 = vld [vmem:[#allocation6 + $0x7e8] sm:$0xff]
    %v4922 = vld [vmem:[#allocation6 + $0x7f0] sm:$0xff]
    %v4923 = vld [vmem:[#allocation6 + $0x7f8] sm:$0xff]
    %v4924 = vld [vmem:[#allocation6 + $0x800] sm:$0xff]
    %v4925 = vld [vmem:[#allocation6 + $0x808] sm:$0xff]
    %v4926 = vld [vmem:[#allocation6 + $0x810] sm:$0xff]
    %v4927 = vld [vmem:[#allocation6 + $0x818] sm:$0xff]
    %v4928 = vld [vmem:[#allocation6 + $0x820] sm:$0xff]
    %v4929 = vld [vmem:[#allocation6 + $0x828] sm:$0xff]
    %v4930 = vld [vmem:[#allocation6 + $0x830] sm:$0xff]
    %v4931 = vld [vmem:[#allocation6 + $0x838] sm:$0xff]
    %v4932 = vld [vmem:[#allocation6 + $0x840] sm:$0xff]
    %v4933 = vld [vmem:[#allocation6 + $0x848] sm:$0xff]
    %v4934 = vld [vmem:[#allocation6 + $0x850] sm:$0xff]
    %v4935 = vld [vmem:[#allocation6 + $0x858] sm:$0xff]
    %v4936 = vld [vmem:[#allocation6 + $0x860] sm:$0xff]
    %v4937 = vld [vmem:[#allocation6 + $0x868] sm:$0xff]
    %v4938 = vld [vmem:[#allocation6 + $0x870] sm:$0xff]
    %v4939 = vld [vmem:[#allocation6 + $0x878] sm:$0xff]
    %v4940 = vld [vmem:[#allocation6 + $0x880] sm:$0xff]
    %v4941 = vld [vmem:[#allocation6 + $0x888] sm:$0xff]
    %v4942 = vld [vmem:[#allocation6 + $0x890] sm:$0xff]
    %v4943 = vld [vmem:[#allocation6 + $0x898] sm:$0xff]
    %v4944 = vld [vmem:[#allocation6 + $0x8a0] sm:$0xff]
    %v4945 = vld [vmem:[#allocation6 + $0x8a8] sm:$0xff]
    %v4946 = vld [vmem:[#allocation6 + $0x8b0] sm:$0xff]
    %v4947 = vld [vmem:[#allocation6 + $0x8b8] sm:$0xff]
    %v4948 = vld [vmem:[#allocation6 + $0x8c0] sm:$0xff]
    %v4949 = vld [vmem:[#allocation6 + $0x8c8] sm:$0xff]
    %v4950 = vld [vmem:[#allocation6 + $0x8d0] sm:$0xff]
    %v4951 = vld [vmem:[#allocation6 + $0x8d8] sm:$0xff]
    %v4952 = vld [vmem:[#allocation6 + $0x8e0] sm:$0xff]
    %v4953 = vld [vmem:[#allocation6 + $0x8e8] sm:$0xff]
    %v4954 = vld [vmem:[#allocation6 + $0x8f0] sm:$0xff]
    %v4955 = vld [vmem:[#allocation6 + $0x8f8] sm:$0xff]
    %v4956 = vld [vmem:[#allocation8] sm:$0xff]
    %v4958 = vlaneseq
    %v4959 = vshrl.u32 %v4958, 7
    %v4960 = vsub.s32 0, %v4959
    %v4961 = vrot.slane %v4956, %v4960
    %v4962 = vlaneseq
    %v4963 = vshrl.u32 %v4962, 7
    %v4964 = vsub.s32 1, %v4963
    %v4965 = vrot.slane %v4956, %v4964
    %v4966 = vlaneseq
    %v4967 = vshrl.u32 %v4966, 7
    %v4968 = vsub.s32 2, %v4967
    %v4969 = vrot.slane %v4956, %v4968
    %v4970 = vlaneseq
    %v4971 = vshrl.u32 %v4970, 7
    %v4972 = vsub.s32 3, %v4971
    %v4973 = vrot.slane %v4956, %v4972
    %v4974 = vlaneseq
    %v4975 = vshrl.u32 %v4974, 7
    %v4976 = vsub.s32 4, %v4975
    %v4977 = vrot.slane %v4956, %v4976
    %v4978 = vlaneseq
    %v4979 = vshrl.u32 %v4978, 7
    %v4980 = vsub.s32 5, %v4979
    %v4981 = vrot.slane %v4956, %v4980
    %v4982 = vlaneseq
    %v4983 = vshrl.u32 %v4982, 7
    %v4984 = vsub.s32 6, %v4983
    %v4985 = vrot.slane %v4956, %v4984
    %v4986 = vlaneseq
    %v4987 = vshrl.u32 %v4986, 7
    %v4988 = vsub.s32 7, %v4987
    %v4989 = vrot.slane %v4956, %v4988
    %v5286 = vunpack.c.l.b16 %v4668
    %v5287 = vunpack.c.h.b16 %v4668
    %v5288 = vunpack.c.l.b16 %v4669
    %v5289 = vunpack.c.h.b16 %v4669
    %v5290 = vunpack.c.l.b16 %v4670
    %v5291 = vunpack.c.h.b16 %v4670
    %v5292 = vunpack.c.l.b16 %v4671
    %v5293 = vunpack.c.h.b16 %v4671
    %v5294 = vunpack.c.l.b16 %v4672
    %v5295 = vunpack.c.h.b16 %v4672
    %v5296 = vunpack.c.l.b16 %v4673
    %v5297 = vunpack.c.h.b16 %v4673
    %v5298 = vunpack.c.l.b16 %v4674
    %v5299 = vunpack.c.h.b16 %v4674
    %v5300 = vunpack.c.l.b16 %v4675
    %v5301 = vunpack.c.h.b16 %v4675
    %v5302 = vunpack.c.l.b16 %v4676
    %v5303 = vunpack.c.h.b16 %v4676
    %v5304 = vunpack.c.l.b16 %v4677
    %v5305 = vunpack.c.h.b16 %v4677
    %v5306 = vunpack.c.l.b16 %v4678
    %v5307 = vunpack.c.h.b16 %v4678
    %v5308 = vunpack.c.l.b16 %v4679
    %v5309 = vunpack.c.h.b16 %v4679
    %v5310 = vunpack.c.l.b16 %v4680
    %v5311 = vunpack.c.h.b16 %v4680
    %v5312 = vunpack.c.l.b16 %v4681
    %v5313 = vunpack.c.h.b16 %v4681
    %v5314 = vunpack.c.l.b16 %v4682
    %v5315 = vunpack.c.h.b16 %v4682
    %v5316 = vunpack.c.l.b16 %v4683
    %v5317 = vunpack.c.h.b16 %v4683
    %v5318 = vunpack.c.l.b16 %v4684
    %v5319 = vunpack.c.h.b16 %v4684
    %v5320 = vunpack.c.l.b16 %v4685
    %v5321 = vunpack.c.h.b16 %v4685
    %v5322 = vunpack.c.l.b16 %v4686
    %v5323 = vunpack.c.h.b16 %v4686
    %v5324 = vunpack.c.l.b16 %v4687
    %v5325 = vunpack.c.h.b16 %v4687
    %v5326 = vunpack.c.l.b16 %v4688
    %v5327 = vunpack.c.h.b16 %v4688
    %v5328 = vunpack.c.l.b16 %v4689
    %v5329 = vunpack.c.h.b16 %v4689
    %v5330 = vunpack.c.l.b16 %v4690
    %v5331 = vunpack.c.h.b16 %v4690
    %v5332 = vunpack.c.l.b16 %v4691
    %v5333 = vunpack.c.h.b16 %v4691
    %v5334 = vunpack.c.l.b16 %v4692
    %v5335 = vunpack.c.h.b16 %v4692
    %v5336 = vunpack.c.l.b16 %v4693
    %v5337 = vunpack.c.h.b16 %v4693
    %v5338 = vunpack.c.l.b16 %v4694
    %v5339 = vunpack.c.h.b16 %v4694
    %v5340 = vunpack.c.l.b16 %v4695
    %v5341 = vunpack.c.h.b16 %v4695
    %v5342 = vunpack.c.l.b16 %v4696
    %v5343 = vunpack.c.h.b16 %v4696
    %v5344 = vunpack.c.l.b16 %v4697
    %v5345 = vunpack.c.h.b16 %v4697
    %v5346 = vunpack.c.l.b16 %v4698
    %v5347 = vunpack.c.h.b16 %v4698
    %v5348 = vunpack.c.l.b16 %v4699
    %v5349 = vunpack.c.h.b16 %v4699
    %v5350 = vunpack.c.l.b16 %v4700
    %v5351 = vunpack.c.h.b16 %v4700
    %v5352 = vunpack.c.l.b16 %v4701
    %v5353 = vunpack.c.h.b16 %v4701
    %v5354 = vunpack.c.l.b16 %v4702
    %v5355 = vunpack.c.h.b16 %v4702
    %v5356 = vunpack.c.l.b16 %v4703
    %v5357 = vunpack.c.h.b16 %v4703
    %v5358 = vunpack.c.l.b16 %v4704
    %v5359 = vunpack.c.h.b16 %v4704
    %v5360 = vunpack.c.l.b16 %v4705
    %v5361 = vunpack.c.h.b16 %v4705
    %v5362 = vunpack.c.l.b16 %v4706
    %v5363 = vunpack.c.h.b16 %v4706
    %v5364 = vunpack.c.l.b16 %v4707
    %v5365 = vunpack.c.h.b16 %v4707
    %v5366 = vunpack.c.l.b16 %v4708
    %v5367 = vunpack.c.h.b16 %v4708
    %v5368 = vunpack.c.l.b16 %v4709
    %v5369 = vunpack.c.h.b16 %v4709
    %v5370 = vunpack.c.l.b16 %v4710
    %v5371 = vunpack.c.h.b16 %v4710
    %v5372 = vunpack.c.l.b16 %v4711
    %v5373 = vunpack.c.h.b16 %v4711
    %v5374 = vunpack.c.l.b16 %v4712
    %v5375 = vunpack.c.h.b16 %v4712
    %v5376 = vunpack.c.l.b16 %v4713
    %v5377 = vunpack.c.h.b16 %v4713
    %v5378 = vunpack.c.l.b16 %v4714
    %v5379 = vunpack.c.h.b16 %v4714
    %v5380 = vunpack.c.l.b16 %v4715
    %v5381 = vunpack.c.h.b16 %v4715
    %v5382 = vunpack.c.l.b16 %v4716
    %v5383 = vunpack.c.h.b16 %v4716
    %v5384 = vunpack.c.l.b16 %v4717
    %v5385 = vunpack.c.h.b16 %v4717
    %v5386 = vunpack.c.l.b16 %v4718
    %v5387 = vunpack.c.h.b16 %v4718
    %v5388 = vunpack.c.l.b16 %v4719
    %v5389 = vunpack.c.h.b16 %v4719
    %v5390 = vunpack.c.l.b16 %v4720
    %v5391 = vunpack.c.h.b16 %v4720
    %v5392 = vunpack.c.l.b16 %v4721
    %v5393 = vunpack.c.h.b16 %v4721
    %v5394 = vunpack.c.l.b16 %v4722
    %v5395 = vunpack.c.h.b16 %v4722
    %v5396 = vunpack.c.l.b16 %v4723
    %v5397 = vunpack.c.h.b16 %v4723
    %v5398 = vunpack.c.l.b16 %v4724
    %v5399 = vunpack.c.h.b16 %v4724
    %v5400 = vunpack.c.l.b16 %v4725
    %v5401 = vunpack.c.h.b16 %v4725
    %v5402 = vunpack.c.l.b16 %v4726
    %v5403 = vunpack.c.h.b16 %v4726
    %v5404 = vunpack.c.l.b16 %v4727
    %v5405 = vunpack.c.h.b16 %v4727
    %v5406 = vunpack.c.l.b16 %v4728
    %v5407 = vunpack.c.h.b16 %v4728
    %v5408 = vunpack.c.l.b16 %v4729
    %v5409 = vunpack.c.h.b16 %v4729
    %v5410 = vunpack.c.l.b16 %v4730
    %v5411 = vunpack.c.h.b16 %v4730
    %v5412 = vunpack.c.l.b16 %v4731
    %v5413 = vunpack.c.h.b16 %v4731
    %v5414 = vunpack.c.l.b16 %v4732
    %v5415 = vunpack.c.h.b16 %v4732
    %v5416 = vunpack.c.l.b16 %v4733
    %v5417 = vunpack.c.h.b16 %v4733
    %v5418 = vunpack.c.l.b16 %v4734
    %v5419 = vunpack.c.h.b16 %v4734
    %v5420 = vunpack.c.l.b16 %v4735
    %v5421 = vunpack.c.h.b16 %v4735
    %v5422 = vunpack.c.l.b16 %v4736
    %v5423 = vunpack.c.h.b16 %v4736
    %v5424 = vunpack.c.l.b16 %v4737
    %v5425 = vunpack.c.h.b16 %v4737
    %v5426 = vunpack.c.l.b16 %v4738
    %v5427 = vunpack.c.h.b16 %v4738
    %v5428 = vunpack.c.l.b16 %v4739
    %v5429 = vunpack.c.h.b16 %v4739
    %v5430 = vunpack.c.l.b16 %v4740
    %v5431 = vunpack.c.h.b16 %v4740
    %v5432 = vunpack.c.l.b16 %v4741
    %v5433 = vunpack.c.h.b16 %v4741
    %v5434 = vunpack.c.l.b16 %v4742
    %v5435 = vunpack.c.h.b16 %v4742
    %v5436 = vunpack.c.l.b16 %v4743
    %v5437 = vunpack.c.h.b16 %v4743
    %v5438 = vunpack.c.l.b16 %v4744
    %v5439 = vunpack.c.h.b16 %v4744
    %v5440 = vunpack.c.l.b16 %v4745
    %v5441 = vunpack.c.h.b16 %v4745
    %v5442 = vunpack.c.l.b16 %v4746
    %v5443 = vunpack.c.h.b16 %v4746
    %v5444 = vunpack.c.l.b16 %v4747
    %v5445 = vunpack.c.h.b16 %v4747
    %v5446 = vunpack.c.l.b16 %v4748
    %v5447 = vunpack.c.h.b16 %v4748
    %v5448 = vunpack.c.l.b16 %v4749
    %v5449 = vunpack.c.h.b16 %v4749
    %v5450 = vunpack.c.l.b16 %v4750
    %v5451 = vunpack.c.h.b16 %v4750
    %v5452 = vunpack.c.l.b16 %v4751
    %v5453 = vunpack.c.h.b16 %v4751
    %v5454 = vunpack.c.l.b16 %v4752
    %v5455 = vunpack.c.h.b16 %v4752
    %v5456 = vunpack.c.l.b16 %v4753
    %v5457 = vunpack.c.h.b16 %v4753
    %v5458 = vunpack.c.l.b16 %v4754
    %v5459 = vunpack.c.h.b16 %v4754
    %v5460 = vunpack.c.l.b16 %v4755
    %v5461 = vunpack.c.h.b16 %v4755
    %v5462 = vunpack.c.l.b16 %v4756
    %v5463 = vunpack.c.h.b16 %v4756
    %v5464 = vunpack.c.l.b16 %v4757
    %v5465 = vunpack.c.h.b16 %v4757
    %v5466 = vunpack.c.l.b16 %v4758
    %v5467 = vunpack.c.h.b16 %v4758
    %v5468 = vunpack.c.l.b16 %v4759
    %v5469 = vunpack.c.h.b16 %v4759
    %v5470 = vunpack.c.l.b16 %v4760
    %v5471 = vunpack.c.h.b16 %v4760
    %v5472 = vunpack.c.l.b16 %v4761
    %v5473 = vunpack.c.h.b16 %v4761
    %v5474 = vunpack.c.l.b16 %v4762
    %v5475 = vunpack.c.h.b16 %v4762
    %v5476 = vunpack.c.l.b16 %v4763
    %v5477 = vunpack.c.h.b16 %v4763
    %v5478 = vunpack.c.l.b16 %v4764
    %v5479 = vunpack.c.h.b16 %v4764
    %v5480 = vunpack.c.l.b16 %v4765
    %v5481 = vunpack.c.h.b16 %v4765
    %v5482 = vunpack.c.l.b16 %v4766
    %v5483 = vunpack.c.h.b16 %v4766
    %v5484 = vunpack.c.l.b16 %v4767
    %v5485 = vunpack.c.h.b16 %v4767
    %v5486 = vunpack.c.l.b16 %v4768
    %v5487 = vunpack.c.h.b16 %v4768
    %v5488 = vunpack.c.l.b16 %v4769
    %v5489 = vunpack.c.h.b16 %v4769
    %v5490 = vunpack.c.l.b16 %v4770
    %v5491 = vunpack.c.h.b16 %v4770
    %v5492 = vunpack.c.l.b16 %v4771
    %v5493 = vunpack.c.h.b16 %v4771
    %v5494 = vunpack.c.l.b16 %v4772
    %v5495 = vunpack.c.h.b16 %v4772
    %v5496 = vunpack.c.l.b16 %v4773
    %v5497 = vunpack.c.h.b16 %v4773
    %v5498 = vunpack.c.l.b16 %v4774
    %v5499 = vunpack.c.h.b16 %v4774
    %v5500 = vunpack.c.l.b16 %v4775
    %v5501 = vunpack.c.h.b16 %v4775
    %v5502 = vunpack.c.l.b16 %v4776
    %v5503 = vunpack.c.h.b16 %v4776
    %v5504 = vunpack.c.l.b16 %v4777
    %v5505 = vunpack.c.h.b16 %v4777
    %v5506 = vunpack.c.l.b16 %v4778
    %v5507 = vunpack.c.h.b16 %v4778
    %v5508 = vunpack.c.l.b16 %v4779
    %v5509 = vunpack.c.h.b16 %v4779
    %v5510 = vunpack.c.l.b16 %v4780
    %v5511 = vunpack.c.h.b16 %v4780
    %v5512 = vunpack.c.l.b16 %v4781
    %v5513 = vunpack.c.h.b16 %v4781
    %v5514 = vunpack.c.l.b16 %v4782
    %v5515 = vunpack.c.h.b16 %v4782
    %v5516 = vunpack.c.l.b16 %v4783
    %v5517 = vunpack.c.h.b16 %v4783
    %v5518 = vunpack.c.l.b16 %v4784
    %v5519 = vunpack.c.h.b16 %v4784
    %v5520 = vunpack.c.l.b16 %v4785
    %v5521 = vunpack.c.h.b16 %v4785
    %v5522 = vunpack.c.l.b16 %v4786
    %v5523 = vunpack.c.h.b16 %v4786
    %v5524 = vunpack.c.l.b16 %v4787
    %v5525 = vunpack.c.h.b16 %v4787
    %v5526 = vunpack.c.l.b16 %v4788
    %v5527 = vunpack.c.h.b16 %v4788
    %v5528 = vunpack.c.l.b16 %v4789
    %v5529 = vunpack.c.h.b16 %v4789
    %v5530 = vunpack.c.l.b16 %v4790
    %v5531 = vunpack.c.h.b16 %v4790
    %v5532 = vunpack.c.l.b16 %v4791
    %v5533 = vunpack.c.h.b16 %v4791
    %v5534 = vunpack.c.l.b16 %v4792
    %v5535 = vunpack.c.h.b16 %v4792
    %v5536 = vunpack.c.l.b16 %v4793
    %v5537 = vunpack.c.h.b16 %v4793
    %v5538 = vunpack.c.l.b16 %v4794
    %v5539 = vunpack.c.h.b16 %v4794
    %v5540 = vunpack.c.l.b16 %v4795
    %v5541 = vunpack.c.h.b16 %v4795
    %v5542 = vunpack.c.l.b16 %v4796
    %v5543 = vunpack.c.h.b16 %v4796
    %v5544 = vunpack.c.l.b16 %v4797
    %v5545 = vunpack.c.h.b16 %v4797
    %v5546 = vunpack.c.l.b16 %v4798
    %v5547 = vunpack.c.h.b16 %v4798
    %v5548 = vunpack.c.l.b16 %v4799
    %v5549 = vunpack.c.h.b16 %v4799
    %v5550 = vunpack.c.l.b16 %v4800
    %v5551 = vunpack.c.h.b16 %v4800
    %v5552 = vunpack.c.l.b16 %v4801
    %v5553 = vunpack.c.h.b16 %v4801
    %v5554 = vunpack.c.l.b16 %v4802
    %v5555 = vunpack.c.h.b16 %v4802
    %v5556 = vunpack.c.l.b16 %v4803
    %v5557 = vunpack.c.h.b16 %v4803
    %v5558 = vunpack.c.l.b16 %v4804
    %v5559 = vunpack.c.h.b16 %v4804
    %v5560 = vunpack.c.l.b16 %v4805
    %v5561 = vunpack.c.h.b16 %v4805
    %v5562 = vunpack.c.l.b16 %v4806
    %v5563 = vunpack.c.h.b16 %v4806
    %v5564 = vunpack.c.l.b16 %v4807
    %v5565 = vunpack.c.h.b16 %v4807
    %v5566 = vunpack.c.l.b16 %v4808
    %v5567 = vunpack.c.h.b16 %v4808
    %v5568 = vunpack.c.l.b16 %v4809
    %v5569 = vunpack.c.h.b16 %v4809
    %v5570 = vunpack.c.l.b16 %v4810
    %v5571 = vunpack.c.h.b16 %v4810
    %v5572 = vunpack.c.l.b16 %v4811
    %v5573 = vunpack.c.h.b16 %v4811
    %v5574 = vunpack.c.l.b16 %v4812
    %v5575 = vunpack.c.h.b16 %v4812
    %v5576 = vunpack.c.l.b16 %v4813
    %v5577 = vunpack.c.h.b16 %v4813
    %v5578 = vunpack.c.l.b16 %v4814
    %v5579 = vunpack.c.h.b16 %v4814
    %v5580 = vunpack.c.l.b16 %v4815
    %v5581 = vunpack.c.h.b16 %v4815
    %v5582 = vunpack.c.l.b16 %v4816
    %v5583 = vunpack.c.h.b16 %v4816
    %v5584 = vunpack.c.l.b16 %v4817
    %v5585 = vunpack.c.h.b16 %v4817
    %v5586 = vunpack.c.l.b16 %v4818
    %v5587 = vunpack.c.h.b16 %v4818
    %v5588 = vunpack.c.l.b16 %v4819
    %v5589 = vunpack.c.h.b16 %v4819
    %v5590 = vunpack.c.l.b16 %v4820
    %v5591 = vunpack.c.h.b16 %v4820
    %v5592 = vunpack.c.l.b16 %v4821
    %v5593 = vunpack.c.h.b16 %v4821
    %v5594 = vunpack.c.l.b16 %v4822
    %v5595 = vunpack.c.h.b16 %v4822
    %v5596 = vunpack.c.l.b16 %v4823
    %v5597 = vunpack.c.h.b16 %v4823
    %v5598 = vunpack.c.l.b16 %v4824
    %v5599 = vunpack.c.h.b16 %v4824
    %v5600 = vunpack.c.l.b16 %v4825
    %v5601 = vunpack.c.h.b16 %v4825
    %v5602 = vunpack.c.l.b16 %v4826
    %v5603 = vunpack.c.h.b16 %v4826
    %v5604 = vunpack.c.l.b16 %v4827
    %v5605 = vunpack.c.h.b16 %v4827
    %v5606 = vunpack.c.l.b16 %v4828
    %v5607 = vunpack.c.h.b16 %v4828
    %v5608 = vunpack.c.l.b16 %v4829
    %v5609 = vunpack.c.h.b16 %v4829
    %v5610 = vunpack.c.l.b16 %v4830
    %v5611 = vunpack.c.h.b16 %v4830
    %v5612 = vunpack.c.l.b16 %v4831
    %v5613 = vunpack.c.h.b16 %v4831
    %v5614 = vunpack.c.l.b16 %v4832
    %v5615 = vunpack.c.h.b16 %v4832
    %v5616 = vunpack.c.l.b16 %v4833
    %v5617 = vunpack.c.h.b16 %v4833
    %v5618 = vunpack.c.l.b16 %v4834
    %v5619 = vunpack.c.h.b16 %v4834
    %v5620 = vunpack.c.l.b16 %v4835
    %v5621 = vunpack.c.h.b16 %v4835
    %v5622 = vunpack.c.l.b16 %v4836
    %v5623 = vunpack.c.h.b16 %v4836
    %v5624 = vunpack.c.l.b16 %v4837
    %v5625 = vunpack.c.h.b16 %v4837
    %v5626 = vunpack.c.l.b16 %v4838
    %v5627 = vunpack.c.h.b16 %v4838
    %v5628 = vunpack.c.l.b16 %v4839
    %v5629 = vunpack.c.h.b16 %v4839
    %v5630 = vunpack.c.l.b16 %v4840
    %v5631 = vunpack.c.h.b16 %v4840
    %v5632 = vunpack.c.l.b16 %v4841
    %v5633 = vunpack.c.h.b16 %v4841
    %v5634 = vunpack.c.l.b16 %v4842
    %v5635 = vunpack.c.h.b16 %v4842
    %v5636 = vunpack.c.l.b16 %v4843
    %v5637 = vunpack.c.h.b16 %v4843
    %v5638 = vunpack.c.l.b16 %v4844
    %v5639 = vunpack.c.h.b16 %v4844
    %v5640 = vunpack.c.l.b16 %v4845
    %v5641 = vunpack.c.h.b16 %v4845
    %v5642 = vunpack.c.l.b16 %v4846
    %v5643 = vunpack.c.h.b16 %v4846
    %v5644 = vunpack.c.l.b16 %v4847
    %v5645 = vunpack.c.h.b16 %v4847
    %v5646 = vunpack.c.l.b16 %v4848
    %v5647 = vunpack.c.h.b16 %v4848
    %v5648 = vunpack.c.l.b16 %v4849
    %v5649 = vunpack.c.h.b16 %v4849
    %v5650 = vunpack.c.l.b16 %v4850
    %v5651 = vunpack.c.h.b16 %v4850
    %v5652 = vunpack.c.l.b16 %v4851
    %v5653 = vunpack.c.h.b16 %v4851
    %v5654 = vunpack.c.l.b16 %v4852
    %v5655 = vunpack.c.h.b16 %v4852
    %v5656 = vunpack.c.l.b16 %v4853
    %v5657 = vunpack.c.h.b16 %v4853
    %v5658 = vunpack.c.l.b16 %v4854
    %v5659 = vunpack.c.h.b16 %v4854
    %v5660 = vunpack.c.l.b16 %v4855
    %v5661 = vunpack.c.h.b16 %v4855
    %v5662 = vunpack.c.l.b16 %v4856
    %v5663 = vunpack.c.h.b16 %v4856
    %v5664 = vunpack.c.l.b16 %v4857
    %v5665 = vunpack.c.h.b16 %v4857
    %v5666 = vunpack.c.l.b16 %v4858
    %v5667 = vunpack.c.h.b16 %v4858
    %v5668 = vunpack.c.l.b16 %v4859
    %v5669 = vunpack.c.h.b16 %v4859
    %v5670 = vunpack.c.l.b16 %v4860
    %v5671 = vunpack.c.h.b16 %v4860
    %v5672 = vunpack.c.l.b16 %v4861
    %v5673 = vunpack.c.h.b16 %v4861
    %v5674 = vunpack.c.l.b16 %v4862
    %v5675 = vunpack.c.h.b16 %v4862
    %v5676 = vunpack.c.l.b16 %v4863
    %v5677 = vunpack.c.h.b16 %v4863
    %v5678 = vunpack.c.l.b16 %v4864
    %v5679 = vunpack.c.h.b16 %v4864
    %v5680 = vunpack.c.l.b16 %v4865
    %v5681 = vunpack.c.h.b16 %v4865
    %v5682 = vunpack.c.l.b16 %v4866
    %v5683 = vunpack.c.h.b16 %v4866
    %v5684 = vunpack.c.l.b16 %v4867
    %v5685 = vunpack.c.h.b16 %v4867
    %v5686 = vunpack.c.l.b16 %v4868
    %v5687 = vunpack.c.h.b16 %v4868
    %v5688 = vunpack.c.l.b16 %v4869
    %v5689 = vunpack.c.h.b16 %v4869
    %v5690 = vunpack.c.l.b16 %v4870
    %v5691 = vunpack.c.h.b16 %v4870
    %v5692 = vunpack.c.l.b16 %v4871
    %v5693 = vunpack.c.h.b16 %v4871
    %v5694 = vunpack.c.l.b16 %v4872
    %v5695 = vunpack.c.h.b16 %v4872
    %v5696 = vunpack.c.l.b16 %v4873
    %v5697 = vunpack.c.h.b16 %v4873
    %v5698 = vunpack.c.l.b16 %v4874
    %v5699 = vunpack.c.h.b16 %v4874
    %v5700 = vunpack.c.l.b16 %v4875
    %v5701 = vunpack.c.h.b16 %v4875
    %v5702 = vunpack.c.l.b16 %v4876
    %v5703 = vunpack.c.h.b16 %v4876
    %v5704 = vunpack.c.l.b16 %v4877
    %v5705 = vunpack.c.h.b16 %v4877
    %v5706 = vunpack.c.l.b16 %v4878
    %v5707 = vunpack.c.h.b16 %v4878
    %v5708 = vunpack.c.l.b16 %v4879
    %v5709 = vunpack.c.h.b16 %v4879
    %v5710 = vunpack.c.l.b16 %v4880
    %v5711 = vunpack.c.h.b16 %v4880
    %v5712 = vunpack.c.l.b16 %v4881
    %v5713 = vunpack.c.h.b16 %v4881
    %v5714 = vunpack.c.l.b16 %v4882
    %v5715 = vunpack.c.h.b16 %v4882
    %v5716 = vunpack.c.l.b16 %v4883
    %v5717 = vunpack.c.h.b16 %v4883
    %v5718 = vunpack.c.l.b16 %v4884
    %v5719 = vunpack.c.h.b16 %v4884
    %v5720 = vunpack.c.l.b16 %v4885
    %v5721 = vunpack.c.h.b16 %v4885
    %v5722 = vunpack.c.l.b16 %v4886
    %v5723 = vunpack.c.h.b16 %v4886
    %v5724 = vunpack.c.l.b16 %v4887
    %v5725 = vunpack.c.h.b16 %v4887
    %v5726 = vunpack.c.l.b16 %v4888
    %v5727 = vunpack.c.h.b16 %v4888
    %v5728 = vunpack.c.l.b16 %v4889
    %v5729 = vunpack.c.h.b16 %v4889
    %v5730 = vunpack.c.l.b16 %v4890
    %v5731 = vunpack.c.h.b16 %v4890
    %v5732 = vunpack.c.l.b16 %v4891
    %v5733 = vunpack.c.h.b16 %v4891
    %v5734 = vunpack.c.l.b16 %v4892
    %v5735 = vunpack.c.h.b16 %v4892
    %v5736 = vunpack.c.l.b16 %v4893
    %v5737 = vunpack.c.h.b16 %v4893
    %v5738 = vunpack.c.l.b16 %v4894
    %v5739 = vunpack.c.h.b16 %v4894
    %v5740 = vunpack.c.l.b16 %v4895
    %v5741 = vunpack.c.h.b16 %v4895
    %v5742 = vunpack.c.l.b16 %v4896
    %v5743 = vunpack.c.h.b16 %v4896
    %v5744 = vunpack.c.l.b16 %v4897
    %v5745 = vunpack.c.h.b16 %v4897
    %v5746 = vunpack.c.l.b16 %v4898
    %v5747 = vunpack.c.h.b16 %v4898
    %v5748 = vunpack.c.l.b16 %v4899
    %v5749 = vunpack.c.h.b16 %v4899
    %v5750 = vunpack.c.l.b16 %v4900
    %v5751 = vunpack.c.h.b16 %v4900
    %v5752 = vunpack.c.l.b16 %v4901
    %v5753 = vunpack.c.h.b16 %v4901
    %v5754 = vunpack.c.l.b16 %v4902
    %v5755 = vunpack.c.h.b16 %v4902
    %v5756 = vunpack.c.l.b16 %v4903
    %v5757 = vunpack.c.h.b16 %v4903
    %v5758 = vunpack.c.l.b16 %v4904
    %v5759 = vunpack.c.h.b16 %v4904
    %v5760 = vunpack.c.l.b16 %v4905
    %v5761 = vunpack.c.h.b16 %v4905
    %v5762 = vunpack.c.l.b16 %v4906
    %v5763 = vunpack.c.h.b16 %v4906
    %v5764 = vunpack.c.l.b16 %v4907
    %v5765 = vunpack.c.h.b16 %v4907
    %v5766 = vunpack.c.l.b16 %v4908
    %v5767 = vunpack.c.h.b16 %v4908
    %v5768 = vunpack.c.l.b16 %v4909
    %v5769 = vunpack.c.h.b16 %v4909
    %v5770 = vunpack.c.l.b16 %v4910
    %v5771 = vunpack.c.h.b16 %v4910
    %v5772 = vunpack.c.l.b16 %v4911
    %v5773 = vunpack.c.h.b16 %v4911
    %v5774 = vunpack.c.l.b16 %v4912
    %v5775 = vunpack.c.h.b16 %v4912
    %v5776 = vunpack.c.l.b16 %v4913
    %v5777 = vunpack.c.h.b16 %v4913
    %v5778 = vunpack.c.l.b16 %v4914
    %v5779 = vunpack.c.h.b16 %v4914
    %v5780 = vunpack.c.l.b16 %v4915
    %v5781 = vunpack.c.h.b16 %v4915
    %v5782 = vunpack.c.l.b16 %v4916
    %v5783 = vunpack.c.h.b16 %v4916
    %v5784 = vunpack.c.l.b16 %v4917
    %v5785 = vunpack.c.h.b16 %v4917
    %v5786 = vunpack.c.l.b16 %v4918
    %v5787 = vunpack.c.h.b16 %v4918
    %v5788 = vunpack.c.l.b16 %v4919
    %v5789 = vunpack.c.h.b16 %v4919
    %v5790 = vunpack.c.l.b16 %v4920
    %v5791 = vunpack.c.h.b16 %v4920
    %v5792 = vunpack.c.l.b16 %v4921
    %v5793 = vunpack.c.h.b16 %v4921
    %v5794 = vunpack.c.l.b16 %v4922
    %v5795 = vunpack.c.h.b16 %v4922
    %v5796 = vunpack.c.l.b16 %v4923
    %v5797 = vunpack.c.h.b16 %v4923
    %v5798 = vunpack.c.l.b16 %v4924
    %v5799 = vunpack.c.h.b16 %v4924
    %v5800 = vunpack.c.l.b16 %v4925
    %v5801 = vunpack.c.h.b16 %v4925
    %v5802 = vunpack.c.l.b16 %v4926
    %v5803 = vunpack.c.h.b16 %v4926
    %v5804 = vunpack.c.l.b16 %v4927
    %v5805 = vunpack.c.h.b16 %v4927
    %v5806 = vunpack.c.l.b16 %v4928
    %v5807 = vunpack.c.h.b16 %v4928
    %v5808 = vunpack.c.l.b16 %v4929
    %v5809 = vunpack.c.h.b16 %v4929
    %v5810 = vunpack.c.l.b16 %v4930
    %v5811 = vunpack.c.h.b16 %v4930
    %v5812 = vunpack.c.l.b16 %v4931
    %v5813 = vunpack.c.h.b16 %v4931
    %v5814 = vunpack.c.l.b16 %v4932
    %v5815 = vunpack.c.h.b16 %v4932
    %v5816 = vunpack.c.l.b16 %v4933
    %v5817 = vunpack.c.h.b16 %v4933
    %v5818 = vunpack.c.l.b16 %v4934
    %v5819 = vunpack.c.h.b16 %v4934
    %v5820 = vunpack.c.l.b16 %v4935
    %v5821 = vunpack.c.h.b16 %v4935
    %v5822 = vunpack.c.l.b16 %v4936
    %v5823 = vunpack.c.h.b16 %v4936
    %v5824 = vunpack.c.l.b16 %v4937
    %v5825 = vunpack.c.h.b16 %v4937
    %v5826 = vunpack.c.l.b16 %v4938
    %v5827 = vunpack.c.h.b16 %v4938
    %v5828 = vunpack.c.l.b16 %v4939
    %v5829 = vunpack.c.h.b16 %v4939
    %v5830 = vunpack.c.l.b16 %v4940
    %v5831 = vunpack.c.h.b16 %v4940
    %v5832 = vunpack.c.l.b16 %v4941
    %v5833 = vunpack.c.h.b16 %v4941
    %v5834 = vunpack.c.l.b16 %v4942
    %v5835 = vunpack.c.h.b16 %v4942
    %v5836 = vunpack.c.l.b16 %v4943
    %v5837 = vunpack.c.h.b16 %v4943
    %v5838 = vunpack.c.l.b16 %v4944
    %v5839 = vunpack.c.h.b16 %v4944
    %v5840 = vunpack.c.l.b16 %v4945
    %v5841 = vunpack.c.h.b16 %v4945
    %v5842 = vunpack.c.l.b16 %v4946
    %v5843 = vunpack.c.h.b16 %v4946
    %v5844 = vunpack.c.l.b16 %v4947
    %v5845 = vunpack.c.h.b16 %v4947
    %v5846 = vunpack.c.l.b16 %v4948
    %v5847 = vunpack.c.h.b16 %v4948
    %v5848 = vunpack.c.l.b16 %v4949
    %v5849 = vunpack.c.h.b16 %v4949
    %v5850 = vunpack.c.l.b16 %v4950
    %v5851 = vunpack.c.h.b16 %v4950
    %v5852 = vunpack.c.l.b16 %v4951
    %v5853 = vunpack.c.h.b16 %v4951
    %v5854 = vunpack.c.l.b16 %v4952
    %v5855 = vunpack.c.h.b16 %v4952
    %v5856 = vunpack.c.l.b16 %v4953
    %v5857 = vunpack.c.h.b16 %v4953
    %v5858 = vunpack.c.l.b16 %v4954
    %v5859 = vunpack.c.h.b16 %v4954
    %v5860 = vunpack.c.l.b16 %v4955
    %v5861 = vunpack.c.h.b16 %v4955
    %v5862 = vpack.c.b16 %v5294, %v5286
    %v5863 = vpack.c.b16 %v5295, %v5287
    %v5864 = vpack.c.b16 %v5296, %v5288
    %v5865 = vpack.c.b16 %v5297, %v5289
    %v5866 = vpack.c.b16 %v5298, %v5290
    %v5867 = vpack.c.b16 %v5299, %v5291
    %v5868 = vpack.c.b16 %v5300, %v5292
    %v5869 = vpack.c.b16 %v5301, %v5293
    %v5870 = vpack.c.b16 %v5310, %v5302
    %v5871 = vpack.c.b16 %v5311, %v5303
    %v5872 = vpack.c.b16 %v5312, %v5304
    %v5873 = vpack.c.b16 %v5313, %v5305
    %v5874 = vpack.c.b16 %v5314, %v5306
    %v5875 = vpack.c.b16 %v5315, %v5307
    %v5876 = vpack.c.b16 %v5316, %v5308
    %v5877 = vpack.c.b16 %v5317, %v5309
    %v5878 = vpack.c.b16 %v5326, %v5318
    %v5879 = vpack.c.b16 %v5327, %v5319
    %v5880 = vpack.c.b16 %v5328, %v5320
    %v5881 = vpack.c.b16 %v5329, %v5321
    %v5882 = vpack.c.b16 %v5330, %v5322
    %v5883 = vpack.c.b16 %v5331, %v5323
    %v5884 = vpack.c.b16 %v5332, %v5324
    %v5885 = vpack.c.b16 %v5333, %v5325
    %v5886 = vpack.c.b16 %v5342, %v5334
    %v5887 = vpack.c.b16 %v5343, %v5335
    %v5888 = vpack.c.b16 %v5344, %v5336
    %v5889 = vpack.c.b16 %v5345, %v5337
    %v5890 = vpack.c.b16 %v5346, %v5338
    %v5891 = vpack.c.b16 %v5347, %v5339
    %v5892 = vpack.c.b16 %v5348, %v5340
    %v5893 = vpack.c.b16 %v5349, %v5341
    %v5894 = vpack.c.b16 %v5358, %v5350
    %v5895 = vpack.c.b16 %v5359, %v5351
    %v5896 = vpack.c.b16 %v5360, %v5352
    %v5897 = vpack.c.b16 %v5361, %v5353
    %v5898 = vpack.c.b16 %v5362, %v5354
    %v5899 = vpack.c.b16 %v5363, %v5355
    %v5900 = vpack.c.b16 %v5364, %v5356
    %v5901 = vpack.c.b16 %v5365, %v5357
    %v5902 = vpack.c.b16 %v5374, %v5366
    %v5903 = vpack.c.b16 %v5375, %v5367
    %v5904 = vpack.c.b16 %v5376, %v5368
    %v5905 = vpack.c.b16 %v5377, %v5369
    %v5906 = vpack.c.b16 %v5378, %v5370
    %v5907 = vpack.c.b16 %v5379, %v5371
    %v5908 = vpack.c.b16 %v5380, %v5372
    %v5909 = vpack.c.b16 %v5381, %v5373
    %v5910 = vpack.c.b16 %v5390, %v5382
    %v5911 = vpack.c.b16 %v5391, %v5383
    %v5912 = vpack.c.b16 %v5392, %v5384
    %v5913 = vpack.c.b16 %v5393, %v5385
    %v5914 = vpack.c.b16 %v5394, %v5386
    %v5915 = vpack.c.b16 %v5395, %v5387
    %v5916 = vpack.c.b16 %v5396, %v5388
    %v5917 = vpack.c.b16 %v5397, %v5389
    %v5918 = vpack.c.b16 %v5406, %v5398
    %v5919 = vpack.c.b16 %v5407, %v5399
    %v5920 = vpack.c.b16 %v5408, %v5400
    %v5921 = vpack.c.b16 %v5409, %v5401
    %v5922 = vpack.c.b16 %v5410, %v5402
    %v5923 = vpack.c.b16 %v5411, %v5403
    %v5924 = vpack.c.b16 %v5412, %v5404
    %v5925 = vpack.c.b16 %v5413, %v5405
    %v5926 = vpack.c.b16 %v5422, %v5414
    %v5927 = vpack.c.b16 %v5423, %v5415
    %v5928 = vpack.c.b16 %v5424, %v5416
    %v5929 = vpack.c.b16 %v5425, %v5417
    %v5930 = vpack.c.b16 %v5426, %v5418
    %v5931 = vpack.c.b16 %v5427, %v5419
    %v5932 = vpack.c.b16 %v5428, %v5420
    %v5933 = vpack.c.b16 %v5429, %v5421
    %v5934 = vpack.c.b16 %v5438, %v5430
    %v5935 = vpack.c.b16 %v5439, %v5431
    %v5936 = vpack.c.b16 %v5440, %v5432
    %v5937 = vpack.c.b16 %v5441, %v5433
    %v5938 = vpack.c.b16 %v5442, %v5434
    %v5939 = vpack.c.b16 %v5443, %v5435
    %v5940 = vpack.c.b16 %v5444, %v5436
    %v5941 = vpack.c.b16 %v5445, %v5437
    %v5942 = vpack.c.b16 %v5454, %v5446
    %v5943 = vpack.c.b16 %v5455, %v5447
    %v5944 = vpack.c.b16 %v5456, %v5448
    %v5945 = vpack.c.b16 %v5457, %v5449
    %v5946 = vpack.c.b16 %v5458, %v5450
    %v5947 = vpack.c.b16 %v5459, %v5451
    %v5948 = vpack.c.b16 %v5460, %v5452
    %v5949 = vpack.c.b16 %v5461, %v5453
    %v5950 = vpack.c.b16 %v5470, %v5462
    %v5951 = vpack.c.b16 %v5471, %v5463
    %v5952 = vpack.c.b16 %v5472, %v5464
    %v5953 = vpack.c.b16 %v5473, %v5465
    %v5954 = vpack.c.b16 %v5474, %v5466
    %v5955 = vpack.c.b16 %v5475, %v5467
    %v5956 = vpack.c.b16 %v5476, %v5468
    %v5957 = vpack.c.b16 %v5477, %v5469
    %v5958 = vpack.c.b16 %v5486, %v5478
    %v5959 = vpack.c.b16 %v5487, %v5479
    %v5960 = vpack.c.b16 %v5488, %v5480
    %v5961 = vpack.c.b16 %v5489, %v5481
    %v5962 = vpack.c.b16 %v5490, %v5482
    %v5963 = vpack.c.b16 %v5491, %v5483
    %v5964 = vpack.c.b16 %v5492, %v5484
    %v5965 = vpack.c.b16 %v5493, %v5485
    %v5966 = vpack.c.b16 %v5502, %v5494
    %v5967 = vpack.c.b16 %v5503, %v5495
    %v5968 = vpack.c.b16 %v5504, %v5496
    %v5969 = vpack.c.b16 %v5505, %v5497
    %v5970 = vpack.c.b16 %v5506, %v5498
    %v5971 = vpack.c.b16 %v5507, %v5499
    %v5972 = vpack.c.b16 %v5508, %v5500
    %v5973 = vpack.c.b16 %v5509, %v5501
    %v5974 = vpack.c.b16 %v5518, %v5510
    %v5975 = vpack.c.b16 %v5519, %v5511
    %v5976 = vpack.c.b16 %v5520, %v5512
    %v5977 = vpack.c.b16 %v5521, %v5513
    %v5978 = vpack.c.b16 %v5522, %v5514
    %v5979 = vpack.c.b16 %v5523, %v5515
    %v5980 = vpack.c.b16 %v5524, %v5516
    %v5981 = vpack.c.b16 %v5525, %v5517
    %v5982 = vpack.c.b16 %v5534, %v5526
    %v5983 = vpack.c.b16 %v5535, %v5527
    %v5984 = vpack.c.b16 %v5536, %v5528
    %v5985 = vpack.c.b16 %v5537, %v5529
    %v5986 = vpack.c.b16 %v5538, %v5530
    %v5987 = vpack.c.b16 %v5539, %v5531
    %v5988 = vpack.c.b16 %v5540, %v5532
    %v5989 = vpack.c.b16 %v5541, %v5533
    %v5990 = vpack.c.b16 %v5550, %v5542
    %v5991 = vpack.c.b16 %v5551, %v5543
    %v5992 = vpack.c.b16 %v5552, %v5544
    %v5993 = vpack.c.b16 %v5553, %v5545
    %v5994 = vpack.c.b16 %v5554, %v5546
    %v5995 = vpack.c.b16 %v5555, %v5547
    %v5996 = vpack.c.b16 %v5556, %v5548
    %v5997 = vpack.c.b16 %v5557, %v5549
    %v5998 = vpack.c.b16 %v5566, %v5558
    %v5999 = vpack.c.b16 %v5567, %v5559
    %v6000 = vpack.c.b16 %v5568, %v5560
    %v6001 = vpack.c.b16 %v5569, %v5561
    %v6002 = vpack.c.b16 %v5570, %v5562
    %v6003 = vpack.c.b16 %v5571, %v5563
    %v6004 = vpack.c.b16 %v5572, %v5564
    %v6005 = vpack.c.b16 %v5573, %v5565
    %v6006 = vpack.c.b16 %v5582, %v5574
    %v6007 = vpack.c.b16 %v5583, %v5575
    %v6008 = vpack.c.b16 %v5584, %v5576
    %v6009 = vpack.c.b16 %v5585, %v5577
    %v6010 = vpack.c.b16 %v5586, %v5578
    %v6011 = vpack.c.b16 %v5587, %v5579
    %v6012 = vpack.c.b16 %v5588, %v5580
    %v6013 = vpack.c.b16 %v5589, %v5581
    %v6014 = vpack.c.b16 %v5598, %v5590
    %v6015 = vpack.c.b16 %v5599, %v5591
    %v6016 = vpack.c.b16 %v5600, %v5592
    %v6017 = vpack.c.b16 %v5601, %v5593
    %v6018 = vpack.c.b16 %v5602, %v5594
    %v6019 = vpack.c.b16 %v5603, %v5595
    %v6020 = vpack.c.b16 %v5604, %v5596
    %v6021 = vpack.c.b16 %v5605, %v5597
    %v6022 = vpack.c.b16 %v5614, %v5606
    %v6023 = vpack.c.b16 %v5615, %v5607
    %v6024 = vpack.c.b16 %v5616, %v5608
    %v6025 = vpack.c.b16 %v5617, %v5609
    %v6026 = vpack.c.b16 %v5618, %v5610
    %v6027 = vpack.c.b16 %v5619, %v5611
    %v6028 = vpack.c.b16 %v5620, %v5612
    %v6029 = vpack.c.b16 %v5621, %v5613
    %v6030 = vpack.c.b16 %v5630, %v5622
    %v6031 = vpack.c.b16 %v5631, %v5623
    %v6032 = vpack.c.b16 %v5632, %v5624
    %v6033 = vpack.c.b16 %v5633, %v5625
    %v6034 = vpack.c.b16 %v5634, %v5626
    %v6035 = vpack.c.b16 %v5635, %v5627
    %v6036 = vpack.c.b16 %v5636, %v5628
    %v6037 = vpack.c.b16 %v5637, %v5629
    %v6038 = vpack.c.b16 %v5646, %v5638
    %v6039 = vpack.c.b16 %v5647, %v5639
    %v6040 = vpack.c.b16 %v5648, %v5640
    %v6041 = vpack.c.b16 %v5649, %v5641
    %v6042 = vpack.c.b16 %v5650, %v5642
    %v6043 = vpack.c.b16 %v5651, %v5643
    %v6044 = vpack.c.b16 %v5652, %v5644
    %v6045 = vpack.c.b16 %v5653, %v5645
    %v6046 = vpack.c.b16 %v5662, %v5654
    %v6047 = vpack.c.b16 %v5663, %v5655
    %v6048 = vpack.c.b16 %v5664, %v5656
    %v6049 = vpack.c.b16 %v5665, %v5657
    %v6050 = vpack.c.b16 %v5666, %v5658
    %v6051 = vpack.c.b16 %v5667, %v5659
    %v6052 = vpack.c.b16 %v5668, %v5660
    %v6053 = vpack.c.b16 %v5669, %v5661
    %v6054 = vpack.c.b16 %v5678, %v5670
    %v6055 = vpack.c.b16 %v5679, %v5671
    %v6056 = vpack.c.b16 %v5680, %v5672
    %v6057 = vpack.c.b16 %v5681, %v5673
    %v6058 = vpack.c.b16 %v5682, %v5674
    %v6059 = vpack.c.b16 %v5683, %v5675
    %v6060 = vpack.c.b16 %v5684, %v5676
    %v6061 = vpack.c.b16 %v5685, %v5677
    %v6062 = vpack.c.b16 %v5694, %v5686
    %v6063 = vpack.c.b16 %v5695, %v5687
    %v6064 = vpack.c.b16 %v5696, %v5688
    %v6065 = vpack.c.b16 %v5697, %v5689
    %v6066 = vpack.c.b16 %v5698, %v5690
    %v6067 = vpack.c.b16 %v5699, %v5691
    %v6068 = vpack.c.b16 %v5700, %v5692
    %v6069 = vpack.c.b16 %v5701, %v5693
    %v6070 = vpack.c.b16 %v5710, %v5702
    %v6071 = vpack.c.b16 %v5711, %v5703
    %v6072 = vpack.c.b16 %v5712, %v5704
    %v6073 = vpack.c.b16 %v5713, %v5705
    %v6074 = vpack.c.b16 %v5714, %v5706
    %v6075 = vpack.c.b16 %v5715, %v5707
    %v6076 = vpack.c.b16 %v5716, %v5708
    %v6077 = vpack.c.b16 %v5717, %v5709
    %v6078 = vpack.c.b16 %v5726, %v5718
    %v6079 = vpack.c.b16 %v5727, %v5719
    %v6080 = vpack.c.b16 %v5728, %v5720
    %v6081 = vpack.c.b16 %v5729, %v5721
    %v6082 = vpack.c.b16 %v5730, %v5722
    %v6083 = vpack.c.b16 %v5731, %v5723
    %v6084 = vpack.c.b16 %v5732, %v5724
    %v6085 = vpack.c.b16 %v5733, %v5725
    %v6086 = vpack.c.b16 %v5742, %v5734
    %v6087 = vpack.c.b16 %v5743, %v5735
    %v6088 = vpack.c.b16 %v5744, %v5736
    %v6089 = vpack.c.b16 %v5745, %v5737
    %v6090 = vpack.c.b16 %v5746, %v5738
    %v6091 = vpack.c.b16 %v5747, %v5739
    %v6092 = vpack.c.b16 %v5748, %v5740
    %v6093 = vpack.c.b16 %v5749, %v5741
    %v6094 = vpack.c.b16 %v5758, %v5750
    %v6095 = vpack.c.b16 %v5759, %v5751
    %v6096 = vpack.c.b16 %v5760, %v5752
    %v6097 = vpack.c.b16 %v5761, %v5753
    %v6098 = vpack.c.b16 %v5762, %v5754
    %v6099 = vpack.c.b16 %v5763, %v5755
    %v6100 = vpack.c.b16 %v5764, %v5756
    %v6101 = vpack.c.b16 %v5765, %v5757
    %v6102 = vpack.c.b16 %v5774, %v5766
    %v6103 = vpack.c.b16 %v5775, %v5767
    %v6104 = vpack.c.b16 %v5776, %v5768
    %v6105 = vpack.c.b16 %v5777, %v5769
    %v6106 = vpack.c.b16 %v5778, %v5770
    %v6107 = vpack.c.b16 %v5779, %v5771
    %v6108 = vpack.c.b16 %v5780, %v5772
    %v6109 = vpack.c.b16 %v5781, %v5773
    %v6110 = vpack.c.b16 %v5790, %v5782
    %v6111 = vpack.c.b16 %v5791, %v5783
    %v6112 = vpack.c.b16 %v5792, %v5784
    %v6113 = vpack.c.b16 %v5793, %v5785
    %v6114 = vpack.c.b16 %v5794, %v5786
    %v6115 = vpack.c.b16 %v5795, %v5787
    %v6116 = vpack.c.b16 %v5796, %v5788
    %v6117 = vpack.c.b16 %v5797, %v5789
    %v6118 = vpack.c.b16 %v5806, %v5798
    %v6119 = vpack.c.b16 %v5807, %v5799
    %v6120 = vpack.c.b16 %v5808, %v5800
    %v6121 = vpack.c.b16 %v5809, %v5801
    %v6122 = vpack.c.b16 %v5810, %v5802
    %v6123 = vpack.c.b16 %v5811, %v5803
    %v6124 = vpack.c.b16 %v5812, %v5804
    %v6125 = vpack.c.b16 %v5813, %v5805
    %v6126 = vpack.c.b16 %v5822, %v5814
    %v6127 = vpack.c.b16 %v5823, %v5815
    %v6128 = vpack.c.b16 %v5824, %v5816
    %v6129 = vpack.c.b16 %v5825, %v5817
    %v6130 = vpack.c.b16 %v5826, %v5818
    %v6131 = vpack.c.b16 %v5827, %v5819
    %v6132 = vpack.c.b16 %v5828, %v5820
    %v6133 = vpack.c.b16 %v5829, %v5821
    %v6134 = vpack.c.b16 %v5838, %v5830
    %v6135 = vpack.c.b16 %v5839, %v5831
    %v6136 = vpack.c.b16 %v5840, %v5832
    %v6137 = vpack.c.b16 %v5841, %v5833
    %v6138 = vpack.c.b16 %v5842, %v5834
    %v6139 = vpack.c.b16 %v5843, %v5835
    %v6140 = vpack.c.b16 %v5844, %v5836
    %v6141 = vpack.c.b16 %v5845, %v5837
    %v6142 = vpack.c.b16 %v5854, %v5846
    %v6143 = vpack.c.b16 %v5855, %v5847
    %v6144 = vpack.c.b16 %v5856, %v5848
    %v6145 = vpack.c.b16 %v5857, %v5849
    %v6146 = vpack.c.b16 %v5858, %v5850
    %v6147 = vpack.c.b16 %v5859, %v5851
    %v6148 = vpack.c.b16 %v5860, %v5852
    %v6149 = vpack.c.b16 %v5861, %v5853
    %v6439 = vsel %vm252, %v4652, 0
    %6441 = vmatprep.subr.bf16.mxu0 %v5863
    %6442 = vmatpush1.bf16.msra.mxu0 %v5862
    %6443 = vmatprep.subr.bf16.mxu0 %v5871
    %6444 = vmatpush1.bf16.msra.mxu0 %v5870
    %6445 = vmatprep.subr.bf16.mxu0 %v5879
    %6446 = vmatpush1.bf16.msra.mxu0 %v5878
    %6447 = vmatprep.subr.bf16.mxu0 %v5887
    %6448 = vmatpush1.bf16.msra.mxu0 %v5886
    %6449 = vmatprep.subr.bf16.mxu0 %v5895
    %6450 = vmatpush1.bf16.msra.mxu0 %v5894
    %6451 = vmatprep.subr.bf16.mxu0 %v5903
    %6452 = vmatpush1.bf16.msra.mxu0 %v5902
    %6453 = vmatprep.subr.bf16.mxu0 %v5911
    %6454 = vmatpush1.bf16.msra.mxu0 %v5910
    %6455 = vmatprep.subr.bf16.mxu0 %v5919
    %6456 = vmatpush1.bf16.msra.mxu0 %v5918
    %6457 = vmatprep.subr.bf16.mxu0 %v5927
    %6458 = vmatpush1.bf16.msra.mxu0 %v5926
    %6459 = vmatprep.subr.bf16.mxu0 %v5935
    %6460 = vmatpush1.bf16.msra.mxu0 %v5934
    %6461 = vmatprep.subr.bf16.mxu0 %v5943
    %6462 = vmatpush1.bf16.msra.mxu0 %v5942
    %6463 = vmatprep.subr.bf16.mxu0 %v5951
    %6464 = vmatpush1.bf16.msra.mxu0 %v5950
    %6465 = vmatprep.subr.bf16.mxu0 %v5959
    %6466 = vmatpush1.bf16.msra.mxu0 %v5958
    %6467 = vmatprep.subr.bf16.mxu0 %v5967
    %6468 = vmatpush1.bf16.msra.mxu0 %v5966
    %6469 = vmatprep.subr.bf16.mxu0 %v5975
    %6470 = vmatpush1.bf16.msra.mxu0 %v5974
    %6471 = vmatprep.subr.bf16.mxu0 %v5983
    %6472 = vmatpush1.bf16.msra.mxu0 %v5982
    %6473 = vmatprep.mubr.bf16.mxu0 %v4658
    %6474 = vmatmul.mubr.bf16.gmra.mrb[0].mxu0 %v4654
    %v6475 = vpop.f32.mrb[0].mxu0
    %v6476 = vadd.f32 %v4961, %v6475
    %v6477 = vpop.f32.mrb[0].mxu0
    %v6478 = vadd.f32 %v4965, %v6477
    %v6479 = vpop.f32.mrb[0].mxu0
    %v6480 = vadd.f32 %v4961, %v6479
    %v6481 = vpop.f32.mrb[0].mxu0
    %v6482 = vadd.f32 %v4965, %v6481
    %6483 = vdwg.mxu0
    %6484 = vmatprep.subr.bf16.mxu0 %v5991
    %6485 = vmatpush1.bf16.msra.mxu0 %v5990
    %6486 = vmatprep.subr.bf16.mxu0 %v5999
    %6487 = vmatpush1.bf16.msra.mxu0 %v5998
    %6488 = vmatprep.subr.bf16.mxu0 %v6007
    %6489 = vmatpush1.bf16.msra.mxu0 %v6006
    %6490 = vmatprep.subr.bf16.mxu0 %v6015
    %6491 = vmatpush1.bf16.msra.mxu0 %v6014
    %6492 = vmatprep.subr.bf16.mxu0 %v6023
    %6493 = vmatpush1.bf16.msra.mxu0 %v6022
    %6494 = vmatprep.subr.bf16.mxu0 %v6031
    %6495 = vmatpush1.bf16.msra.mxu0 %v6030
    %6496 = vmatprep.subr.bf16.mxu0 %v6039
    %6497 = vmatpush1.bf16.msra.mxu0 %v6038
    %6498 = vmatprep.subr.bf16.mxu0 %v6047
    %6499 = vmatpush1.bf16.msra.mxu0 %v6046
    %6500 = vmatprep.subr.bf16.mxu0 %v6055
    %6501 = vmatpush1.bf16.msra.mxu0 %v6054
    %6502 = vmatprep.subr.bf16.mxu0 %v6063
    %6503 = vmatpush1.bf16.msra.mxu0 %v6062
    %6504 = vmatprep.subr.bf16.mxu0 %v6071
    %6505 = vmatpush1.bf16.msra.mxu0 %v6070
    %6506 = vmatprep.subr.bf16.mxu0 %v6079
    %6507 = vmatpush1.bf16.msra.mxu0 %v6078
    %6508 = vmatprep.subr.bf16.mxu0 %v6087
    %6509 = vmatpush1.bf16.msra.mxu0 %v6086
    %6510 = vmatprep.subr.bf16.mxu0 %v6095
    %6511 = vmatpush1.bf16.msra.mxu0 %v6094
    %6512 = vmatprep.subr.bf16.mxu0 %v6103
    %6513 = vmatpush1.bf16.msra.mxu0 %v6102
    %6514 = vmatprep.subr.bf16.mxu0 %v6111
    %6515 = vmatpush1.bf16.msra.mxu0 %v6110
    %6516 = vmatprep.mubr.bf16.mxu0 %v4666
    %6517 = vmatmul.mubr.bf16.gmra.mrb[0].mxu0 %v4662
    %v6518 = vpop.f32.mrb[0].mxu0
    %v6519 = vadd.f32 %v6476, %v6518
    %v6520 = vpop.f32.mrb[0].mxu0
    %v6521 = vadd.f32 %v6478, %v6520
    %v6522 = vpop.f32.mrb[0].mxu0
    %v6523 = vadd.f32 %v6480, %v6522
    %v6524 = vpop.f32.mrb[0].mxu0
    %v6525 = vadd.f32 %v6482, %v6524
    %6526 = vdwg.mxu0
    %6527 = vmatprep.subr.bf16.mxu0 %v6119
    %6528 = vmatpush1.bf16.msra.mxu0 %v6118
    %6529 = vmatprep.subr.bf16.mxu0 %v6127
    %6530 = vmatpush1.bf16.msra.mxu0 %v6126
    %6531 = vmatprep.subr.bf16.mxu0 %v6135
    %6532 = vmatpush1.bf16.msra.mxu0 %v6134
    %6533 = vmatprep.subr.bf16.mxu0 %v6143
    %6534 = vmatpush1.bf16.msra.mxu0 %v6142
    %6535 = vmatprep.subr.bf16.mxu0 0
    %6536 = vmatpush1.bf16.msra.mxu0 0
    %6537 = vmatprep.subr.bf16.mxu0 0
    %6538 = vmatpush1.bf16.msra.mxu0 0
    %6539 = vmatprep.subr.bf16.mxu0 0
    %6540 = vmatpush1.bf16.msra.mxu0 0
    %6541 = vmatprep.subr.bf16.mxu0 0
    %6542 = vmatpush1.bf16.msra.mxu0 0
    %6543 = vmatprep.subr.bf16.mxu0 0
    %6544 = vmatpush1.bf16.msra.mxu0 0
    %6545 = vmatprep.subr.bf16.mxu0 0
    %6546 = vmatpush1.bf16.msra.mxu0 0
    %6547 = vmatprep.subr.bf16.mxu0 0
    %6548 = vmatpush1.bf16.msra.mxu0 0
    %6549 = vmatprep.subr.bf16.mxu0 0
    %6550 = vmatpush1.bf16.msra.mxu0 0
    %6551 = vmatprep.subr.bf16.mxu0 0
    %6552 = vmatpush1.bf16.msra.mxu0 0
    %6553 = vmatprep.subr.bf16.mxu0 0
    %6554 = vmatpush1.bf16.msra.mxu0 0
    %6555 = vmatprep.subr.bf16.mxu0 0
    %6556 = vmatpush1.bf16.msra.mxu0 0
    %6557 = vmatprep.subr.bf16.mxu0 0
    %6558 = vmatpush1.bf16.msra.mxu0 0
    %6559 = vmatprep.mubr.bf16.mxu0 0
    %6560 = vmatmul.mubr.bf16.gmra.mrb[0].mxu0 %v6439
    %v6561 = vpop.f32.mrb[0].mxu0
    %v6562 = vadd.f32 %v6519, %v6561
    %v6563 = vpop.f32.mrb[0].mxu0
    %v6564 = vadd.f32 %v6521, %v6563
    %v6565 = vpop.f32.mrb[0].mxu0
    %v6566 = vadd.f32 %v6523, %v6565
    %v6567 = vpop.f32.mrb[0].mxu0
    %v6568 = vadd.f32 %v6525, %v6567
    %6569 = vdwg.mxu0
    %6570 = vmatprep.subr.bf16.mxu0 %v5865
    %6571 = vmatpush1.bf16.msra.mxu0 %v5864
    %6572 = vmatprep.subr.bf16.mxu0 %v5873
    %6573 = vmatpush1.bf16.msra.mxu0 %v5872
    %6574 = vmatprep.subr.bf16.mxu0 %v5881
    %6575 = vmatpush1.bf16.msra.mxu0 %v5880
    %6576 = vmatprep.subr.bf16.mxu0 %v5889
    %6577 = vmatpush1.bf16.msra.mxu0 %v5888
    %6578 = vmatprep.subr.bf16.mxu0 %v5897
    %6579 = vmatpush1.bf16.msra.mxu0 %v5896
    %6580 = vmatprep.subr.bf16.mxu0 %v5905
    %6581 = vmatpush1.bf16.msra.mxu0 %v5904
    %6582 = vmatprep.subr.bf16.mxu0 %v5913
    %6583 = vmatpush1.bf16.msra.mxu0 %v5912
    %6584 = vmatprep.subr.bf16.mxu0 %v5921
    %6585 = vmatpush1.bf16.msra.mxu0 %v5920
    %6586 = vmatprep.subr.bf16.mxu0 %v5929
    %6587 = vmatpush1.bf16.msra.mxu0 %v5928
    %6588 = vmatprep.subr.bf16.mxu0 %v5937
    %6589 = vmatpush1.bf16.msra.mxu0 %v5936
    %6590 = vmatprep.subr.bf16.mxu0 %v5945
    %6591 = vmatpush1.bf16.msra.mxu0 %v5944
    %6592 = vmatprep.subr.bf16.mxu0 %v5953
    %6593 = vmatpush1.bf16.msra.mxu0 %v5952
    %6594 = vmatprep.subr.bf16.mxu0 %v5961
    %6595 = vmatpush1.bf16.msra.mxu0 %v5960
    %6596 = vmatprep.subr.bf16.mxu0 %v5969
    %6597 = vmatpush1.bf16.msra.mxu0 %v5968
    %6598 = vmatprep.subr.bf16.mxu0 %v5977
    %6599 = vmatpush1.bf16.msra.mxu0 %v5976
    %6600 = vmatprep.subr.bf16.mxu0 %v5985
    %6601 = vmatpush1.bf16.msra.mxu0 %v5984
    %6602 = vmatprep.mubr.bf16.mxu0 %v4658
    %6603 = vmatmul.mubr.bf16.gmra.mrb[0].mxu0 %v4654
    %v6604 = vpop.f32.mrb[0].mxu0
    %v6605 = vadd.f32 %v4969, %v6604
    %v6606 = vpop.f32.mrb[0].mxu0
    %v6607 = vadd.f32 %v4973, %v6606
    %v6608 = vpop.f32.mrb[0].mxu0
    %v6609 = vadd.f32 %v4969, %v6608
    %v6610 = vpop.f32.mrb[0].mxu0
    %v6611 = vadd.f32 %v4973, %v6610
    %6612 = vdwg.mxu0
    %6613 = vmatprep.subr.bf16.mxu0 %v5993
    %6614 = vmatpush1.bf16.msra.mxu0 %v5992
    %6615 = vmatprep.subr.bf16.mxu0 %v6001
    %6616 = vmatpush1.bf16.msra.mxu0 %v6000
    %6617 = vmatprep.subr.bf16.mxu0 %v6009
    %6618 = vmatpush1.bf16.msra.mxu0 %v6008
    %6619 = vmatprep.subr.bf16.mxu0 %v6017
    %6620 = vmatpush1.bf16.msra.mxu0 %v6016
    %6621 = vmatprep.subr.bf16.mxu0 %v6025
    %6622 = vmatpush1.bf16.msra.mxu0 %v6024
    %6623 = vmatprep.subr.bf16.mxu0 %v6033
    %6624 = vmatpush1.bf16.msra.mxu0 %v6032
    %6625 = vmatprep.subr.bf16.mxu0 %v6041
    %6626 = vmatpush1.bf16.msra.mxu0 %v6040
    %6627 = vmatprep.subr.bf16.mxu0 %v6049
    %6628 = vmatpush1.bf16.msra.mxu0 %v6048
    %6629 = vmatprep.subr.bf16.mxu0 %v6057
    %6630 = vmatpush1.bf16.msra.mxu0 %v6056
    %6631 = vmatprep.subr.bf16.mxu0 %v6065
    %6632 = vmatpush1.bf16.msra.mxu0 %v6064
    %6633 = vmatprep.subr.bf16.mxu0 %v6073
    %6634 = vmatpush1.bf16.msra.mxu0 %v6072
    %6635 = vmatprep.subr.bf16.mxu0 %v6081
    %6636 = vmatpush1.bf16.msra.mxu0 %v6080
    %6637 = vmatprep.subr.bf16.mxu0 %v6089
    %6638 = vmatpush1.bf16.msra.mxu0 %v6088
    %6639 = vmatprep.subr.bf16.mxu0 %v6097
    %6640 = vmatpush1.bf16.msra.mxu0 %v6096
    %6641 = vmatprep.subr.bf16.mxu0 %v6105
    %6642 = vmatpush1.bf16.msra.mxu0 %v6104
    %6643 = vmatprep.subr.bf16.mxu0 %v6113
    %6644 = vmatpush1.bf16.msra.mxu0 %v6112
    %6645 = vmatprep.mubr.bf16.mxu0 %v4666
    %6646 = vmatmul.mubr.bf16.gmra.mrb[0].mxu0 %v4662
    %v6647 = vpop.f32.mrb[0].mxu0
    %v6648 = vadd.f32 %v6605, %v6647
    %v6649 = vpop.f32.mrb[0].mxu0
    %v6650 = vadd.f32 %v6607, %v6649
    %v6651 = vpop.f32.mrb[0].mxu0
    %v6652 = vadd.f32 %v6609, %v6651
    %v6653 = vpop.f32.mrb[0].mxu0
    %v6654 = vadd.f32 %v6611, %v6653
    %6655 = vdwg.mxu0
    %6656 = vmatprep.subr.bf16.mxu0 %v6121
    %6657 = vmatpush1.bf16.msra.mxu0 %v6120
    %6658 = vmatprep.subr.bf16.mxu0 %v6129
    %6659 = vmatpush1.bf16.msra.mxu0 %v6128
    %6660 = vmatprep.subr.bf16.mxu0 %v6137
    %6661 = vmatpush1.bf16.msra.mxu0 %v6136
    %6662 = vmatprep.subr.bf16.mxu0 %v6145
    %6663 = vmatpush1.bf16.msra.mxu0 %v6144
    %6664 = vmatprep.subr.bf16.mxu0 0
    %6665 = vmatpush1.bf16.msra.mxu0 0
    %6666 = vmatprep.subr.bf16.mxu0 0
    %6667 = vmatpush1.bf16.msra.mxu0 0
    %6668 = vmatprep.subr.bf16.mxu0 0
    %6669 = vmatpush1.bf16.msra.mxu0 0
    %6670 = vmatprep.subr.bf16.mxu0 0
    %6671 = vmatpush1.bf16.msra.mxu0 0
    %6672 = vmatprep.subr.bf16.mxu0 0
    %6673 = vmatpush1.bf16.msra.mxu0 0
    %6674 = vmatprep.subr.bf16.mxu0 0
    %6675 = vmatpush1.bf16.msra.mxu0 0
    %6676 = vmatprep.subr.bf16.mxu0 0
    %6677 = vmatpush1.bf16.msra.mxu0 0
    %6678 = vmatprep.subr.bf16.mxu0 0
    %6679 = vmatpush1.bf16.msra.mxu0 0
    %6680 = vmatprep.subr.bf16.mxu0 0
    %6681 = vmatpush1.bf16.msra.mxu0 0
    %6682 = vmatprep.subr.bf16.mxu0 0
    %6683 = vmatpush1.bf16.msra.mxu0 0
    %6684 = vmatprep.subr.bf16.mxu0 0
    %6685 = vmatpush1.bf16.msra.mxu0 0
    %6686 = vmatprep.subr.bf16.mxu0 0
    %6687 = vmatpush1.bf16.msra.mxu0 0
    %6688 = vmatprep.mubr.bf16.mxu0 0
    %6689 = vmatmul.mubr.bf16.gmra.mrb[0].mxu0 %v6439
    %v6690 = vpop.f32.mrb[0].mxu0
    %v6691 = vadd.f32 %v6648, %v6690
    %v6692 = vpop.f32.mrb[0].mxu0
    %v6693 = vadd.f32 %v6650, %v6692
    %v6694 = vpop.f32.mrb[0].mxu0
    %v6695 = vadd.f32 %v6652, %v6694
    %v6696 = vpop.f32.mrb[0].mxu0
    %v6697 = vadd.f32 %v6654, %v6696
    %6698 = vdwg.mxu0
    %6699 = vmatprep.subr.bf16.mxu0 %v5867
    %6700 = vmatpush1.bf16.msra.mxu0 %v5866
    %6701 = vmatprep.subr.bf16.mxu0 %v5875
    %6702 = vmatpush1.bf16.msra.mxu0 %v5874
    %6703 = vmatprep.subr.bf16.mxu0 %v5883
    %6704 = vmatpush1.bf16.msra.mxu0 %v5882
    %6705 = vmatprep.subr.bf16.mxu0 %v5891
    %6706 = vmatpush1.bf16.msra.mxu0 %v5890
    %6707 = vmatprep.subr.bf16.mxu0 %v5899
    %6708 = vmatpush1.bf16.msra.mxu0 %v5898
    %6709 = vmatprep.subr.bf16.mxu0 %v5907
    %6710 = vmatpush1.bf16.msra.mxu0 %v5906
    %6711 = vmatprep.subr.bf16.mxu0 %v5915
    %6712 = vmatpush1.bf16.msra.mxu0 %v5914
    %6713 = vmatprep.subr.bf16.mxu0 %v5923
    %6714 = vmatpush1.bf16.msra.mxu0 %v5922
    %6715 = vmatprep.subr.bf16.mxu0 %v5931
    %6716 = vmatpush1.bf16.msra.mxu0 %v5930
    %6717 = vmatprep.subr.bf16.mxu0 %v5939
    %6718 = vmatpush1.bf16.msra.mxu0 %v5938
    %6719 = vmatprep.subr.bf16.mxu0 %v5947
    %6720 = vmatpush1.bf16.msra.mxu0 %v5946
    %6721 = vmatprep.subr.bf16.mxu0 %v5955
    %6722 = vmatpush1.bf16.msra.mxu0 %v5954
    %6723 = vmatprep.subr.bf16.mxu0 %v5963
    %6724 = vmatpush1.bf16.msra.mxu0 %v5962
    %6725 = vmatprep.subr.bf16.mxu0 %v5971
    %6726 = vmatpush1.bf16.msra.mxu0 %v5970
    %6727 = vmatprep.subr.bf16.mxu0 %v5979
    %6728 = vmatpush1.bf16.msra.mxu0 %v5978
    %6729 = vmatprep.subr.bf16.mxu0 %v5987
    %6730 = vmatpush1.bf16.msra.mxu0 %v5986
    %6731 = vmatprep.mubr.bf16.mxu0 %v4658
    %6732 = vmatmul.mubr.bf16.gmra.mrb[0].mxu0 %v4654
    %v6733 = vpop.f32.mrb[0].mxu0
    %v6734 = vadd.f32 %v4977, %v6733
    %v6735 = vpop.f32.mrb[0].mxu0
    %v6736 = vadd.f32 %v4981, %v6735
    %v6737 = vpop.f32.mrb[0].mxu0
    %v6738 = vadd.f32 %v4977, %v6737
    %v6739 = vpop.f32.mrb[0].mxu0
    %v6740 = vadd.f32 %v4981, %v6739
    %6741 = vdwg.mxu0
    %6742 = vmatprep.subr.bf16.mxu0 %v5995
    %6743 = vmatpush1.bf16.msra.mxu0 %v5994
    %6744 = vmatprep.subr.bf16.mxu0 %v6003
    %6745 = vmatpush1.bf16.msra.mxu0 %v6002
    %6746 = vmatprep.subr.bf16.mxu0 %v6011
    %6747 = vmatpush1.bf16.msra.mxu0 %v6010
    %6748 = vmatprep.subr.bf16.mxu0 %v6019
    %6749 = vmatpush1.bf16.msra.mxu0 %v6018
    %6750 = vmatprep.subr.bf16.mxu0 %v6027
    %6751 = vmatpush1.bf16.msra.mxu0 %v6026
    %6752 = vmatprep.subr.bf16.mxu0 %v6035
    %6753 = vmatpush1.bf16.msra.mxu0 %v6034
    %6754 = vmatprep.subr.bf16.mxu0 %v6043
    %6755 = vmatpush1.bf16.msra.mxu0 %v6042
    %6756 = vmatprep.subr.bf16.mxu0 %v6051
    %6757 = vmatpush1.bf16.msra.mxu0 %v6050
    %6758 = vmatprep.subr.bf16.mxu0 %v6059
    %6759 = vmatpush1.bf16.msra.mxu0 %v6058
    %6760 = vmatprep.subr.bf16.mxu0 %v6067
    %6761 = vmatpush1.bf16.msra.mxu0 %v6066
    %6762 = vmatprep.subr.bf16.mxu0 %v6075
    %6763 = vmatpush1.bf16.msra.mxu0 %v6074
    %6764 = vmatprep.subr.bf16.mxu0 %v6083
    %6765 = vmatpush1.bf16.msra.mxu0 %v6082
    %6766 = vmatprep.subr.bf16.mxu0 %v6091
    %6767 = vmatpush1.bf16.msra.mxu0 %v6090
    %6768 = vmatprep.subr.bf16.mxu0 %v6099
    %6769 = vmatpush1.bf16.msra.mxu0 %v6098
    %6770 = vmatprep.subr.bf16.mxu0 %v6107
    %6771 = vmatpush1.bf16.msra.mxu0 %v6106
    %6772 = vmatprep.subr.bf16.mxu0 %v6115
    %6773 = vmatpush1.bf16.msra.mxu0 %v6114
    %6774 = vmatprep.mubr.bf16.mxu0 %v4666
    %6775 = vmatmul.mubr.bf16.gmra.mrb[0].mxu0 %v4662
    %v6776 = vpop.f32.mrb[0].mxu0
    %v6777 = vadd.f32 %v6734, %v6776
    %v6778 = vpop.f32.mrb[0].mxu0
    %v6779 = vadd.f32 %v6736, %v6778
    %v6780 = vpop.f32.mrb[0].mxu0
    %v6781 = vadd.f32 %v6738, %v6780
    %v6782 = vpop.f32.mrb[0].mxu0
    %v6783 = vadd.f32 %v6740, %v6782
    %6784 = vdwg.mxu0
    %6785 = vmatprep.subr.bf16.mxu0 %v6123
    %6786 = vmatpush1.bf16.msra.mxu0 %v6122
    %6787 = vmatprep.subr.bf16.mxu0 %v6131
    %6788 = vmatpush1.bf16.msra.mxu0 %v6130
    %6789 = vmatprep.subr.bf16.mxu0 %v6139
    %6790 = vmatpush1.bf16.msra.mxu0 %v6138
    %6791 = vmatprep.subr.bf16.mxu0 %v6147
    %6792 = vmatpush1.bf16.msra.mxu0 %v6146
    %6793 = vmatprep.subr.bf16.mxu0 0
    %6794 = vmatpush1.bf16.msra.mxu0 0
    %6795 = vmatprep.subr.bf16.mxu0 0
    %6796 = vmatpush1.bf16.msra.mxu0 0
    %6797 = vmatprep.subr.bf16.mxu0 0
    %6798 = vmatpush1.bf16.msra.mxu0 0
    %6799 = vmatprep.subr.bf16.mxu0 0
    %6800 = vmatpush1.bf16.msra.mxu0 0
    %6801 = vmatprep.subr.bf16.mxu0 0
    %6802 = vmatpush1.bf16.msra.mxu0 0
    %6803 = vmatprep.subr.bf16.mxu0 0
    %6804 = vmatpush1.bf16.msra.mxu0 0
    %6805 = vmatprep.subr.bf16.mxu0 0
    %6806 = vmatpush1.bf16.msra.mxu0 0
    %6807 = vmatprep.subr.bf16.mxu0 0
    %6808 = vmatpush1.bf16.msra.mxu0 0
    %6809 = vmatprep.subr.bf16.mxu0 0
    %6810 = vmatpush1.bf16.msra.mxu0 0
    %6811 = vmatprep.subr.bf16.mxu0 0
    %6812 = vmatpush1.bf16.msra.mxu0 0
    %6813 = vmatprep.subr.bf16.mxu0 0
    %6814 = vmatpush1.bf16.msra.mxu0 0
    %6815 = vmatprep.subr.bf16.mxu0 0
    %6816 = vmatpush1.bf16.msra.mxu0 0
    %6817 = vmatprep.mubr.bf16.mxu0 0
    %6818 = vmatmul.mubr.bf16.gmra.mrb[0].mxu0 %v6439
    %v6819 = vpop.f32.mrb[0].mxu0
    %v6820 = vadd.f32 %v6777, %v6819
    %v6821 = vpop.f32.mrb[0].mxu0
    %v6822 = vadd.f32 %v6779, %v6821
    %v6823 = vpop.f32.mrb[0].mxu0
    %v6824 = vadd.f32 %v6781, %v6823
    %v6825 = vpop.f32.mrb[0].mxu0
    %v6826 = vadd.f32 %v6783, %v6825
    %6827 = vdwg.mxu0
    %6828 = vmatprep.subr.bf16.mxu0 %v5869
    %6829 = vmatpush1.bf16.msra.mxu0 %v5868
    %6830 = vmatprep.subr.bf16.mxu0 %v5877
    %6831 = vmatpush1.bf16.msra.mxu0 %v5876
    %6832 = vmatprep.subr.bf16.mxu0 %v5885
    %6833 = vmatpush1.bf16.msra.mxu0 %v5884
    %6834 = vmatprep.subr.bf16.mxu0 %v5893
    %6835 = vmatpush1.bf16.msra.mxu0 %v5892
    %6836 = vmatprep.subr.bf16.mxu0 %v5901
    %6837 = vmatpush1.bf16.msra.mxu0 %v5900
    %6838 = vmatprep.subr.bf16.mxu0 %v5909
    %6839 = vmatpush1.bf16.msra.mxu0 %v5908
    %6840 = vmatprep.subr.bf16.mxu0 %v5917
    %6841 = vmatpush1.bf16.msra.mxu0 %v5916
    %6842 = vmatprep.subr.bf16.mxu0 %v5925
    %6843 = vmatpush1.bf16.msra.mxu0 %v5924
    %6844 = vmatprep.subr.bf16.mxu0 %v5933
    %6845 = vmatpush1.bf16.msra.mxu0 %v5932
    %6846 = vmatprep.subr.bf16.mxu0 %v5941
    %6847 = vmatpush1.bf16.msra.mxu0 %v5940
    %6848 = vmatprep.subr.bf16.mxu0 %v5949
    %6849 = vmatpush1.bf16.msra.mxu0 %v5948
    %6850 = vmatprep.subr.bf16.mxu0 %v5957
    %6851 = vmatpush1.bf16.msra.mxu0 %v5956
    %6852 = vmatprep.subr.bf16.mxu0 %v5965
    %6853 = vmatpush1.bf16.msra.mxu0 %v5964
    %6854 = vmatprep.subr.bf16.mxu0 %v5973
    %6855 = vmatpush1.bf16.msra.mxu0 %v5972
    %6856 = vmatprep.subr.bf16.mxu0 %v5981
    %6857 = vmatpush1.bf16.msra.mxu0 %v5980
    %6858 = vmatprep.subr.bf16.mxu0 %v5989
    %6859 = vmatpush1.bf16.msra.mxu0 %v5988
    %6860 = vmatprep.mubr.bf16.mxu0 %v4658
    %6861 = vmatmul.mubr.bf16.gmra.mrb[0].mxu0 %v4654
    %v6862 = vpop.f32.mrb[0].mxu0
    %v6863 = vadd.f32 %v4985, %v6862
    %v6864 = vpop.f32.mrb[0].mxu0
    %v6865 = vadd.f32 %v4989, %v6864
    %v6866 = vpop.f32.mrb[0].mxu0
    %v6867 = vadd.f32 %v4985, %v6866
    %v6868 = vpop.f32.mrb[0].mxu0
    %v6869 = vadd.f32 %v4989, %v6868
    %6870 = vdwg.mxu0
    %6871 = vmatprep.subr.bf16.mxu0 %v5997
    %6872 = vmatpush1.bf16.msra.mxu0 %v5996
    %6873 = vmatprep.subr.bf16.mxu0 %v6005
    %6874 = vmatpush1.bf16.msra.mxu0 %v6004
    %6875 = vmatprep.subr.bf16.mxu0 %v6013
    %6876 = vmatpush1.bf16.msra.mxu0 %v6012
    %6877 = vmatprep.subr.bf16.mxu0 %v6021
    %6878 = vmatpush1.bf16.msra.mxu0 %v6020
    %6879 = vmatprep.subr.bf16.mxu0 %v6029
    %6880 = vmatpush1.bf16.msra.mxu0 %v6028
    %6881 = vmatprep.subr.bf16.mxu0 %v6037
    %6882 = vmatpush1.bf16.msra.mxu0 %v6036
    %6883 = vmatprep.subr.bf16.mxu0 %v6045
    %6884 = vmatpush1.bf16.msra.mxu0 %v6044
    %6885 = vmatprep.subr.bf16.mxu0 %v6053
    %6886 = vmatpush1.bf16.msra.mxu0 %v6052
    %6887 = vmatprep.subr.bf16.mxu0 %v6061
    %6888 = vmatpush1.bf16.msra.mxu0 %v6060
    %6889 = vmatprep.subr.bf16.mxu0 %v6069
    %6890 = vmatpush1.bf16.msra.mxu0 %v6068
    %6891 = vmatprep.subr.bf16.mxu0 %v6077
    %6892 = vmatpush1.bf16.msra.mxu0 %v6076
    %6893 = vmatprep.subr.bf16.mxu0 %v6085
    %6894 = vmatpush1.bf16.msra.mxu0 %v6084
    %6895 = vmatprep.subr.bf16.mxu0 %v6093
    %6896 = vmatpush1.bf16.msra.mxu0 %v6092
    %6897 = vmatprep.subr.bf16.mxu0 %v6101
    %6898 = vmatpush1.bf16.msra.mxu0 %v6100
    %6899 = vmatprep.subr.bf16.mxu0 %v6109
    %6900 = vmatpush1.bf16.msra.mxu0 %v6108
    %6901 = vmatprep.subr.bf16.mxu0 %v6117
    %6902 = vmatpush1.bf16.msra.mxu0 %v6116
    %6903 = vmatprep.mubr.bf16.mxu0 %v4666
    %6904 = vmatmul.mubr.bf16.gmra.mrb[0].mxu0 %v4662
    %v6905 = vpop.f32.mrb[0].mxu0
    %v6906 = vadd.f32 %v6863, %v6905
    %v6907 = vpop.f32.mrb[0].mxu0
    %v6908 = vadd.f32 %v6865, %v6907
    %v6909 = vpop.f32.mrb[0].mxu0
    %v6910 = vadd.f32 %v6867, %v6909
    %v6911 = vpop.f32.mrb[0].mxu0
    %v6912 = vadd.f32 %v6869, %v6911
    %6913 = vdwg.mxu0
    %6914 = vmatprep.subr.bf16.mxu0 %v6125
    %6915 = vmatpush1.bf16.msra.mxu0 %v6124
    %6916 = vmatprep.subr.bf16.mxu0 %v6133
    %6917 = vmatpush1.bf16.msra.mxu0 %v6132
    %6918 = vmatprep.subr.bf16.mxu0 %v6141
    %6919 = vmatpush1.bf16.msra.mxu0 %v6140
    %6920 = vmatprep.subr.bf16.mxu0 %v6149
    %6921 = vmatpush1.bf16.msra.mxu0 %v6148
    %6922 = vmatprep.subr.bf16.mxu0 0
    %6923 = vmatpush1.bf16.msra.mxu0 0
    %6924 = vmatprep.subr.bf16.mxu0 0
    %6925 = vmatpush1.bf16.msra.mxu0 0
    %6926 = vmatprep.subr.bf16.mxu0 0
    %6927 = vmatpush1.bf16.msra.mxu0 0
    %6928 = vmatprep.subr.bf16.mxu0 0
    %6929 = vmatpush1.bf16.msra.mxu0 0
    %6930 = vmatprep.subr.bf16.mxu0 0
    %6931 = vmatpush1.bf16.msra.mxu0 0
    %6932 = vmatprep.subr.bf16.mxu0 0
    %6933 = vmatpush1.bf16.msra.mxu0 0
    %6934 = vmatprep.subr.bf16.mxu0 0
    %6935 = vmatpush1.bf16.msra.mxu0 0
    %6936 = vmatprep.subr.bf16.mxu0 0
    %6937 = vmatpush1.bf16.msra.mxu0 0
    %6938 = vmatprep.subr.bf16.mxu0 0
    %6939 = vmatpush1.bf16.msra.mxu0 0
    %6940 = vmatprep.subr.bf16.mxu0 0
    %6941 = vmatpush1.bf16.msra.mxu0 0
    %6942 = vmatprep.subr.bf16.mxu0 0
    %6943 = vmatpush1.bf16.msra.mxu0 0
    %6944 = vmatprep.subr.bf16.mxu0 0
    %6945 = vmatpush1.bf16.msra.mxu0 0
    %6946 = vmatprep.mubr.bf16.mxu0 0
    %6947 = vmatmul.mubr.bf16.gmra.mrb[0].mxu0 %v6439
    %v6948 = vpop.f32.mrb[0].mxu0
    %v6949 = vadd.f32 %v6906, %v6948
    %v6950 = vpop.f32.mrb[0].mxu0
    %v6951 = vadd.f32 %v6908, %v6950
    %v6952 = vpop.f32.mrb[0].mxu0
    %v6953 = vadd.f32 %v6910, %v6952
    %v6954 = vpop.f32.mrb[0].mxu0
    %v6955 = vadd.f32 %v6912, %v6954
    %6956 = vdwg.mxu0
    %v6957 = vmax.f32 %v6562, 0.0
    %v6958 = vmax.f32 %v6564, 0.0
    %v6959 = vmax.f32 %v6691, 0.0
    %v6960 = vmax.f32 %v6693, 0.0
    %v6961 = vmax.f32 %v6820, 0.0
    %v6962 = vmax.f32 %v6822, 0.0
    %v6963 = vmax.f32 %v6949, 0.0
    %v6964 = vmax.f32 %v6951, 0.0
    %v6965 = vmax.f32 %v6566, 0.0
    %v6966 = vmax.f32 %v6568, 0.0
    %v6967 = vmax.f32 %v6695, 0.0
    %v6968 = vmax.f32 %v6697, 0.0
    %v6969 = vmax.f32 %v6824, 0.0
    %v6970 = vmax.f32 %v6826, 0.0
    %v6971 = vmax.f32 %v6953, 0.0
    %v6972 = vmax.f32 %v6955, 0.0
    %v6973 = vpack.c.bf16 %v6965, %v6957
    %v6974 = vpack.c.bf16 %v6966, %v6958
    %v6975 = vpack.c.bf16 %v6967, %v6959
    %v6976 = vpack.c.bf16 %v6968, %v6960
    %v6977 = vpack.c.bf16 %v6969, %v6961
    %v6978 = vpack.c.bf16 %v6970, %v6962
    %v6979 = vpack.c.bf16 %v6971, %v6963
    %v6980 = vpack.c.bf16 %v6972, %v6964
    %v6981 = vld [vmem:[#allocation9] sm:$0xff]
    %v6982 = vld [vmem:[#allocation9 + $0x8] sm:$0xff]
    %v6983 = vld [vmem:[#allocation9 + $0x10] sm:$0xff]
    %v6984 = vld [vmem:[#allocation9 + $0x18] sm:$0xff]
    %v6985 = vld [vmem:[#allocation9 + $0x20] sm:$0xff]
    %v6986 = vld [vmem:[#allocation9 + $0x28] sm:$0xff]
    %v6987 = vld [vmem:[#allocation9 + $0x30] sm:$0xff]
    %v6988 = vld [vmem:[#allocation9 + $0x38] sm:$0xff]
    %v6989 = vld [vmem:[#allocation9 + $0x40] sm:$0xff]
    %v6990 = vld [vmem:[#allocation9 + $0x48] sm:$0xff]
    %v6991 = vld [vmem:[#allocation9 + $0x50] sm:$0xff]
    %v6992 = vld [vmem:[#allocation9 + $0x58] sm:$0xff]
    %v6993 = vld [vmem:[#allocation9 + $0x60] sm:$0xff]
    %v6994 = vld [vmem:[#allocation9 + $0x68] sm:$0xff]
    %v6995 = vld [vmem:[#allocation9 + $0x70] sm:$0xff]
    %v6996 = vld [vmem:[#allocation9 + $0x78] sm:$0xff]
    %v6997 = vld [vmem:[#allocation9 + $0x80] sm:$0xff]
    %v6998 = vld [vmem:[#allocation9 + $0x88] sm:$0xff]
    %v6999 = vld [vmem:[#allocation9 + $0x90] sm:$0xff]
    %v7000 = vld [vmem:[#allocation9 + $0x98] sm:$0xff]
    %v7001 = vld [vmem:[#allocation9 + $0xa0] sm:$0xff]
    %v7002 = vld [vmem:[#allocation9 + $0xa8] sm:$0xff]
    %v7003 = vld [vmem:[#allocation9 + $0xb0] sm:$0xff]
    %v7004 = vld [vmem:[#allocation9 + $0xb8] sm:$0xff]
    %v7005 = vld [vmem:[#allocation9 + $0xc0] sm:$0xff]
    %v7006 = vld [vmem:[#allocation9 + $0xc8] sm:$0xff]
    %v7007 = vld [vmem:[#allocation9 + $0xd0] sm:$0xff]
    %v7008 = vld [vmem:[#allocation9 + $0xd8] sm:$0xff]
    %v7009 = vld [vmem:[#allocation9 + $0xe0] sm:$0xff]
    %v7010 = vld [vmem:[#allocation9 + $0xe8] sm:$0xff]
    %v7011 = vld [vmem:[#allocation9 + $0xf0] sm:$0xff]
    %v7012 = vld [vmem:[#allocation9 + $0xf8] sm:$0xff]
    %v7013 = vld [vmem:[#allocation9 + $0x100] sm:$0xff]
    %v7014 = vld [vmem:[#allocation9 + $0x108] sm:$0xff]
    %v7015 = vld [vmem:[#allocation9 + $0x110] sm:$0xff]
    %v7016 = vld [vmem:[#allocation9 + $0x118] sm:$0xff]
    %v7017 = vld [vmem:[#allocation9 + $0x120] sm:$0xff]
    %v7018 = vld [vmem:[#allocation9 + $0x128] sm:$0xff]
    %v7019 = vld [vmem:[#allocation9 + $0x130] sm:$0xff]
    %v7020 = vld [vmem:[#allocation9 + $0x138] sm:$0xff]
    %v7021 = vld [vmem:[#allocation9 + $0x140] sm:$0xff]
    %v7022 = vld [vmem:[#allocation9 + $0x148] sm:$0xff]
    %v7023 = vld [vmem:[#allocation9 + $0x150] sm:$0xff]
    %v7024 = vld [vmem:[#allocation9 + $0x158] sm:$0xff]
    %v7025 = vld [vmem:[#allocation9 + $0x160] sm:$0xff]
    %v7026 = vld [vmem:[#allocation9 + $0x168] sm:$0xff]
    %v7027 = vld [vmem:[#allocation9 + $0x170] sm:$0xff]
    %v7028 = vld [vmem:[#allocation9 + $0x178] sm:$0xff]
    %v7029 = vld [vmem:[#allocation9 + $0x180] sm:$0xff]
    %v7030 = vld [vmem:[#allocation9 + $0x188] sm:$0xff]
    %v7031 = vld [vmem:[#allocation9 + $0x190] sm:$0xff]
    %v7032 = vld [vmem:[#allocation9 + $0x198] sm:$0xff]
    %v7033 = vld [vmem:[#allocation9 + $0x1a0] sm:$0xff]
    %v7034 = vld [vmem:[#allocation9 + $0x1a8] sm:$0xff]
    %v7035 = vld [vmem:[#allocation9 + $0x1b0] sm:$0xff]
    %v7036 = vld [vmem:[#allocation9 + $0x1b8] sm:$0xff]
    %v7037 = vld [vmem:[#allocation9 + $0x1c0] sm:$0xff]
    %v7038 = vld [vmem:[#allocation9 + $0x1c8] sm:$0xff]
    %v7039 = vld [vmem:[#allocation9 + $0x1d0] sm:$0xff]
    %v7040 = vld [vmem:[#allocation9 + $0x1d8] sm:$0xff]
    %v7041 = vld [vmem:[#allocation9 + $0x1e0] sm:$0xff]
    %v7042 = vld [vmem:[#allocation9 + $0x1e8] sm:$0xff]
    %v7043 = vld [vmem:[#allocation9 + $0x1f0] sm:$0xff]
    %v7044 = vld [vmem:[#allocation9 + $0x1f8] sm:$0xff]
    %v7045 = vld [vmem:[#allocation9 + $0x200] sm:$0xff]
    %v7046 = vld [vmem:[#allocation9 + $0x208] sm:$0xff]
    %v7047 = vld [vmem:[#allocation9 + $0x210] sm:$0xff]
    %v7048 = vld [vmem:[#allocation9 + $0x218] sm:$0xff]
    %v7049 = vld [vmem:[#allocation9 + $0x220] sm:$0xff]
    %v7050 = vld [vmem:[#allocation9 + $0x228] sm:$0xff]
    %v7051 = vld [vmem:[#allocation9 + $0x230] sm:$0xff]
    %v7052 = vld [vmem:[#allocation9 + $0x238] sm:$0xff]
    %v7053 = vld [vmem:[#allocation9 + $0x240] sm:$0xff]
    %v7054 = vld [vmem:[#allocation9 + $0x248] sm:$0xff]
    %v7055 = vld [vmem:[#allocation9 + $0x250] sm:$0xff]
    %v7056 = vld [vmem:[#allocation9 + $0x258] sm:$0xff]
    %v7057 = vld [vmem:[#allocation9 + $0x260] sm:$0xff]
    %v7058 = vld [vmem:[#allocation9 + $0x268] sm:$0xff]
    %v7059 = vld [vmem:[#allocation9 + $0x270] sm:$0xff]
    %v7060 = vld [vmem:[#allocation9 + $0x278] sm:$0xff]
    %v7061 = vld [vmem:[#allocation9 + $0x280] sm:$0xff]
    %v7062 = vld [vmem:[#allocation9 + $0x288] sm:$0xff]
    %v7063 = vld [vmem:[#allocation9 + $0x290] sm:$0xff]
    %v7064 = vld [vmem:[#allocation9 + $0x298] sm:$0xff]
    %v7065 = vld [vmem:[#allocation9 + $0x2a0] sm:$0xff]
    %v7066 = vld [vmem:[#allocation9 + $0x2a8] sm:$0xff]
    %v7067 = vld [vmem:[#allocation9 + $0x2b0] sm:$0xff]
    %v7068 = vld [vmem:[#allocation9 + $0x2b8] sm:$0xff]
    %v7069 = vld [vmem:[#allocation9 + $0x2c0] sm:$0xff]
    %v7070 = vld [vmem:[#allocation9 + $0x2c8] sm:$0xff]
    %v7071 = vld [vmem:[#allocation9 + $0x2d0] sm:$0xff]
    %v7072 = vld [vmem:[#allocation9 + $0x2d8] sm:$0xff]
    %v7073 = vld [vmem:[#allocation9 + $0x2e0] sm:$0xff]
    %v7074 = vld [vmem:[#allocation9 + $0x2e8] sm:$0xff]
    %v7075 = vld [vmem:[#allocation9 + $0x2f0] sm:$0xff]
    %v7076 = vld [vmem:[#allocation9 + $0x2f8] sm:$0xff]
    %v7077 = vld [vmem:[#allocation9 + $0x300] sm:$0xff]
    %v7078 = vld [vmem:[#allocation9 + $0x308] sm:$0xff]
    %v7079 = vld [vmem:[#allocation9 + $0x310] sm:$0xff]
    %v7080 = vld [vmem:[#allocation9 + $0x318] sm:$0xff]
    %v7081 = vld [vmem:[#allocation9 + $0x320] sm:$0xff]
    %v7082 = vld [vmem:[#allocation9 + $0x328] sm:$0xff]
    %v7083 = vld [vmem:[#allocation9 + $0x330] sm:$0xff]
    %v7084 = vld [vmem:[#allocation9 + $0x338] sm:$0xff]
    %v7085 = vld [vmem:[#allocation9 + $0x340] sm:$0xff]
    %v7086 = vld [vmem:[#allocation9 + $0x348] sm:$0xff]
    %v7087 = vld [vmem:[#allocation9 + $0x350] sm:$0xff]
    %v7088 = vld [vmem:[#allocation9 + $0x358] sm:$0xff]
    %v7089 = vld [vmem:[#allocation9 + $0x360] sm:$0xff]
    %v7090 = vld [vmem:[#allocation9 + $0x368] sm:$0xff]
    %v7091 = vld [vmem:[#allocation9 + $0x370] sm:$0xff]
    %v7092 = vld [vmem:[#allocation9 + $0x378] sm:$0xff]
    %v7093 = vld [vmem:[#allocation9 + $0x380] sm:$0xff]
    %v7094 = vld [vmem:[#allocation9 + $0x388] sm:$0xff]
    %v7095 = vld [vmem:[#allocation9 + $0x390] sm:$0xff]
    %v7096 = vld [vmem:[#allocation9 + $0x398] sm:$0xff]
    %v7097 = vld [vmem:[#allocation9 + $0x3a0] sm:$0xff]
    %v7098 = vld [vmem:[#allocation9 + $0x3a8] sm:$0xff]
    %v7099 = vld [vmem:[#allocation9 + $0x3b0] sm:$0xff]
    %v7100 = vld [vmem:[#allocation9 + $0x3b8] sm:$0xff]
    %v7101 = vld [vmem:[#allocation9 + $0x3c0] sm:$0xff]
    %v7102 = vld [vmem:[#allocation9 + $0x3c8] sm:$0xff]
    %v7103 = vld [vmem:[#allocation9 + $0x3d0] sm:$0xff]
    %v7104 = vld [vmem:[#allocation9 + $0x3d8] sm:$0xff]
    %v7105 = vld [vmem:[#allocation9 + $0x3e0] sm:$0xff]
    %v7106 = vld [vmem:[#allocation9 + $0x3e8] sm:$0xff]
    %v7107 = vld [vmem:[#allocation9 + $0x3f0] sm:$0xff]
    %v7108 = vld [vmem:[#allocation9 + $0x3f8] sm:$0xff]
    %v7109 = vld [vmem:[#allocation9 + $0x400] sm:$0xff]
    %v7110 = vld [vmem:[#allocation9 + $0x408] sm:$0xff]
    %v7111 = vld [vmem:[#allocation9 + $0x410] sm:$0xff]
    %v7112 = vld [vmem:[#allocation9 + $0x418] sm:$0xff]
    %v7113 = vld [vmem:[#allocation9 + $0x420] sm:$0xff]
    %v7114 = vld [vmem:[#allocation9 + $0x428] sm:$0xff]
    %v7115 = vld [vmem:[#allocation9 + $0x430] sm:$0xff]
    %v7116 = vld [vmem:[#allocation9 + $0x438] sm:$0xff]
    %v7117 = vld [vmem:[#allocation9 + $0x440] sm:$0xff]
    %v7118 = vld [vmem:[#allocation9 + $0x448] sm:$0xff]
    %v7119 = vld [vmem:[#allocation9 + $0x450] sm:$0xff]
    %v7120 = vld [vmem:[#allocation9 + $0x458] sm:$0xff]
    %v7121 = vld [vmem:[#allocation9 + $0x460] sm:$0xff]
    %v7122 = vld [vmem:[#allocation9 + $0x468] sm:$0xff]
    %v7123 = vld [vmem:[#allocation9 + $0x470] sm:$0xff]
    %v7124 = vld [vmem:[#allocation9 + $0x478] sm:$0xff]
    %v7125 = vld [vmem:[#allocation9 + $0x480] sm:$0xff]
    %v7126 = vld [vmem:[#allocation9 + $0x488] sm:$0xff]
    %v7127 = vld [vmem:[#allocation9 + $0x490] sm:$0xff]
    %v7128 = vld [vmem:[#allocation9 + $0x498] sm:$0xff]
    %v7129 = vld [vmem:[#allocation9 + $0x4a0] sm:$0xff]
    %v7130 = vld [vmem:[#allocation9 + $0x4a8] sm:$0xff]
    %v7131 = vld [vmem:[#allocation9 + $0x4b0] sm:$0xff]
    %v7132 = vld [vmem:[#allocation9 + $0x4b8] sm:$0xff]
    %v7133 = vld [vmem:[#allocation9 + $0x4c0] sm:$0xff]
    %v7134 = vld [vmem:[#allocation9 + $0x4c8] sm:$0xff]
    %v7135 = vld [vmem:[#allocation9 + $0x4d0] sm:$0xff]
    %v7136 = vld [vmem:[#allocation9 + $0x4d8] sm:$0xff]
    %v7137 = vld [vmem:[#allocation9 + $0x4e0] sm:$0xff]
    %v7138 = vld [vmem:[#allocation9 + $0x4e8] sm:$0xff]
    %v7139 = vld [vmem:[#allocation9 + $0x4f0] sm:$0xff]
    %v7140 = vld [vmem:[#allocation9 + $0x4f8] sm:$0xff]
    %v7141 = vld [vmem:[#allocation9 + $0x500] sm:$0xff]
    %v7142 = vld [vmem:[#allocation9 + $0x508] sm:$0xff]
    %v7143 = vld [vmem:[#allocation9 + $0x510] sm:$0xff]
    %v7144 = vld [vmem:[#allocation9 + $0x518] sm:$0xff]
    %v7145 = vld [vmem:[#allocation9 + $0x520] sm:$0xff]
    %v7146 = vld [vmem:[#allocation9 + $0x528] sm:$0xff]
    %v7147 = vld [vmem:[#allocation9 + $0x530] sm:$0xff]
    %v7148 = vld [vmem:[#allocation9 + $0x538] sm:$0xff]
    %v7149 = vld [vmem:[#allocation9 + $0x540] sm:$0xff]
    %v7150 = vld [vmem:[#allocation9 + $0x548] sm:$0xff]
    %v7151 = vld [vmem:[#allocation9 + $0x550] sm:$0xff]
    %v7152 = vld [vmem:[#allocation9 + $0x558] sm:$0xff]
    %v7153 = vld [vmem:[#allocation9 + $0x560] sm:$0xff]
    %v7154 = vld [vmem:[#allocation9 + $0x568] sm:$0xff]
    %v7155 = vld [vmem:[#allocation9 + $0x570] sm:$0xff]
    %v7156 = vld [vmem:[#allocation9 + $0x578] sm:$0xff]
    %v7157 = vld [vmem:[#allocation9 + $0x580] sm:$0xff]
    %v7158 = vld [vmem:[#allocation9 + $0x588] sm:$0xff]
    %v7159 = vld [vmem:[#allocation9 + $0x590] sm:$0xff]
    %v7160 = vld [vmem:[#allocation9 + $0x598] sm:$0xff]
    %v7161 = vld [vmem:[#allocation9 + $0x5a0] sm:$0xff]
    %v7162 = vld [vmem:[#allocation9 + $0x5a8] sm:$0xff]
    %v7163 = vld [vmem:[#allocation9 + $0x5b0] sm:$0xff]
    %v7164 = vld [vmem:[#allocation9 + $0x5b8] sm:$0xff]
    %v7165 = vld [vmem:[#allocation9 + $0x5c0] sm:$0xff]
    %v7166 = vld [vmem:[#allocation9 + $0x5c8] sm:$0xff]
    %v7167 = vld [vmem:[#allocation9 + $0x5d0] sm:$0xff]
    %v7168 = vld [vmem:[#allocation9 + $0x5d8] sm:$0xff]
    %v7169 = vld [vmem:[#allocation9 + $0x5e0] sm:$0xff]
    %v7170 = vld [vmem:[#allocation9 + $0x5e8] sm:$0xff]
    %v7171 = vld [vmem:[#allocation9 + $0x5f0] sm:$0xff]
    %v7172 = vld [vmem:[#allocation9 + $0x5f8] sm:$0xff]
    %v7173 = vld [vmem:[#allocation9 + $0x600] sm:$0xff]
    %v7174 = vld [vmem:[#allocation9 + $0x608] sm:$0xff]
    %v7175 = vld [vmem:[#allocation9 + $0x610] sm:$0xff]
    %v7176 = vld [vmem:[#allocation9 + $0x618] sm:$0xff]
    %v7177 = vld [vmem:[#allocation9 + $0x620] sm:$0xff]
    %v7178 = vld [vmem:[#allocation9 + $0x628] sm:$0xff]
    %v7179 = vld [vmem:[#allocation9 + $0x630] sm:$0xff]
    %v7180 = vld [vmem:[#allocation9 + $0x638] sm:$0xff]
    %v7181 = vld [vmem:[#allocation9 + $0x640] sm:$0xff]
    %v7182 = vld [vmem:[#allocation9 + $0x648] sm:$0xff]
    %v7183 = vld [vmem:[#allocation9 + $0x650] sm:$0xff]
    %v7184 = vld [vmem:[#allocation9 + $0x658] sm:$0xff]
    %v7185 = vld [vmem:[#allocation9 + $0x660] sm:$0xff]
    %v7186 = vld [vmem:[#allocation9 + $0x668] sm:$0xff]
    %v7187 = vld [vmem:[#allocation9 + $0x670] sm:$0xff]
    %v7188 = vld [vmem:[#allocation9 + $0x678] sm:$0xff]
    %v7189 = vld [vmem:[#allocation9 + $0x680] sm:$0xff]
    %v7190 = vld [vmem:[#allocation9 + $0x688] sm:$0xff]
    %v7191 = vld [vmem:[#allocation9 + $0x690] sm:$0xff]
    %v7192 = vld [vmem:[#allocation9 + $0x698] sm:$0xff]
    %v7193 = vld [vmem:[#allocation9 + $0x6a0] sm:$0xff]
    %v7194 = vld [vmem:[#allocation9 + $0x6a8] sm:$0xff]
    %v7195 = vld [vmem:[#allocation9 + $0x6b0] sm:$0xff]
    %v7196 = vld [vmem:[#allocation9 + $0x6b8] sm:$0xff]
    %v7197 = vld [vmem:[#allocation9 + $0x6c0] sm:$0xff]
    %v7198 = vld [vmem:[#allocation9 + $0x6c8] sm:$0xff]
    %v7199 = vld [vmem:[#allocation9 + $0x6d0] sm:$0xff]
    %v7200 = vld [vmem:[#allocation9 + $0x6d8] sm:$0xff]
    %v7201 = vld [vmem:[#allocation9 + $0x6e0] sm:$0xff]
    %v7202 = vld [vmem:[#allocation9 + $0x6e8] sm:$0xff]
    %v7203 = vld [vmem:[#allocation9 + $0x6f0] sm:$0xff]
    %v7204 = vld [vmem:[#allocation9 + $0x6f8] sm:$0xff]
    %v7205 = vld [vmem:[#allocation9 + $0x700] sm:$0xff]
    %v7206 = vld [vmem:[#allocation9 + $0x708] sm:$0xff]
    %v7207 = vld [vmem:[#allocation9 + $0x710] sm:$0xff]
    %v7208 = vld [vmem:[#allocation9 + $0x718] sm:$0xff]
    %v7209 = vld [vmem:[#allocation9 + $0x720] sm:$0xff]
    %v7210 = vld [vmem:[#allocation9 + $0x728] sm:$0xff]
    %v7211 = vld [vmem:[#allocation9 + $0x730] sm:$0xff]
    %v7212 = vld [vmem:[#allocation9 + $0x738] sm:$0xff]
    %v7213 = vld [vmem:[#allocation9 + $0x740] sm:$0xff]
    %v7214 = vld [vmem:[#allocation9 + $0x748] sm:$0xff]
    %v7215 = vld [vmem:[#allocation9 + $0x750] sm:$0xff]
    %v7216 = vld [vmem:[#allocation9 + $0x758] sm:$0xff]
    %v7217 = vld [vmem:[#allocation9 + $0x760] sm:$0xff]
    %v7218 = vld [vmem:[#allocation9 + $0x768] sm:$0xff]
    %v7219 = vld [vmem:[#allocation9 + $0x770] sm:$0xff]
    %v7220 = vld [vmem:[#allocation9 + $0x778] sm:$0xff]
    %v7221 = vld [vmem:[#allocation9 + $0x780] sm:$0xff]
    %v7222 = vld [vmem:[#allocation9 + $0x788] sm:$0xff]
    %v7223 = vld [vmem:[#allocation9 + $0x790] sm:$0xff]
    %v7224 = vld [vmem:[#allocation9 + $0x798] sm:$0xff]
    %v7225 = vld [vmem:[#allocation9 + $0x7a0] sm:$0xff]
    %v7226 = vld [vmem:[#allocation9 + $0x7a8] sm:$0xff]
    %v7227 = vld [vmem:[#allocation9 + $0x7b0] sm:$0xff]
    %v7228 = vld [vmem:[#allocation9 + $0x7b8] sm:$0xff]
    %v7229 = vld [vmem:[#allocation9 + $0x7c0] sm:$0xff]
    %v7230 = vld [vmem:[#allocation9 + $0x7c8] sm:$0xff]
    %v7231 = vld [vmem:[#allocation9 + $0x7d0] sm:$0xff]
    %v7232 = vld [vmem:[#allocation9 + $0x7d8] sm:$0xff]
    %v7233 = vld [vmem:[#allocation9 + $0x7e0] sm:$0xff]
    %v7234 = vld [vmem:[#allocation9 + $0x7e8] sm:$0xff]
    %v7235 = vld [vmem:[#allocation9 + $0x7f0] sm:$0xff]
    %v7236 = vld [vmem:[#allocation9 + $0x7f8] sm:$0xff]
    %v7237 = vld [vmem:[#allocation11] sm:$0xf]
    %v7239 = vlaneseq
    %v7240 = vshrl.u32 %v7239, 7
    %v7241 = vsub.s32 0, %v7240
    %v7242 = vrot.slane %v7237, %v7241
    %v7243 = vlaneseq
    %v7244 = vshrl.u32 %v7243, 7
    %v7245 = vsub.s32 1, %v7244
    %v7246 = vrot.slane %v7237, %v7245
    %v7247 = vlaneseq
    %v7248 = vshrl.u32 %v7247, 7
    %v7249 = vsub.s32 2, %v7248
    %v7250 = vrot.slane %v7237, %v7249
    %v7251 = vlaneseq
    %v7252 = vshrl.u32 %v7251, 7
    %v7253 = vsub.s32 3, %v7252
    %v7254 = vrot.slane %v7237, %v7253
    %v7515 = vunpack.c.l.b16 %v6981
    %v7516 = vunpack.c.h.b16 %v6981
    %v7517 = vunpack.c.l.b16 %v6982
    %v7518 = vunpack.c.h.b16 %v6982
    %v7519 = vunpack.c.l.b16 %v6983
    %v7520 = vunpack.c.h.b16 %v6983
    %v7521 = vunpack.c.l.b16 %v6984
    %v7522 = vunpack.c.h.b16 %v6984
    %v7523 = vunpack.c.l.b16 %v6985
    %v7524 = vunpack.c.h.b16 %v6985
    %v7525 = vunpack.c.l.b16 %v6986
    %v7526 = vunpack.c.h.b16 %v6986
    %v7527 = vunpack.c.l.b16 %v6987
    %v7528 = vunpack.c.h.b16 %v6987
    %v7529 = vunpack.c.l.b16 %v6988
    %v7530 = vunpack.c.h.b16 %v6988
    %v7531 = vunpack.c.l.b16 %v6989
    %v7532 = vunpack.c.h.b16 %v6989
    %v7533 = vunpack.c.l.b16 %v6990
    %v7534 = vunpack.c.h.b16 %v6990
    %v7535 = vunpack.c.l.b16 %v6991
    %v7536 = vunpack.c.h.b16 %v6991
    %v7537 = vunpack.c.l.b16 %v6992
    %v7538 = vunpack.c.h.b16 %v6992
    %v7539 = vunpack.c.l.b16 %v6993
    %v7540 = vunpack.c.h.b16 %v6993
    %v7541 = vunpack.c.l.b16 %v6994
    %v7542 = vunpack.c.h.b16 %v6994
    %v7543 = vunpack.c.l.b16 %v6995
    %v7544 = vunpack.c.h.b16 %v6995
    %v7545 = vunpack.c.l.b16 %v6996
    %v7546 = vunpack.c.h.b16 %v6996
    %v7547 = vunpack.c.l.b16 %v6997
    %v7548 = vunpack.c.h.b16 %v6997
    %v7549 = vunpack.c.l.b16 %v6998
    %v7550 = vunpack.c.h.b16 %v6998
    %v7551 = vunpack.c.l.b16 %v6999
    %v7552 = vunpack.c.h.b16 %v6999
    %v7553 = vunpack.c.l.b16 %v7000
    %v7554 = vunpack.c.h.b16 %v7000
    %v7555 = vunpack.c.l.b16 %v7001
    %v7556 = vunpack.c.h.b16 %v7001
    %v7557 = vunpack.c.l.b16 %v7002
    %v7558 = vunpack.c.h.b16 %v7002
    %v7559 = vunpack.c.l.b16 %v7003
    %v7560 = vunpack.c.h.b16 %v7003
    %v7561 = vunpack.c.l.b16 %v7004
    %v7562 = vunpack.c.h.b16 %v7004
    %v7563 = vunpack.c.l.b16 %v7005
    %v7564 = vunpack.c.h.b16 %v7005
    %v7565 = vunpack.c.l.b16 %v7006
    %v7566 = vunpack.c.h.b16 %v7006
    %v7567 = vunpack.c.l.b16 %v7007
    %v7568 = vunpack.c.h.b16 %v7007
    %v7569 = vunpack.c.l.b16 %v7008
    %v7570 = vunpack.c.h.b16 %v7008
    %v7571 = vunpack.c.l.b16 %v7009
    %v7572 = vunpack.c.h.b16 %v7009
    %v7573 = vunpack.c.l.b16 %v7010
    %v7574 = vunpack.c.h.b16 %v7010
    %v7575 = vunpack.c.l.b16 %v7011
    %v7576 = vunpack.c.h.b16 %v7011
    %v7577 = vunpack.c.l.b16 %v7012
    %v7578 = vunpack.c.h.b16 %v7012
    %v7579 = vunpack.c.l.b16 %v7013
    %v7580 = vunpack.c.h.b16 %v7013
    %v7581 = vunpack.c.l.b16 %v7014
    %v7582 = vunpack.c.h.b16 %v7014
    %v7583 = vunpack.c.l.b16 %v7015
    %v7584 = vunpack.c.h.b16 %v7015
    %v7585 = vunpack.c.l.b16 %v7016
    %v7586 = vunpack.c.h.b16 %v7016
    %v7587 = vunpack.c.l.b16 %v7017
    %v7588 = vunpack.c.h.b16 %v7017
    %v7589 = vunpack.c.l.b16 %v7018
    %v7590 = vunpack.c.h.b16 %v7018
    %v7591 = vunpack.c.l.b16 %v7019
    %v7592 = vunpack.c.h.b16 %v7019
    %v7593 = vunpack.c.l.b16 %v7020
    %v7594 = vunpack.c.h.b16 %v7020
    %v7595 = vunpack.c.l.b16 %v7021
    %v7596 = vunpack.c.h.b16 %v7021
    %v7597 = vunpack.c.l.b16 %v7022
    %v7598 = vunpack.c.h.b16 %v7022
    %v7599 = vunpack.c.l.b16 %v7023
    %v7600 = vunpack.c.h.b16 %v7023
    %v7601 = vunpack.c.l.b16 %v7024
    %v7602 = vunpack.c.h.b16 %v7024
    %v7603 = vunpack.c.l.b16 %v7025
    %v7604 = vunpack.c.h.b16 %v7025
    %v7605 = vunpack.c.l.b16 %v7026
    %v7606 = vunpack.c.h.b16 %v7026
    %v7607 = vunpack.c.l.b16 %v7027
    %v7608 = vunpack.c.h.b16 %v7027
    %v7609 = vunpack.c.l.b16 %v7028
    %v7610 = vunpack.c.h.b16 %v7028
    %v7611 = vunpack.c.l.b16 %v7029
    %v7612 = vunpack.c.h.b16 %v7029
    %v7613 = vunpack.c.l.b16 %v7030
    %v7614 = vunpack.c.h.b16 %v7030
    %v7615 = vunpack.c.l.b16 %v7031
    %v7616 = vunpack.c.h.b16 %v7031
    %v7617 = vunpack.c.l.b16 %v7032
    %v7618 = vunpack.c.h.b16 %v7032
    %v7619 = vunpack.c.l.b16 %v7033
    %v7620 = vunpack.c.h.b16 %v7033
    %v7621 = vunpack.c.l.b16 %v7034
    %v7622 = vunpack.c.h.b16 %v7034
    %v7623 = vunpack.c.l.b16 %v7035
    %v7624 = vunpack.c.h.b16 %v7035
    %v7625 = vunpack.c.l.b16 %v7036
    %v7626 = vunpack.c.h.b16 %v7036
    %v7627 = vunpack.c.l.b16 %v7037
    %v7628 = vunpack.c.h.b16 %v7037
    %v7629 = vunpack.c.l.b16 %v7038
    %v7630 = vunpack.c.h.b16 %v7038
    %v7631 = vunpack.c.l.b16 %v7039
    %v7632 = vunpack.c.h.b16 %v7039
    %v7633 = vunpack.c.l.b16 %v7040
    %v7634 = vunpack.c.h.b16 %v7040
    %v7635 = vunpack.c.l.b16 %v7041
    %v7636 = vunpack.c.h.b16 %v7041
    %v7637 = vunpack.c.l.b16 %v7042
    %v7638 = vunpack.c.h.b16 %v7042
    %v7639 = vunpack.c.l.b16 %v7043
    %v7640 = vunpack.c.h.b16 %v7043
    %v7641 = vunpack.c.l.b16 %v7044
    %v7642 = vunpack.c.h.b16 %v7044
    %v7643 = vunpack.c.l.b16 %v7045
    %v7644 = vunpack.c.h.b16 %v7045
    %v7645 = vunpack.c.l.b16 %v7046
    %v7646 = vunpack.c.h.b16 %v7046
    %v7647 = vunpack.c.l.b16 %v7047
    %v7648 = vunpack.c.h.b16 %v7047
    %v7649 = vunpack.c.l.b16 %v7048
    %v7650 = vunpack.c.h.b16 %v7048
    %v7651 = vunpack.c.l.b16 %v7049
    %v7652 = vunpack.c.h.b16 %v7049
    %v7653 = vunpack.c.l.b16 %v7050
    %v7654 = vunpack.c.h.b16 %v7050
    %v7655 = vunpack.c.l.b16 %v7051
    %v7656 = vunpack.c.h.b16 %v7051
    %v7657 = vunpack.c.l.b16 %v7052
    %v7658 = vunpack.c.h.b16 %v7052
    %v7659 = vunpack.c.l.b16 %v7053
    %v7660 = vunpack.c.h.b16 %v7053
    %v7661 = vunpack.c.l.b16 %v7054
    %v7662 = vunpack.c.h.b16 %v7054
    %v7663 = vunpack.c.l.b16 %v7055
    %v7664 = vunpack.c.h.b16 %v7055
    %v7665 = vunpack.c.l.b16 %v7056
    %v7666 = vunpack.c.h.b16 %v7056
    %v7667 = vunpack.c.l.b16 %v7057
    %v7668 = vunpack.c.h.b16 %v7057
    %v7669 = vunpack.c.l.b16 %v7058
    %v7670 = vunpack.c.h.b16 %v7058
    %v7671 = vunpack.c.l.b16 %v7059
    %v7672 = vunpack.c.h.b16 %v7059
    %v7673 = vunpack.c.l.b16 %v7060
    %v7674 = vunpack.c.h.b16 %v7060
    %v7675 = vunpack.c.l.b16 %v7061
    %v7676 = vunpack.c.h.b16 %v7061
    %v7677 = vunpack.c.l.b16 %v7062
    %v7678 = vunpack.c.h.b16 %v7062
    %v7679 = vunpack.c.l.b16 %v7063
    %v7680 = vunpack.c.h.b16 %v7063
    %v7681 = vunpack.c.l.b16 %v7064
    %v7682 = vunpack.c.h.b16 %v7064
    %v7683 = vunpack.c.l.b16 %v7065
    %v7684 = vunpack.c.h.b16 %v7065
    %v7685 = vunpack.c.l.b16 %v7066
    %v7686 = vunpack.c.h.b16 %v7066
    %v7687 = vunpack.c.l.b16 %v7067
    %v7688 = vunpack.c.h.b16 %v7067
    %v7689 = vunpack.c.l.b16 %v7068
    %v7690 = vunpack.c.h.b16 %v7068
    %v7691 = vunpack.c.l.b16 %v7069
    %v7692 = vunpack.c.h.b16 %v7069
    %v7693 = vunpack.c.l.b16 %v7070
    %v7694 = vunpack.c.h.b16 %v7070
    %v7695 = vunpack.c.l.b16 %v7071
    %v7696 = vunpack.c.h.b16 %v7071
    %v7697 = vunpack.c.l.b16 %v7072
    %v7698 = vunpack.c.h.b16 %v7072
    %v7699 = vunpack.c.l.b16 %v7073
    %v7700 = vunpack.c.h.b16 %v7073
    %v7701 = vunpack.c.l.b16 %v7074
    %v7702 = vunpack.c.h.b16 %v7074
    %v7703 = vunpack.c.l.b16 %v7075
    %v7704 = vunpack.c.h.b16 %v7075
    %v7705 = vunpack.c.l.b16 %v7076
    %v7706 = vunpack.c.h.b16 %v7076
    %v7707 = vunpack.c.l.b16 %v7077
    %v7708 = vunpack.c.h.b16 %v7077
    %v7709 = vunpack.c.l.b16 %v7078
    %v7710 = vunpack.c.h.b16 %v7078
    %v7711 = vunpack.c.l.b16 %v7079
    %v7712 = vunpack.c.h.b16 %v7079
    %v7713 = vunpack.c.l.b16 %v7080
    %v7714 = vunpack.c.h.b16 %v7080
    %v7715 = vunpack.c.l.b16 %v7081
    %v7716 = vunpack.c.h.b16 %v7081
    %v7717 = vunpack.c.l.b16 %v7082
    %v7718 = vunpack.c.h.b16 %v7082
    %v7719 = vunpack.c.l.b16 %v7083
    %v7720 = vunpack.c.h.b16 %v7083
    %v7721 = vunpack.c.l.b16 %v7084
    %v7722 = vunpack.c.h.b16 %v7084
    %v7723 = vunpack.c.l.b16 %v7085
    %v7724 = vunpack.c.h.b16 %v7085
    %v7725 = vunpack.c.l.b16 %v7086
    %v7726 = vunpack.c.h.b16 %v7086
    %v7727 = vunpack.c.l.b16 %v7087
    %v7728 = vunpack.c.h.b16 %v7087
    %v7729 = vunpack.c.l.b16 %v7088
    %v7730 = vunpack.c.h.b16 %v7088
    %v7731 = vunpack.c.l.b16 %v7089
    %v7732 = vunpack.c.h.b16 %v7089
    %v7733 = vunpack.c.l.b16 %v7090
    %v7734 = vunpack.c.h.b16 %v7090
    %v7735 = vunpack.c.l.b16 %v7091
    %v7736 = vunpack.c.h.b16 %v7091
    %v7737 = vunpack.c.l.b16 %v7092
    %v7738 = vunpack.c.h.b16 %v7092
    %v7739 = vunpack.c.l.b16 %v7093
    %v7740 = vunpack.c.h.b16 %v7093
    %v7741 = vunpack.c.l.b16 %v7094
    %v7742 = vunpack.c.h.b16 %v7094
    %v7743 = vunpack.c.l.b16 %v7095
    %v7744 = vunpack.c.h.b16 %v7095
    %v7745 = vunpack.c.l.b16 %v7096
    %v7746 = vunpack.c.h.b16 %v7096
    %v7747 = vunpack.c.l.b16 %v7097
    %v7748 = vunpack.c.h.b16 %v7097
    %v7749 = vunpack.c.l.b16 %v7098
    %v7750 = vunpack.c.h.b16 %v7098
    %v7751 = vunpack.c.l.b16 %v7099
    %v7752 = vunpack.c.h.b16 %v7099
    %v7753 = vunpack.c.l.b16 %v7100
    %v7754 = vunpack.c.h.b16 %v7100
    %v7755 = vunpack.c.l.b16 %v7101
    %v7756 = vunpack.c.h.b16 %v7101
    %v7757 = vunpack.c.l.b16 %v7102
    %v7758 = vunpack.c.h.b16 %v7102
    %v7759 = vunpack.c.l.b16 %v7103
    %v7760 = vunpack.c.h.b16 %v7103
    %v7761 = vunpack.c.l.b16 %v7104
    %v7762 = vunpack.c.h.b16 %v7104
    %v7763 = vunpack.c.l.b16 %v7105
    %v7764 = vunpack.c.h.b16 %v7105
    %v7765 = vunpack.c.l.b16 %v7106
    %v7766 = vunpack.c.h.b16 %v7106
    %v7767 = vunpack.c.l.b16 %v7107
    %v7768 = vunpack.c.h.b16 %v7107
    %v7769 = vunpack.c.l.b16 %v7108
    %v7770 = vunpack.c.h.b16 %v7108
    %v7771 = vunpack.c.l.b16 %v7109
    %v7772 = vunpack.c.h.b16 %v7109
    %v7773 = vunpack.c.l.b16 %v7110
    %v7774 = vunpack.c.h.b16 %v7110
    %v7775 = vunpack.c.l.b16 %v7111
    %v7776 = vunpack.c.h.b16 %v7111
    %v7777 = vunpack.c.l.b16 %v7112
    %v7778 = vunpack.c.h.b16 %v7112
    %v7779 = vunpack.c.l.b16 %v7113
    %v7780 = vunpack.c.h.b16 %v7113
    %v7781 = vunpack.c.l.b16 %v7114
    %v7782 = vunpack.c.h.b16 %v7114
    %v7783 = vunpack.c.l.b16 %v7115
    %v7784 = vunpack.c.h.b16 %v7115
    %v7785 = vunpack.c.l.b16 %v7116
    %v7786 = vunpack.c.h.b16 %v7116
    %v7787 = vunpack.c.l.b16 %v7117
    %v7788 = vunpack.c.h.b16 %v7117
    %v7789 = vunpack.c.l.b16 %v7118
    %v7790 = vunpack.c.h.b16 %v7118
    %v7791 = vunpack.c.l.b16 %v7119
    %v7792 = vunpack.c.h.b16 %v7119
    %v7793 = vunpack.c.l.b16 %v7120
    %v7794 = vunpack.c.h.b16 %v7120
    %v7795 = vunpack.c.l.b16 %v7121
    %v7796 = vunpack.c.h.b16 %v7121
    %v7797 = vunpack.c.l.b16 %v7122
    %v7798 = vunpack.c.h.b16 %v7122
    %v7799 = vunpack.c.l.b16 %v7123
    %v7800 = vunpack.c.h.b16 %v7123
    %v7801 = vunpack.c.l.b16 %v7124
    %v7802 = vunpack.c.h.b16 %v7124
    %v7803 = vunpack.c.l.b16 %v7125
    %v7804 = vunpack.c.h.b16 %v7125
    %v7805 = vunpack.c.l.b16 %v7126
    %v7806 = vunpack.c.h.b16 %v7126
    %v7807 = vunpack.c.l.b16 %v7127
    %v7808 = vunpack.c.h.b16 %v7127
    %v7809 = vunpack.c.l.b16 %v7128
    %v7810 = vunpack.c.h.b16 %v7128
    %v7811 = vunpack.c.l.b16 %v7129
    %v7812 = vunpack.c.h.b16 %v7129
    %v7813 = vunpack.c.l.b16 %v7130
    %v7814 = vunpack.c.h.b16 %v7130
    %v7815 = vunpack.c.l.b16 %v7131
    %v7816 = vunpack.c.h.b16 %v7131
    %v7817 = vunpack.c.l.b16 %v7132
    %v7818 = vunpack.c.h.b16 %v7132
    %v7819 = vunpack.c.l.b16 %v7133
    %v7820 = vunpack.c.h.b16 %v7133
    %v7821 = vunpack.c.l.b16 %v7134
    %v7822 = vunpack.c.h.b16 %v7134
    %v7823 = vunpack.c.l.b16 %v7135
    %v7824 = vunpack.c.h.b16 %v7135
    %v7825 = vunpack.c.l.b16 %v7136
    %v7826 = vunpack.c.h.b16 %v7136
    %v7827 = vunpack.c.l.b16 %v7137
    %v7828 = vunpack.c.h.b16 %v7137
    %v7829 = vunpack.c.l.b16 %v7138
    %v7830 = vunpack.c.h.b16 %v7138
    %v7831 = vunpack.c.l.b16 %v7139
    %v7832 = vunpack.c.h.b16 %v7139
    %v7833 = vunpack.c.l.b16 %v7140
    %v7834 = vunpack.c.h.b16 %v7140
    %v7835 = vunpack.c.l.b16 %v7141
    %v7836 = vunpack.c.h.b16 %v7141
    %v7837 = vunpack.c.l.b16 %v7142
    %v7838 = vunpack.c.h.b16 %v7142
    %v7839 = vunpack.c.l.b16 %v7143
    %v7840 = vunpack.c.h.b16 %v7143
    %v7841 = vunpack.c.l.b16 %v7144
    %v7842 = vunpack.c.h.b16 %v7144
    %v7843 = vunpack.c.l.b16 %v7145
    %v7844 = vunpack.c.h.b16 %v7145
    %v7845 = vunpack.c.l.b16 %v7146
    %v7846 = vunpack.c.h.b16 %v7146
    %v7847 = vunpack.c.l.b16 %v7147
    %v7848 = vunpack.c.h.b16 %v7147
    %v7849 = vunpack.c.l.b16 %v7148
    %v7850 = vunpack.c.h.b16 %v7148
    %v7851 = vunpack.c.l.b16 %v7149
    %v7852 = vunpack.c.h.b16 %v7149
    %v7853 = vunpack.c.l.b16 %v7150
    %v7854 = vunpack.c.h.b16 %v7150
    %v7855 = vunpack.c.l.b16 %v7151
    %v7856 = vunpack.c.h.b16 %v7151
    %v7857 = vunpack.c.l.b16 %v7152
    %v7858 = vunpack.c.h.b16 %v7152
    %v7859 = vunpack.c.l.b16 %v7153
    %v7860 = vunpack.c.h.b16 %v7153
    %v7861 = vunpack.c.l.b16 %v7154
    %v7862 = vunpack.c.h.b16 %v7154
    %v7863 = vunpack.c.l.b16 %v7155
    %v7864 = vunpack.c.h.b16 %v7155
    %v7865 = vunpack.c.l.b16 %v7156
    %v7866 = vunpack.c.h.b16 %v7156
    %v7867 = vunpack.c.l.b16 %v7157
    %v7868 = vunpack.c.h.b16 %v7157
    %v7869 = vunpack.c.l.b16 %v7158
    %v7870 = vunpack.c.h.b16 %v7158
    %v7871 = vunpack.c.l.b16 %v7159
    %v7872 = vunpack.c.h.b16 %v7159
    %v7873 = vunpack.c.l.b16 %v7160
    %v7874 = vunpack.c.h.b16 %v7160
    %v7875 = vunpack.c.l.b16 %v7161
    %v7876 = vunpack.c.h.b16 %v7161
    %v7877 = vunpack.c.l.b16 %v7162
    %v7878 = vunpack.c.h.b16 %v7162
    %v7879 = vunpack.c.l.b16 %v7163
    %v7880 = vunpack.c.h.b16 %v7163
    %v7881 = vunpack.c.l.b16 %v7164
    %v7882 = vunpack.c.h.b16 %v7164
    %v7883 = vunpack.c.l.b16 %v7165
    %v7884 = vunpack.c.h.b16 %v7165
    %v7885 = vunpack.c.l.b16 %v7166
    %v7886 = vunpack.c.h.b16 %v7166
    %v7887 = vunpack.c.l.b16 %v7167
    %v7888 = vunpack.c.h.b16 %v7167
    %v7889 = vunpack.c.l.b16 %v7168
    %v7890 = vunpack.c.h.b16 %v7168
    %v7891 = vunpack.c.l.b16 %v7169
    %v7892 = vunpack.c.h.b16 %v7169
    %v7893 = vunpack.c.l.b16 %v7170
    %v7894 = vunpack.c.h.b16 %v7170
    %v7895 = vunpack.c.l.b16 %v7171
    %v7896 = vunpack.c.h.b16 %v7171
    %v7897 = vunpack.c.l.b16 %v7172
    %v7898 = vunpack.c.h.b16 %v7172
    %v7899 = vunpack.c.l.b16 %v7173
    %v7900 = vunpack.c.h.b16 %v7173
    %v7901 = vunpack.c.l.b16 %v7174
    %v7902 = vunpack.c.h.b16 %v7174
    %v7903 = vunpack.c.l.b16 %v7175
    %v7904 = vunpack.c.h.b16 %v7175
    %v7905 = vunpack.c.l.b16 %v7176
    %v7906 = vunpack.c.h.b16 %v7176
    %v7907 = vunpack.c.l.b16 %v7177
    %v7908 = vunpack.c.h.b16 %v7177
    %v7909 = vunpack.c.l.b16 %v7178
    %v7910 = vunpack.c.h.b16 %v7178
    %v7911 = vunpack.c.l.b16 %v7179
    %v7912 = vunpack.c.h.b16 %v7179
    %v7913 = vunpack.c.l.b16 %v7180
    %v7914 = vunpack.c.h.b16 %v7180
    %v7915 = vunpack.c.l.b16 %v7181
    %v7916 = vunpack.c.h.b16 %v7181
    %v7917 = vunpack.c.l.b16 %v7182
    %v7918 = vunpack.c.h.b16 %v7182
    %v7919 = vunpack.c.l.b16 %v7183
    %v7920 = vunpack.c.h.b16 %v7183
    %v7921 = vunpack.c.l.b16 %v7184
    %v7922 = vunpack.c.h.b16 %v7184
    %v7923 = vunpack.c.l.b16 %v7185
    %v7924 = vunpack.c.h.b16 %v7185
    %v7925 = vunpack.c.l.b16 %v7186
    %v7926 = vunpack.c.h.b16 %v7186
    %v7927 = vunpack.c.l.b16 %v7187
    %v7928 = vunpack.c.h.b16 %v7187
    %v7929 = vunpack.c.l.b16 %v7188
    %v7930 = vunpack.c.h.b16 %v7188
    %v7931 = vunpack.c.l.b16 %v7189
    %v7932 = vunpack.c.h.b16 %v7189
    %v7933 = vunpack.c.l.b16 %v7190
    %v7934 = vunpack.c.h.b16 %v7190
    %v7935 = vunpack.c.l.b16 %v7191
    %v7936 = vunpack.c.h.b16 %v7191
    %v7937 = vunpack.c.l.b16 %v7192
    %v7938 = vunpack.c.h.b16 %v7192
    %v7939 = vunpack.c.l.b16 %v7193
    %v7940 = vunpack.c.h.b16 %v7193
    %v7941 = vunpack.c.l.b16 %v7194
    %v7942 = vunpack.c.h.b16 %v7194
    %v7943 = vunpack.c.l.b16 %v7195
    %v7944 = vunpack.c.h.b16 %v7195
    %v7945 = vunpack.c.l.b16 %v7196
    %v7946 = vunpack.c.h.b16 %v7196
    %v7947 = vunpack.c.l.b16 %v7197
    %v7948 = vunpack.c.h.b16 %v7197
    %v7949 = vunpack.c.l.b16 %v7198
    %v7950 = vunpack.c.h.b16 %v7198
    %v7951 = vunpack.c.l.b16 %v7199
    %v7952 = vunpack.c.h.b16 %v7199
    %v7953 = vunpack.c.l.b16 %v7200
    %v7954 = vunpack.c.h.b16 %v7200
    %v7955 = vunpack.c.l.b16 %v7201
    %v7956 = vunpack.c.h.b16 %v7201
    %v7957 = vunpack.c.l.b16 %v7202
    %v7958 = vunpack.c.h.b16 %v7202
    %v7959 = vunpack.c.l.b16 %v7203
    %v7960 = vunpack.c.h.b16 %v7203
    %v7961 = vunpack.c.l.b16 %v7204
    %v7962 = vunpack.c.h.b16 %v7204
    %v7963 = vunpack.c.l.b16 %v7205
    %v7964 = vunpack.c.h.b16 %v7205
    %v7965 = vunpack.c.l.b16 %v7206
    %v7966 = vunpack.c.h.b16 %v7206
    %v7967 = vunpack.c.l.b16 %v7207
    %v7968 = vunpack.c.h.b16 %v7207
    %v7969 = vunpack.c.l.b16 %v7208
    %v7970 = vunpack.c.h.b16 %v7208
    %v7971 = vunpack.c.l.b16 %v7209
    %v7972 = vunpack.c.h.b16 %v7209
    %v7973 = vunpack.c.l.b16 %v7210
    %v7974 = vunpack.c.h.b16 %v7210
    %v7975 = vunpack.c.l.b16 %v7211
    %v7976 = vunpack.c.h.b16 %v7211
    %v7977 = vunpack.c.l.b16 %v7212
    %v7978 = vunpack.c.h.b16 %v7212
    %v7979 = vunpack.c.l.b16 %v7213
    %v7980 = vunpack.c.h.b16 %v7213
    %v7981 = vunpack.c.l.b16 %v7214
    %v7982 = vunpack.c.h.b16 %v7214
    %v7983 = vunpack.c.l.b16 %v7215
    %v7984 = vunpack.c.h.b16 %v7215
    %v7985 = vunpack.c.l.b16 %v7216
    %v7986 = vunpack.c.h.b16 %v7216
    %v7987 = vunpack.c.l.b16 %v7217
    %v7988 = vunpack.c.h.b16 %v7217
    %v7989 = vunpack.c.l.b16 %v7218
    %v7990 = vunpack.c.h.b16 %v7218
    %v7991 = vunpack.c.l.b16 %v7219
    %v7992 = vunpack.c.h.b16 %v7219
    %v7993 = vunpack.c.l.b16 %v7220
    %v7994 = vunpack.c.h.b16 %v7220
    %v7995 = vunpack.c.l.b16 %v7221
    %v7996 = vunpack.c.h.b16 %v7221
    %v7997 = vunpack.c.l.b16 %v7222
    %v7998 = vunpack.c.h.b16 %v7222
    %v7999 = vunpack.c.l.b16 %v7223
    %v8000 = vunpack.c.h.b16 %v7223
    %v8001 = vunpack.c.l.b16 %v7224
    %v8002 = vunpack.c.h.b16 %v7224
    %v8003 = vunpack.c.l.b16 %v7225
    %v8004 = vunpack.c.h.b16 %v7225
    %v8005 = vunpack.c.l.b16 %v7226
    %v8006 = vunpack.c.h.b16 %v7226
    %v8007 = vunpack.c.l.b16 %v7227
    %v8008 = vunpack.c.h.b16 %v7227
    %v8009 = vunpack.c.l.b16 %v7228
    %v8010 = vunpack.c.h.b16 %v7228
    %v8011 = vunpack.c.l.b16 %v7229
    %v8012 = vunpack.c.h.b16 %v7229
    %v8013 = vunpack.c.l.b16 %v7230
    %v8014 = vunpack.c.h.b16 %v7230
    %v8015 = vunpack.c.l.b16 %v7231
    %v8016 = vunpack.c.h.b16 %v7231
    %v8017 = vunpack.c.l.b16 %v7232
    %v8018 = vunpack.c.h.b16 %v7232
    %v8019 = vunpack.c.l.b16 %v7233
    %v8020 = vunpack.c.h.b16 %v7233
    %v8021 = vunpack.c.l.b16 %v7234
    %v8022 = vunpack.c.h.b16 %v7234
    %v8023 = vunpack.c.l.b16 %v7235
    %v8024 = vunpack.c.h.b16 %v7235
    %v8025 = vunpack.c.l.b16 %v7236
    %v8026 = vunpack.c.h.b16 %v7236
    %v8027 = vpack.c.b16 %v7519, %v7515
    %v8028 = vpack.c.b16 %v7520, %v7516
    %v8029 = vpack.c.b16 %v7521, %v7517
    %v8030 = vpack.c.b16 %v7522, %v7518
    %v8031 = vpack.c.b16 %v7527, %v7523
    %v8032 = vpack.c.b16 %v7528, %v7524
    %v8033 = vpack.c.b16 %v7529, %v7525
    %v8034 = vpack.c.b16 %v7530, %v7526
    %v8035 = vpack.c.b16 %v7535, %v7531
    %v8036 = vpack.c.b16 %v7536, %v7532
    %v8037 = vpack.c.b16 %v7537, %v7533
    %v8038 = vpack.c.b16 %v7538, %v7534
    %v8039 = vpack.c.b16 %v7543, %v7539
    %v8040 = vpack.c.b16 %v7544, %v7540
    %v8041 = vpack.c.b16 %v7545, %v7541
    %v8042 = vpack.c.b16 %v7546, %v7542
    %v8043 = vpack.c.b16 %v7551, %v7547
    %v8044 = vpack.c.b16 %v7552, %v7548
    %v8045 = vpack.c.b16 %v7553, %v7549
    %v8046 = vpack.c.b16 %v7554, %v7550
    %v8047 = vpack.c.b16 %v7559, %v7555
    %v8048 = vpack.c.b16 %v7560, %v7556
    %v8049 = vpack.c.b16 %v7561, %v7557
    %v8050 = vpack.c.b16 %v7562, %v7558
    %v8051 = vpack.c.b16 %v7567, %v7563
    %v8052 = vpack.c.b16 %v7568, %v7564
    %v8053 = vpack.c.b16 %v7569, %v7565
    %v8054 = vpack.c.b16 %v7570, %v7566
    %v8055 = vpack.c.b16 %v7575, %v7571
    %v8056 = vpack.c.b16 %v7576, %v7572
    %v8057 = vpack.c.b16 %v7577, %v7573
    %v8058 = vpack.c.b16 %v7578, %v7574
    %v8059 = vpack.c.b16 %v7583, %v7579
    %v8060 = vpack.c.b16 %v7584, %v7580
    %v8061 = vpack.c.b16 %v7585, %v7581
    %v8062 = vpack.c.b16 %v7586, %v7582
    %v8063 = vpack.c.b16 %v7591, %v7587
    %v8064 = vpack.c.b16 %v7592, %v7588
    %v8065 = vpack.c.b16 %v7593, %v7589
    %v8066 = vpack.c.b16 %v7594, %v7590
    %v8067 = vpack.c.b16 %v7599, %v7595
    %v8068 = vpack.c.b16 %v7600, %v7596
    %v8069 = vpack.c.b16 %v7601, %v7597
    %v8070 = vpack.c.b16 %v7602, %v7598
    %v8071 = vpack.c.b16 %v7607, %v7603
    %v8072 = vpack.c.b16 %v7608, %v7604
    %v8073 = vpack.c.b16 %v7609, %v7605
    %v8074 = vpack.c.b16 %v7610, %v7606
    %v8075 = vpack.c.b16 %v7615, %v7611
    %v8076 = vpack.c.b16 %v7616, %v7612
    %v8077 = vpack.c.b16 %v7617, %v7613
    %v8078 = vpack.c.b16 %v7618, %v7614
    %v8079 = vpack.c.b16 %v7623, %v7619
    %v8080 = vpack.c.b16 %v7624, %v7620
    %v8081 = vpack.c.b16 %v7625, %v7621
    %v8082 = vpack.c.b16 %v7626, %v7622
    %v8083 = vpack.c.b16 %v7631, %v7627
    %v8084 = vpack.c.b16 %v7632, %v7628
    %v8085 = vpack.c.b16 %v7633, %v7629
    %v8086 = vpack.c.b16 %v7634, %v7630
    %v8087 = vpack.c.b16 %v7639, %v7635
    %v8088 = vpack.c.b16 %v7640, %v7636
    %v8089 = vpack.c.b16 %v7641, %v7637
    %v8090 = vpack.c.b16 %v7642, %v7638
    %v8091 = vpack.c.b16 %v7647, %v7643
    %v8092 = vpack.c.b16 %v7648, %v7644
    %v8093 = vpack.c.b16 %v7649, %v7645
    %v8094 = vpack.c.b16 %v7650, %v7646
    %v8095 = vpack.c.b16 %v7655, %v7651
    %v8096 = vpack.c.b16 %v7656, %v7652
    %v8097 = vpack.c.b16 %v7657, %v7653
    %v8098 = vpack.c.b16 %v7658, %v7654
    %v8099 = vpack.c.b16 %v7663, %v7659
    %v8100 = vpack.c.b16 %v7664, %v7660
    %v8101 = vpack.c.b16 %v7665, %v7661
    %v8102 = vpack.c.b16 %v7666, %v7662
    %v8103 = vpack.c.b16 %v7671, %v7667
    %v8104 = vpack.c.b16 %v7672, %v7668
    %v8105 = vpack.c.b16 %v7673, %v7669
    %v8106 = vpack.c.b16 %v7674, %v7670
    %v8107 = vpack.c.b16 %v7679, %v7675
    %v8108 = vpack.c.b16 %v7680, %v7676
    %v8109 = vpack.c.b16 %v7681, %v7677
    %v8110 = vpack.c.b16 %v7682, %v7678
    %v8111 = vpack.c.b16 %v7687, %v7683
    %v8112 = vpack.c.b16 %v7688, %v7684
    %v8113 = vpack.c.b16 %v7689, %v7685
    %v8114 = vpack.c.b16 %v7690, %v7686
    %v8115 = vpack.c.b16 %v7695, %v7691
    %v8116 = vpack.c.b16 %v7696, %v7692
    %v8117 = vpack.c.b16 %v7697, %v7693
    %v8118 = vpack.c.b16 %v7698, %v7694
    %v8119 = vpack.c.b16 %v7703, %v7699
    %v8120 = vpack.c.b16 %v7704, %v7700
    %v8121 = vpack.c.b16 %v7705, %v7701
    %v8122 = vpack.c.b16 %v7706, %v7702
    %v8123 = vpack.c.b16 %v7711, %v7707
    %v8124 = vpack.c.b16 %v7712, %v7708
    %v8125 = vpack.c.b16 %v7713, %v7709
    %v8126 = vpack.c.b16 %v7714, %v7710
    %v8127 = vpack.c.b16 %v7719, %v7715
    %v8128 = vpack.c.b16 %v7720, %v7716
    %v8129 = vpack.c.b16 %v7721, %v7717
    %v8130 = vpack.c.b16 %v7722, %v7718
    %v8131 = vpack.c.b16 %v7727, %v7723
    %v8132 = vpack.c.b16 %v7728, %v7724
    %v8133 = vpack.c.b16 %v7729, %v7725
    %v8134 = vpack.c.b16 %v7730, %v7726
    %v8135 = vpack.c.b16 %v7735, %v7731
    %v8136 = vpack.c.b16 %v7736, %v7732
    %v8137 = vpack.c.b16 %v7737, %v7733
    %v8138 = vpack.c.b16 %v7738, %v7734
    %v8139 = vpack.c.b16 %v7743, %v7739
    %v8140 = vpack.c.b16 %v7744, %v7740
    %v8141 = vpack.c.b16 %v7745, %v7741
    %v8142 = vpack.c.b16 %v7746, %v7742
    %v8143 = vpack.c.b16 %v7751, %v7747
    %v8144 = vpack.c.b16 %v7752, %v7748
    %v8145 = vpack.c.b16 %v7753, %v7749
    %v8146 = vpack.c.b16 %v7754, %v7750
    %v8147 = vpack.c.b16 %v7759, %v7755
    %v8148 = vpack.c.b16 %v7760, %v7756
    %v8149 = vpack.c.b16 %v7761, %v7757
    %v8150 = vpack.c.b16 %v7762, %v7758
    %v8151 = vpack.c.b16 %v7767, %v7763
    %v8152 = vpack.c.b16 %v7768, %v7764
    %v8153 = vpack.c.b16 %v7769, %v7765
    %v8154 = vpack.c.b16 %v7770, %v7766
    %v8155 = vpack.c.b16 %v7775, %v7771
    %v8156 = vpack.c.b16 %v7776, %v7772
    %v8157 = vpack.c.b16 %v7777, %v7773
    %v8158 = vpack.c.b16 %v7778, %v7774
    %v8159 = vpack.c.b16 %v7783, %v7779
    %v8160 = vpack.c.b16 %v7784, %v7780
    %v8161 = vpack.c.b16 %v7785, %v7781
    %v8162 = vpack.c.b16 %v7786, %v7782
    %v8163 = vpack.c.b16 %v7791, %v7787
    %v8164 = vpack.c.b16 %v7792, %v7788
    %v8165 = vpack.c.b16 %v7793, %v7789
    %v8166 = vpack.c.b16 %v7794, %v7790
    %v8167 = vpack.c.b16 %v7799, %v7795
    %v8168 = vpack.c.b16 %v7800, %v7796
    %v8169 = vpack.c.b16 %v7801, %v7797
    %v8170 = vpack.c.b16 %v7802, %v7798
    %v8171 = vpack.c.b16 %v7807, %v7803
    %v8172 = vpack.c.b16 %v7808, %v7804
    %v8173 = vpack.c.b16 %v7809, %v7805
    %v8174 = vpack.c.b16 %v7810, %v7806
    %v8175 = vpack.c.b16 %v7815, %v7811
    %v8176 = vpack.c.b16 %v7816, %v7812
    %v8177 = vpack.c.b16 %v7817, %v7813
    %v8178 = vpack.c.b16 %v7818, %v7814
    %v8179 = vpack.c.b16 %v7823, %v7819
    %v8180 = vpack.c.b16 %v7824, %v7820
    %v8181 = vpack.c.b16 %v7825, %v7821
    %v8182 = vpack.c.b16 %v7826, %v7822
    %v8183 = vpack.c.b16 %v7831, %v7827
    %v8184 = vpack.c.b16 %v7832, %v7828
    %v8185 = vpack.c.b16 %v7833, %v7829
    %v8186 = vpack.c.b16 %v7834, %v7830
    %v8187 = vpack.c.b16 %v7839, %v7835
    %v8188 = vpack.c.b16 %v7840, %v7836
    %v8189 = vpack.c.b16 %v7841, %v7837
    %v8190 = vpack.c.b16 %v7842, %v7838
    %v8191 = vpack.c.b16 %v7847, %v7843
    %v8192 = vpack.c.b16 %v7848, %v7844
    %v8193 = vpack.c.b16 %v7849, %v7845
    %v8194 = vpack.c.b16 %v7850, %v7846
    %v8195 = vpack.c.b16 %v7855, %v7851
    %v8196 = vpack.c.b16 %v7856, %v7852
    %v8197 = vpack.c.b16 %v7857, %v7853
    %v8198 = vpack.c.b16 %v7858, %v7854
    %v8199 = vpack.c.b16 %v7863, %v7859
    %v8200 = vpack.c.b16 %v7864, %v7860
    %v8201 = vpack.c.b16 %v7865, %v7861
    %v8202 = vpack.c.b16 %v7866, %v7862
    %v8203 = vpack.c.b16 %v7871, %v7867
    %v8204 = vpack.c.b16 %v7872, %v7868
    %v8205 = vpack.c.b16 %v7873, %v7869
    %v8206 = vpack.c.b16 %v7874, %v7870
    %v8207 = vpack.c.b16 %v7879, %v7875
    %v8208 = vpack.c.b16 %v7880, %v7876
    %v8209 = vpack.c.b16 %v7881, %v7877
    %v8210 = vpack.c.b16 %v7882, %v7878
    %v8211 = vpack.c.b16 %v7887, %v7883
    %v8212 = vpack.c.b16 %v7888, %v7884
    %v8213 = vpack.c.b16 %v7889, %v7885
    %v8214 = vpack.c.b16 %v7890, %v7886
    %v8215 = vpack.c.b16 %v7895, %v7891
    %v8216 = vpack.c.b16 %v7896, %v7892
    %v8217 = vpack.c.b16 %v7897, %v7893
    %v8218 = vpack.c.b16 %v7898, %v7894
    %v8219 = vpack.c.b16 %v7903, %v7899
    %v8220 = vpack.c.b16 %v7904, %v7900
    %v8221 = vpack.c.b16 %v7905, %v7901
    %v8222 = vpack.c.b16 %v7906, %v7902
    %v8223 = vpack.c.b16 %v7911, %v7907
    %v8224 = vpack.c.b16 %v7912, %v7908
    %v8225 = vpack.c.b16 %v7913, %v7909
    %v8226 = vpack.c.b16 %v7914, %v7910
    %v8227 = vpack.c.b16 %v7919, %v7915
    %v8228 = vpack.c.b16 %v7920, %v7916
    %v8229 = vpack.c.b16 %v7921, %v7917
    %v8230 = vpack.c.b16 %v7922, %v7918
    %v8231 = vpack.c.b16 %v7927, %v7923
    %v8232 = vpack.c.b16 %v7928, %v7924
    %v8233 = vpack.c.b16 %v7929, %v7925
    %v8234 = vpack.c.b16 %v7930, %v7926
    %v8235 = vpack.c.b16 %v7935, %v7931
    %v8236 = vpack.c.b16 %v7936, %v7932
    %v8237 = vpack.c.b16 %v7937, %v7933
    %v8238 = vpack.c.b16 %v7938, %v7934
    %v8239 = vpack.c.b16 %v7943, %v7939
    %v8240 = vpack.c.b16 %v7944, %v7940
    %v8241 = vpack.c.b16 %v7945, %v7941
    %v8242 = vpack.c.b16 %v7946, %v7942
    %v8243 = vpack.c.b16 %v7951, %v7947
    %v8244 = vpack.c.b16 %v7952, %v7948
    %v8245 = vpack.c.b16 %v7953, %v7949
    %v8246 = vpack.c.b16 %v7954, %v7950
    %v8247 = vpack.c.b16 %v7959, %v7955
    %v8248 = vpack.c.b16 %v7960, %v7956
    %v8249 = vpack.c.b16 %v7961, %v7957
    %v8250 = vpack.c.b16 %v7962, %v7958
    %v8251 = vpack.c.b16 %v7967, %v7963
    %v8252 = vpack.c.b16 %v7968, %v7964
    %v8253 = vpack.c.b16 %v7969, %v7965
    %v8254 = vpack.c.b16 %v7970, %v7966
    %v8255 = vpack.c.b16 %v7975, %v7971
    %v8256 = vpack.c.b16 %v7976, %v7972
    %v8257 = vpack.c.b16 %v7977, %v7973
    %v8258 = vpack.c.b16 %v7978, %v7974
    %v8259 = vpack.c.b16 %v7983, %v7979
    %v8260 = vpack.c.b16 %v7984, %v7980
    %v8261 = vpack.c.b16 %v7985, %v7981
    %v8262 = vpack.c.b16 %v7986, %v7982
    %v8263 = vpack.c.b16 %v7991, %v7987
    %v8264 = vpack.c.b16 %v7992, %v7988
    %v8265 = vpack.c.b16 %v7993, %v7989
    %v8266 = vpack.c.b16 %v7994, %v7990
    %v8267 = vpack.c.b16 %v7999, %v7995
    %v8268 = vpack.c.b16 %v8000, %v7996
    %v8269 = vpack.c.b16 %v8001, %v7997
    %v8270 = vpack.c.b16 %v8002, %v7998
    %v8271 = vpack.c.b16 %v8007, %v8003
    %v8272 = vpack.c.b16 %v8008, %v8004
    %v8273 = vpack.c.b16 %v8009, %v8005
    %v8274 = vpack.c.b16 %v8010, %v8006
    %v8275 = vpack.c.b16 %v8015, %v8011
    %v8276 = vpack.c.b16 %v8016, %v8012
    %v8277 = vpack.c.b16 %v8017, %v8013
    %v8278 = vpack.c.b16 %v8018, %v8014
    %v8279 = vpack.c.b16 %v8023, %v8019
    %v8280 = vpack.c.b16 %v8024, %v8020
    %v8281 = vpack.c.b16 %v8025, %v8021
    %v8282 = vpack.c.b16 %v8026, %v8022
    %8539 = vmatprep.subr.bf16.mxu0 %v8028
    %8540 = vmatpush1.bf16.msra.mxu0 %v8027
    %8541 = vmatprep.subr.bf16.mxu0 %v8032
    %8542 = vmatpush1.bf16.msra.mxu0 %v8031
    %8543 = vmatprep.subr.bf16.mxu0 %v8036
    %8544 = vmatpush1.bf16.msra.mxu0 %v8035
    %8545 = vmatprep.subr.bf16.mxu0 %v8040
    %8546 = vmatpush1.bf16.msra.mxu0 %v8039
    %8547 = vmatprep.subr.bf16.mxu0 %v8044
    %8548 = vmatpush1.bf16.msra.mxu0 %v8043
    %8549 = vmatprep.subr.bf16.mxu0 %v8048
    %8550 = vmatpush1.bf16.msra.mxu0 %v8047
    %8551 = vmatprep.subr.bf16.mxu0 %v8052
    %8552 = vmatpush1.bf16.msra.mxu0 %v8051
    %8553 = vmatprep.subr.bf16.mxu0 %v8056
    %8554 = vmatpush1.bf16.msra.mxu0 %v8055
    %8555 = vmatprep.subr.bf16.mxu0 %v8060
    %8556 = vmatpush1.bf16.msra.mxu0 %v8059
    %8557 = vmatprep.subr.bf16.mxu0 %v8064
    %8558 = vmatpush1.bf16.msra.mxu0 %v8063
    %8559 = vmatprep.subr.bf16.mxu0 %v8068
    %8560 = vmatpush1.bf16.msra.mxu0 %v8067
    %8561 = vmatprep.subr.bf16.mxu0 %v8072
    %8562 = vmatpush1.bf16.msra.mxu0 %v8071
    %8563 = vmatprep.subr.bf16.mxu0 %v8076
    %8564 = vmatpush1.bf16.msra.mxu0 %v8075
    %8565 = vmatprep.subr.bf16.mxu0 %v8080
    %8566 = vmatpush1.bf16.msra.mxu0 %v8079
    %8567 = vmatprep.subr.bf16.mxu0 %v8084
    %8568 = vmatpush1.bf16.msra.mxu0 %v8083
    %8569 = vmatprep.subr.bf16.mxu0 %v8088
    %8570 = vmatpush1.bf16.msra.mxu0 %v8087
    %8571 = vmatprep.mubr.bf16.mxu0 %v6974
    %8572 = vmatmul.mubr.bf16.gmra.mrb[0].mxu0 %v6973
    %v8573 = vpop.f32.mrb[0].mxu0
    %v8574 = vadd.f32 %v7242, %v8573
    %v8575 = vpop.f32.mrb[0].mxu0
    %v8576 = vadd.f32 %v7246, %v8575
    %v8577 = vpop.f32.mrb[0].mxu0
    %v8578 = vadd.f32 %v7242, %v8577
    %v8579 = vpop.f32.mrb[0].mxu0
    %v8580 = vadd.f32 %v7246, %v8579
    %8581 = vdwg.mxu0
    %8582 = vmatprep.subr.bf16.mxu0 %v8092
    %8583 = vmatpush1.bf16.msra.mxu0 %v8091
    %8584 = vmatprep.subr.bf16.mxu0 %v8096
    %8585 = vmatpush1.bf16.msra.mxu0 %v8095
    %8586 = vmatprep.subr.bf16.mxu0 %v8100
    %8587 = vmatpush1.bf16.msra.mxu0 %v8099
    %8588 = vmatprep.subr.bf16.mxu0 %v8104
    %8589 = vmatpush1.bf16.msra.mxu0 %v8103
    %8590 = vmatprep.subr.bf16.mxu0 %v8108
    %8591 = vmatpush1.bf16.msra.mxu0 %v8107
    %8592 = vmatprep.subr.bf16.mxu0 %v8112
    %8593 = vmatpush1.bf16.msra.mxu0 %v8111
    %8594 = vmatprep.subr.bf16.mxu0 %v8116
    %8595 = vmatpush1.bf16.msra.mxu0 %v8115
    %8596 = vmatprep.subr.bf16.mxu0 %v8120
    %8597 = vmatpush1.bf16.msra.mxu0 %v8119
    %8598 = vmatprep.subr.bf16.mxu0 %v8124
    %8599 = vmatpush1.bf16.msra.mxu0 %v8123
    %8600 = vmatprep.subr.bf16.mxu0 %v8128
    %8601 = vmatpush1.bf16.msra.mxu0 %v8127
    %8602 = vmatprep.subr.bf16.mxu0 %v8132
    %8603 = vmatpush1.bf16.msra.mxu0 %v8131
    %8604 = vmatprep.subr.bf16.mxu0 %v8136
    %8605 = vmatpush1.bf16.msra.mxu0 %v8135
    %8606 = vmatprep.subr.bf16.mxu0 %v8140
    %8607 = vmatpush1.bf16.msra.mxu0 %v8139
    %8608 = vmatprep.subr.bf16.mxu0 %v8144
    %8609 = vmatpush1.bf16.msra.mxu0 %v8143
    %8610 = vmatprep.subr.bf16.mxu0 %v8148
    %8611 = vmatpush1.bf16.msra.mxu0 %v8147
    %8612 = vmatprep.subr.bf16.mxu0 %v8152
    %8613 = vmatpush1.bf16.msra.mxu0 %v8151
    %8614 = vmatprep.mubr.bf16.mxu0 %v6976
    %8615 = vmatmul.mubr.bf16.gmra.mrb[0].mxu0 %v6975
    %v8616 = vpop.f32.mrb[0].mxu0
    %v8617 = vadd.f32 %v8574, %v8616
    %v8618 = vpop.f32.mrb[0].mxu0
    %v8619 = vadd.f32 %v8576, %v8618
    %v8620 = vpop.f32.mrb[0].mxu0
    %v8621 = vadd.f32 %v8578, %v8620
    %v8622 = vpop.f32.mrb[0].mxu0
    %v8623 = vadd.f32 %v8580, %v8622
    %8624 = vdwg.mxu0
    %8625 = vmatprep.subr.bf16.mxu0 %v8156
    %8626 = vmatpush1.bf16.msra.mxu0 %v8155
    %8627 = vmatprep.subr.bf16.mxu0 %v8160
    %8628 = vmatpush1.bf16.msra.mxu0 %v8159
    %8629 = vmatprep.subr.bf16.mxu0 %v8164
    %8630 = vmatpush1.bf16.msra.mxu0 %v8163
    %8631 = vmatprep.subr.bf16.mxu0 %v8168
    %8632 = vmatpush1.bf16.msra.mxu0 %v8167
    %8633 = vmatprep.subr.bf16.mxu0 %v8172
    %8634 = vmatpush1.bf16.msra.mxu0 %v8171
    %8635 = vmatprep.subr.bf16.mxu0 %v8176
    %8636 = vmatpush1.bf16.msra.mxu0 %v8175
    %8637 = vmatprep.subr.bf16.mxu0 %v8180
    %8638 = vmatpush1.bf16.msra.mxu0 %v8179
    %8639 = vmatprep.subr.bf16.mxu0 %v8184
    %8640 = vmatpush1.bf16.msra.mxu0 %v8183
    %8641 = vmatprep.subr.bf16.mxu0 %v8188
    %8642 = vmatpush1.bf16.msra.mxu0 %v8187
    %8643 = vmatprep.subr.bf16.mxu0 %v8192
    %8644 = vmatpush1.bf16.msra.mxu0 %v8191
    %8645 = vmatprep.subr.bf16.mxu0 %v8196
    %8646 = vmatpush1.bf16.msra.mxu0 %v8195
    %8647 = vmatprep.subr.bf16.mxu0 %v8200
    %8648 = vmatpush1.bf16.msra.mxu0 %v8199
    %8649 = vmatprep.subr.bf16.mxu0 %v8204
    %8650 = vmatpush1.bf16.msra.mxu0 %v8203
    %8651 = vmatprep.subr.bf16.mxu0 %v8208
    %8652 = vmatpush1.bf16.msra.mxu0 %v8207
    %8653 = vmatprep.subr.bf16.mxu0 %v8212
    %8654 = vmatpush1.bf16.msra.mxu0 %v8211
    %8655 = vmatprep.subr.bf16.mxu0 %v8216
    %8656 = vmatpush1.bf16.msra.mxu0 %v8215
    %8657 = vmatprep.mubr.bf16.mxu0 %v6978
    %8658 = vmatmul.mubr.bf16.gmra.mrb[0].mxu0 %v6977
    %v8659 = vpop.f32.mrb[0].mxu0
    %v8660 = vadd.f32 %v8617, %v8659
    %v8661 = vpop.f32.mrb[0].mxu0
    %v8662 = vadd.f32 %v8619, %v8661
    %v8663 = vpop.f32.mrb[0].mxu0
    %v8664 = vadd.f32 %v8621, %v8663
    %v8665 = vpop.f32.mrb[0].mxu0
    %v8666 = vadd.f32 %v8623, %v8665
    %8667 = vdwg.mxu0
    %8668 = vmatprep.subr.bf16.mxu0 %v8220
    %8669 = vmatpush1.bf16.msra.mxu0 %v8219
    %8670 = vmatprep.subr.bf16.mxu0 %v8224
    %8671 = vmatpush1.bf16.msra.mxu0 %v8223
    %8672 = vmatprep.subr.bf16.mxu0 %v8228
    %8673 = vmatpush1.bf16.msra.mxu0 %v8227
    %8674 = vmatprep.subr.bf16.mxu0 %v8232
    %8675 = vmatpush1.bf16.msra.mxu0 %v8231
    %8676 = vmatprep.subr.bf16.mxu0 %v8236
    %8677 = vmatpush1.bf16.msra.mxu0 %v8235
    %8678 = vmatprep.subr.bf16.mxu0 %v8240
    %8679 = vmatpush1.bf16.msra.mxu0 %v8239
    %8680 = vmatprep.subr.bf16.mxu0 %v8244
    %8681 = vmatpush1.bf16.msra.mxu0 %v8243
    %8682 = vmatprep.subr.bf16.mxu0 %v8248
    %8683 = vmatpush1.bf16.msra.mxu0 %v8247
    %8684 = vmatprep.subr.bf16.mxu0 %v8252
    %8685 = vmatpush1.bf16.msra.mxu0 %v8251
    %8686 = vmatprep.subr.bf16.mxu0 %v8256
    %8687 = vmatpush1.bf16.msra.mxu0 %v8255
    %8688 = vmatprep.subr.bf16.mxu0 %v8260
    %8689 = vmatpush1.bf16.msra.mxu0 %v8259
    %8690 = vmatprep.subr.bf16.mxu0 %v8264
    %8691 = vmatpush1.bf16.msra.mxu0 %v8263
    %8692 = vmatprep.subr.bf16.mxu0 %v8268
    %8693 = vmatpush1.bf16.msra.mxu0 %v8267
    %8694 = vmatprep.subr.bf16.mxu0 %v8272
    %8695 = vmatpush1.bf16.msra.mxu0 %v8271
    %8696 = vmatprep.subr.bf16.mxu0 %v8276
    %8697 = vmatpush1.bf16.msra.mxu0 %v8275
    %8698 = vmatprep.subr.bf16.mxu0 %v8280
    %8699 = vmatpush1.bf16.msra.mxu0 %v8279
    %8700 = vmatprep.mubr.bf16.mxu0 %v6980
    %8701 = vmatmul.mubr.bf16.gmra.mrb[0].mxu0 %v6979
    %v8702 = vpop.f32.mrb[0].mxu0
    %v8703 = vadd.f32 %v8660, %v8702
    %v8704 = vpop.f32.mrb[0].mxu0
    %v8705 = vadd.f32 %v8662, %v8704
    %v8706 = vpop.f32.mrb[0].mxu0
    %v8707 = vadd.f32 %v8664, %v8706
    %v8708 = vpop.f32.mrb[0].mxu0
    %v8709 = vadd.f32 %v8666, %v8708
    %8710 = vdwg.mxu0
    %8711 = vmatprep.subr.bf16.mxu0 %v8030
    %8712 = vmatpush1.bf16.msra.mxu0 %v8029
    %8713 = vmatprep.subr.bf16.mxu0 %v8034
    %8714 = vmatpush1.bf16.msra.mxu0 %v8033
    %8715 = vmatprep.subr.bf16.mxu0 %v8038
    %8716 = vmatpush1.bf16.msra.mxu0 %v8037
    %8717 = vmatprep.subr.bf16.mxu0 %v8042
    %8718 = vmatpush1.bf16.msra.mxu0 %v8041
    %8719 = vmatprep.subr.bf16.mxu0 %v8046
    %8720 = vmatpush1.bf16.msra.mxu0 %v8045
    %8721 = vmatprep.subr.bf16.mxu0 %v8050
    %8722 = vmatpush1.bf16.msra.mxu0 %v8049
    %8723 = vmatprep.subr.bf16.mxu0 %v8054
    %8724 = vmatpush1.bf16.msra.mxu0 %v8053
    %8725 = vmatprep.subr.bf16.mxu0 %v8058
    %8726 = vmatpush1.bf16.msra.mxu0 %v8057
    %8727 = vmatprep.subr.bf16.mxu0 %v8062
    %8728 = vmatpush1.bf16.msra.mxu0 %v8061
    %8729 = vmatprep.subr.bf16.mxu0 %v8066
    %8730 = vmatpush1.bf16.msra.mxu0 %v8065
    %8731 = vmatprep.subr.bf16.mxu0 %v8070
    %8732 = vmatpush1.bf16.msra.mxu0 %v8069
    %8733 = vmatprep.subr.bf16.mxu0 %v8074
    %8734 = vmatpush1.bf16.msra.mxu0 %v8073
    %8735 = vmatprep.subr.bf16.mxu0 %v8078
    %8736 = vmatpush1.bf16.msra.mxu0 %v8077
    %8737 = vmatprep.subr.bf16.mxu0 %v8082
    %8738 = vmatpush1.bf16.msra.mxu0 %v8081
    %8739 = vmatprep.subr.bf16.mxu0 %v8086
    %8740 = vmatpush1.bf16.msra.mxu0 %v8085
    %8741 = vmatprep.subr.bf16.mxu0 %v8090
    %8742 = vmatpush1.bf16.msra.mxu0 %v8089
    %8743 = vmatprep.mubr.bf16.mxu0 %v6974
    %8744 = vmatmul.mubr.bf16.gmra.mrb[0].mxu0 %v6973
    %v8745 = vpop.f32.mrb[0].mxu0
    %v8746 = vadd.f32 %v7250, %v8745
    %v8747 = vpop.f32.mrb[0].mxu0
    %v8748 = vadd.f32 %v7254, %v8747
    %v8749 = vpop.f32.mrb[0].mxu0
    %v8750 = vadd.f32 %v7250, %v8749
    %v8751 = vpop.f32.mrb[0].mxu0
    %v8752 = vadd.f32 %v7254, %v8751
    %8753 = vdwg.mxu0
    %8754 = vmatprep.subr.bf16.mxu0 %v8094
    %8755 = vmatpush1.bf16.msra.mxu0 %v8093
    %8756 = vmatprep.subr.bf16.mxu0 %v8098
    %8757 = vmatpush1.bf16.msra.mxu0 %v8097
    %8758 = vmatprep.subr.bf16.mxu0 %v8102
    %8759 = vmatpush1.bf16.msra.mxu0 %v8101
    %8760 = vmatprep.subr.bf16.mxu0 %v8106
    %8761 = vmatpush1.bf16.msra.mxu0 %v8105
    %8762 = vmatprep.subr.bf16.mxu0 %v8110
    %8763 = vmatpush1.bf16.msra.mxu0 %v8109
    %8764 = vmatprep.subr.bf16.mxu0 %v8114
    %8765 = vmatpush1.bf16.msra.mxu0 %v8113
    %8766 = vmatprep.subr.bf16.mxu0 %v8118
    %8767 = vmatpush1.bf16.msra.mxu0 %v8117
    %8768 = vmatprep.subr.bf16.mxu0 %v8122
    %8769 = vmatpush1.bf16.msra.mxu0 %v8121
    %8770 = vmatprep.subr.bf16.mxu0 %v8126
    %8771 = vmatpush1.bf16.msra.mxu0 %v8125
    %8772 = vmatprep.subr.bf16.mxu0 %v8130
    %8773 = vmatpush1.bf16.msra.mxu0 %v8129
    %8774 = vmatprep.subr.bf16.mxu0 %v8134
    %8775 = vmatpush1.bf16.msra.mxu0 %v8133
    %8776 = vmatprep.subr.bf16.mxu0 %v8138
    %8777 = vmatpush1.bf16.msra.mxu0 %v8137
    %8778 = vmatprep.subr.bf16.mxu0 %v8142
    %8779 = vmatpush1.bf16.msra.mxu0 %v8141
    %8780 = vmatprep.subr.bf16.mxu0 %v8146
    %8781 = vmatpush1.bf16.msra.mxu0 %v8145
    %8782 = vmatprep.subr.bf16.mxu0 %v8150
    %8783 = vmatpush1.bf16.msra.mxu0 %v8149
    %8784 = vmatprep.subr.bf16.mxu0 %v8154
    %8785 = vmatpush1.bf16.msra.mxu0 %v8153
    %8786 = vmatprep.mubr.bf16.mxu0 %v6976
    %8787 = vmatmul.mubr.bf16.gmra.mrb[0].mxu0 %v6975
    %v8788 = vpop.f32.mrb[0].mxu0
    %v8789 = vadd.f32 %v8746, %v8788
    %v8790 = vpop.f32.mrb[0].mxu0
    %v8791 = vadd.f32 %v8748, %v8790
    %v8792 = vpop.f32.mrb[0].mxu0
    %v8793 = vadd.f32 %v8750, %v8792
    %v8794 = vpop.f32.mrb[0].mxu0
    %v8795 = vadd.f32 %v8752, %v8794
    %8796 = vdwg.mxu0
    %8797 = vmatprep.subr.bf16.mxu0 %v8158
    %8798 = vmatpush1.bf16.msra.mxu0 %v8157
    %8799 = vmatprep.subr.bf16.mxu0 %v8162
    %8800 = vmatpush1.bf16.msra.mxu0 %v8161
    %8801 = vmatprep.subr.bf16.mxu0 %v8166
    %8802 = vmatpush1.bf16.msra.mxu0 %v8165
    %8803 = vmatprep.subr.bf16.mxu0 %v8170
    %8804 = vmatpush1.bf16.msra.mxu0 %v8169
    %8805 = vmatprep.subr.bf16.mxu0 %v8174
    %8806 = vmatpush1.bf16.msra.mxu0 %v8173
    %8807 = vmatprep.subr.bf16.mxu0 %v8178
    %8808 = vmatpush1.bf16.msra.mxu0 %v8177
    %8809 = vmatprep.subr.bf16.mxu0 %v8182
    %8810 = vmatpush1.bf16.msra.mxu0 %v8181
    %8811 = vmatprep.subr.bf16.mxu0 %v8186
    %8812 = vmatpush1.bf16.msra.mxu0 %v8185
    %8813 = vmatprep.subr.bf16.mxu0 %v8190
    %8814 = vmatpush1.bf16.msra.mxu0 %v8189
    %8815 = vmatprep.subr.bf16.mxu0 %v8194
    %8816 = vmatpush1.bf16.msra.mxu0 %v8193
    %8817 = vmatprep.subr.bf16.mxu0 %v8198
    %8818 = vmatpush1.bf16.msra.mxu0 %v8197
    %8819 = vmatprep.subr.bf16.mxu0 %v8202
    %8820 = vmatpush1.bf16.msra.mxu0 %v8201
    %8821 = vmatprep.subr.bf16.mxu0 %v8206
    %8822 = vmatpush1.bf16.msra.mxu0 %v8205
    %8823 = vmatprep.subr.bf16.mxu0 %v8210
    %8824 = vmatpush1.bf16.msra.mxu0 %v8209
    %8825 = vmatprep.subr.bf16.mxu0 %v8214
    %8826 = vmatpush1.bf16.msra.mxu0 %v8213
    %8827 = vmatprep.subr.bf16.mxu0 %v8218
    %8828 = vmatpush1.bf16.msra.mxu0 %v8217
    %8829 = vmatprep.mubr.bf16.mxu0 %v6978
    %8830 = vmatmul.mubr.bf16.gmra.mrb[0].mxu0 %v6977
    %v8831 = vpop.f32.mrb[0].mxu0
    %v8832 = vadd.f32 %v8789, %v8831
    %v8833 = vpop.f32.mrb[0].mxu0
    %v8834 = vadd.f32 %v8791, %v8833
    %v8835 = vpop.f32.mrb[0].mxu0
    %v8836 = vadd.f32 %v8793, %v8835
    %v8837 = vpop.f32.mrb[0].mxu0
    %v8838 = vadd.f32 %v8795, %v8837
    %8839 = vdwg.mxu0
    %8840 = vmatprep.subr.bf16.mxu0 %v8222
    %8841 = vmatpush1.bf16.msra.mxu0 %v8221
    %8842 = vmatprep.subr.bf16.mxu0 %v8226
    %8843 = vmatpush1.bf16.msra.mxu0 %v8225
    %8844 = vmatprep.subr.bf16.mxu0 %v8230
    %8845 = vmatpush1.bf16.msra.mxu0 %v8229
    %8846 = vmatprep.subr.bf16.mxu0 %v8234
    %8847 = vmatpush1.bf16.msra.mxu0 %v8233
    %8848 = vmatprep.subr.bf16.mxu0 %v8238
    %8849 = vmatpush1.bf16.msra.mxu0 %v8237
    %8850 = vmatprep.subr.bf16.mxu0 %v8242
    %8851 = vmatpush1.bf16.msra.mxu0 %v8241
    %8852 = vmatprep.subr.bf16.mxu0 %v8246
    %8853 = vmatpush1.bf16.msra.mxu0 %v8245
    %8854 = vmatprep.subr.bf16.mxu0 %v8250
    %8855 = vmatpush1.bf16.msra.mxu0 %v8249
    %8856 = vmatprep.subr.bf16.mxu0 %v8254
    %8857 = vmatpush1.bf16.msra.mxu0 %v8253
    %8858 = vmatprep.subr.bf16.mxu0 %v8258
    %8859 = vmatpush1.bf16.msra.mxu0 %v8257
    %8860 = vmatprep.subr.bf16.mxu0 %v8262
    %8861 = vmatpush1.bf16.msra.mxu0 %v8261
    %8862 = vmatprep.subr.bf16.mxu0 %v8266
    %8863 = vmatpush1.bf16.msra.mxu0 %v8265
    %8864 = vmatprep.subr.bf16.mxu0 %v8270
    %8865 = vmatpush1.bf16.msra.mxu0 %v8269
    %8866 = vmatprep.subr.bf16.mxu0 %v8274
    %8867 = vmatpush1.bf16.msra.mxu0 %v8273
    %8868 = vmatprep.subr.bf16.mxu0 %v8278
    %8869 = vmatpush1.bf16.msra.mxu0 %v8277
    %8870 = vmatprep.subr.bf16.mxu0 %v8282
    %8871 = vmatpush1.bf16.msra.mxu0 %v8281
    %8872 = vmatprep.mubr.bf16.mxu0 %v6980
    %8873 = vmatmul.mubr.bf16.gmra.mrb[0].mxu0 %v6979
    %v8874 = vpop.f32.mrb[0].mxu0
    %v8875 = vadd.f32 %v8832, %v8874
    %v8876 = vpop.f32.mrb[0].mxu0
    %v8877 = vadd.f32 %v8834, %v8876
    %v8878 = vpop.f32.mrb[0].mxu0
    %v8879 = vadd.f32 %v8836, %v8878
    %v8880 = vpop.f32.mrb[0].mxu0
    %v8881 = vadd.f32 %v8838, %v8880
    %8882 = vdwg.mxu0
    %v8883 = vmax.f32 %v8703, 0.0
    %v8884 = vmax.f32 %v8705, 0.0
    %v8885 = vmax.f32 %v8875, 0.0
    %v8886 = vmax.f32 %v8877, 0.0
    %v8887 = vmax.f32 %v8707, 0.0
    %v8888 = vmax.f32 %v8709, 0.0
    %v8889 = vmax.f32 %v8879, 0.0
    %v8890 = vmax.f32 %v8881, 0.0
    %v8891 = vpack.c.bf16 %v8887, %v8883
    %v8892 = vpack.c.bf16 %v8888, %v8884
    %v8893 = vpack.c.bf16 %v8889, %v8885
    %v8894 = vpack.c.bf16 %v8890, %v8886
    %v8899 = vunpack.c.l.b16 %v8891
    %v8900 = vunpack.c.l.b16 %v8892
    %v8901 = vunpack.c.l.b16 %v8893
    %v8902 = vunpack.c.l.b16 %v8894
    %v8903 = vunpack.c.h.b16 %v8891
    %v8904 = vunpack.c.h.b16 %v8892
    %v8905 = vunpack.c.h.b16 %v8893
    %v8906 = vunpack.c.h.b16 %v8894
    %v8907 = vpack.c.b16 %v8900, %v8899
    %v8908 = vpack.c.b16 %v8902, %v8901
    %v8909 = vpack.c.b16 %v8904, %v8903
    %v8910 = vpack.c.b16 %v8906, %v8905
    %v8911 = vrot.slane %v8907, 7
    %v8912 = vrot.slane %v8908, 7
    %v8913 = vrot.slane %v8911, 4
    %v8914 = vrot.slane %v8909, 7
    %v8915 = vsel %vm4513, %v8913, %v8914
    %v8916 = vrot.slane %v8912, 4
    %v8917 = vrot.slane %v8910, 7
    %v8918 = vsel %vm4513, %v8916, %v8917
    %v8919 = vrot.slane %v8914, 4
    %v8920 = vrot.slane %v8917, 4
    %s8927 = scalar_lea.vmem [#allocation2], 48
    %8928 = vst [vmem:[%s8927] sm:$0xee] %v8911
    %8929 = vst [vmem:[%s8927 + $0x8] sm:$0xee] %v8912
    %8930 = vst [vmem:[%s8927 + $0x10] sm:$0xff] %v8915
    %8931 = vst [vmem:[%s8927 + $0x18] sm:$0xff] %v8918
    %8932 = vst [vmem:[%s8927 + $0x20] sm:$0x11] %v8919
    %8933 = vst [vmem:[%s8927 + $0x28] sm:$0x11] %v8920
    %v8934 = vld [vmem:[#allocation2] sm:$0xff]
    %v8935 = vld [vmem:[#allocation2 + $0x8] sm:$0xff]
    %v8936 = vld [vmem:[#allocation2 + $0x10] sm:$0xff]
    %v8937 = vld [vmem:[#allocation2 + $0x18] sm:$0xff]
    %v8938 = vld [vmem:[#allocation2 + $0x30] sm:$0xff]
    %v8939 = vld [vmem:[#allocation2 + $0x38] sm:$0xff]
    %v8940 = vld [vmem:[#allocation2 + $0x40] sm:$0xff]
    %v8941 = vld [vmem:[#allocation2 + $0x48] sm:$0xff]
    %v8942 = vld [vmem:[#allocation2 + $0x20] sm:$0x11]
    %v8943 = vld [vmem:[#allocation2 + $0x28] sm:$0x11]
    %v8944 = vld [vmem:[#allocation2 + $0x50] sm:$0x11]
    %v8945 = vld [vmem:[#allocation2 + $0x58] sm:$0x11]
    %v8946 = vld [vmem:[#allocation2] sm:$0xee]
    %v8947 = vld [vmem:[#allocation2 + $0x8] sm:$0xee]
    %v8948 = vld [vmem:[#allocation2 + $0x30] sm:$0xee]
    %v8949 = vld [vmem:[#allocation2 + $0x38] sm:$0xee]
    %v8950 = vld [vmem:[#allocation2 + $0x20] sm:$0x33]
    %v8951 = vld [vmem:[#allocation2 + $0x28] sm:$0x33]
    %v8952 = vld [vmem:[#allocation2 + $0x50] sm:$0x33]
    %v8953 = vld [vmem:[#allocation2 + $0x58] sm:$0x33]
    %v8954 = vld [vmem:[#allocation2] sm:$0xcc]
    %v8955 = vld [vmem:[#allocation2 + $0x8] sm:$0xcc]
    %v8956 = vld [vmem:[#allocation2 + $0x30] sm:$0xcc]
    %v8957 = vld [vmem:[#allocation2 + $0x38] sm:$0xcc]
    %v8966 = vunpack.c.l.b16 %v8934
    %v8967 = vunpack.c.h.b16 %v8934
    %v8968 = vunpack.c.l.b16 %v8935
    %v8969 = vunpack.c.h.b16 %v8935
    %v8970 = vunpack.c.l.b16 %v8936
    %v8971 = vunpack.c.h.b16 %v8936
    %v8972 = vunpack.c.l.b16 %v8937
    %v8973 = vunpack.c.h.b16 %v8937
    %v8974 = vunpack.c.l.b16 %v8938
    %v8975 = vunpack.c.h.b16 %v8938
    %v8976 = vunpack.c.l.b16 %v8939
    %v8977 = vunpack.c.h.b16 %v8939
    %v8978 = vunpack.c.l.b16 %v8940
    %v8979 = vunpack.c.h.b16 %v8940
    %v8980 = vunpack.c.l.b16 %v8941
    %v8981 = vunpack.c.h.b16 %v8941
    %v8982 = vpack.c.b16 %v8970, %v8966
    %v8983 = vpack.c.b16 %v8971, %v8967
    %v8984 = vpack.c.b16 %v8972, %v8968
    %v8985 = vpack.c.b16 %v8973, %v8969
    %v8986 = vpack.c.b16 %v8978, %v8974
    %v8987 = vpack.c.b16 %v8979, %v8975
    %v8988 = vpack.c.b16 %v8980, %v8976
    %v8989 = vpack.c.b16 %v8981, %v8977
    %v9002 = vunpack.c.l.b16 %v8942
    %v9003 = vunpack.c.h.b16 %v8942
    %v9004 = vunpack.c.l.b16 %v8943
    %v9005 = vunpack.c.h.b16 %v8943
    %v9006 = vunpack.c.l.b16 %v8944
    %v9007 = vunpack.c.h.b16 %v8944
    %v9008 = vunpack.c.l.b16 %v8945
    %v9009 = vunpack.c.h.b16 %v8945
    %v9010 = vpack.c.b16 %v9002, %v9002
    %v9011 = vpack.c.b16 %v9003, %v9003
    %v9012 = vpack.c.b16 %v9004, %v9004
    %v9013 = vpack.c.b16 %v9005, %v9005
    %v9014 = vpack.c.b16 %v9006, %v9006
    %v9015 = vpack.c.b16 %v9007, %v9007
    %v9016 = vpack.c.b16 %v9008, %v9008
    %v9017 = vpack.c.b16 %v9009, %v9009
    %v9019 = vshrl.u32 %v8982, 16
    %v9021 = vshll.u32 %v8982, 16
    %v9023 = vrot.slane %v9021, 1
    %v9024 = vor.u32 %v9019, %v9023
    %v9026 = vshll.u32 %v9010, 16
    %v9028 = vrot.slane %v9026, 1
    %v9029 = vsel %vm146, %v9024, %v9028
    %v9031 = vshrl.u32 %v8983, 16
    %v9033 = vshll.u32 %v8983, 16
    %v9035 = vrot.slane %v9033, 1
    %v9036 = vor.u32 %v9031, %v9035
    %v9038 = vshll.u32 %v9011, 16
    %v9040 = vrot.slane %v9038, 1
    %v9041 = vsel %vm146, %v9036, %v9040
    %v9043 = vshrl.u32 %v8984, 16
    %v9045 = vshll.u32 %v8984, 16
    %v9047 = vrot.slane %v9045, 1
    %v9048 = vor.u32 %v9043, %v9047
    %v9050 = vshll.u32 %v9012, 16
    %v9052 = vrot.slane %v9050, 1
    %v9053 = vsel %vm146, %v9048, %v9052
    %v9055 = vshrl.u32 %v8985, 16
    %v9057 = vshll.u32 %v8985, 16
    %v9059 = vrot.slane %v9057, 1
    %v9060 = vor.u32 %v9055, %v9059
    %v9062 = vshll.u32 %v9013, 16
    %v9064 = vrot.slane %v9062, 1
    %v9065 = vsel %vm146, %v9060, %v9064
    %v9067 = vshrl.u32 %v8986, 16
    %v9069 = vshll.u32 %v8986, 16
    %v9071 = vrot.slane %v9069, 1
    %v9072 = vor.u32 %v9067, %v9071
    %v9074 = vshll.u32 %v9014, 16
    %v9076 = vrot.slane %v9074, 1
    %v9077 = vsel %vm146, %v9072, %v9076
    %v9079 = vshrl.u32 %v8987, 16
    %v9081 = vshll.u32 %v8987, 16
    %v9083 = vrot.slane %v9081, 1
    %v9084 = vor.u32 %v9079, %v9083
    %v9086 = vshll.u32 %v9015, 16
    %v9088 = vrot.slane %v9086, 1
    %v9089 = vsel %vm146, %v9084, %v9088
    %v9091 = vshrl.u32 %v8988, 16
    %v9093 = vshll.u32 %v8988, 16
    %v9095 = vrot.slane %v9093, 1
    %v9096 = vor.u32 %v9091, %v9095
    %v9098 = vshll.u32 %v9016, 16
    %v9100 = vrot.slane %v9098, 1
    %v9101 = vsel %vm146, %v9096, %v9100
    %v9103 = vshrl.u32 %v8989, 16
    %v9105 = vshll.u32 %v8989, 16
    %v9107 = vrot.slane %v9105, 1
    %v9108 = vor.u32 %v9103, %v9107
    %v9110 = vshll.u32 %v9017, 16
    %v9112 = vrot.slane %v9110, 1
    %v9113 = vsel %vm146, %v9108, %v9112
    %v9126 = vunpack.c.l.b16 %v8946
    %v9127 = vunpack.c.h.b16 %v8946
    %v9128 = vunpack.c.l.b16 %v8947
    %v9129 = vunpack.c.h.b16 %v8947
    %v9130 = vunpack.c.l.b16 %v8948
    %v9131 = vunpack.c.h.b16 %v8948
    %v9132 = vunpack.c.l.b16 %v8949
    %v9133 = vunpack.c.h.b16 %v8949
    %v9134 = vpack.c.b16 %v8970, %v9126
    %v9135 = vpack.c.b16 %v8971, %v9127
    %v9136 = vpack.c.b16 %v8972, %v9128
    %v9137 = vpack.c.b16 %v8973, %v9129
    %v9138 = vpack.c.b16 %v8978, %v9130
    %v9139 = vpack.c.b16 %v8979, %v9131
    %v9140 = vpack.c.b16 %v8980, %v9132
    %v9141 = vpack.c.b16 %v8981, %v9133
    %v9142 = vrot.slane %v9134, 1
    %v9143 = vrot.slane %v9010, 1
    %v9144 = vsel %vm164, %v9142, %v9143
    %v9145 = vrot.slane %v9135, 1
    %v9146 = vrot.slane %v9011, 1
    %v9147 = vsel %vm164, %v9145, %v9146
    %v9148 = vrot.slane %v9136, 1
    %v9149 = vrot.slane %v9012, 1
    %v9150 = vsel %vm164, %v9148, %v9149
    %v9151 = vrot.slane %v9137, 1
    %v9152 = vrot.slane %v9013, 1
    %v9153 = vsel %vm164, %v9151, %v9152
    %v9154 = vrot.slane %v9138, 1
    %v9155 = vrot.slane %v9014, 1
    %v9156 = vsel %vm164, %v9154, %v9155
    %v9157 = vrot.slane %v9139, 1
    %v9158 = vrot.slane %v9015, 1
    %v9159 = vsel %vm164, %v9157, %v9158
    %v9160 = vrot.slane %v9140, 1
    %v9161 = vrot.slane %v9016, 1
    %v9162 = vsel %vm164, %v9160, %v9161
    %v9163 = vrot.slane %v9141, 1
    %v9164 = vrot.slane %v9017, 1
    %v9165 = vsel %vm164, %v9163, %v9164
    %v9178 = vunpack.c.l.b16 %v8950
    %v9179 = vunpack.c.h.b16 %v8950
    %v9180 = vunpack.c.l.b16 %v8951
    %v9181 = vunpack.c.h.b16 %v8951
    %v9182 = vunpack.c.l.b16 %v8952
    %v9183 = vunpack.c.h.b16 %v8952
    %v9184 = vunpack.c.l.b16 %v8953
    %v9185 = vunpack.c.h.b16 %v8953
    %v9186 = vpack.c.b16 %v9178, %v9178
    %v9187 = vpack.c.b16 %v9179, %v9179
    %v9188 = vpack.c.b16 %v9180, %v9180
    %v9189 = vpack.c.b16 %v9181, %v9181
    %v9190 = vpack.c.b16 %v9182, %v9182
    %v9191 = vpack.c.b16 %v9183, %v9183
    %v9192 = vpack.c.b16 %v9184, %v9184
    %v9193 = vpack.c.b16 %v9185, %v9185
    %v9195 = vshrl.u32 %v9134, 16
    %v9197 = vrot.slane %v9195, 1
    %v9198 = vshll.u32 %v9134, 16
    %v9200 = vrot.slane %v9198, 2
    %v9201 = vor.u32 %v9197, %v9200
    %v9203 = vshrl.u32 %v9186, 16
    %v9205 = vrot.slane %v9203, 1
    %v9206 = vshll.u32 %v9186, 16
    %v9208 = vrot.slane %v9206, 2
    %v9209 = vor.u32 %v9205, %v9208
    %v9210 = vsel %vm171, %v9201, %v9209
    %v9212 = vshrl.u32 %v9135, 16
    %v9214 = vrot.slane %v9212, 1
    %v9215 = vshll.u32 %v9135, 16
    %v9217 = vrot.slane %v9215, 2
    %v9218 = vor.u32 %v9214, %v9217
    %v9220 = vshrl.u32 %v9187, 16
    %v9222 = vrot.slane %v9220, 1
    %v9223 = vshll.u32 %v9187, 16
    %v9225 = vrot.slane %v9223, 2
    %v9226 = vor.u32 %v9222, %v9225
    %v9227 = vsel %vm171, %v9218, %v9226
    %v9229 = vshrl.u32 %v9136, 16
    %v9231 = vrot.slane %v9229, 1
    %v9232 = vshll.u32 %v9136, 16
    %v9234 = vrot.slane %v9232, 2
    %v9235 = vor.u32 %v9231, %v9234
    %v9237 = vshrl.u32 %v9188, 16
    %v9239 = vrot.slane %v9237, 1
    %v9240 = vshll.u32 %v9188, 16
    %v9242 = vrot.slane %v9240, 2
    %v9243 = vor.u32 %v9239, %v9242
    %v9244 = vsel %vm171, %v9235, %v9243
    %v9246 = vshrl.u32 %v9137, 16
    %v9248 = vrot.slane %v9246, 1
    %v9249 = vshll.u32 %v9137, 16
    %v9251 = vrot.slane %v9249, 2
    %v9252 = vor.u32 %v9248, %v9251
    %v9254 = vshrl.u32 %v9189, 16
    %v9256 = vrot.slane %v9254, 1
    %v9257 = vshll.u32 %v9189, 16
    %v9259 = vrot.slane %v9257, 2
    %v9260 = vor.u32 %v9256, %v9259
    %v9261 = vsel %vm171, %v9252, %v9260
    %v9263 = vshrl.u32 %v9138, 16
    %v9265 = vrot.slane %v9263, 1
    %v9266 = vshll.u32 %v9138, 16
    %v9268 = vrot.slane %v9266, 2
    %v9269 = vor.u32 %v9265, %v9268
    %v9271 = vshrl.u32 %v9190, 16
    %v9273 = vrot.slane %v9271, 1
    %v9274 = vshll.u32 %v9190, 16
    %v9276 = vrot.slane %v9274, 2
    %v9277 = vor.u32 %v9273, %v9276
    %v9278 = vsel %vm171, %v9269, %v9277
    %v9280 = vshrl.u32 %v9139, 16
    %v9282 = vrot.slane %v9280, 1
    %v9283 = vshll.u32 %v9139, 16
    %v9285 = vrot.slane %v9283, 2
    %v9286 = vor.u32 %v9282, %v9285
    %v9288 = vshrl.u32 %v9191, 16
    %v9290 = vrot.slane %v9288, 1
    %v9291 = vshll.u32 %v9191, 16
    %v9293 = vrot.slane %v9291, 2
    %v9294 = vor.u32 %v9290, %v9293
    %v9295 = vsel %vm171, %v9286, %v9294
    %v9297 = vshrl.u32 %v9140, 16
    %v9299 = vrot.slane %v9297, 1
    %v9300 = vshll.u32 %v9140, 16
    %v9302 = vrot.slane %v9300, 2
    %v9303 = vor.u32 %v9299, %v9302
    %v9305 = vshrl.u32 %v9192, 16
    %v9307 = vrot.slane %v9305, 1
    %v9308 = vshll.u32 %v9192, 16
    %v9310 = vrot.slane %v9308, 2
    %v9311 = vor.u32 %v9307, %v9310
    %v9312 = vsel %vm171, %v9303, %v9311
    %v9314 = vshrl.u32 %v9141, 16
    %v9316 = vrot.slane %v9314, 1
    %v9317 = vshll.u32 %v9141, 16
    %v9319 = vrot.slane %v9317, 2
    %v9320 = vor.u32 %v9316, %v9319
    %v9322 = vshrl.u32 %v9193, 16
    %v9324 = vrot.slane %v9322, 1
    %v9325 = vshll.u32 %v9193, 16
    %v9327 = vrot.slane %v9325, 2
    %v9328 = vor.u32 %v9324, %v9327
    %v9329 = vsel %vm171, %v9320, %v9328
    %v9342 = vunpack.c.l.b16 %v8954
    %v9343 = vunpack.c.h.b16 %v8954
    %v9344 = vunpack.c.l.b16 %v8955
    %v9345 = vunpack.c.h.b16 %v8955
    %v9346 = vunpack.c.l.b16 %v8956
    %v9347 = vunpack.c.h.b16 %v8956
    %v9348 = vunpack.c.l.b16 %v8957
    %v9349 = vunpack.c.h.b16 %v8957
    %v9350 = vpack.c.b16 %v8970, %v9342
    %v9351 = vpack.c.b16 %v8971, %v9343
    %v9352 = vpack.c.b16 %v8972, %v9344
    %v9353 = vpack.c.b16 %v8973, %v9345
    %v9354 = vpack.c.b16 %v8978, %v9346
    %v9355 = vpack.c.b16 %v8979, %v9347
    %v9356 = vpack.c.b16 %v8980, %v9348
    %v9357 = vpack.c.b16 %v8981, %v9349
    %v9358 = vrot.slane %v9350, 2
    %v9359 = vrot.slane %v9186, 2
    %v9360 = vsel %vm194, %v9358, %v9359
    %v9361 = vrot.slane %v9351, 2
    %v9362 = vrot.slane %v9187, 2
    %v9363 = vsel %vm194, %v9361, %v9362
    %v9364 = vrot.slane %v9352, 2
    %v9365 = vrot.slane %v9188, 2
    %v9366 = vsel %vm194, %v9364, %v9365
    %v9367 = vrot.slane %v9353, 2
    %v9368 = vrot.slane %v9189, 2
    %v9369 = vsel %vm194, %v9367, %v9368
    %v9370 = vrot.slane %v9354, 2
    %v9371 = vrot.slane %v9190, 2
    %v9372 = vsel %vm194, %v9370, %v9371
    %v9373 = vrot.slane %v9355, 2
    %v9374 = vrot.slane %v9191, 2
    %v9375 = vsel %vm194, %v9373, %v9374
    %v9376 = vrot.slane %v9356, 2
    %v9377 = vrot.slane %v9192, 2
    %v9378 = vsel %vm194, %v9376, %v9377
    %v9379 = vrot.slane %v9357, 2
    %v9380 = vrot.slane %v9193, 2
    %v9381 = vsel %vm194, %v9379, %v9380
    %v9390 = vld [vmem:[#allocation12] sm:$0xf]
    %v9391 = vld [vmem:[#allocation12 + $0x4] sm:$0xf]
    %v9392 = vld [vmem:[#allocation12 + $0x8] sm:$0xf]
    %v9393 = vld [vmem:[#allocation12 + $0xc] sm:$0xf]
    %v9394 = vld [vmem:[#allocation12 + $0x10] sm:$0xf]
    %v9395 = vld [vmem:[#allocation12 + $0x14] sm:$0xf]
    %v9396 = vld [vmem:[#allocation12 + $0x18] sm:$0xf]
    %v9397 = vld [vmem:[#allocation12 + $0x1c] sm:$0xf]
    %v9398 = vld [vmem:[#allocation12 + $0x20] sm:$0xf]
    %v9399 = vld [vmem:[#allocation12 + $0x24] sm:$0xf]
    %v9400 = vld [vmem:[#allocation12 + $0x28] sm:$0xf]
    %v9401 = vld [vmem:[#allocation12 + $0x2c] sm:$0xf]
    %v9402 = vld [vmem:[#allocation12 + $0x30] sm:$0xf]
    %v9403 = vld [vmem:[#allocation12 + $0x34] sm:$0xf]
    %v9404 = vld [vmem:[#allocation12 + $0x38] sm:$0xf]
    %v9405 = vld [vmem:[#allocation12 + $0x3c] sm:$0xf]
    %v9406 = vld [vmem:[#allocation12 + $0x40] sm:$0xf]
    %v9407 = vld [vmem:[#allocation12 + $0x44] sm:$0xf]
    %v9408 = vld [vmem:[#allocation12 + $0x48] sm:$0xf]
    %v9409 = vld [vmem:[#allocation12 + $0x4c] sm:$0xf]
    %v9410 = vld [vmem:[#allocation12 + $0x50] sm:$0xf]
    %v9411 = vld [vmem:[#allocation12 + $0x54] sm:$0xf]
    %v9412 = vld [vmem:[#allocation12 + $0x58] sm:$0xf]
    %v9413 = vld [vmem:[#allocation12 + $0x5c] sm:$0xf]
    %v9414 = vld [vmem:[#allocation12 + $0x60] sm:$0xf]
    %v9415 = vld [vmem:[#allocation12 + $0x64] sm:$0xf]
    %v9416 = vld [vmem:[#allocation12 + $0x68] sm:$0xf]
    %v9417 = vld [vmem:[#allocation12 + $0x6c] sm:$0xf]
    %v9418 = vld [vmem:[#allocation12 + $0x70] sm:$0xf]
    %v9419 = vld [vmem:[#allocation12 + $0x74] sm:$0xf]
    %v9420 = vld [vmem:[#allocation12 + $0x78] sm:$0xf]
    %v9421 = vld [vmem:[#allocation12 + $0x7c] sm:$0xf]
    %v9422 = vld [vmem:[#allocation12 + $0x80] sm:$0xf]
    %v9423 = vld [vmem:[#allocation12 + $0x84] sm:$0xf]
    %v9424 = vld [vmem:[#allocation12 + $0x88] sm:$0xf]
    %v9425 = vld [vmem:[#allocation12 + $0x8c] sm:$0xf]
    %v9426 = vld [vmem:[#allocation12 + $0x90] sm:$0xf]
    %v9427 = vld [vmem:[#allocation12 + $0x94] sm:$0xf]
    %v9428 = vld [vmem:[#allocation12 + $0x98] sm:$0xf]
    %v9429 = vld [vmem:[#allocation12 + $0x9c] sm:$0xf]
    %v9430 = vld [vmem:[#allocation12 + $0xa0] sm:$0xf]
    %v9431 = vld [vmem:[#allocation12 + $0xa4] sm:$0xf]
    %v9432 = vld [vmem:[#allocation12 + $0xa8] sm:$0xf]
    %v9433 = vld [vmem:[#allocation12 + $0xac] sm:$0xf]
    %v9434 = vld [vmem:[#allocation12 + $0xb0] sm:$0xf]
    %v9435 = vld [vmem:[#allocation12 + $0xb4] sm:$0xf]
    %v9436 = vld [vmem:[#allocation12 + $0xb8] sm:$0xf]
    %v9437 = vld [vmem:[#allocation12 + $0xbc] sm:$0xf]
    %v9438 = vld [vmem:[#allocation12 + $0xc0] sm:$0xf]
    %v9439 = vld [vmem:[#allocation12 + $0xc4] sm:$0xf]
    %v9440 = vld [vmem:[#allocation12 + $0xc8] sm:$0xf]
    %v9441 = vld [vmem:[#allocation12 + $0xcc] sm:$0xf]
    %v9442 = vld [vmem:[#allocation12 + $0xd0] sm:$0xf]
    %v9443 = vld [vmem:[#allocation12 + $0xd4] sm:$0xf]
    %v9444 = vld [vmem:[#allocation12 + $0xd8] sm:$0xf]
    %v9445 = vld [vmem:[#allocation12 + $0xdc] sm:$0xf]
    %v9446 = vld [vmem:[#allocation12 + $0xe0] sm:$0xf]
    %v9447 = vld [vmem:[#allocation12 + $0xe4] sm:$0xf]
    %v9448 = vld [vmem:[#allocation12 + $0xe8] sm:$0xf]
    %v9449 = vld [vmem:[#allocation12 + $0xec] sm:$0xf]
    %v9450 = vld [vmem:[#allocation12 + $0xf0] sm:$0xf]
    %v9451 = vld [vmem:[#allocation12 + $0xf4] sm:$0xf]
    %v9452 = vld [vmem:[#allocation12 + $0xf8] sm:$0xf]
    %v9453 = vld [vmem:[#allocation12 + $0xfc] sm:$0xf]
    %v9454 = vld [vmem:[#allocation12 + $0x100] sm:$0xf]
    %v9455 = vld [vmem:[#allocation12 + $0x104] sm:$0xf]
    %v9456 = vld [vmem:[#allocation12 + $0x108] sm:$0xf]
    %v9457 = vld [vmem:[#allocation12 + $0x10c] sm:$0xf]
    %v9458 = vld [vmem:[#allocation12 + $0x110] sm:$0xf]
    %v9459 = vld [vmem:[#allocation12 + $0x114] sm:$0xf]
    %v9460 = vld [vmem:[#allocation12 + $0x118] sm:$0xf]
    %v9461 = vld [vmem:[#allocation12 + $0x11c] sm:$0xf]
    %v9462 = vld [vmem:[#allocation12 + $0x120] sm:$0xf]
    %v9463 = vld [vmem:[#allocation12 + $0x124] sm:$0xf]
    %v9464 = vld [vmem:[#allocation12 + $0x128] sm:$0xf]
    %v9465 = vld [vmem:[#allocation12 + $0x12c] sm:$0xf]
    %v9466 = vld [vmem:[#allocation12 + $0x130] sm:$0xf]
    %v9467 = vld [vmem:[#allocation12 + $0x134] sm:$0xf]
    %v9468 = vld [vmem:[#allocation12 + $0x138] sm:$0xf]
    %v9469 = vld [vmem:[#allocation12 + $0x13c] sm:$0xf]
    %v9470 = vld [vmem:[#allocation12 + $0x140] sm:$0xf]
    %v9471 = vld [vmem:[#allocation12 + $0x144] sm:$0xf]
    %v9472 = vld [vmem:[#allocation12 + $0x148] sm:$0xf]
    %v9473 = vld [vmem:[#allocation12 + $0x14c] sm:$0xf]
    %v9474 = vld [vmem:[#allocation12 + $0x150] sm:$0xf]
    %v9475 = vld [vmem:[#allocation12 + $0x154] sm:$0xf]
    %v9476 = vld [vmem:[#allocation12 + $0x158] sm:$0xf]
    %v9477 = vld [vmem:[#allocation12 + $0x15c] sm:$0xf]
    %v9478 = vld [vmem:[#allocation12 + $0x160] sm:$0xf]
    %v9479 = vld [vmem:[#allocation12 + $0x164] sm:$0xf]
    %v9480 = vld [vmem:[#allocation12 + $0x168] sm:$0xf]
    %v9481 = vld [vmem:[#allocation12 + $0x16c] sm:$0xf]
    %v9482 = vld [vmem:[#allocation12 + $0x170] sm:$0xf]
    %v9483 = vld [vmem:[#allocation12 + $0x174] sm:$0xf]
    %v9484 = vld [vmem:[#allocation12 + $0x178] sm:$0xf]
    %v9485 = vld [vmem:[#allocation12 + $0x17c] sm:$0xf]
    %v9486 = vld [vmem:[#allocation12 + $0x180] sm:$0xf]
    %v9487 = vld [vmem:[#allocation12 + $0x184] sm:$0xf]
    %v9488 = vld [vmem:[#allocation12 + $0x188] sm:$0xf]
    %v9489 = vld [vmem:[#allocation12 + $0x18c] sm:$0xf]
    %v9490 = vld [vmem:[#allocation12 + $0x190] sm:$0xf]
    %v9491 = vld [vmem:[#allocation12 + $0x194] sm:$0xf]
    %v9492 = vld [vmem:[#allocation12 + $0x198] sm:$0xf]
    %v9493 = vld [vmem:[#allocation12 + $0x19c] sm:$0xf]
    %v9494 = vld [vmem:[#allocation12 + $0x1a0] sm:$0xf]
    %v9495 = vld [vmem:[#allocation12 + $0x1a4] sm:$0xf]
    %v9496 = vld [vmem:[#allocation12 + $0x1a8] sm:$0xf]
    %v9497 = vld [vmem:[#allocation12 + $0x1ac] sm:$0xf]
    %v9498 = vld [vmem:[#allocation12 + $0x1b0] sm:$0xf]
    %v9499 = vld [vmem:[#allocation12 + $0x1b4] sm:$0xf]
    %v9500 = vld [vmem:[#allocation12 + $0x1b8] sm:$0xf]
    %v9501 = vld [vmem:[#allocation12 + $0x1bc] sm:$0xf]
    %v9502 = vld [vmem:[#allocation12 + $0x1c0] sm:$0xf]
    %v9503 = vld [vmem:[#allocation12 + $0x1c4] sm:$0xf]
    %v9504 = vld [vmem:[#allocation12 + $0x1c8] sm:$0xf]
    %v9505 = vld [vmem:[#allocation12 + $0x1cc] sm:$0xf]
    %v9506 = vld [vmem:[#allocation12 + $0x1d0] sm:$0xf]
    %v9507 = vld [vmem:[#allocation12 + $0x1d4] sm:$0xf]
    %v9508 = vld [vmem:[#allocation12 + $0x1d8] sm:$0xf]
    %v9509 = vld [vmem:[#allocation12 + $0x1dc] sm:$0xf]
    %v9510 = vld [vmem:[#allocation12 + $0x1e0] sm:$0xf]
    %v9511 = vld [vmem:[#allocation12 + $0x1e4] sm:$0xf]
    %v9512 = vld [vmem:[#allocation12 + $0x1e8] sm:$0xf]
    %v9513 = vld [vmem:[#allocation12 + $0x1ec] sm:$0xf]
    %v9514 = vld [vmem:[#allocation12 + $0x1f0] sm:$0xf]
    %v9515 = vld [vmem:[#allocation12 + $0x1f4] sm:$0xf]
    %v9516 = vld [vmem:[#allocation12 + $0x1f8] sm:$0xf]
    %v9517 = vld [vmem:[#allocation12 + $0x1fc] sm:$0xf]
    %v9518 = vld [vmem:[#allocation12 + $0x200] sm:$0xf]
    %v9519 = vld [vmem:[#allocation12 + $0x204] sm:$0xf]
    %v9520 = vld [vmem:[#allocation12 + $0x208] sm:$0xf]
    %v9521 = vld [vmem:[#allocation12 + $0x20c] sm:$0xf]
    %v9522 = vld [vmem:[#allocation12 + $0x210] sm:$0xf]
    %v9523 = vld [vmem:[#allocation12 + $0x214] sm:$0xf]
    %v9524 = vld [vmem:[#allocation12 + $0x218] sm:$0xf]
    %v9525 = vld [vmem:[#allocation12 + $0x21c] sm:$0xf]
    %v9526 = vld [vmem:[#allocation12 + $0x220] sm:$0xf]
    %v9527 = vld [vmem:[#allocation12 + $0x224] sm:$0xf]
    %v9528 = vld [vmem:[#allocation12 + $0x228] sm:$0xf]
    %v9529 = vld [vmem:[#allocation12 + $0x22c] sm:$0xf]
    %v9530 = vld [vmem:[#allocation12 + $0x230] sm:$0xf]
    %v9531 = vld [vmem:[#allocation12 + $0x234] sm:$0xf]
    %v9532 = vld [vmem:[#allocation12 + $0x238] sm:$0xf]
    %v9533 = vld [vmem:[#allocation12 + $0x23c] sm:$0xf]
    %v9534 = vld [vmem:[#allocation12 + $0x240] sm:$0xf]
    %v9535 = vld [vmem:[#allocation12 + $0x244] sm:$0xf]
    %v9536 = vld [vmem:[#allocation12 + $0x248] sm:$0xf]
    %v9537 = vld [vmem:[#allocation12 + $0x24c] sm:$0xf]
    %v9538 = vld [vmem:[#allocation12 + $0x250] sm:$0xf]
    %v9539 = vld [vmem:[#allocation12 + $0x254] sm:$0xf]
    %v9540 = vld [vmem:[#allocation12 + $0x258] sm:$0xf]
    %v9541 = vld [vmem:[#allocation12 + $0x25c] sm:$0xf]
    %v9542 = vld [vmem:[#allocation12 + $0x260] sm:$0xf]
    %v9543 = vld [vmem:[#allocation12 + $0x264] sm:$0xf]
    %v9544 = vld [vmem:[#allocation12 + $0x268] sm:$0xf]
    %v9545 = vld [vmem:[#allocation12 + $0x26c] sm:$0xf]
    %v9546 = vld [vmem:[#allocation12 + $0x270] sm:$0xf]
    %v9547 = vld [vmem:[#allocation12 + $0x274] sm:$0xf]
    %v9548 = vld [vmem:[#allocation12 + $0x278] sm:$0xf]
    %v9549 = vld [vmem:[#allocation12 + $0x27c] sm:$0xf]
    %v9550 = vld [vmem:[#allocation12 + $0x280] sm:$0xf]
    %v9551 = vld [vmem:[#allocation12 + $0x284] sm:$0xf]
    %v9552 = vld [vmem:[#allocation12 + $0x288] sm:$0xf]
    %v9553 = vld [vmem:[#allocation12 + $0x28c] sm:$0xf]
    %v9554 = vld [vmem:[#allocation12 + $0x290] sm:$0xf]
    %v9555 = vld [vmem:[#allocation12 + $0x294] sm:$0xf]
    %v9556 = vld [vmem:[#allocation12 + $0x298] sm:$0xf]
    %v9557 = vld [vmem:[#allocation12 + $0x29c] sm:$0xf]
    %v9558 = vld [vmem:[#allocation12 + $0x2a0] sm:$0xf]
    %v9559 = vld [vmem:[#allocation12 + $0x2a4] sm:$0xf]
    %v9560 = vld [vmem:[#allocation12 + $0x2a8] sm:$0xf]
    %v9561 = vld [vmem:[#allocation12 + $0x2ac] sm:$0xf]
    %v9562 = vld [vmem:[#allocation12 + $0x2b0] sm:$0xf]
    %v9563 = vld [vmem:[#allocation12 + $0x2b4] sm:$0xf]
    %v9564 = vld [vmem:[#allocation12 + $0x2b8] sm:$0xf]
    %v9565 = vld [vmem:[#allocation12 + $0x2bc] sm:$0xf]
    %v9566 = vld [vmem:[#allocation12 + $0x2c0] sm:$0xf]
    %v9567 = vld [vmem:[#allocation12 + $0x2c4] sm:$0xf]
    %v9568 = vld [vmem:[#allocation12 + $0x2c8] sm:$0xf]
    %v9569 = vld [vmem:[#allocation12 + $0x2cc] sm:$0xf]
    %v9570 = vld [vmem:[#allocation12 + $0x2d0] sm:$0xf]
    %v9571 = vld [vmem:[#allocation12 + $0x2d4] sm:$0xf]
    %v9572 = vld [vmem:[#allocation12 + $0x2d8] sm:$0xf]
    %v9573 = vld [vmem:[#allocation12 + $0x2dc] sm:$0xf]
    %v9574 = vld [vmem:[#allocation12 + $0x2e0] sm:$0xf]
    %v9575 = vld [vmem:[#allocation12 + $0x2e4] sm:$0xf]
    %v9576 = vld [vmem:[#allocation12 + $0x2e8] sm:$0xf]
    %v9577 = vld [vmem:[#allocation12 + $0x2ec] sm:$0xf]
    %v9578 = vld [vmem:[#allocation12 + $0x2f0] sm:$0xf]
    %v9579 = vld [vmem:[#allocation12 + $0x2f4] sm:$0xf]
    %v9580 = vld [vmem:[#allocation12 + $0x2f8] sm:$0xf]
    %v9581 = vld [vmem:[#allocation12 + $0x2fc] sm:$0xf]
    %v9582 = vld [vmem:[#allocation12 + $0x300] sm:$0xf]
    %v9583 = vld [vmem:[#allocation12 + $0x304] sm:$0xf]
    %v9584 = vld [vmem:[#allocation12 + $0x308] sm:$0xf]
    %v9585 = vld [vmem:[#allocation12 + $0x30c] sm:$0xf]
    %v9586 = vld [vmem:[#allocation12 + $0x310] sm:$0xf]
    %v9587 = vld [vmem:[#allocation12 + $0x314] sm:$0xf]
    %v9588 = vld [vmem:[#allocation12 + $0x318] sm:$0xf]
    %v9589 = vld [vmem:[#allocation12 + $0x31c] sm:$0xf]
    %v9590 = vld [vmem:[#allocation12 + $0x320] sm:$0xf]
    %v9591 = vld [vmem:[#allocation12 + $0x324] sm:$0xf]
    %v9592 = vld [vmem:[#allocation12 + $0x328] sm:$0xf]
    %v9593 = vld [vmem:[#allocation12 + $0x32c] sm:$0xf]
    %v9594 = vld [vmem:[#allocation12 + $0x330] sm:$0xf]
    %v9595 = vld [vmem:[#allocation12 + $0x334] sm:$0xf]
    %v9596 = vld [vmem:[#allocation12 + $0x338] sm:$0xf]
    %v9597 = vld [vmem:[#allocation12 + $0x33c] sm:$0xf]
    %v9598 = vld [vmem:[#allocation12 + $0x340] sm:$0xf]
    %v9599 = vld [vmem:[#allocation12 + $0x344] sm:$0xf]
    %v9600 = vld [vmem:[#allocation12 + $0x348] sm:$0xf]
    %v9601 = vld [vmem:[#allocation12 + $0x34c] sm:$0xf]
    %v9602 = vld [vmem:[#allocation12 + $0x350] sm:$0xf]
    %v9603 = vld [vmem:[#allocation12 + $0x354] sm:$0xf]
    %v9604 = vld [vmem:[#allocation12 + $0x358] sm:$0xf]
    %v9605 = vld [vmem:[#allocation12 + $0x35c] sm:$0xf]
    %v9606 = vld [vmem:[#allocation12 + $0x360] sm:$0xf]
    %v9607 = vld [vmem:[#allocation12 + $0x364] sm:$0xf]
    %v9608 = vld [vmem:[#allocation12 + $0x368] sm:$0xf]
    %v9609 = vld [vmem:[#allocation12 + $0x36c] sm:$0xf]
    %v9610 = vld [vmem:[#allocation12 + $0x370] sm:$0xf]
    %v9611 = vld [vmem:[#allocation12 + $0x374] sm:$0xf]
    %v9612 = vld [vmem:[#allocation12 + $0x378] sm:$0xf]
    %v9613 = vld [vmem:[#allocation12 + $0x37c] sm:$0xf]
    %v9614 = vld [vmem:[#allocation12 + $0x380] sm:$0xf]
    %v9615 = vld [vmem:[#allocation12 + $0x384] sm:$0xf]
    %v9616 = vld [vmem:[#allocation12 + $0x388] sm:$0xf]
    %v9617 = vld [vmem:[#allocation12 + $0x38c] sm:$0xf]
    %v9618 = vld [vmem:[#allocation12 + $0x390] sm:$0xf]
    %v9619 = vld [vmem:[#allocation12 + $0x394] sm:$0xf]
    %v9620 = vld [vmem:[#allocation12 + $0x398] sm:$0xf]
    %v9621 = vld [vmem:[#allocation12 + $0x39c] sm:$0xf]
    %v9622 = vld [vmem:[#allocation12 + $0x3a0] sm:$0xf]
    %v9623 = vld [vmem:[#allocation12 + $0x3a4] sm:$0xf]
    %v9624 = vld [vmem:[#allocation12 + $0x3a8] sm:$0xf]
    %v9625 = vld [vmem:[#allocation12 + $0x3ac] sm:$0xf]
    %v9626 = vld [vmem:[#allocation12 + $0x3b0] sm:$0xf]
    %v9627 = vld [vmem:[#allocation12 + $0x3b4] sm:$0xf]
    %v9628 = vld [vmem:[#allocation12 + $0x3b8] sm:$0xf]
    %v9629 = vld [vmem:[#allocation12 + $0x3bc] sm:$0xf]
    %v9630 = vld [vmem:[#allocation12 + $0x3c0] sm:$0xf]
    %v9631 = vld [vmem:[#allocation12 + $0x3c4] sm:$0xf]
    %v9632 = vld [vmem:[#allocation12 + $0x3c8] sm:$0xf]
    %v9633 = vld [vmem:[#allocation12 + $0x3cc] sm:$0xf]
    %v9634 = vld [vmem:[#allocation12 + $0x3d0] sm:$0xf]
    %v9635 = vld [vmem:[#allocation12 + $0x3d4] sm:$0xf]
    %v9636 = vld [vmem:[#allocation12 + $0x3d8] sm:$0xf]
    %v9637 = vld [vmem:[#allocation12 + $0x3dc] sm:$0xf]
    %v9638 = vld [vmem:[#allocation12 + $0x3e0] sm:$0xf]
    %v9639 = vld [vmem:[#allocation12 + $0x3e4] sm:$0xf]
    %v9640 = vld [vmem:[#allocation12 + $0x3e8] sm:$0xf]
    %v9641 = vld [vmem:[#allocation12 + $0x3ec] sm:$0xf]
    %v9642 = vld [vmem:[#allocation12 + $0x3f0] sm:$0xf]
    %v9643 = vld [vmem:[#allocation12 + $0x3f4] sm:$0xf]
    %v9644 = vld [vmem:[#allocation12 + $0x3f8] sm:$0xf]
    %v9645 = vld [vmem:[#allocation12 + $0x3fc] sm:$0xf]
    %v9646 = vld [vmem:[#allocation12 + $0x400] sm:$0xf]
    %v9647 = vld [vmem:[#allocation12 + $0x404] sm:$0xf]
    %v9648 = vld [vmem:[#allocation12 + $0x408] sm:$0xf]
    %v9649 = vld [vmem:[#allocation12 + $0x40c] sm:$0xf]
    %v9650 = vld [vmem:[#allocation12 + $0x410] sm:$0xf]
    %v9651 = vld [vmem:[#allocation12 + $0x414] sm:$0xf]
    %v9652 = vld [vmem:[#allocation12 + $0x418] sm:$0xf]
    %v9653 = vld [vmem:[#allocation12 + $0x41c] sm:$0xf]
    %v9654 = vld [vmem:[#allocation12 + $0x420] sm:$0xf]
    %v9655 = vld [vmem:[#allocation12 + $0x424] sm:$0xf]
    %v9656 = vld [vmem:[#allocation12 + $0x428] sm:$0xf]
    %v9657 = vld [vmem:[#allocation12 + $0x42c] sm:$0xf]
    %v9658 = vld [vmem:[#allocation12 + $0x430] sm:$0xf]
    %v9659 = vld [vmem:[#allocation12 + $0x434] sm:$0xf]
    %v9660 = vld [vmem:[#allocation12 + $0x438] sm:$0xf]
    %v9661 = vld [vmem:[#allocation12 + $0x43c] sm:$0xf]
    %v9662 = vld [vmem:[#allocation12 + $0x440] sm:$0xf]
    %v9663 = vld [vmem:[#allocation12 + $0x444] sm:$0xf]
    %v9664 = vld [vmem:[#allocation12 + $0x448] sm:$0xf]
    %v9665 = vld [vmem:[#allocation12 + $0x44c] sm:$0xf]
    %v9666 = vld [vmem:[#allocation12 + $0x450] sm:$0xf]
    %v9667 = vld [vmem:[#allocation12 + $0x454] sm:$0xf]
    %v9668 = vld [vmem:[#allocation12 + $0x458] sm:$0xf]
    %v9669 = vld [vmem:[#allocation12 + $0x45c] sm:$0xf]
    %v9670 = vld [vmem:[#allocation12 + $0x460] sm:$0xf]
    %v9671 = vld [vmem:[#allocation12 + $0x464] sm:$0xf]
    %v9672 = vld [vmem:[#allocation12 + $0x468] sm:$0xf]
    %v9673 = vld [vmem:[#allocation12 + $0x46c] sm:$0xf]
    %v9674 = vld [vmem:[#allocation12 + $0x470] sm:$0xf]
    %v9675 = vld [vmem:[#allocation12 + $0x474] sm:$0xf]
    %v9676 = vld [vmem:[#allocation12 + $0x478] sm:$0xf]
    %v9677 = vld [vmem:[#allocation12 + $0x47c] sm:$0xf]
    %v9678 = vld [vmem:[#allocation12 + $0x480] sm:$0xf]
    %v9679 = vld [vmem:[#allocation12 + $0x484] sm:$0xf]
    %v9680 = vld [vmem:[#allocation12 + $0x488] sm:$0xf]
    %v9681 = vld [vmem:[#allocation12 + $0x48c] sm:$0xf]
    %v9682 = vld [vmem:[#allocation12 + $0x490] sm:$0xf]
    %v9683 = vld [vmem:[#allocation12 + $0x494] sm:$0xf]
    %v9684 = vld [vmem:[#allocation12 + $0x498] sm:$0xf]
    %v9685 = vld [vmem:[#allocation12 + $0x49c] sm:$0xf]
    %v9686 = vld [vmem:[#allocation12 + $0x4a0] sm:$0xf]
    %v9687 = vld [vmem:[#allocation12 + $0x4a4] sm:$0xf]
    %v9688 = vld [vmem:[#allocation12 + $0x4a8] sm:$0xf]
    %v9689 = vld [vmem:[#allocation12 + $0x4ac] sm:$0xf]
    %v9690 = vld [vmem:[#allocation12 + $0x4b0] sm:$0xf]
    %v9691 = vld [vmem:[#allocation12 + $0x4b4] sm:$0xf]
    %v9692 = vld [vmem:[#allocation12 + $0x4b8] sm:$0xf]
    %v9693 = vld [vmem:[#allocation12 + $0x4bc] sm:$0xf]
    %v9694 = vld [vmem:[#allocation12 + $0x4c0] sm:$0xf]
    %v9695 = vld [vmem:[#allocation12 + $0x4c4] sm:$0xf]
    %v9696 = vld [vmem:[#allocation12 + $0x4c8] sm:$0xf]
    %v9697 = vld [vmem:[#allocation12 + $0x4cc] sm:$0xf]
    %v9698 = vld [vmem:[#allocation12 + $0x4d0] sm:$0xf]
    %v9699 = vld [vmem:[#allocation12 + $0x4d4] sm:$0xf]
    %v9700 = vld [vmem:[#allocation12 + $0x4d8] sm:$0xf]
    %v9701 = vld [vmem:[#allocation12 + $0x4dc] sm:$0xf]
    %v9702 = vld [vmem:[#allocation12 + $0x4e0] sm:$0xf]
    %v9703 = vld [vmem:[#allocation12 + $0x4e4] sm:$0xf]
    %v9704 = vld [vmem:[#allocation12 + $0x4e8] sm:$0xf]
    %v9705 = vld [vmem:[#allocation12 + $0x4ec] sm:$0xf]
    %v9706 = vld [vmem:[#allocation12 + $0x4f0] sm:$0xf]
    %v9707 = vld [vmem:[#allocation12 + $0x4f4] sm:$0xf]
    %v9708 = vld [vmem:[#allocation12 + $0x4f8] sm:$0xf]
    %v9709 = vld [vmem:[#allocation12 + $0x4fc] sm:$0xf]
    %v9710 = vld [vmem:[#allocation14] sm:$0x1]
    %v9712 = vlaneseq
    %v9713 = vshrl.u32 %v9712, 7
    %v9714 = vsub.s32 0, %v9713
    %v9715 = vrot.slane %v9710, %v9714
    %v10037 = vunpack.c.l.b16 %v9390
    %v10038 = vunpack.c.l.b16 %v9391
    %v10039 = vunpack.c.l.b16 %v9392
    %v10040 = vunpack.c.l.b16 %v9393
    %v10041 = vunpack.c.l.b16 %v9394
    %v10042 = vunpack.c.l.b16 %v9395
    %v10043 = vunpack.c.l.b16 %v9396
    %v10044 = vunpack.c.l.b16 %v9397
    %v10045 = vunpack.c.l.b16 %v9398
    %v10046 = vunpack.c.l.b16 %v9399
    %v10047 = vunpack.c.l.b16 %v9400
    %v10048 = vunpack.c.l.b16 %v9401
    %v10049 = vunpack.c.l.b16 %v9402
    %v10050 = vunpack.c.l.b16 %v9403
    %v10051 = vunpack.c.l.b16 %v9404
    %v10052 = vunpack.c.l.b16 %v9405
    %v10053 = vunpack.c.l.b16 %v9406
    %v10054 = vunpack.c.l.b16 %v9407
    %v10055 = vunpack.c.l.b16 %v9408
    %v10056 = vunpack.c.l.b16 %v9409
    %v10057 = vunpack.c.l.b16 %v9410
    %v10058 = vunpack.c.l.b16 %v9411
    %v10059 = vunpack.c.l.b16 %v9412
    %v10060 = vunpack.c.l.b16 %v9413
    %v10061 = vunpack.c.l.b16 %v9414
    %v10062 = vunpack.c.l.b16 %v9415
    %v10063 = vunpack.c.l.b16 %v9416
    %v10064 = vunpack.c.l.b16 %v9417
    %v10065 = vunpack.c.l.b16 %v9418
    %v10066 = vunpack.c.l.b16 %v9419
    %v10067 = vunpack.c.l.b16 %v9420
    %v10068 = vunpack.c.l.b16 %v9421
    %v10069 = vunpack.c.l.b16 %v9422
    %v10070 = vunpack.c.l.b16 %v9423
    %v10071 = vunpack.c.l.b16 %v9424
    %v10072 = vunpack.c.l.b16 %v9425
    %v10073 = vunpack.c.l.b16 %v9426
    %v10074 = vunpack.c.l.b16 %v9427
    %v10075 = vunpack.c.l.b16 %v9428
    %v10076 = vunpack.c.l.b16 %v9429
    %v10077 = vunpack.c.l.b16 %v9430
    %v10078 = vunpack.c.l.b16 %v9431
    %v10079 = vunpack.c.l.b16 %v9432
    %v10080 = vunpack.c.l.b16 %v9433
    %v10081 = vunpack.c.l.b16 %v9434
    %v10082 = vunpack.c.l.b16 %v9435
    %v10083 = vunpack.c.l.b16 %v9436
    %v10084 = vunpack.c.l.b16 %v9437
    %v10085 = vunpack.c.l.b16 %v9438
    %v10086 = vunpack.c.l.b16 %v9439
    %v10087 = vunpack.c.l.b16 %v9440
    %v10088 = vunpack.c.l.b16 %v9441
    %v10089 = vunpack.c.l.b16 %v9442
    %v10090 = vunpack.c.l.b16 %v9443
    %v10091 = vunpack.c.l.b16 %v9444
    %v10092 = vunpack.c.l.b16 %v9445
    %v10093 = vunpack.c.l.b16 %v9446
    %v10094 = vunpack.c.l.b16 %v9447
    %v10095 = vunpack.c.l.b16 %v9448
    %v10096 = vunpack.c.l.b16 %v9449
    %v10097 = vunpack.c.l.b16 %v9450
    %v10098 = vunpack.c.l.b16 %v9451
    %v10099 = vunpack.c.l.b16 %v9452
    %v10100 = vunpack.c.l.b16 %v9453
    %v10101 = vunpack.c.l.b16 %v9454
    %v10102 = vunpack.c.l.b16 %v9455
    %v10103 = vunpack.c.l.b16 %v9456
    %v10104 = vunpack.c.l.b16 %v9457
    %v10105 = vunpack.c.l.b16 %v9458
    %v10106 = vunpack.c.l.b16 %v9459
    %v10107 = vunpack.c.l.b16 %v9460
    %v10108 = vunpack.c.l.b16 %v9461
    %v10109 = vunpack.c.l.b16 %v9462
    %v10110 = vunpack.c.l.b16 %v9463
    %v10111 = vunpack.c.l.b16 %v9464
    %v10112 = vunpack.c.l.b16 %v9465
    %v10113 = vunpack.c.l.b16 %v9466
    %v10114 = vunpack.c.l.b16 %v9467
    %v10115 = vunpack.c.l.b16 %v9468
    %v10116 = vunpack.c.l.b16 %v9469
    %v10117 = vunpack.c.l.b16 %v9470
    %v10118 = vunpack.c.l.b16 %v9471
    %v10119 = vunpack.c.l.b16 %v9472
    %v10120 = vunpack.c.l.b16 %v9473
    %v10121 = vunpack.c.l.b16 %v9474
    %v10122 = vunpack.c.l.b16 %v9475
    %v10123 = vunpack.c.l.b16 %v9476
    %v10124 = vunpack.c.l.b16 %v9477
    %v10125 = vunpack.c.l.b16 %v9478
    %v10126 = vunpack.c.l.b16 %v9479
    %v10127 = vunpack.c.l.b16 %v9480
    %v10128 = vunpack.c.l.b16 %v9481
    %v10129 = vunpack.c.l.b16 %v9482
    %v10130 = vunpack.c.l.b16 %v9483
    %v10131 = vunpack.c.l.b16 %v9484
    %v10132 = vunpack.c.l.b16 %v9485
    %v10133 = vunpack.c.l.b16 %v9486
    %v10134 = vunpack.c.l.b16 %v9487
    %v10135 = vunpack.c.l.b16 %v9488
    %v10136 = vunpack.c.l.b16 %v9489
    %v10137 = vunpack.c.l.b16 %v9490
    %v10138 = vunpack.c.l.b16 %v9491
    %v10139 = vunpack.c.l.b16 %v9492
    %v10140 = vunpack.c.l.b16 %v9493
    %v10141 = vunpack.c.l.b16 %v9494
    %v10142 = vunpack.c.l.b16 %v9495
    %v10143 = vunpack.c.l.b16 %v9496
    %v10144 = vunpack.c.l.b16 %v9497
    %v10145 = vunpack.c.l.b16 %v9498
    %v10146 = vunpack.c.l.b16 %v9499
    %v10147 = vunpack.c.l.b16 %v9500
    %v10148 = vunpack.c.l.b16 %v9501
    %v10149 = vunpack.c.l.b16 %v9502
    %v10150 = vunpack.c.l.b16 %v9503
    %v10151 = vunpack.c.l.b16 %v9504
    %v10152 = vunpack.c.l.b16 %v9505
    %v10153 = vunpack.c.l.b16 %v9506
    %v10154 = vunpack.c.l.b16 %v9507
    %v10155 = vunpack.c.l.b16 %v9508
    %v10156 = vunpack.c.l.b16 %v9509
    %v10157 = vunpack.c.l.b16 %v9510
    %v10158 = vunpack.c.l.b16 %v9511
    %v10159 = vunpack.c.l.b16 %v9512
    %v10160 = vunpack.c.l.b16 %v9513
    %v10161 = vunpack.c.l.b16 %v9514
    %v10162 = vunpack.c.l.b16 %v9515
    %v10163 = vunpack.c.l.b16 %v9516
    %v10164 = vunpack.c.l.b16 %v9517
    %v10165 = vunpack.c.l.b16 %v9518
    %v10166 = vunpack.c.l.b16 %v9519
    %v10167 = vunpack.c.l.b16 %v9520
    %v10168 = vunpack.c.l.b16 %v9521
    %v10169 = vunpack.c.l.b16 %v9522
    %v10170 = vunpack.c.l.b16 %v9523
    %v10171 = vunpack.c.l.b16 %v9524
    %v10172 = vunpack.c.l.b16 %v9525
    %v10173 = vunpack.c.l.b16 %v9526
    %v10174 = vunpack.c.l.b16 %v9527
    %v10175 = vunpack.c.l.b16 %v9528
    %v10176 = vunpack.c.l.b16 %v9529
    %v10177 = vunpack.c.l.b16 %v9530
    %v10178 = vunpack.c.l.b16 %v9531
    %v10179 = vunpack.c.l.b16 %v9532
    %v10180 = vunpack.c.l.b16 %v9533
    %v10181 = vunpack.c.l.b16 %v9534
    %v10182 = vunpack.c.l.b16 %v9535
    %v10183 = vunpack.c.l.b16 %v9536
    %v10184 = vunpack.c.l.b16 %v9537
    %v10185 = vunpack.c.l.b16 %v9538
    %v10186 = vunpack.c.l.b16 %v9539
    %v10187 = vunpack.c.l.b16 %v9540
    %v10188 = vunpack.c.l.b16 %v9541
    %v10189 = vunpack.c.l.b16 %v9542
    %v10190 = vunpack.c.l.b16 %v9543
    %v10191 = vunpack.c.l.b16 %v9544
    %v10192 = vunpack.c.l.b16 %v9545
    %v10193 = vunpack.c.l.b16 %v9546
    %v10194 = vunpack.c.l.b16 %v9547
    %v10195 = vunpack.c.l.b16 %v9548
    %v10196 = vunpack.c.l.b16 %v9549
    %v10197 = vunpack.c.l.b16 %v9550
    %v10198 = vunpack.c.l.b16 %v9551
    %v10199 = vunpack.c.l.b16 %v9552
    %v10200 = vunpack.c.l.b16 %v9553
    %v10201 = vunpack.c.l.b16 %v9554
    %v10202 = vunpack.c.l.b16 %v9555
    %v10203 = vunpack.c.l.b16 %v9556
    %v10204 = vunpack.c.l.b16 %v9557
    %v10205 = vunpack.c.l.b16 %v9558
    %v10206 = vunpack.c.l.b16 %v9559
    %v10207 = vunpack.c.l.b16 %v9560
    %v10208 = vunpack.c.l.b16 %v9561
    %v10209 = vunpack.c.l.b16 %v9562
    %v10210 = vunpack.c.l.b16 %v9563
    %v10211 = vunpack.c.l.b16 %v9564
    %v10212 = vunpack.c.l.b16 %v9565
    %v10213 = vunpack.c.l.b16 %v9566
    %v10214 = vunpack.c.l.b16 %v9567
    %v10215 = vunpack.c.l.b16 %v9568
    %v10216 = vunpack.c.l.b16 %v9569
    %v10217 = vunpack.c.l.b16 %v9570
    %v10218 = vunpack.c.l.b16 %v9571
    %v10219 = vunpack.c.l.b16 %v9572
    %v10220 = vunpack.c.l.b16 %v9573
    %v10221 = vunpack.c.l.b16 %v9574
    %v10222 = vunpack.c.l.b16 %v9575
    %v10223 = vunpack.c.l.b16 %v9576
    %v10224 = vunpack.c.l.b16 %v9577
    %v10225 = vunpack.c.l.b16 %v9578
    %v10226 = vunpack.c.l.b16 %v9579
    %v10227 = vunpack.c.l.b16 %v9580
    %v10228 = vunpack.c.l.b16 %v9581
    %v10229 = vunpack.c.l.b16 %v9582
    %v10230 = vunpack.c.l.b16 %v9583
    %v10231 = vunpack.c.l.b16 %v9584
    %v10232 = vunpack.c.l.b16 %v9585
    %v10233 = vunpack.c.l.b16 %v9586
    %v10234 = vunpack.c.l.b16 %v9587
    %v10235 = vunpack.c.l.b16 %v9588
    %v10236 = vunpack.c.l.b16 %v9589
    %v10237 = vunpack.c.l.b16 %v9590
    %v10238 = vunpack.c.l.b16 %v9591
    %v10239 = vunpack.c.l.b16 %v9592
    %v10240 = vunpack.c.l.b16 %v9593
    %v10241 = vunpack.c.l.b16 %v9594
    %v10242 = vunpack.c.l.b16 %v9595
    %v10243 = vunpack.c.l.b16 %v9596
    %v10244 = vunpack.c.l.b16 %v9597
    %v10245 = vunpack.c.l.b16 %v9598
    %v10246 = vunpack.c.l.b16 %v9599
    %v10247 = vunpack.c.l.b16 %v9600
    %v10248 = vunpack.c.l.b16 %v9601
    %v10249 = vunpack.c.l.b16 %v9602
    %v10250 = vunpack.c.l.b16 %v9603
    %v10251 = vunpack.c.l.b16 %v9604
    %v10252 = vunpack.c.l.b16 %v9605
    %v10253 = vunpack.c.l.b16 %v9606
    %v10254 = vunpack.c.l.b16 %v9607
    %v10255 = vunpack.c.l.b16 %v9608
    %v10256 = vunpack.c.l.b16 %v9609
    %v10257 = vunpack.c.l.b16 %v9610
    %v10258 = vunpack.c.l.b16 %v9611
    %v10259 = vunpack.c.l.b16 %v9612
    %v10260 = vunpack.c.l.b16 %v9613
    %v10261 = vunpack.c.l.b16 %v9614
    %v10262 = vunpack.c.l.b16 %v9615
    %v10263 = vunpack.c.l.b16 %v9616
    %v10264 = vunpack.c.l.b16 %v9617
    %v10265 = vunpack.c.l.b16 %v9618
    %v10266 = vunpack.c.l.b16 %v9619
    %v10267 = vunpack.c.l.b16 %v9620
    %v10268 = vunpack.c.l.b16 %v9621
    %v10269 = vunpack.c.l.b16 %v9622
    %v10270 = vunpack.c.l.b16 %v9623
    %v10271 = vunpack.c.l.b16 %v9624
    %v10272 = vunpack.c.l.b16 %v9625
    %v10273 = vunpack.c.l.b16 %v9626
    %v10274 = vunpack.c.l.b16 %v9627
    %v10275 = vunpack.c.l.b16 %v9628
    %v10276 = vunpack.c.l.b16 %v9629
    %v10277 = vunpack.c.l.b16 %v9630
    %v10278 = vunpack.c.l.b16 %v9631
    %v10279 = vunpack.c.l.b16 %v9632
    %v10280 = vunpack.c.l.b16 %v9633
    %v10281 = vunpack.c.l.b16 %v9634
    %v10282 = vunpack.c.l.b16 %v9635
    %v10283 = vunpack.c.l.b16 %v9636
    %v10284 = vunpack.c.l.b16 %v9637
    %v10285 = vunpack.c.l.b16 %v9638
    %v10286 = vunpack.c.l.b16 %v9639
    %v10287 = vunpack.c.l.b16 %v9640
    %v10288 = vunpack.c.l.b16 %v9641
    %v10289 = vunpack.c.l.b16 %v9642
    %v10290 = vunpack.c.l.b16 %v9643
    %v10291 = vunpack.c.l.b16 %v9644
    %v10292 = vunpack.c.l.b16 %v9645
    %v10293 = vunpack.c.l.b16 %v9646
    %v10294 = vunpack.c.l.b16 %v9647
    %v10295 = vunpack.c.l.b16 %v9648
    %v10296 = vunpack.c.l.b16 %v9649
    %v10297 = vunpack.c.l.b16 %v9650
    %v10298 = vunpack.c.l.b16 %v9651
    %v10299 = vunpack.c.l.b16 %v9652
    %v10300 = vunpack.c.l.b16 %v9653
    %v10301 = vunpack.c.l.b16 %v9654
    %v10302 = vunpack.c.l.b16 %v9655
    %v10303 = vunpack.c.l.b16 %v9656
    %v10304 = vunpack.c.l.b16 %v9657
    %v10305 = vunpack.c.l.b16 %v9658
    %v10306 = vunpack.c.l.b16 %v9659
    %v10307 = vunpack.c.l.b16 %v9660
    %v10308 = vunpack.c.l.b16 %v9661
    %v10309 = vunpack.c.l.b16 %v9662
    %v10310 = vunpack.c.l.b16 %v9663
    %v10311 = vunpack.c.l.b16 %v9664
    %v10312 = vunpack.c.l.b16 %v9665
    %v10313 = vunpack.c.l.b16 %v9666
    %v10314 = vunpack.c.l.b16 %v9667
    %v10315 = vunpack.c.l.b16 %v9668
    %v10316 = vunpack.c.l.b16 %v9669
    %v10317 = vunpack.c.l.b16 %v9670
    %v10318 = vunpack.c.l.b16 %v9671
    %v10319 = vunpack.c.l.b16 %v9672
    %v10320 = vunpack.c.l.b16 %v9673
    %v10321 = vunpack.c.l.b16 %v9674
    %v10322 = vunpack.c.l.b16 %v9675
    %v10323 = vunpack.c.l.b16 %v9676
    %v10324 = vunpack.c.l.b16 %v9677
    %v10325 = vunpack.c.l.b16 %v9678
    %v10326 = vunpack.c.l.b16 %v9679
    %v10327 = vunpack.c.l.b16 %v9680
    %v10328 = vunpack.c.l.b16 %v9681
    %v10329 = vunpack.c.l.b16 %v9682
    %v10330 = vunpack.c.l.b16 %v9683
    %v10331 = vunpack.c.l.b16 %v9684
    %v10332 = vunpack.c.l.b16 %v9685
    %v10333 = vunpack.c.l.b16 %v9686
    %v10334 = vunpack.c.l.b16 %v9687
    %v10335 = vunpack.c.l.b16 %v9688
    %v10336 = vunpack.c.l.b16 %v9689
    %v10337 = vunpack.c.l.b16 %v9690
    %v10338 = vunpack.c.l.b16 %v9691
    %v10339 = vunpack.c.l.b16 %v9692
    %v10340 = vunpack.c.l.b16 %v9693
    %v10341 = vunpack.c.l.b16 %v9694
    %v10342 = vunpack.c.l.b16 %v9695
    %v10343 = vunpack.c.l.b16 %v9696
    %v10344 = vunpack.c.l.b16 %v9697
    %v10345 = vunpack.c.l.b16 %v9698
    %v10346 = vunpack.c.l.b16 %v9699
    %v10347 = vunpack.c.l.b16 %v9700
    %v10348 = vunpack.c.l.b16 %v9701
    %v10349 = vunpack.c.l.b16 %v9702
    %v10350 = vunpack.c.l.b16 %v9703
    %v10351 = vunpack.c.l.b16 %v9704
    %v10352 = vunpack.c.l.b16 %v9705
    %v10353 = vunpack.c.l.b16 %v9706
    %v10354 = vunpack.c.l.b16 %v9707
    %v10355 = vunpack.c.l.b16 %v9708
    %v10356 = vunpack.c.l.b16 %v9709
    %v10357 = vpack.c.b16 %v10038, %v10037
    %v10358 = vpack.c.b16 %v10040, %v10039
    %v10359 = vpack.c.b16 %v10042, %v10041
    %v10360 = vpack.c.b16 %v10044, %v10043
    %v10361 = vpack.c.b16 %v10046, %v10045
    %v10362 = vpack.c.b16 %v10048, %v10047
    %v10363 = vpack.c.b16 %v10050, %v10049
    %v10364 = vpack.c.b16 %v10052, %v10051
    %v10365 = vpack.c.b16 %v10054, %v10053
    %v10366 = vpack.c.b16 %v10056, %v10055
    %v10367 = vpack.c.b16 %v10058, %v10057
    %v10368 = vpack.c.b16 %v10060, %v10059
    %v10369 = vpack.c.b16 %v10062, %v10061
    %v10370 = vpack.c.b16 %v10064, %v10063
    %v10371 = vpack.c.b16 %v10066, %v10065
    %v10372 = vpack.c.b16 %v10068, %v10067
    %v10373 = vpack.c.b16 %v10070, %v10069
    %v10374 = vpack.c.b16 %v10072, %v10071
    %v10375 = vpack.c.b16 %v10074, %v10073
    %v10376 = vpack.c.b16 %v10076, %v10075
    %v10377 = vpack.c.b16 %v10078, %v10077
    %v10378 = vpack.c.b16 %v10080, %v10079
    %v10379 = vpack.c.b16 %v10082, %v10081
    %v10380 = vpack.c.b16 %v10084, %v10083
    %v10381 = vpack.c.b16 %v10086, %v10085
    %v10382 = vpack.c.b16 %v10088, %v10087
    %v10383 = vpack.c.b16 %v10090, %v10089
    %v10384 = vpack.c.b16 %v10092, %v10091
    %v10385 = vpack.c.b16 %v10094, %v10093
    %v10386 = vpack.c.b16 %v10096, %v10095
    %v10387 = vpack.c.b16 %v10098, %v10097
    %v10388 = vpack.c.b16 %v10100, %v10099
    %v10389 = vpack.c.b16 %v10102, %v10101
    %v10390 = vpack.c.b16 %v10104, %v10103
    %v10391 = vpack.c.b16 %v10106, %v10105
    %v10392 = vpack.c.b16 %v10108, %v10107
    %v10393 = vpack.c.b16 %v10110, %v10109
    %v10394 = vpack.c.b16 %v10112, %v10111
    %v10395 = vpack.c.b16 %v10114, %v10113
    %v10396 = vpack.c.b16 %v10116, %v10115
    %v10397 = vpack.c.b16 %v10118, %v10117
    %v10398 = vpack.c.b16 %v10120, %v10119
    %v10399 = vpack.c.b16 %v10122, %v10121
    %v10400 = vpack.c.b16 %v10124, %v10123
    %v10401 = vpack.c.b16 %v10126, %v10125
    %v10402 = vpack.c.b16 %v10128, %v10127
    %v10403 = vpack.c.b16 %v10130, %v10129
    %v10404 = vpack.c.b16 %v10132, %v10131
    %v10405 = vpack.c.b16 %v10134, %v10133
    %v10406 = vpack.c.b16 %v10136, %v10135
    %v10407 = vpack.c.b16 %v10138, %v10137
    %v10408 = vpack.c.b16 %v10140, %v10139
    %v10409 = vpack.c.b16 %v10142, %v10141
    %v10410 = vpack.c.b16 %v10144, %v10143
    %v10411 = vpack.c.b16 %v10146, %v10145
    %v10412 = vpack.c.b16 %v10148, %v10147
    %v10413 = vpack.c.b16 %v10150, %v10149
    %v10414 = vpack.c.b16 %v10152, %v10151
    %v10415 = vpack.c.b16 %v10154, %v10153
    %v10416 = vpack.c.b16 %v10156, %v10155
    %v10417 = vpack.c.b16 %v10158, %v10157
    %v10418 = vpack.c.b16 %v10160, %v10159
    %v10419 = vpack.c.b16 %v10162, %v10161
    %v10420 = vpack.c.b16 %v10164, %v10163
    %v10421 = vpack.c.b16 %v10166, %v10165
    %v10422 = vpack.c.b16 %v10168, %v10167
    %v10423 = vpack.c.b16 %v10170, %v10169
    %v10424 = vpack.c.b16 %v10172, %v10171
    %v10425 = vpack.c.b16 %v10174, %v10173
    %v10426 = vpack.c.b16 %v10176, %v10175
    %v10427 = vpack.c.b16 %v10178, %v10177
    %v10428 = vpack.c.b16 %v10180, %v10179
    %v10429 = vpack.c.b16 %v10182, %v10181
    %v10430 = vpack.c.b16 %v10184, %v10183
    %v10431 = vpack.c.b16 %v10186, %v10185
    %v10432 = vpack.c.b16 %v10188, %v10187
    %v10433 = vpack.c.b16 %v10190, %v10189
    %v10434 = vpack.c.b16 %v10192, %v10191
    %v10435 = vpack.c.b16 %v10194, %v10193
    %v10436 = vpack.c.b16 %v10196, %v10195
    %v10437 = vpack.c.b16 %v10198, %v10197
    %v10438 = vpack.c.b16 %v10200, %v10199
    %v10439 = vpack.c.b16 %v10202, %v10201
    %v10440 = vpack.c.b16 %v10204, %v10203
    %v10441 = vpack.c.b16 %v10206, %v10205
    %v10442 = vpack.c.b16 %v10208, %v10207
    %v10443 = vpack.c.b16 %v10210, %v10209
    %v10444 = vpack.c.b16 %v10212, %v10211
    %v10445 = vpack.c.b16 %v10214, %v10213
    %v10446 = vpack.c.b16 %v10216, %v10215
    %v10447 = vpack.c.b16 %v10218, %v10217
    %v10448 = vpack.c.b16 %v10220, %v10219
    %v10449 = vpack.c.b16 %v10222, %v10221
    %v10450 = vpack.c.b16 %v10224, %v10223
    %v10451 = vpack.c.b16 %v10226, %v10225
    %v10452 = vpack.c.b16 %v10228, %v10227
    %v10453 = vpack.c.b16 %v10230, %v10229
    %v10454 = vpack.c.b16 %v10232, %v10231
    %v10455 = vpack.c.b16 %v10234, %v10233
    %v10456 = vpack.c.b16 %v10236, %v10235
    %v10457 = vpack.c.b16 %v10238, %v10237
    %v10458 = vpack.c.b16 %v10240, %v10239
    %v10459 = vpack.c.b16 %v10242, %v10241
    %v10460 = vpack.c.b16 %v10244, %v10243
    %v10461 = vpack.c.b16 %v10246, %v10245
    %v10462 = vpack.c.b16 %v10248, %v10247
    %v10463 = vpack.c.b16 %v10250, %v10249
    %v10464 = vpack.c.b16 %v10252, %v10251
    %v10465 = vpack.c.b16 %v10254, %v10253
    %v10466 = vpack.c.b16 %v10256, %v10255
    %v10467 = vpack.c.b16 %v10258, %v10257
    %v10468 = vpack.c.b16 %v10260, %v10259
    %v10469 = vpack.c.b16 %v10262, %v10261
    %v10470 = vpack.c.b16 %v10264, %v10263
    %v10471 = vpack.c.b16 %v10266, %v10265
    %v10472 = vpack.c.b16 %v10268, %v10267
    %v10473 = vpack.c.b16 %v10270, %v10269
    %v10474 = vpack.c.b16 %v10272, %v10271
    %v10475 = vpack.c.b16 %v10274, %v10273
    %v10476 = vpack.c.b16 %v10276, %v10275
    %v10477 = vpack.c.b16 %v10278, %v10277
    %v10478 = vpack.c.b16 %v10280, %v10279
    %v10479 = vpack.c.b16 %v10282, %v10281
    %v10480 = vpack.c.b16 %v10284, %v10283
    %v10481 = vpack.c.b16 %v10286, %v10285
    %v10482 = vpack.c.b16 %v10288, %v10287
    %v10483 = vpack.c.b16 %v10290, %v10289
    %v10484 = vpack.c.b16 %v10292, %v10291
    %v10485 = vpack.c.b16 %v10294, %v10293
    %v10486 = vpack.c.b16 %v10296, %v10295
    %v10487 = vpack.c.b16 %v10298, %v10297
    %v10488 = vpack.c.b16 %v10300, %v10299
    %v10489 = vpack.c.b16 %v10302, %v10301
    %v10490 = vpack.c.b16 %v10304, %v10303
    %v10491 = vpack.c.b16 %v10306, %v10305
    %v10492 = vpack.c.b16 %v10308, %v10307
    %v10493 = vpack.c.b16 %v10310, %v10309
    %v10494 = vpack.c.b16 %v10312, %v10311
    %v10495 = vpack.c.b16 %v10314, %v10313
    %v10496 = vpack.c.b16 %v10316, %v10315
    %v10497 = vpack.c.b16 %v10318, %v10317
    %v10498 = vpack.c.b16 %v10320, %v10319
    %v10499 = vpack.c.b16 %v10322, %v10321
    %v10500 = vpack.c.b16 %v10324, %v10323
    %v10501 = vpack.c.b16 %v10326, %v10325
    %v10502 = vpack.c.b16 %v10328, %v10327
    %v10503 = vpack.c.b16 %v10330, %v10329
    %v10504 = vpack.c.b16 %v10332, %v10331
    %v10505 = vpack.c.b16 %v10334, %v10333
    %v10506 = vpack.c.b16 %v10336, %v10335
    %v10507 = vpack.c.b16 %v10338, %v10337
    %v10508 = vpack.c.b16 %v10340, %v10339
    %v10509 = vpack.c.b16 %v10342, %v10341
    %v10510 = vpack.c.b16 %v10344, %v10343
    %v10511 = vpack.c.b16 %v10346, %v10345
    %v10512 = vpack.c.b16 %v10348, %v10347
    %v10513 = vpack.c.b16 %v10350, %v10349
    %v10514 = vpack.c.b16 %v10352, %v10351
    %v10515 = vpack.c.b16 %v10354, %v10353
    %v10516 = vpack.c.b16 %v10356, %v10355
    %10677 = vmatprep.subr.bf16.mxu0 0
    %10678 = vmatpush1.bf16.msra.mxu0 %v10357
    %10679 = vmatprep.subr.bf16.mxu0 0
    %10680 = vmatpush1.bf16.msra.mxu0 %v10358
    %10681 = vmatprep.subr.bf16.mxu0 0
    %10682 = vmatpush1.bf16.msra.mxu0 %v10359
    %10683 = vmatprep.subr.bf16.mxu0 0
    %10684 = vmatpush1.bf16.msra.mxu0 %v10360
    %10685 = vmatprep.subr.bf16.mxu0 0
    %10686 = vmatpush1.bf16.msra.mxu0 %v10361
    %10687 = vmatprep.subr.bf16.mxu0 0
    %10688 = vmatpush1.bf16.msra.mxu0 %v10362
    %10689 = vmatprep.subr.bf16.mxu0 0
    %10690 = vmatpush1.bf16.msra.mxu0 %v10363
    %10691 = vmatprep.subr.bf16.mxu0 0
    %10692 = vmatpush1.bf16.msra.mxu0 %v10364
    %10693 = vmatprep.subr.bf16.mxu0 0
    %10694 = vmatpush1.bf16.msra.mxu0 %v10365
    %10695 = vmatprep.subr.bf16.mxu0 0
    %10696 = vmatpush1.bf16.msra.mxu0 %v10366
    %10697 = vmatprep.subr.bf16.mxu0 0
    %10698 = vmatpush1.bf16.msra.mxu0 %v10367
    %10699 = vmatprep.subr.bf16.mxu0 0
    %10700 = vmatpush1.bf16.msra.mxu0 %v10368
    %10701 = vmatprep.subr.bf16.mxu0 0
    %10702 = vmatpush1.bf16.msra.mxu0 %v10369
    %10703 = vmatprep.subr.bf16.mxu0 0
    %10704 = vmatpush1.bf16.msra.mxu0 %v10370
    %10705 = vmatprep.subr.bf16.mxu0 0
    %10706 = vmatpush1.bf16.msra.mxu0 %v10371
    %10707 = vmatprep.subr.bf16.mxu0 0
    %10708 = vmatpush1.bf16.msra.mxu0 %v10372
    %10709 = vmatprep.mubr.bf16.mxu0 %v8983
    %10710 = vmatmul.mubr.bf16.gmra.mrb[0].mxu0 %v8982
    %v10711 = vpop.f32.mrb[0].mxu0
    %v10712 = vadd.f32 %v9715, %v10711
    %v10713 = vpop.f32.mrb[0].mxu0
    %v10714 = vpop.f32.mrb[0].mxu0
    %v10715 = vadd.f32 %v9715, %v10714
    %v10716 = vpop.f32.mrb[0].mxu0
    %10717 = vmatprep.mubr.bf16.mxu0 %v8987
    %10718 = vmatmul.mubr.bf16.gmra.mrb[0].mxu0 %v8986
    %v10719 = vpop.f32.mrb[0].mxu0
    %v10720 = vadd.f32 %v9715, %v10719
    %v10721 = vpop.f32.mrb[0].mxu0
    %v10722 = vpop.f32.mrb[0].mxu0
    %v10723 = vadd.f32 %v9715, %v10722
    %v10724 = vpop.f32.mrb[0].mxu0
    %10725 = vdwg.mxu0
    %10726 = vmatprep.subr.bf16.mxu0 0
    %10727 = vmatpush1.bf16.msra.mxu0 %v10373
    %10728 = vmatprep.subr.bf16.mxu0 0
    %10729 = vmatpush1.bf16.msra.mxu0 %v10374
    %10730 = vmatprep.subr.bf16.mxu0 0
    %10731 = vmatpush1.bf16.msra.mxu0 %v10375
    %10732 = vmatprep.subr.bf16.mxu0 0
    %10733 = vmatpush1.bf16.msra.mxu0 %v10376
    %10734 = vmatprep.subr.bf16.mxu0 0
    %10735 = vmatpush1.bf16.msra.mxu0 %v10377
    %10736 = vmatprep.subr.bf16.mxu0 0
    %10737 = vmatpush1.bf16.msra.mxu0 %v10378
    %10738 = vmatprep.subr.bf16.mxu0 0
    %10739 = vmatpush1.bf16.msra.mxu0 %v10379
    %10740 = vmatprep.subr.bf16.mxu0 0
    %10741 = vmatpush1.bf16.msra.mxu0 %v10380
    %10742 = vmatprep.subr.bf16.mxu0 0
    %10743 = vmatpush1.bf16.msra.mxu0 %v10381
    %10744 = vmatprep.subr.bf16.mxu0 0
    %10745 = vmatpush1.bf16.msra.mxu0 %v10382
    %10746 = vmatprep.subr.bf16.mxu0 0
    %10747 = vmatpush1.bf16.msra.mxu0 %v10383
    %10748 = vmatprep.subr.bf16.mxu0 0
    %10749 = vmatpush1.bf16.msra.mxu0 %v10384
    %10750 = vmatprep.subr.bf16.mxu0 0
    %10751 = vmatpush1.bf16.msra.mxu0 %v10385
    %10752 = vmatprep.subr.bf16.mxu0 0
    %10753 = vmatpush1.bf16.msra.mxu0 %v10386
    %10754 = vmatprep.subr.bf16.mxu0 0
    %10755 = vmatpush1.bf16.msra.mxu0 %v10387
    %10756 = vmatprep.subr.bf16.mxu0 0
    %10757 = vmatpush1.bf16.msra.mxu0 %v10388
    %10758 = vmatprep.mubr.bf16.mxu0 %v8985
    %10759 = vmatmul.mubr.bf16.gmra.mrb[0].mxu0 %v8984
    %v10760 = vpop.f32.mrb[0].mxu0
    %v10761 = vadd.f32 %v10712, %v10760
    %v10762 = vpop.f32.mrb[0].mxu0
    %v10763 = vpop.f32.mrb[0].mxu0
    %v10764 = vadd.f32 %v10715, %v10763
    %v10765 = vpop.f32.mrb[0].mxu0
    %10766 = vmatprep.mubr.bf16.mxu0 %v8989
    %10767 = vmatmul.mubr.bf16.gmra.mrb[0].mxu0 %v8988
    %v10768 = vpop.f32.mrb[0].mxu0
    %v10769 = vadd.f32 %v10720, %v10768
    %v10770 = vpop.f32.mrb[0].mxu0
    %v10771 = vpop.f32.mrb[0].mxu0
    %v10772 = vadd.f32 %v10723, %v10771
    %v10773 = vpop.f32.mrb[0].mxu0
    %10774 = vdwg.mxu0
    %10775 = vmatprep.subr.bf16.mxu0 0
    %10776 = vmatpush1.bf16.msra.mxu0 %v10389
    %10777 = vmatprep.subr.bf16.mxu0 0
    %10778 = vmatpush1.bf16.msra.mxu0 %v10390
    %10779 = vmatprep.subr.bf16.mxu0 0
    %10780 = vmatpush1.bf16.msra.mxu0 %v10391
    %10781 = vmatprep.subr.bf16.mxu0 0
    %10782 = vmatpush1.bf16.msra.mxu0 %v10392
    %10783 = vmatprep.subr.bf16.mxu0 0
    %10784 = vmatpush1.bf16.msra.mxu0 %v10393
    %10785 = vmatprep.subr.bf16.mxu0 0
    %10786 = vmatpush1.bf16.msra.mxu0 %v10394
    %10787 = vmatprep.subr.bf16.mxu0 0
    %10788 = vmatpush1.bf16.msra.mxu0 %v10395
    %10789 = vmatprep.subr.bf16.mxu0 0
    %10790 = vmatpush1.bf16.msra.mxu0 %v10396
    %10791 = vmatprep.subr.bf16.mxu0 0
    %10792 = vmatpush1.bf16.msra.mxu0 %v10397
    %10793 = vmatprep.subr.bf16.mxu0 0
    %10794 = vmatpush1.bf16.msra.mxu0 %v10398
    %10795 = vmatprep.subr.bf16.mxu0 0
    %10796 = vmatpush1.bf16.msra.mxu0 %v10399
    %10797 = vmatprep.subr.bf16.mxu0 0
    %10798 = vmatpush1.bf16.msra.mxu0 %v10400
    %10799 = vmatprep.subr.bf16.mxu0 0
    %10800 = vmatpush1.bf16.msra.mxu0 %v10401
    %10801 = vmatprep.subr.bf16.mxu0 0
    %10802 = vmatpush1.bf16.msra.mxu0 %v10402
    %10803 = vmatprep.subr.bf16.mxu0 0
    %10804 = vmatpush1.bf16.msra.mxu0 %v10403
    %10805 = vmatprep.subr.bf16.mxu0 0
    %10806 = vmatpush1.bf16.msra.mxu0 %v10404
    %10807 = vmatprep.mubr.bf16.mxu0 %v9041
    %10808 = vmatmul.mubr.bf16.gmra.mrb[0].mxu0 %v9029
    %v10809 = vpop.f32.mrb[0].mxu0
    %v10810 = vadd.f32 %v10761, %v10809
    %v10811 = vpop.f32.mrb[0].mxu0
    %v10812 = vpop.f32.mrb[0].mxu0
    %v10813 = vadd.f32 %v10764, %v10812
    %v10814 = vpop.f32.mrb[0].mxu0
    %10815 = vmatprep.mubr.bf16.mxu0 %v9089
    %10816 = vmatmul.mubr.bf16.gmra.mrb[0].mxu0 %v9077
    %v10817 = vpop.f32.mrb[0].mxu0
    %v10818 = vadd.f32 %v10769, %v10817
    %v10819 = vpop.f32.mrb[0].mxu0
    %v10820 = vpop.f32.mrb[0].mxu0
    %v10821 = vadd.f32 %v10772, %v10820
    %v10822 = vpop.f32.mrb[0].mxu0
    %10823 = vdwg.mxu0
    %10824 = vmatprep.subr.bf16.mxu0 0
    %10825 = vmatpush1.bf16.msra.mxu0 %v10405
    %10826 = vmatprep.subr.bf16.mxu0 0
    %10827 = vmatpush1.bf16.msra.mxu0 %v10406
    %10828 = vmatprep.subr.bf16.mxu0 0
    %10829 = vmatpush1.bf16.msra.mxu0 %v10407
    %10830 = vmatprep.subr.bf16.mxu0 0
    %10831 = vmatpush1.bf16.msra.mxu0 %v10408
    %10832 = vmatprep.subr.bf16.mxu0 0
    %10833 = vmatpush1.bf16.msra.mxu0 %v10409
    %10834 = vmatprep.subr.bf16.mxu0 0
    %10835 = vmatpush1.bf16.msra.mxu0 %v10410
    %10836 = vmatprep.subr.bf16.mxu0 0
    %10837 = vmatpush1.bf16.msra.mxu0 %v10411
    %10838 = vmatprep.subr.bf16.mxu0 0
    %10839 = vmatpush1.bf16.msra.mxu0 %v10412
    %10840 = vmatprep.subr.bf16.mxu0 0
    %10841 = vmatpush1.bf16.msra.mxu0 %v10413
    %10842 = vmatprep.subr.bf16.mxu0 0
    %10843 = vmatpush1.bf16.msra.mxu0 %v10414
    %10844 = vmatprep.subr.bf16.mxu0 0
    %10845 = vmatpush1.bf16.msra.mxu0 %v10415
    %10846 = vmatprep.subr.bf16.mxu0 0
    %10847 = vmatpush1.bf16.msra.mxu0 %v10416
    %10848 = vmatprep.subr.bf16.mxu0 0
    %10849 = vmatpush1.bf16.msra.mxu0 %v10417
    %10850 = vmatprep.subr.bf16.mxu0 0
    %10851 = vmatpush1.bf16.msra.mxu0 %v10418
    %10852 = vmatprep.subr.bf16.mxu0 0
    %10853 = vmatpush1.bf16.msra.mxu0 %v10419
    %10854 = vmatprep.subr.bf16.mxu0 0
    %10855 = vmatpush1.bf16.msra.mxu0 %v10420
    %10856 = vmatprep.mubr.bf16.mxu0 %v9065
    %10857 = vmatmul.mubr.bf16.gmra.mrb[0].mxu0 %v9053
    %v10858 = vpop.f32.mrb[0].mxu0
    %v10859 = vadd.f32 %v10810, %v10858
    %v10860 = vpop.f32.mrb[0].mxu0
    %v10861 = vpop.f32.mrb[0].mxu0
    %v10862 = vadd.f32 %v10813, %v10861
    %v10863 = vpop.f32.mrb[0].mxu0
    %10864 = vmatprep.mubr.bf16.mxu0 %v9113
    %10865 = vmatmul.mubr.bf16.gmra.mrb[0].mxu0 %v9101
    %v10866 = vpop.f32.mrb[0].mxu0
    %v10867 = vadd.f32 %v10818, %v10866
    %v10868 = vpop.f32.mrb[0].mxu0
    %v10869 = vpop.f32.mrb[0].mxu0
    %v10870 = vadd.f32 %v10821, %v10869
    %v10871 = vpop.f32.mrb[0].mxu0
    %10872 = vdwg.mxu0
    %10873 = vmatprep.subr.bf16.mxu0 0
    %10874 = vmatpush1.bf16.msra.mxu0 %v10421
    %10875 = vmatprep.subr.bf16.mxu0 0
    %10876 = vmatpush1.bf16.msra.mxu0 %v10422
    %10877 = vmatprep.subr.bf16.mxu0 0
    %10878 = vmatpush1.bf16.msra.mxu0 %v10423
    %10879 = vmatprep.subr.bf16.mxu0 0
    %10880 = vmatpush1.bf16.msra.mxu0 %v10424
    %10881 = vmatprep.subr.bf16.mxu0 0
    %10882 = vmatpush1.bf16.msra.mxu0 %v10425
    %10883 = vmatprep.subr.bf16.mxu0 0
    %10884 = vmatpush1.bf16.msra.mxu0 %v10426
    %10885 = vmatprep.subr.bf16.mxu0 0
    %10886 = vmatpush1.bf16.msra.mxu0 %v10427
    %10887 = vmatprep.subr.bf16.mxu0 0
    %10888 = vmatpush1.bf16.msra.mxu0 %v10428
    %10889 = vmatprep.subr.bf16.mxu0 0
    %10890 = vmatpush1.bf16.msra.mxu0 %v10429
    %10891 = vmatprep.subr.bf16.mxu0 0
    %10892 = vmatpush1.bf16.msra.mxu0 %v10430
    %10893 = vmatprep.subr.bf16.mxu0 0
    %10894 = vmatpush1.bf16.msra.mxu0 %v10431
    %10895 = vmatprep.subr.bf16.mxu0 0
    %10896 = vmatpush1.bf16.msra.mxu0 %v10432
    %10897 = vmatprep.subr.bf16.mxu0 0
    %10898 = vmatpush1.bf16.msra.mxu0 %v10433
    %10899 = vmatprep.subr.bf16.mxu0 0
    %10900 = vmatpush1.bf16.msra.mxu0 %v10434
    %10901 = vmatprep.subr.bf16.mxu0 0
    %10902 = vmatpush1.bf16.msra.mxu0 %v10435
    %10903 = vmatprep.subr.bf16.mxu0 0
    %10904 = vmatpush1.bf16.msra.mxu0 %v10436
    %10905 = vmatprep.mubr.bf16.mxu0 %v9147
    %10906 = vmatmul.mubr.bf16.gmra.mrb[0].mxu0 %v9144
    %v10907 = vpop.f32.mrb[0].mxu0
    %v10908 = vadd.f32 %v10859, %v10907
    %v10909 = vpop.f32.mrb[0].mxu0
    %v10910 = vpop.f32.mrb[0].mxu0
    %v10911 = vadd.f32 %v10862, %v10910
    %v10912 = vpop.f32.mrb[0].mxu0
    %10913 = vmatprep.mubr.bf16.mxu0 %v9159
    %10914 = vmatmul.mubr.bf16.gmra.mrb[0].mxu0 %v9156
    %v10915 = vpop.f32.mrb[0].mxu0
    %v10916 = vadd.f32 %v10867, %v10915
    %v10917 = vpop.f32.mrb[0].mxu0
    %v10918 = vpop.f32.mrb[0].mxu0
    %v10919 = vadd.f32 %v10870, %v10918
    %v10920 = vpop.f32.mrb[0].mxu0
    %10921 = vdwg.mxu0
    %10922 = vmatprep.subr.bf16.mxu0 0
    %10923 = vmatpush1.bf16.msra.mxu0 %v10437
    %10924 = vmatprep.subr.bf16.mxu0 0
    %10925 = vmatpush1.bf16.msra.mxu0 %v10438
    %10926 = vmatprep.subr.bf16.mxu0 0
    %10927 = vmatpush1.bf16.msra.mxu0 %v10439
    %10928 = vmatprep.subr.bf16.mxu0 0
    %10929 = vmatpush1.bf16.msra.mxu0 %v10440
    %10930 = vmatprep.subr.bf16.mxu0 0
    %10931 = vmatpush1.bf16.msra.mxu0 %v10441
    %10932 = vmatprep.subr.bf16.mxu0 0
    %10933 = vmatpush1.bf16.msra.mxu0 %v10442
    %10934 = vmatprep.subr.bf16.mxu0 0
    %10935 = vmatpush1.bf16.msra.mxu0 %v10443
    %10936 = vmatprep.subr.bf16.mxu0 0
    %10937 = vmatpush1.bf16.msra.mxu0 %v10444
    %10938 = vmatprep.subr.bf16.mxu0 0
    %10939 = vmatpush1.bf16.msra.mxu0 %v10445
    %10940 = vmatprep.subr.bf16.mxu0 0
    %10941 = vmatpush1.bf16.msra.mxu0 %v10446
    %10942 = vmatprep.subr.bf16.mxu0 0
    %10943 = vmatpush1.bf16.msra.mxu0 %v10447
    %10944 = vmatprep.subr.bf16.mxu0 0
    %10945 = vmatpush1.bf16.msra.mxu0 %v10448
    %10946 = vmatprep.subr.bf16.mxu0 0
    %10947 = vmatpush1.bf16.msra.mxu0 %v10449
    %10948 = vmatprep.subr.bf16.mxu0 0
    %10949 = vmatpush1.bf16.msra.mxu0 %v10450
    %10950 = vmatprep.subr.bf16.mxu0 0
    %10951 = vmatpush1.bf16.msra.mxu0 %v10451
    %10952 = vmatprep.subr.bf16.mxu0 0
    %10953 = vmatpush1.bf16.msra.mxu0 %v10452
    %10954 = vmatprep.mubr.bf16.mxu0 %v9153
    %10955 = vmatmul.mubr.bf16.gmra.mrb[0].mxu0 %v9150
    %v10956 = vpop.f32.mrb[0].mxu0
    %v10957 = vadd.f32 %v10908, %v10956
    %v10958 = vpop.f32.mrb[0].mxu0
    %v10959 = vpop.f32.mrb[0].mxu0
    %v10960 = vadd.f32 %v10911, %v10959
    %v10961 = vpop.f32.mrb[0].mxu0
    %10962 = vmatprep.mubr.bf16.mxu0 %v9165
    %10963 = vmatmul.mubr.bf16.gmra.mrb[0].mxu0 %v9162
    %v10964 = vpop.f32.mrb[0].mxu0
    %v10965 = vadd.f32 %v10916, %v10964
    %v10966 = vpop.f32.mrb[0].mxu0
    %v10967 = vpop.f32.mrb[0].mxu0
    %v10968 = vadd.f32 %v10919, %v10967
    %v10969 = vpop.f32.mrb[0].mxu0
    %10970 = vdwg.mxu0
    %10971 = vmatprep.subr.bf16.mxu0 0
    %10972 = vmatpush1.bf16.msra.mxu0 %v10453
    %10973 = vmatprep.subr.bf16.mxu0 0
    %10974 = vmatpush1.bf16.msra.mxu0 %v10454
    %10975 = vmatprep.subr.bf16.mxu0 0
    %10976 = vmatpush1.bf16.msra.mxu0 %v10455
    %10977 = vmatprep.subr.bf16.mxu0 0
    %10978 = vmatpush1.bf16.msra.mxu0 %v10456
    %10979 = vmatprep.subr.bf16.mxu0 0
    %10980 = vmatpush1.bf16.msra.mxu0 %v10457
    %10981 = vmatprep.subr.bf16.mxu0 0
    %10982 = vmatpush1.bf16.msra.mxu0 %v10458
    %10983 = vmatprep.subr.bf16.mxu0 0
    %10984 = vmatpush1.bf16.msra.mxu0 %v10459
    %10985 = vmatprep.subr.bf16.mxu0 0
    %10986 = vmatpush1.bf16.msra.mxu0 %v10460
    %10987 = vmatprep.subr.bf16.mxu0 0
    %10988 = vmatpush1.bf16.msra.mxu0 %v10461
    %10989 = vmatprep.subr.bf16.mxu0 0
    %10990 = vmatpush1.bf16.msra.mxu0 %v10462
    %10991 = vmatprep.subr.bf16.mxu0 0
    %10992 = vmatpush1.bf16.msra.mxu0 %v10463
    %10993 = vmatprep.subr.bf16.mxu0 0
    %10994 = vmatpush1.bf16.msra.mxu0 %v10464
    %10995 = vmatprep.subr.bf16.mxu0 0
    %10996 = vmatpush1.bf16.msra.mxu0 %v10465
    %10997 = vmatprep.subr.bf16.mxu0 0
    %10998 = vmatpush1.bf16.msra.mxu0 %v10466
    %10999 = vmatprep.subr.bf16.mxu0 0
    %11000 = vmatpush1.bf16.msra.mxu0 %v10467
    %11001 = vmatprep.subr.bf16.mxu0 0
    %11002 = vmatpush1.bf16.msra.mxu0 %v10468
    %11003 = vmatprep.mubr.bf16.mxu0 %v9227
    %11004 = vmatmul.mubr.bf16.gmra.mrb[0].mxu0 %v9210
    %v11005 = vpop.f32.mrb[0].mxu0
    %v11006 = vadd.f32 %v10957, %v11005
    %v11007 = vpop.f32.mrb[0].mxu0
    %v11008 = vpop.f32.mrb[0].mxu0
    %v11009 = vadd.f32 %v10960, %v11008
    %v11010 = vpop.f32.mrb[0].mxu0
    %11011 = vmatprep.mubr.bf16.mxu0 %v9295
    %11012 = vmatmul.mubr.bf16.gmra.mrb[0].mxu0 %v9278
    %v11013 = vpop.f32.mrb[0].mxu0
    %v11014 = vadd.f32 %v10965, %v11013
    %v11015 = vpop.f32.mrb[0].mxu0
    %v11016 = vpop.f32.mrb[0].mxu0
    %v11017 = vadd.f32 %v10968, %v11016
    %v11018 = vpop.f32.mrb[0].mxu0
    %11019 = vdwg.mxu0
    %11020 = vmatprep.subr.bf16.mxu0 0
    %11021 = vmatpush1.bf16.msra.mxu0 %v10469
    %11022 = vmatprep.subr.bf16.mxu0 0
    %11023 = vmatpush1.bf16.msra.mxu0 %v10470
    %11024 = vmatprep.subr.bf16.mxu0 0
    %11025 = vmatpush1.bf16.msra.mxu0 %v10471
    %11026 = vmatprep.subr.bf16.mxu0 0
    %11027 = vmatpush1.bf16.msra.mxu0 %v10472
    %11028 = vmatprep.subr.bf16.mxu0 0
    %11029 = vmatpush1.bf16.msra.mxu0 %v10473
    %11030 = vmatprep.subr.bf16.mxu0 0
    %11031 = vmatpush1.bf16.msra.mxu0 %v10474
    %11032 = vmatprep.subr.bf16.mxu0 0
    %11033 = vmatpush1.bf16.msra.mxu0 %v10475
    %11034 = vmatprep.subr.bf16.mxu0 0
    %11035 = vmatpush1.bf16.msra.mxu0 %v10476
    %11036 = vmatprep.subr.bf16.mxu0 0
    %11037 = vmatpush1.bf16.msra.mxu0 %v10477
    %11038 = vmatprep.subr.bf16.mxu0 0
    %11039 = vmatpush1.bf16.msra.mxu0 %v10478
    %11040 = vmatprep.subr.bf16.mxu0 0
    %11041 = vmatpush1.bf16.msra.mxu0 %v10479
    %11042 = vmatprep.subr.bf16.mxu0 0
    %11043 = vmatpush1.bf16.msra.mxu0 %v10480
    %11044 = vmatprep.subr.bf16.mxu0 0
    %11045 = vmatpush1.bf16.msra.mxu0 %v10481
    %11046 = vmatprep.subr.bf16.mxu0 0
    %11047 = vmatpush1.bf16.msra.mxu0 %v10482
    %11048 = vmatprep.subr.bf16.mxu0 0
    %11049 = vmatpush1.bf16.msra.mxu0 %v10483
    %11050 = vmatprep.subr.bf16.mxu0 0
    %11051 = vmatpush1.bf16.msra.mxu0 %v10484
    %11052 = vmatprep.mubr.bf16.mxu0 %v9261
    %11053 = vmatmul.mubr.bf16.gmra.mrb[0].mxu0 %v9244
    %v11054 = vpop.f32.mrb[0].mxu0
    %v11055 = vadd.f32 %v11006, %v11054
    %v11056 = vpop.f32.mrb[0].mxu0
    %v11057 = vpop.f32.mrb[0].mxu0
    %v11058 = vadd.f32 %v11009, %v11057
    %v11059 = vpop.f32.mrb[0].mxu0
    %11060 = vmatprep.mubr.bf16.mxu0 %v9329
    %11061 = vmatmul.mubr.bf16.gmra.mrb[0].mxu0 %v9312
    %v11062 = vpop.f32.mrb[0].mxu0
    %v11063 = vadd.f32 %v11014, %v11062
    %v11064 = vpop.f32.mrb[0].mxu0
    %v11065 = vpop.f32.mrb[0].mxu0
    %v11066 = vadd.f32 %v11017, %v11065
    %v11067 = vpop.f32.mrb[0].mxu0
    %11068 = vdwg.mxu0
    %11069 = vmatprep.subr.bf16.mxu0 0
    %11070 = vmatpush1.bf16.msra.mxu0 %v10485
    %11071 = vmatprep.subr.bf16.mxu0 0
    %11072 = vmatpush1.bf16.msra.mxu0 %v10486
    %11073 = vmatprep.subr.bf16.mxu0 0
    %11074 = vmatpush1.bf16.msra.mxu0 %v10487
    %11075 = vmatprep.subr.bf16.mxu0 0
    %11076 = vmatpush1.bf16.msra.mxu0 %v10488
    %11077 = vmatprep.subr.bf16.mxu0 0
    %11078 = vmatpush1.bf16.msra.mxu0 %v10489
    %11079 = vmatprep.subr.bf16.mxu0 0
    %11080 = vmatpush1.bf16.msra.mxu0 %v10490
    %11081 = vmatprep.subr.bf16.mxu0 0
    %11082 = vmatpush1.bf16.msra.mxu0 %v10491
    %11083 = vmatprep.subr.bf16.mxu0 0
    %11084 = vmatpush1.bf16.msra.mxu0 %v10492
    %11085 = vmatprep.subr.bf16.mxu0 0
    %11086 = vmatpush1.bf16.msra.mxu0 %v10493
    %11087 = vmatprep.subr.bf16.mxu0 0
    %11088 = vmatpush1.bf16.msra.mxu0 %v10494
    %11089 = vmatprep.subr.bf16.mxu0 0
    %11090 = vmatpush1.bf16.msra.mxu0 %v10495
    %11091 = vmatprep.subr.bf16.mxu0 0
    %11092 = vmatpush1.bf16.msra.mxu0 %v10496
    %11093 = vmatprep.subr.bf16.mxu0 0
    %11094 = vmatpush1.bf16.msra.mxu0 %v10497
    %11095 = vmatprep.subr.bf16.mxu0 0
    %11096 = vmatpush1.bf16.msra.mxu0 %v10498
    %11097 = vmatprep.subr.bf16.mxu0 0
    %11098 = vmatpush1.bf16.msra.mxu0 %v10499
    %11099 = vmatprep.subr.bf16.mxu0 0
    %11100 = vmatpush1.bf16.msra.mxu0 %v10500
    %11101 = vmatprep.mubr.bf16.mxu0 %v9363
    %11102 = vmatmul.mubr.bf16.gmra.mrb[0].mxu0 %v9360
    %v11103 = vpop.f32.mrb[0].mxu0
    %v11104 = vadd.f32 %v11055, %v11103
    %v11105 = vpop.f32.mrb[0].mxu0
    %v11106 = vpop.f32.mrb[0].mxu0
    %v11107 = vadd.f32 %v11058, %v11106
    %v11108 = vpop.f32.mrb[0].mxu0
    %11109 = vmatprep.mubr.bf16.mxu0 %v9375
    %11110 = vmatmul.mubr.bf16.gmra.mrb[0].mxu0 %v9372
    %v11111 = vpop.f32.mrb[0].mxu0
    %v11112 = vadd.f32 %v11063, %v11111
    %v11113 = vpop.f32.mrb[0].mxu0
    %v11114 = vpop.f32.mrb[0].mxu0
    %v11115 = vadd.f32 %v11066, %v11114
    %v11116 = vpop.f32.mrb[0].mxu0
    %11117 = vdwg.mxu0
    %11118 = vmatprep.subr.bf16.mxu0 0
    %11119 = vmatpush1.bf16.msra.mxu0 %v10501
    %11120 = vmatprep.subr.bf16.mxu0 0
    %11121 = vmatpush1.bf16.msra.mxu0 %v10502
    %11122 = vmatprep.subr.bf16.mxu0 0
    %11123 = vmatpush1.bf16.msra.mxu0 %v10503
    %11124 = vmatprep.subr.bf16.mxu0 0
    %11125 = vmatpush1.bf16.msra.mxu0 %v10504
    %11126 = vmatprep.subr.bf16.mxu0 0
    %11127 = vmatpush1.bf16.msra.mxu0 %v10505
    %11128 = vmatprep.subr.bf16.mxu0 0
    %11129 = vmatpush1.bf16.msra.mxu0 %v10506
    %11130 = vmatprep.subr.bf16.mxu0 0
    %11131 = vmatpush1.bf16.msra.mxu0 %v10507
    %11132 = vmatprep.subr.bf16.mxu0 0
    %11133 = vmatpush1.bf16.msra.mxu0 %v10508
    %11134 = vmatprep.subr.bf16.mxu0 0
    %11135 = vmatpush1.bf16.msra.mxu0 %v10509
    %11136 = vmatprep.subr.bf16.mxu0 0
    %11137 = vmatpush1.bf16.msra.mxu0 %v10510
    %11138 = vmatprep.subr.bf16.mxu0 0
    %11139 = vmatpush1.bf16.msra.mxu0 %v10511
    %11140 = vmatprep.subr.bf16.mxu0 0
    %11141 = vmatpush1.bf16.msra.mxu0 %v10512
    %11142 = vmatprep.subr.bf16.mxu0 0
    %11143 = vmatpush1.bf16.msra.mxu0 %v10513
    %11144 = vmatprep.subr.bf16.mxu0 0
    %11145 = vmatpush1.bf16.msra.mxu0 %v10514
    %11146 = vmatprep.subr.bf16.mxu0 0
    %11147 = vmatpush1.bf16.msra.mxu0 %v10515
    %11148 = vmatprep.subr.bf16.mxu0 0
    %11149 = vmatpush1.bf16.msra.mxu0 %v10516
    %11150 = vmatprep.mubr.bf16.mxu0 %v9369
    %11151 = vmatmul.mubr.bf16.gmra.mrb[0].mxu0 %v9366
    %v11152 = vpop.f32.mrb[0].mxu0
    %v11153 = vadd.f32 %v11104, %v11152
    %v11154 = vpop.f32.mrb[0].mxu0
    %v11155 = vpop.f32.mrb[0].mxu0
    %v11156 = vadd.f32 %v11107, %v11155
    %v11157 = vpop.f32.mrb[0].mxu0
    %11158 = vmatprep.mubr.bf16.mxu0 %v9381
    %11159 = vmatmul.mubr.bf16.gmra.mrb[0].mxu0 %v9378
    %v11160 = vpop.f32.mrb[0].mxu0
    %v11161 = vadd.f32 %v11112, %v11160
    %v11162 = vpop.f32.mrb[0].mxu0
    %v11163 = vpop.f32.mrb[0].mxu0
    %v11164 = vadd.f32 %v11115, %v11163
    %v11165 = vpop.f32.mrb[0].mxu0
    %11166 = vdwg.mxu0
    %11167 = vst [vmem:[#allocation15] sm:$0xff] %v11153
    %11168 = vst [vmem:[#allocation15 + $0x8] sm:$0xff] %v11156
    %11169 = vst [vmem:[#allocation15 + $0x10] sm:$0xff] %v11161
    %11170 = vst [vmem:[#allocation15 + $0x18] sm:$0xff] %v11164
    // Predicated region
    $region58: #{tpu_custom_call.1} parent=1 // pred_check
      _
    $region59: #{tpu_custom_call.1} parent=1 // pred_check_branch
      %11172 = sbr.rel (0) target = $region61
    $region60: #{tpu_custom_call.1} parent=1 // pred_region
      %s11174 = ssub.s32 512, 512
      %11175 = vsyncadd [#allocation5], %s11174
      %s11176 = sshll.u32 [#allocation15], 4
      %s11177 = int_to_ptr.vmem [resolvable:$true] %s11176
      %11182 = dma.vmem_to_hbm [thread:$0]  %s11177, 512, %s7, [#allocation5], 128, 128, 8
    $region61: #{tpu_custom_call.1} parent=1 // pred_fallthru
      _
    // Predicated region
    $region62: #{tpu_custom_call.1} parent=1 // pred_check
      _
    $region63: #{tpu_custom_call.1} parent=1 // pred_check_branch
      %11184 = sbr.rel (0) target = $region65
    $region64: #{tpu_custom_call.1} parent=1 // pred_region
      %11185 = dma.done [#allocation5], 512
    $region65: #{tpu_custom_call.1} parent=1 // pred_fallthru
      _
    %11186 = vsyncpa [#allocation4], 1
    %11187 = vsyncpa [#allocation7], 1
    %11188 = vsyncpa [#allocation10], 1
    %11189 = vsyncpa [#allocation13], 1
    %11190 = vsyncpa [#allocation5], 1

</llo_original>
